<compile_context>
chip_gen: v7x
topology: tpu7x:2x2x1
jax: 0.10.0
libtpu: 0.0.40
codegen_flags: <defaults>
</compile_context>

<pallas_src>
import functools

import jax
import jax.numpy as jnp
from jax.experimental import pallas as pl
from jax.experimental.pallas import tpu as pltpu

# ----------------------------- model sizes -----------------------------------
INPUT_DIM  = 12    # encoder (source) vocab
OUTPUT_DIM = 10    # decoder (target) vocab == decoder.output_dim
EMB_DIM    = 16
HID_DIM    = 32
N_LAYERS   = 2
SRC_LEN    = 6
MAX_LEN    = 8     # trg.shape[0]
BATCH      = 8     # trg.shape[1]; multiple of 8 sublanes (f32)


# ----------------------------- fused Pallas kernel ----------------------------
def seq2seq_kernel(tf_ref,                               # SMEM (MAX_LEN,) i32 (scalar prefetch)
                   src_emb_ref, trg_oh_ref,              # (S,B,E) f32, (T,B,V) f32
                   enc_wih0_ref, enc_whh0_ref, enc_b0_ref,
                   enc_wih1_ref, enc_whh1_ref, enc_b1_ref,
                   dec_emb_ref,                          # (V, E)
                   dec_wih0_ref, dec_whh0_ref, dec_b0_ref,
                   dec_wih1_ref, dec_whh1_ref, dec_b1_ref,
                   fc_w_ref, fc_b_ref,                   # (H, V), (1, V)
                   out_ref):                             # (T, B, V)
    B = src_emb_ref.shape[1]
    H = HID_DIM
    V = trg_oh_ref.shape[2]

    def lstm_cell(x, h, c, wih_ref, whh_ref, b_ref):
        # gates in PyTorch order [i, f, g, o] along the 4H lane axis.
        gates = (jnp.dot(x, wih_ref[...], preferred_element_type=jnp.float32)
                 + jnp.dot(h, whh_ref[...], preferred_element_type=jnp.float32)
                 + b_ref[...])                            # (B, 4H)
        sig = jax.nn.sigmoid(gates)                       # one full-width EUP pass
        th  = jnp.tanh(gates)                             # one full-width EUP pass
        i_g = sig[:, 0 * H:1 * H]
        f_g = sig[:, 1 * H:2 * H]
        g_g = th[:, 2 * H:3 * H]
        o_g = sig[:, 3 * H:4 * H]
        c_new = f_g * c + i_g * g_g
        h_new = o_g * jnp.tanh(c_new)
        return h_new, c_new

    enc_w = [(enc_wih0_ref, enc_whh0_ref, enc_b0_ref),
             (enc_wih1_ref, enc_whh1_ref, enc_b1_ref)]
    dec_w = [(dec_wih0_ref, dec_whh0_ref, dec_b0_ref),
             (dec_wih1_ref, dec_whh1_ref, dec_b1_ref)]

    h = [jnp.zeros((B, H), jnp.float32) for _ in range(N_LAYERS)]
    c = [jnp.zeros((B, H), jnp.float32) for _ in range(N_LAYERS)]

    # ---------------- encoder: in-kernel, fully unrolled time loop ------------
    for t in range(SRC_LEN):
        inp = src_emb_ref[t]                              # (B, EMB)
        for l in range(N_LAYERS):
            h[l], c[l] = lstm_cell(inp, h[l], c[l], *enc_w[l])
            inp = h[l]

    # ---------------- decoder: serial argmax dependence stays on-chip ---------
    col = jax.lax.broadcasted_iota(jnp.int32, (B, V), 1)
    x_oh = (col == 0).astype(jnp.float32)                 # input = zeros(batch) -> one-hot e_0

    for t in range(MAX_LEN):
        # embedding lookup as one-hot @ table on the MXU
        inp = jnp.dot(x_oh, dec_emb_ref[...], preferred_element_type=jnp.float32)  # (B, EMB)
        for l in range(N_LAYERS):
            h[l], c[l] = lstm_cell(inp, h[l], c[l], *dec_w[l])
            inp = h[l]
        logits = (jnp.dot(inp, fc_w_ref[...], preferred_element_type=jnp.float32)
                  + fc_b_ref[...])                        # (B, V)
        out_ref[t] = logits                               # VMEM store; one HBM writeback at end

        # top1 = output.max(1)[1]  (first index of the max), kept as one-hot
        maxv = jnp.max(logits, axis=1, keepdims=True)
        top1 = jnp.min(jnp.where(logits == maxv, col, jnp.int32(V)),
                       axis=1, keepdims=True)             # (B, 1)
        top1_oh = (col == top1).astype(jnp.float32)       # (B, V)

        # teacher forcing coin for this step (scalar from SMEM), blended at one-hot level
        tf = tf_ref[t].astype(jnp.float32)
        x_oh = tf * trg_oh_ref[t] + (1.0 - tf) * top1_oh


# ----------------------------- wrapper -----------------------------------------
def _vspec(shape):
    nd = len(shape)
    return pl.BlockSpec(shape, lambda *_: (0,) * nd)      # ignores grid idx + prefetch ref


_WEIGHT_ORDER = ("enc_wih_0", "enc_whh_0", "enc_b_0",
                 "enc_wih_1", "enc_whh_1", "enc_b_1",
                 "dec_emb",
                 "dec_wih_0", "dec_whh_0", "dec_b_0",
                 "dec_wih_1", "dec_whh_1", "dec_b_1",
                 "dec_fc_w", "dec_fc_b")


@functools.partial(jax.jit, static_argnames=("teacher_forcing_ratio",))
def seq2seq_forward(src, trg, params, key, teacher_forcing_ratio=0.1):
    """Mirrors Seq2Seq.forward: returns (max_len, batch, trg_vocab) float32."""
    max_len, batch = trg.shape

    # glue that does not depend on in-kernel state (fused into the same jit):
    src_emb = jnp.take(params["enc_emb"], src, axis=0)                # (S, B, E)
    trg_oh  = jax.nn.one_hot(trg, OUTPUT_DIM, dtype=jnp.float32)      # (T, B, V)
    # per-step coin: deterministic jax.random stand-in for python random.random()
    tf_mask = (jax.random.uniform(key, (max_len,))
               < teacher_forcing_ratio).astype(jnp.int32)             # (T,)

    weights = [params[k] for k in _WEIGHT_ORDER]

    grid_spec = pltpu.PrefetchScalarGridSpec(
        num_scalar_prefetch=1,                 # tf_mask -> SMEM
        grid=(1,),
        in_specs=[_vspec(src_emb.shape), _vspec(trg_oh.shape)]
                 + [_vspec(w.shape) for w in weights],
        out_specs=_vspec((max_len, batch, OUTPUT_DIM)),
    )

    return pl.pallas_call(
        seq2seq_kernel,
        grid_spec=grid_spec,
        out_shape=jax.ShapeDtypeStruct((max_len, batch, OUTPUT_DIM), jnp.float32),
        compiler_params=pltpu.CompilerParams(dimension_semantics=("arbitrary",)),
    )(tf_mask, src_emb, trg_oh, *weights)


# ----------------------------- parameters --------------------------------------
def init_params(key):
    """Deterministic uniform(-1/sqrt(H), 1/sqrt(H)) init, PyTorch-LSTM style.

    Weight matrices are stored transposed vs. PyTorch ((in, out)) so kernels
    compute x @ W on the MXU; bias_ih + bias_hh are folded into one (1, 4H) row.
    """
    bound = 1.0 / jnp.sqrt(jnp.float32(HID_DIM))

    def u(k, shape):
        return jax.random.uniform(k, shape, jnp.float32, -bound, bound)

    keys = iter(jax.random.split(key, 64))
    p = {}
    p["enc_emb"] = u(next(keys), (INPUT_DIM, EMB_DIM))
    p["dec_emb"] = u(next(keys), (OUTPUT_DIM, EMB_DIM))
    for tag in ("enc", "dec"):
        for l in range(N_LAYERS):
            in_dim = EMB_DIM if l == 0 else HID_DIM
            p[f"{tag}_wih_{l}"] = u(next(keys), (in_dim, 4 * HID_DIM))
            p[f"{tag}_whh_{l}"] = u(next(keys), (HID_DIM, 4 * HID_DIM))
            p[f"{tag}_b_{l}"] = (u(next(keys), (1, 4 * HID_DIM))
                                 + u(next(keys), (1, 4 * HID_DIM)))
    p["dec_fc_w"] = u(next(keys), (HID_DIM, OUTPUT_DIM))
    p["dec_fc_b"] = u(next(keys), (1, OUTPUT_DIM))
    return p


# ----------------------------- main ---------------------------------------------
if __name__ == "__main__":
    root = jax.random.PRNGKey(0)
    k_param, k_src, k_trg, k_tf = jax.random.split(root, 4)

    params = init_params(k_param)
    src = jax.random.randint(k_src, (SRC_LEN, BATCH), 0, INPUT_DIM, dtype=jnp.int32)
    trg = jax.random.randint(k_trg, (MAX_LEN, BATCH), 0, OUTPUT_DIM, dtype=jnp.int32)

    outputs = seq2seq_forward(src, trg, params, k_tf, teacher_forcing_ratio=0.1)
    outputs = jax.block_until_ready(outputs)

    assert outputs.shape == (MAX_LEN, BATCH, OUTPUT_DIM)
    assert outputs.dtype == jnp.float32
    assert bool(jnp.all(jnp.isfinite(outputs)))
    print("KERNEL_OK")
</pallas_src>

<mosaic_0001>
module attributes {stable_mosaic.version = 11 : i64} {
  func.func @seq2seq_kernel(%arg0: i32, %arg1: memref<8xi32, #tpu.memory_space<smem>>, %arg2: memref<6x8x16xf32, #tpu.memory_space<vmem>>, %arg3: memref<8x8x10xf32, #tpu.memory_space<vmem>>, %arg4: memref<16x128xf32, #tpu.memory_space<vmem>>, %arg5: memref<32x128xf32, #tpu.memory_space<vmem>>, %arg6: memref<1x128xf32, #tpu.memory_space<vmem>>, %arg7: memref<32x128xf32, #tpu.memory_space<vmem>>, %arg8: memref<32x128xf32, #tpu.memory_space<vmem>>, %arg9: memref<1x128xf32, #tpu.memory_space<vmem>>, %arg10: memref<10x16xf32, #tpu.memory_space<vmem>>, %arg11: memref<16x128xf32, #tpu.memory_space<vmem>>, %arg12: memref<32x128xf32, #tpu.memory_space<vmem>>, %arg13: memref<1x128xf32, #tpu.memory_space<vmem>>, %arg14: memref<32x128xf32, #tpu.memory_space<vmem>>, %arg15: memref<32x128xf32, #tpu.memory_space<vmem>>, %arg16: memref<1x128xf32, #tpu.memory_space<vmem>>, %arg17: memref<32x10xf32, #tpu.memory_space<vmem>>, %arg18: memref<1x10xf32, #tpu.memory_space<vmem>>, %arg19: memref<8x8x10xf32, #tpu.memory_space<vmem>>) attributes {dimension_semantics = [#tpu.dimension_semantics<arbitrary>], iteration_bounds = array<i64: 1>, scalar_prefetch = 1 : i64, scratch_operands = 0 : i64, tpu.core_type = #tpu.core_type<tc>, window_params = [{pipeline_mode = #tpu.pipeline_mode<synchronous>, transform_indices = @transform_0, window_bounds = array<i64: 6, 8, 16>}, {pipeline_mode = #tpu.pipeline_mode<synchronous>, transform_indices = @transform_1, window_bounds = array<i64: 8, 8, 10>}, {pipeline_mode = #tpu.pipeline_mode<synchronous>, transform_indices = @transform_2, window_bounds = array<i64: 16, 128>}, {pipeline_mode = #tpu.pipeline_mode<synchronous>, transform_indices = @transform_3, window_bounds = array<i64: 32, 128>}, {pipeline_mode = #tpu.pipeline_mode<synchronous>, transform_indices = @transform_4, window_bounds = array<i64: 1, 128>}, {pipeline_mode = #tpu.pipeline_mode<synchronous>, transform_indices = @transform_5, window_bounds = array<i64: 32, 128>}, {pipeline_mode = #tpu.pipeline_mode<synchronous>, transform_indices = @transform_6, window_bounds = array<i64: 32, 128>}, {pipeline_mode = #tpu.pipeline_mode<synchronous>, transform_indices = @transform_7, window_bounds = array<i64: 1, 128>}, {pipeline_mode = #tpu.pipeline_mode<synchronous>, transform_indices = @transform_8, window_bounds = array<i64: 10, 16>}, {pipeline_mode = #tpu.pipeline_mode<synchronous>, transform_indices = @transform_9, window_bounds = array<i64: 16, 128>}, {pipeline_mode = #tpu.pipeline_mode<synchronous>, transform_indices = @transform_10, window_bounds = array<i64: 32, 128>}, {pipeline_mode = #tpu.pipeline_mode<synchronous>, transform_indices = @transform_11, window_bounds = array<i64: 1, 128>}, {pipeline_mode = #tpu.pipeline_mode<synchronous>, transform_indices = @transform_12, window_bounds = array<i64: 32, 128>}, {pipeline_mode = #tpu.pipeline_mode<synchronous>, transform_indices = @transform_13, window_bounds = array<i64: 32, 128>}, {pipeline_mode = #tpu.pipeline_mode<synchronous>, transform_indices = @transform_14, window_bounds = array<i64: 1, 128>}, {pipeline_mode = #tpu.pipeline_mode<synchronous>, transform_indices = @transform_15, window_bounds = array<i64: 32, 10>}, {pipeline_mode = #tpu.pipeline_mode<synchronous>, transform_indices = @transform_16, window_bounds = array<i64: 1, 10>}, {pipeline_mode = #tpu.pipeline_mode<synchronous>, transform_indices = @transform_17, window_bounds = array<i64: 8, 8, 10>}]} {
    %cst = arith.constant 0.000000e+00 : f32
    %0 = vector.broadcast %cst : f32 to vector<8x32xf32>
    %cst_0 = arith.constant 0.000000e+00 : f32
    %1 = vector.broadcast %cst_0 : f32 to vector<8x32xf32>
    %cst_1 = arith.constant 0.000000e+00 : f32
    %2 = vector.broadcast %cst_1 : f32 to vector<8x32xf32>
    %cst_2 = arith.constant 0.000000e+00 : f32
    %3 = vector.broadcast %cst_2 : f32 to vector<8x32xf32>
    %c0 = arith.constant 0 : index
    %c0_3 = arith.constant 0 : index
    %c0_4 = arith.constant 0 : index
    %4 = vector.load %arg2[%c0, %c0_3, %c0_4] : memref<6x8x16xf32, #tpu.memory_space<vmem>>, vector<1x8x16xf32>
    %5 = vector.shape_cast %4 : vector<1x8x16xf32> to vector<8x16xf32>
    %c0_5 = arith.constant 0 : index
    %c0_6 = arith.constant 0 : index
    %6 = vector.load %arg4[%c0_5, %c0_6] : memref<16x128xf32, #tpu.memory_space<vmem>>, vector<16x128xf32>
    %cst_7 = arith.constant dense<0.000000e+00> : vector<8x128xf32>
    %7 = tpu.matmul %5, %6, %cst_7 {dimension_numbers = #tpu.dot_dimension_numbers<[1], [0], [0], [1], [0, 0, 1, 1], [], []>} : vector<8x16xf32>, vector<16x128xf32>, vector<8x128xf32> -> vector<8x128xf32>
    %c0_8 = arith.constant 0 : index
    %c0_9 = arith.constant 0 : index
    %8 = vector.load %arg5[%c0_8, %c0_9] : memref<32x128xf32, #tpu.memory_space<vmem>>, vector<32x128xf32>
    %cst_10 = arith.constant dense<0.000000e+00> : vector<8x128xf32>
    %9 = tpu.matmul %0, %8, %cst_10 {dimension_numbers = #tpu.dot_dimension_numbers<[1], [0], [0], [1], [0, 0, 1, 1], [], []>} : vector<8x32xf32>, vector<32x128xf32>, vector<8x128xf32> -> vector<8x128xf32>
    %10 = arith.addf %7, %9 : vector<8x128xf32>
    %c0_11 = arith.constant 0 : index
    %c0_12 = arith.constant 0 : index
    %11 = vector.load %arg6[%c0_11, %c0_12] : memref<1x128xf32, #tpu.memory_space<vmem>>, vector<1x128xf32>
    %12 = vector.broadcast %11 : vector<1x128xf32> to vector<8x128xf32>
    %13 = arith.addf %10, %12 : vector<8x128xf32>
    %14 = arith.negf %13 : vector<8x128xf32>
    %15 = math.exp %14 : vector<8x128xf32>
    %cst_13 = arith.constant 1.000000e+00 : f32
    %16 = vector.broadcast %cst_13 : f32 to vector<8x128xf32>
    %17 = arith.addf %16, %15 : vector<8x128xf32>
    %18 = arith.divf %16, %17 : vector<8x128xf32>
    %19 = math.tanh %13 : vector<8x128xf32>
    %20 = vector.extract_strided_slice %18 {offsets = [0, 0], sizes = [8, 32], strides = [1, 1]} : vector<8x128xf32> to vector<8x32xf32>
    %21 = vector.extract_strided_slice %18 {offsets = [0, 32], sizes = [8, 32], strides = [1, 1]} : vector<8x128xf32> to vector<8x32xf32>
    %22 = vector.extract_strided_slice %19 {offsets = [0, 64], sizes = [8, 32], strides = [1, 1]} : vector<8x128xf32> to vector<8x32xf32>
    %23 = vector.extract_strided_slice %18 {offsets = [0, 96], sizes = [8, 32], strides = [1, 1]} : vector<8x128xf32> to vector<8x32xf32>
    %24 = arith.mulf %21, %2 : vector<8x32xf32>
    %25 = arith.mulf %20, %22 : vector<8x32xf32>
    %26 = arith.addf %24, %25 : vector<8x32xf32>
    %27 = math.tanh %26 : vector<8x32xf32>
    %28 = arith.mulf %23, %27 : vector<8x32xf32>
    %c0_14 = arith.constant 0 : index
    %c0_15 = arith.constant 0 : index
    %29 = vector.load %arg7[%c0_14, %c0_15] : memref<32x128xf32, #tpu.memory_space<vmem>>, vector<32x128xf32>
    %cst_16 = arith.constant dense<0.000000e+00> : vector<8x128xf32>
    %30 = tpu.matmul %28, %29, %cst_16 {dimension_numbers = #tpu.dot_dimension_numbers<[1], [0], [0], [1], [0, 0, 1, 1], [], []>} : vector<8x32xf32>, vector<32x128xf32>, vector<8x128xf32> -> vector<8x128xf32>
    %c0_17 = arith.constant 0 : index
    %c0_18 = arith.constant 0 : index
    %31 = vector.load %arg8[%c0_17, %c0_18] : memref<32x128xf32, #tpu.memory_space<vmem>>, vector<32x128xf32>
    %cst_19 = arith.constant dense<0.000000e+00> : vector<8x128xf32>
    %32 = tpu.matmul %1, %31, %cst_19 {dimension_numbers = #tpu.dot_dimension_numbers<[1], [0], [0], [1], [0, 0, 1, 1], [], []>} : vector<8x32xf32>, vector<32x128xf32>, vector<8x128xf32> -> vector<8x128xf32>
    %33 = arith.addf %30, %32 : vector<8x128xf32>
    %c0_20 = arith.constant 0 : index
    %c0_21 = arith.constant 0 : index
    %34 = vector.load %arg9[%c0_20, %c0_21] : memref<1x128xf32, #tpu.memory_space<vmem>>, vector<1x128xf32>
    %35 = vector.broadcast %34 : vector<1x128xf32> to vector<8x128xf32>
    %36 = arith.addf %33, %35 : vector<8x128xf32>
    %37 = arith.negf %36 : vector<8x128xf32>
    %38 = math.exp %37 : vector<8x128xf32>
    %cst_22 = arith.constant 1.000000e+00 : f32
    %39 = vector.broadcast %cst_22 : f32 to vector<8x128xf32>
    %40 = arith.addf %39, %38 : vector<8x128xf32>
    %41 = arith.divf %39, %40 : vector<8x128xf32>
    %42 = math.tanh %36 : vector<8x128xf32>
    %43 = vector.extract_strided_slice %41 {offsets = [0, 0], sizes = [8, 32], strides = [1, 1]} : vector<8x128xf32> to vector<8x32xf32>
    %44 = vector.extract_strided_slice %41 {offsets = [0, 32], sizes = [8, 32], strides = [1, 1]} : vector<8x128xf32> to vector<8x32xf32>
    %45 = vector.extract_strided_slice %42 {offsets = [0, 64], sizes = [8, 32], strides = [1, 1]} : vector<8x128xf32> to vector<8x32xf32>
    %46 = vector.extract_strided_slice %41 {offsets = [0, 96], sizes = [8, 32], strides = [1, 1]} : vector<8x128xf32> to vector<8x32xf32>
    %47 = arith.mulf %44, %3 : vector<8x32xf32>
    %48 = arith.mulf %43, %45 : vector<8x32xf32>
    %49 = arith.addf %47, %48 : vector<8x32xf32>
    %50 = math.tanh %49 : vector<8x32xf32>
    %51 = arith.mulf %46, %50 : vector<8x32xf32>
    %c1 = arith.constant 1 : index
    %c0_23 = arith.constant 0 : index
    %c0_24 = arith.constant 0 : index
    %52 = vector.load %arg2[%c1, %c0_23, %c0_24] : memref<6x8x16xf32, #tpu.memory_space<vmem>>, vector<1x8x16xf32>
    %53 = vector.shape_cast %52 : vector<1x8x16xf32> to vector<8x16xf32>
    %c0_25 = arith.constant 0 : index
    %c0_26 = arith.constant 0 : index
    %54 = vector.load %arg4[%c0_25, %c0_26] : memref<16x128xf32, #tpu.memory_space<vmem>>, vector<16x128xf32>
    %cst_27 = arith.constant dense<0.000000e+00> : vector<8x128xf32>
    %55 = tpu.matmul %53, %54, %cst_27 {dimension_numbers = #tpu.dot_dimension_numbers<[1], [0], [0], [1], [0, 0, 1, 1], [], []>} : vector<8x16xf32>, vector<16x128xf32>, vector<8x128xf32> -> vector<8x128xf32>
    %c0_28 = arith.constant 0 : index
    %c0_29 = arith.constant 0 : index
    %56 = vector.load %arg5[%c0_28, %c0_29] : memref<32x128xf32, #tpu.memory_space<vmem>>, vector<32x128xf32>
    %cst_30 = arith.constant dense<0.000000e+00> : vector<8x128xf32>
    %57 = tpu.matmul %28, %56, %cst_30 {dimension_numbers = #tpu.dot_dimension_numbers<[1], [0], [0], [1], [0, 0, 1, 1], [], []>} : vector<8x32xf32>, vector<32x128xf32>, vector<8x128xf32> -> vector<8x128xf32>
    %58 = arith.addf %55, %57 : vector<8x128xf32>
    %c0_31 = arith.constant 0 : index
    %c0_32 = arith.constant 0 : index
    %59 = vector.load %arg6[%c0_31, %c0_32] : memref<1x128xf32, #tpu.memory_space<vmem>>, vector<1x128xf32>
    %60 = vector.broadcast %59 : vector<1x128xf32> to vector<8x128xf32>
    %61 = arith.addf %58, %60 : vector<8x128xf32>
    %62 = arith.negf %61 : vector<8x128xf32>
    %63 = math.exp %62 : vector<8x128xf32>
    %cst_33 = arith.constant 1.000000e+00 : f32
    %64 = vector.broadcast %cst_33 : f32 to vector<8x128xf32>
    %65 = arith.addf %64, %63 : vector<8x128xf32>
    %66 = arith.divf %64, %65 : vector<8x128xf32>
    %67 = math.tanh %61 : vector<8x128xf32>
    %68 = vector.extract_strided_slice %66 {offsets = [0, 0], sizes = [8, 32], strides = [1, 1]} : vector<8x128xf32> to vector<8x32xf32>
    %69 = vector.extract_strided_slice %66 {offsets = [0, 32], sizes = [8, 32], strides = [1, 1]} : vector<8x128xf32> to vector<8x32xf32>
    %70 = vector.extract_strided_slice %67 {offsets = [0, 64], sizes = [8, 32], strides = [1, 1]} : vector<8x128xf32> to vector<8x32xf32>
    %71 = vector.extract_strided_slice %66 {offsets = [0, 96], sizes = [8, 32], strides = [1, 1]} : vector<8x128xf32> to vector<8x32xf32>
    %72 = arith.mulf %69, %26 : vector<8x32xf32>
    %73 = arith.mulf %68, %70 : vector<8x32xf32>
    %74 = arith.addf %72, %73 : vector<8x32xf32>
    %75 = math.tanh %74 : vector<8x32xf32>
    %76 = arith.mulf %71, %75 : vector<8x32xf32>
    %c0_34 = arith.constant 0 : index
    %c0_35 = arith.constant 0 : index
    %77 = vector.load %arg7[%c0_34, %c0_35] : memref<32x128xf32, #tpu.memory_space<vmem>>, vector<32x128xf32>
    %cst_36 = arith.constant dense<0.000000e+00> : vector<8x128xf32>
    %78 = tpu.matmul %76, %77, %cst_36 {dimension_numbers = #tpu.dot_dimension_numbers<[1], [0], [0], [1], [0, 0, 1, 1], [], []>} : vector<8x32xf32>, vector<32x128xf32>, vector<8x128xf32> -> vector<8x128xf32>
    %c0_37 = arith.constant 0 : index
    %c0_38 = arith.constant 0 : index
    %79 = vector.load %arg8[%c0_37, %c0_38] : memref<32x128xf32, #tpu.memory_space<vmem>>, vector<32x128xf32>
    %cst_39 = arith.constant dense<0.000000e+00> : vector<8x128xf32>
    %80 = tpu.matmul %51, %79, %cst_39 {dimension_numbers = #tpu.dot_dimension_numbers<[1], [0], [0], [1], [0, 0, 1, 1], [], []>} : vector<8x32xf32>, vector<32x128xf32>, vector<8x128xf32> -> vector<8x128xf32>
    %81 = arith.addf %78, %80 : vector<8x128xf32>
    %c0_40 = arith.constant 0 : index
    %c0_41 = arith.constant 0 : index
    %82 = vector.load %arg9[%c0_40, %c0_41] : memref<1x128xf32, #tpu.memory_space<vmem>>, vector<1x128xf32>
    %83 = vector.broadcast %82 : vector<1x128xf32> to vector<8x128xf32>
    %84 = arith.addf %81, %83 : vector<8x128xf32>
    %85 = arith.negf %84 : vector<8x128xf32>
    %86 = math.exp %85 : vector<8x128xf32>
    %cst_42 = arith.constant 1.000000e+00 : f32
    %87 = vector.broadcast %cst_42 : f32 to vector<8x128xf32>
    %88 = arith.addf %87, %86 : vector<8x128xf32>
    %89 = arith.divf %87, %88 : vector<8x128xf32>
    %90 = math.tanh %84 : vector<8x128xf32>
    %91 = vector.extract_strided_slice %89 {offsets = [0, 0], sizes = [8, 32], strides = [1, 1]} : vector<8x128xf32> to vector<8x32xf32>
    %92 = vector.extract_strided_slice %89 {offsets = [0, 32], sizes = [8, 32], strides = [1, 1]} : vector<8x128xf32> to vector<8x32xf32>
    %93 = vector.extract_strided_slice %90 {offsets = [0, 64], sizes = [8, 32], strides = [1, 1]} : vector<8x128xf32> to vector<8x32xf32>
    %94 = vector.extract_strided_slice %89 {offsets = [0, 96], sizes = [8, 32], strides = [1, 1]} : vector<8x128xf32> to vector<8x32xf32>
    %95 = arith.mulf %92, %49 : vector<8x32xf32>
    %96 = arith.mulf %91, %93 : vector<8x32xf32>
    %97 = arith.addf %95, %96 : vector<8x32xf32>
    %98 = math.tanh %97 : vector<8x32xf32>
    %99 = arith.mulf %94, %98 : vector<8x32xf32>
    %c2 = arith.constant 2 : index
    %c0_43 = arith.constant 0 : index
    %c0_44 = arith.constant 0 : index
    %100 = vector.load %arg2[%c2, %c0_43, %c0_44] : memref<6x8x16xf32, #tpu.memory_space<vmem>>, vector<1x8x16xf32>
    %101 = vector.shape_cast %100 : vector<1x8x16xf32> to vector<8x16xf32>
    %c0_45 = arith.constant 0 : index
    %c0_46 = arith.constant 0 : index
    %102 = vector.load %arg4[%c0_45, %c0_46] : memref<16x128xf32, #tpu.memory_space<vmem>>, vector<16x128xf32>
    %cst_47 = arith.constant dense<0.000000e+00> : vector<8x128xf32>
    %103 = tpu.matmul %101, %102, %cst_47 {dimension_numbers = #tpu.dot_dimension_numbers<[1], [0], [0], [1], [0, 0, 1, 1], [], []>} : vector<8x16xf32>, vector<16x128xf32>, vector<8x128xf32> -> vector<8x128xf32>
    %c0_48 = arith.constant 0 : index
    %c0_49 = arith.constant 0 : index
    %104 = vector.load %arg5[%c0_48, %c0_49] : memref<32x128xf32, #tpu.memory_space<vmem>>, vector<32x128xf32>
    %cst_50 = arith.constant dense<0.000000e+00> : vector<8x128xf32>
    %105 = tpu.matmul %76, %104, %cst_50 {dimension_numbers = #tpu.dot_dimension_numbers<[1], [0], [0], [1], [0, 0, 1, 1], [], []>} : vector<8x32xf32>, vector<32x128xf32>, vector<8x128xf32> -> vector<8x128xf32>
    %106 = arith.addf %103, %105 : vector<8x128xf32>
    %c0_51 = arith.constant 0 : index
    %c0_52 = arith.constant 0 : index
    %107 = vector.load %arg6[%c0_51, %c0_52] : memref<1x128xf32, #tpu.memory_space<vmem>>, vector<1x128xf32>
    %108 = vector.broadcast %107 : vector<1x128xf32> to vector<8x128xf32>
    %109 = arith.addf %106, %108 : vector<8x128xf32>
    %110 = arith.negf %109 : vector<8x128xf32>
    %111 = math.exp %110 : vector<8x128xf32>
    %cst_53 = arith.constant 1.000000e+00 : f32
    %112 = vector.broadcast %cst_53 : f32 to vector<8x128xf32>
    %113 = arith.addf %112, %111 : vector<8x128xf32>
    %114 = arith.divf %112, %113 : vector<8x128xf32>
    %115 = math.tanh %109 : vector<8x128xf32>
    %116 = vector.extract_strided_slice %114 {offsets = [0, 0], sizes = [8, 32], strides = [1, 1]} : vector<8x128xf32> to vector<8x32xf32>
    %117 = vector.extract_strided_slice %114 {offsets = [0, 32], sizes = [8, 32], strides = [1, 1]} : vector<8x128xf32> to vector<8x32xf32>
    %118 = vector.extract_strided_slice %115 {offsets = [0, 64], sizes = [8, 32], strides = [1, 1]} : vector<8x128xf32> to vector<8x32xf32>
    %119 = vector.extract_strided_slice %114 {offsets = [0, 96], sizes = [8, 32], strides = [1, 1]} : vector<8x128xf32> to vector<8x32xf32>
    %120 = arith.mulf %117, %74 : vector<8x32xf32>
    %121 = arith.mulf %116, %118 : vector<8x32xf32>
    %122 = arith.addf %120, %121 : vector<8x32xf32>
    %123 = math.tanh %122 : vector<8x32xf32>
    %124 = arith.mulf %119, %123 : vector<8x32xf32>
    %c0_54 = arith.constant 0 : index
    %c0_55 = arith.constant 0 : index
    %125 = vector.load %arg7[%c0_54, %c0_55] : memref<32x128xf32, #tpu.memory_space<vmem>>, vector<32x128xf32>
    %cst_56 = arith.constant dense<0.000000e+00> : vector<8x128xf32>
    %126 = tpu.matmul %124, %125, %cst_56 {dimension_numbers = #tpu.dot_dimension_numbers<[1], [0], [0], [1], [0, 0, 1, 1], [], []>} : vector<8x32xf32>, vector<32x128xf32>, vector<8x128xf32> -> vector<8x128xf32>
    %c0_57 = arith.constant 0 : index
    %c0_58 = arith.constant 0 : index
    %127 = vector.load %arg8[%c0_57, %c0_58] : memref<32x128xf32, #tpu.memory_space<vmem>>, vector<32x128xf32>
    %cst_59 = arith.constant dense<0.000000e+00> : vector<8x128xf32>
    %128 = tpu.matmul %99, %127, %cst_59 {dimension_numbers = #tpu.dot_dimension_numbers<[1], [0], [0], [1], [0, 0, 1, 1], [], []>} : vector<8x32xf32>, vector<32x128xf32>, vector<8x128xf32> -> vector<8x128xf32>
    %129 = arith.addf %126, %128 : vector<8x128xf32>
    %c0_60 = arith.constant 0 : index
    %c0_61 = arith.constant 0 : index
    %130 = vector.load %arg9[%c0_60, %c0_61] : memref<1x128xf32, #tpu.memory_space<vmem>>, vector<1x128xf32>
    %131 = vector.broadcast %130 : vector<1x128xf32> to vector<8x128xf32>
    %132 = arith.addf %129, %131 : vector<8x128xf32>
    %133 = arith.negf %132 : vector<8x128xf32>
    %134 = math.exp %133 : vector<8x128xf32>
    %cst_62 = arith.constant 1.000000e+00 : f32
    %135 = vector.broadcast %cst_62 : f32 to vector<8x128xf32>
    %136 = arith.addf %135, %134 : vector<8x128xf32>
    %137 = arith.divf %135, %136 : vector<8x128xf32>
    %138 = math.tanh %132 : vector<8x128xf32>
    %139 = vector.extract_strided_slice %137 {offsets = [0, 0], sizes = [8, 32], strides = [1, 1]} : vector<8x128xf32> to vector<8x32xf32>
    %140 = vector.extract_strided_slice %137 {offsets = [0, 32], sizes = [8, 32], strides = [1, 1]} : vector<8x128xf32> to vector<8x32xf32>
    %141 = vector.extract_strided_slice %138 {offsets = [0, 64], sizes = [8, 32], strides = [1, 1]} : vector<8x128xf32> to vector<8x32xf32>
    %142 = vector.extract_strided_slice %137 {offsets = [0, 96], sizes = [8, 32], strides = [1, 1]} : vector<8x128xf32> to vector<8x32xf32>
    %143 = arith.mulf %140, %97 : vector<8x32xf32>
    %144 = arith.mulf %139, %141 : vector<8x32xf32>
    %145 = arith.addf %143, %144 : vector<8x32xf32>
    %146 = math.tanh %145 : vector<8x32xf32>
    %147 = arith.mulf %142, %146 : vector<8x32xf32>
    %c3 = arith.constant 3 : index
    %c0_63 = arith.constant 0 : index
    %c0_64 = arith.constant 0 : index
    %148 = vector.load %arg2[%c3, %c0_63, %c0_64] : memref<6x8x16xf32, #tpu.memory_space<vmem>>, vector<1x8x16xf32>
    %149 = vector.shape_cast %148 : vector<1x8x16xf32> to vector<8x16xf32>
    %c0_65 = arith.constant 0 : index
    %c0_66 = arith.constant 0 : index
    %150 = vector.load %arg4[%c0_65, %c0_66] : memref<16x128xf32, #tpu.memory_space<vmem>>, vector<16x128xf32>
    %cst_67 = arith.constant dense<0.000000e+00> : vector<8x128xf32>
    %151 = tpu.matmul %149, %150, %cst_67 {dimension_numbers = #tpu.dot_dimension_numbers<[1], [0], [0], [1], [0, 0, 1, 1], [], []>} : vector<8x16xf32>, vector<16x128xf32>, vector<8x128xf32> -> vector<8x128xf32>
    %c0_68 = arith.constant 0 : index
    %c0_69 = arith.constant 0 : index
    %152 = vector.load %arg5[%c0_68, %c0_69] : memref<32x128xf32, #tpu.memory_space<vmem>>, vector<32x128xf32>
    %cst_70 = arith.constant dense<0.000000e+00> : vector<8x128xf32>
    %153 = tpu.matmul %124, %152, %cst_70 {dimension_numbers = #tpu.dot_dimension_numbers<[1], [0], [0], [1], [0, 0, 1, 1], [], []>} : vector<8x32xf32>, vector<32x128xf32>, vector<8x128xf32> -> vector<8x128xf32>
    %154 = arith.addf %151, %153 : vector<8x128xf32>
    %c0_71 = arith.constant 0 : index
    %c0_72 = arith.constant 0 : index
    %155 = vector.load %arg6[%c0_71, %c0_72] : memref<1x128xf32, #tpu.memory_space<vmem>>, vector<1x128xf32>
    %156 = vector.broadcast %155 : vector<1x128xf32> to vector<8x128xf32>
    %157 = arith.addf %154, %156 : vector<8x128xf32>
    %158 = arith.negf %157 : vector<8x128xf32>
    %159 = math.exp %158 : vector<8x128xf32>
    %cst_73 = arith.constant 1.000000e+00 : f32
    %160 = vector.broadcast %cst_73 : f32 to vector<8x128xf32>
    %161 = arith.addf %160, %159 : vector<8x128xf32>
    %162 = arith.divf %160, %161 : vector<8x128xf32>
    %163 = math.tanh %157 : vector<8x128xf32>
    %164 = vector.extract_strided_slice %162 {offsets = [0, 0], sizes = [8, 32], strides = [1, 1]} : vector<8x128xf32> to vector<8x32xf32>
    %165 = vector.extract_strided_slice %162 {offsets = [0, 32], sizes = [8, 32], strides = [1, 1]} : vector<8x128xf32> to vector<8x32xf32>
    %166 = vector.extract_strided_slice %163 {offsets = [0, 64], sizes = [8, 32], strides = [1, 1]} : vector<8x128xf32> to vector<8x32xf32>
    %167 = vector.extract_strided_slice %162 {offsets = [0, 96], sizes = [8, 32], strides = [1, 1]} : vector<8x128xf32> to vector<8x32xf32>
    %168 = arith.mulf %165, %122 : vector<8x32xf32>
    %169 = arith.mulf %164, %166 : vector<8x32xf32>
    %170 = arith.addf %168, %169 : vector<8x32xf32>
    %171 = math.tanh %170 : vector<8x32xf32>
    %172 = arith.mulf %167, %171 : vector<8x32xf32>
    %c0_74 = arith.constant 0 : index
    %c0_75 = arith.constant 0 : index
    %173 = vector.load %arg7[%c0_74, %c0_75] : memref<32x128xf32, #tpu.memory_space<vmem>>, vector<32x128xf32>
    %cst_76 = arith.constant dense<0.000000e+00> : vector<8x128xf32>
    %174 = tpu.matmul %172, %173, %cst_76 {dimension_numbers = #tpu.dot_dimension_numbers<[1], [0], [0], [1], [0, 0, 1, 1], [], []>} : vector<8x32xf32>, vector<32x128xf32>, vector<8x128xf32> -> vector<8x128xf32>
    %c0_77 = arith.constant 0 : index
    %c0_78 = arith.constant 0 : index
    %175 = vector.load %arg8[%c0_77, %c0_78] : memref<32x128xf32, #tpu.memory_space<vmem>>, vector<32x128xf32>
    %cst_79 = arith.constant dense<0.000000e+00> : vector<8x128xf32>
    %176 = tpu.matmul %147, %175, %cst_79 {dimension_numbers = #tpu.dot_dimension_numbers<[1], [0], [0], [1], [0, 0, 1, 1], [], []>} : vector<8x32xf32>, vector<32x128xf32>, vector<8x128xf32> -> vector<8x128xf32>
    %177 = arith.addf %174, %176 : vector<8x128xf32>
    %c0_80 = arith.constant 0 : index
    %c0_81 = arith.constant 0 : index
    %178 = vector.load %arg9[%c0_80, %c0_81] : memref<1x128xf32, #tpu.memory_space<vmem>>, vector<1x128xf32>
    %179 = vector.broadcast %178 : vector<1x128xf32> to vector<8x128xf32>
    %180 = arith.addf %177, %179 : vector<8x128xf32>
    %181 = arith.negf %180 : vector<8x128xf32>
    %182 = math.exp %181 : vector<8x128xf32>
    %cst_82 = arith.constant 1.000000e+00 : f32
    %183 = vector.broadcast %cst_82 : f32 to vector<8x128xf32>
    %184 = arith.addf %183, %182 : vector<8x128xf32>
    %185 = arith.divf %183, %184 : vector<8x128xf32>
    %186 = math.tanh %180 : vector<8x128xf32>
    %187 = vector.extract_strided_slice %185 {offsets = [0, 0], sizes = [8, 32], strides = [1, 1]} : vector<8x128xf32> to vector<8x32xf32>
    %188 = vector.extract_strided_slice %185 {offsets = [0, 32], sizes = [8, 32], strides = [1, 1]} : vector<8x128xf32> to vector<8x32xf32>
    %189 = vector.extract_strided_slice %186 {offsets = [0, 64], sizes = [8, 32], strides = [1, 1]} : vector<8x128xf32> to vector<8x32xf32>
    %190 = vector.extract_strided_slice %185 {offsets = [0, 96], sizes = [8, 32], strides = [1, 1]} : vector<8x128xf32> to vector<8x32xf32>
    %191 = arith.mulf %188, %145 : vector<8x32xf32>
    %192 = arith.mulf %187, %189 : vector<8x32xf32>
    %193 = arith.addf %191, %192 : vector<8x32xf32>
    %194 = math.tanh %193 : vector<8x32xf32>
    %195 = arith.mulf %190, %194 : vector<8x32xf32>
    %c4 = arith.constant 4 : index
    %c0_83 = arith.constant 0 : index
    %c0_84 = arith.constant 0 : index
    %196 = vector.load %arg2[%c4, %c0_83, %c0_84] : memref<6x8x16xf32, #tpu.memory_space<vmem>>, vector<1x8x16xf32>
    %197 = vector.shape_cast %196 : vector<1x8x16xf32> to vector<8x16xf32>
    %c0_85 = arith.constant 0 : index
    %c0_86 = arith.constant 0 : index
    %198 = vector.load %arg4[%c0_85, %c0_86] : memref<16x128xf32, #tpu.memory_space<vmem>>, vector<16x128xf32>
    %cst_87 = arith.constant dense<0.000000e+00> : vector<8x128xf32>
    %199 = tpu.matmul %197, %198, %cst_87 {dimension_numbers = #tpu.dot_dimension_numbers<[1], [0], [0], [1], [0, 0, 1, 1], [], []>} : vector<8x16xf32>, vector<16x128xf32>, vector<8x128xf32> -> vector<8x128xf32>
    %c0_88 = arith.constant 0 : index
    %c0_89 = arith.constant 0 : index
    %200 = vector.load %arg5[%c0_88, %c0_89] : memref<32x128xf32, #tpu.memory_space<vmem>>, vector<32x128xf32>
    %cst_90 = arith.constant dense<0.000000e+00> : vector<8x128xf32>
    %201 = tpu.matmul %172, %200, %cst_90 {dimension_numbers = #tpu.dot_dimension_numbers<[1], [0], [0], [1], [0, 0, 1, 1], [], []>} : vector<8x32xf32>, vector<32x128xf32>, vector<8x128xf32> -> vector<8x128xf32>
    %202 = arith.addf %199, %201 : vector<8x128xf32>
    %c0_91 = arith.constant 0 : index
    %c0_92 = arith.constant 0 : index
    %203 = vector.load %arg6[%c0_91, %c0_92] : memref<1x128xf32, #tpu.memory_space<vmem>>, vector<1x128xf32>
    %204 = vector.broadcast %203 : vector<1x128xf32> to vector<8x128xf32>
    %205 = arith.addf %202, %204 : vector<8x128xf32>
    %206 = arith.negf %205 : vector<8x128xf32>
    %207 = math.exp %206 : vector<8x128xf32>
    %cst_93 = arith.constant 1.000000e+00 : f32
    %208 = vector.broadcast %cst_93 : f32 to vector<8x128xf32>
    %209 = arith.addf %208, %207 : vector<8x128xf32>
    %210 = arith.divf %208, %209 : vector<8x128xf32>
    %211 = math.tanh %205 : vector<8x128xf32>
    %212 = vector.extract_strided_slice %210 {offsets = [0, 0], sizes = [8, 32], strides = [1, 1]} : vector<8x128xf32> to vector<8x32xf32>
    %213 = vector.extract_strided_slice %210 {offsets = [0, 32], sizes = [8, 32], strides = [1, 1]} : vector<8x128xf32> to vector<8x32xf32>
    %214 = vector.extract_strided_slice %211 {offsets = [0, 64], sizes = [8, 32], strides = [1, 1]} : vector<8x128xf32> to vector<8x32xf32>
    %215 = vector.extract_strided_slice %210 {offsets = [0, 96], sizes = [8, 32], strides = [1, 1]} : vector<8x128xf32> to vector<8x32xf32>
    %216 = arith.mulf %213, %170 : vector<8x32xf32>
    %217 = arith.mulf %212, %214 : vector<8x32xf32>
    %218 = arith.addf %216, %217 : vector<8x32xf32>
    %219 = math.tanh %218 : vector<8x32xf32>
    %220 = arith.mulf %215, %219 : vector<8x32xf32>
    %c0_94 = arith.constant 0 : index
    %c0_95 = arith.constant 0 : index
    %221 = vector.load %arg7[%c0_94, %c0_95] : memref<32x128xf32, #tpu.memory_space<vmem>>, vector<32x128xf32>
    %cst_96 = arith.constant dense<0.000000e+00> : vector<8x128xf32>
    %222 = tpu.matmul %220, %221, %cst_96 {dimension_numbers = #tpu.dot_dimension_numbers<[1], [0], [0], [1], [0, 0, 1, 1], [], []>} : vector<8x32xf32>, vector<32x128xf32>, vector<8x128xf32> -> vector<8x128xf32>
    %c0_97 = arith.constant 0 : index
    %c0_98 = arith.constant 0 : index
    %223 = vector.load %arg8[%c0_97, %c0_98] : memref<32x128xf32, #tpu.memory_space<vmem>>, vector<32x128xf32>
    %cst_99 = arith.constant dense<0.000000e+00> : vector<8x128xf32>
    %224 = tpu.matmul %195, %223, %cst_99 {dimension_numbers = #tpu.dot_dimension_numbers<[1], [0], [0], [1], [0, 0, 1, 1], [], []>} : vector<8x32xf32>, vector<32x128xf32>, vector<8x128xf32> -> vector<8x128xf32>
    %225 = arith.addf %222, %224 : vector<8x128xf32>
    %c0_100 = arith.constant 0 : index
    %c0_101 = arith.constant 0 : index
    %226 = vector.load %arg9[%c0_100, %c0_101] : memref<1x128xf32, #tpu.memory_space<vmem>>, vector<1x128xf32>
    %227 = vector.broadcast %226 : vector<1x128xf32> to vector<8x128xf32>
    %228 = arith.addf %225, %227 : vector<8x128xf32>
    %229 = arith.negf %228 : vector<8x128xf32>
    %230 = math.exp %229 : vector<8x128xf32>
    %cst_102 = arith.constant 1.000000e+00 : f32
    %231 = vector.broadcast %cst_102 : f32 to vector<8x128xf32>
    %232 = arith.addf %231, %230 : vector<8x128xf32>
    %233 = arith.divf %231, %232 : vector<8x128xf32>
    %234 = math.tanh %228 : vector<8x128xf32>
    %235 = vector.extract_strided_slice %233 {offsets = [0, 0], sizes = [8, 32], strides = [1, 1]} : vector<8x128xf32> to vector<8x32xf32>
    %236 = vector.extract_strided_slice %233 {offsets = [0, 32], sizes = [8, 32], strides = [1, 1]} : vector<8x128xf32> to vector<8x32xf32>
    %237 = vector.extract_strided_slice %234 {offsets = [0, 64], sizes = [8, 32], strides = [1, 1]} : vector<8x128xf32> to vector<8x32xf32>
    %238 = vector.extract_strided_slice %233 {offsets = [0, 96], sizes = [8, 32], strides = [1, 1]} : vector<8x128xf32> to vector<8x32xf32>
    %239 = arith.mulf %236, %193 : vector<8x32xf32>
    %240 = arith.mulf %235, %237 : vector<8x32xf32>
    %241 = arith.addf %239, %240 : vector<8x32xf32>
    %242 = math.tanh %241 : vector<8x32xf32>
    %243 = arith.mulf %238, %242 : vector<8x32xf32>
    %c5 = arith.constant 5 : index
    %c0_103 = arith.constant 0 : index
    %c0_104 = arith.constant 0 : index
    %244 = vector.load %arg2[%c5, %c0_103, %c0_104] : memref<6x8x16xf32, #tpu.memory_space<vmem>>, vector<1x8x16xf32>
    %245 = vector.shape_cast %244 : vector<1x8x16xf32> to vector<8x16xf32>
    %c0_105 = arith.constant 0 : index
    %c0_106 = arith.constant 0 : index
    %246 = vector.load %arg4[%c0_105, %c0_106] : memref<16x128xf32, #tpu.memory_space<vmem>>, vector<16x128xf32>
    %cst_107 = arith.constant dense<0.000000e+00> : vector<8x128xf32>
    %247 = tpu.matmul %245, %246, %cst_107 {dimension_numbers = #tpu.dot_dimension_numbers<[1], [0], [0], [1], [0, 0, 1, 1], [], []>} : vector<8x16xf32>, vector<16x128xf32>, vector<8x128xf32> -> vector<8x128xf32>
    %c0_108 = arith.constant 0 : index
    %c0_109 = arith.constant 0 : index
    %248 = vector.load %arg5[%c0_108, %c0_109] : memref<32x128xf32, #tpu.memory_space<vmem>>, vector<32x128xf32>
    %cst_110 = arith.constant dense<0.000000e+00> : vector<8x128xf32>
    %249 = tpu.matmul %220, %248, %cst_110 {dimension_numbers = #tpu.dot_dimension_numbers<[1], [0], [0], [1], [0, 0, 1, 1], [], []>} : vector<8x32xf32>, vector<32x128xf32>, vector<8x128xf32> -> vector<8x128xf32>
    %250 = arith.addf %247, %249 : vector<8x128xf32>
    %c0_111 = arith.constant 0 : index
    %c0_112 = arith.constant 0 : index
    %251 = vector.load %arg6[%c0_111, %c0_112] : memref<1x128xf32, #tpu.memory_space<vmem>>, vector<1x128xf32>
    %252 = vector.broadcast %251 : vector<1x128xf32> to vector<8x128xf32>
    %253 = arith.addf %250, %252 : vector<8x128xf32>
    %254 = arith.negf %253 : vector<8x128xf32>
    %255 = math.exp %254 : vector<8x128xf32>
    %cst_113 = arith.constant 1.000000e+00 : f32
    %256 = vector.broadcast %cst_113 : f32 to vector<8x128xf32>
    %257 = arith.addf %256, %255 : vector<8x128xf32>
    %258 = arith.divf %256, %257 : vector<8x128xf32>
    %259 = math.tanh %253 : vector<8x128xf32>
    %260 = vector.extract_strided_slice %258 {offsets = [0, 0], sizes = [8, 32], strides = [1, 1]} : vector<8x128xf32> to vector<8x32xf32>
    %261 = vector.extract_strided_slice %258 {offsets = [0, 32], sizes = [8, 32], strides = [1, 1]} : vector<8x128xf32> to vector<8x32xf32>
    %262 = vector.extract_strided_slice %259 {offsets = [0, 64], sizes = [8, 32], strides = [1, 1]} : vector<8x128xf32> to vector<8x32xf32>
    %263 = vector.extract_strided_slice %258 {offsets = [0, 96], sizes = [8, 32], strides = [1, 1]} : vector<8x128xf32> to vector<8x32xf32>
    %264 = arith.mulf %261, %218 : vector<8x32xf32>
    %265 = arith.mulf %260, %262 : vector<8x32xf32>
    %266 = arith.addf %264, %265 : vector<8x32xf32>
    %267 = math.tanh %266 : vector<8x32xf32>
    %268 = arith.mulf %263, %267 : vector<8x32xf32>
    %c0_114 = arith.constant 0 : index
    %c0_115 = arith.constant 0 : index
    %269 = vector.load %arg7[%c0_114, %c0_115] : memref<32x128xf32, #tpu.memory_space<vmem>>, vector<32x128xf32>
    %cst_116 = arith.constant dense<0.000000e+00> : vector<8x128xf32>
    %270 = tpu.matmul %268, %269, %cst_116 {dimension_numbers = #tpu.dot_dimension_numbers<[1], [0], [0], [1], [0, 0, 1, 1], [], []>} : vector<8x32xf32>, vector<32x128xf32>, vector<8x128xf32> -> vector<8x128xf32>
    %c0_117 = arith.constant 0 : index
    %c0_118 = arith.constant 0 : index
    %271 = vector.load %arg8[%c0_117, %c0_118] : memref<32x128xf32, #tpu.memory_space<vmem>>, vector<32x128xf32>
    %cst_119 = arith.constant dense<0.000000e+00> : vector<8x128xf32>
    %272 = tpu.matmul %243, %271, %cst_119 {dimension_numbers = #tpu.dot_dimension_numbers<[1], [0], [0], [1], [0, 0, 1, 1], [], []>} : vector<8x32xf32>, vector<32x128xf32>, vector<8x128xf32> -> vector<8x128xf32>
    %273 = arith.addf %270, %272 : vector<8x128xf32>
    %c0_120 = arith.constant 0 : index
    %c0_121 = arith.constant 0 : index
    %274 = vector.load %arg9[%c0_120, %c0_121] : memref<1x128xf32, #tpu.memory_space<vmem>>, vector<1x128xf32>
    %275 = vector.broadcast %274 : vector<1x128xf32> to vector<8x128xf32>
    %276 = arith.addf %273, %275 : vector<8x128xf32>
    %277 = arith.negf %276 : vector<8x128xf32>
    %278 = math.exp %277 : vector<8x128xf32>
    %cst_122 = arith.constant 1.000000e+00 : f32
    %279 = vector.broadcast %cst_122 : f32 to vector<8x128xf32>
    %280 = arith.addf %279, %278 : vector<8x128xf32>
    %281 = arith.divf %279, %280 : vector<8x128xf32>
    %282 = math.tanh %276 : vector<8x128xf32>
    %283 = vector.extract_strided_slice %281 {offsets = [0, 0], sizes = [8, 32], strides = [1, 1]} : vector<8x128xf32> to vector<8x32xf32>
    %284 = vector.extract_strided_slice %281 {offsets = [0, 32], sizes = [8, 32], strides = [1, 1]} : vector<8x128xf32> to vector<8x32xf32>
    %285 = vector.extract_strided_slice %282 {offsets = [0, 64], sizes = [8, 32], strides = [1, 1]} : vector<8x128xf32> to vector<8x32xf32>
    %286 = vector.extract_strided_slice %281 {offsets = [0, 96], sizes = [8, 32], strides = [1, 1]} : vector<8x128xf32> to vector<8x32xf32>
    %287 = arith.mulf %284, %241 : vector<8x32xf32>
    %288 = arith.mulf %283, %285 : vector<8x32xf32>
    %289 = arith.addf %287, %288 : vector<8x32xf32>
    %290 = math.tanh %289 : vector<8x32xf32>
    %291 = arith.mulf %286, %290 : vector<8x32xf32>
    %292 = tpu.iota {dimensions = array<i32: 1>} : vector<8x10xi32>
    %c0_i32 = arith.constant 0 : i32
    %293 = vector.broadcast %c0_i32 : i32 to vector<8x10xi32>
    %294 = arith.cmpi eq, %292, %293 : vector<8x10xi32>
    %295 = arith.extui %294 : vector<8x10xi1> to vector<8x10xi32>
    %296 = arith.sitofp %295 : vector<8x10xi32> to vector<8x10xf32>
    %c0_123 = arith.constant 0 : index
    %c0_124 = arith.constant 0 : index
    %297 = vector.load %arg10[%c0_123, %c0_124] : memref<10x16xf32, #tpu.memory_space<vmem>>, vector<10x16xf32>
    %cst_125 = arith.constant dense<0.000000e+00> : vector<8x16xf32>
    %298 = tpu.matmul %296, %297, %cst_125 {dimension_numbers = #tpu.dot_dimension_numbers<[1], [0], [0], [1], [0, 0, 1, 1], [], []>} : vector<8x10xf32>, vector<10x16xf32>, vector<8x16xf32> -> vector<8x16xf32>
    %c0_126 = arith.constant 0 : index
    %c0_127 = arith.constant 0 : index
    %299 = vector.load %arg11[%c0_126, %c0_127] : memref<16x128xf32, #tpu.memory_space<vmem>>, vector<16x128xf32>
    %cst_128 = arith.constant dense<0.000000e+00> : vector<8x128xf32>
    %300 = tpu.matmul %298, %299, %cst_128 {dimension_numbers = #tpu.dot_dimension_numbers<[1], [0], [0], [1], [0, 0, 1, 1], [], []>} : vector<8x16xf32>, vector<16x128xf32>, vector<8x128xf32> -> vector<8x128xf32>
    %c0_129 = arith.constant 0 : index
    %c0_130 = arith.constant 0 : index
    %301 = vector.load %arg12[%c0_129, %c0_130] : memref<32x128xf32, #tpu.memory_space<vmem>>, vector<32x128xf32>
    %cst_131 = arith.constant dense<0.000000e+00> : vector<8x128xf32>
    %302 = tpu.matmul %268, %301, %cst_131 {dimension_numbers = #tpu.dot_dimension_numbers<[1], [0], [0], [1], [0, 0, 1, 1], [], []>} : vector<8x32xf32>, vector<32x128xf32>, vector<8x128xf32> -> vector<8x128xf32>
    %303 = arith.addf %300, %302 : vector<8x128xf32>
    %c0_132 = arith.constant 0 : index
    %c0_133 = arith.constant 0 : index
    %304 = vector.load %arg13[%c0_132, %c0_133] : memref<1x128xf32, #tpu.memory_space<vmem>>, vector<1x128xf32>
    %305 = vector.broadcast %304 : vector<1x128xf32> to vector<8x128xf32>
    %306 = arith.addf %303, %305 : vector<8x128xf32>
    %307 = arith.negf %306 : vector<8x128xf32>
    %308 = math.exp %307 : vector<8x128xf32>
    %cst_134 = arith.constant 1.000000e+00 : f32
    %309 = vector.broadcast %cst_134 : f32 to vector<8x128xf32>
    %310 = arith.addf %309, %308 : vector<8x128xf32>
    %311 = arith.divf %309, %310 : vector<8x128xf32>
    %312 = math.tanh %306 : vector<8x128xf32>
    %313 = vector.extract_strided_slice %311 {offsets = [0, 0], sizes = [8, 32], strides = [1, 1]} : vector<8x128xf32> to vector<8x32xf32>
    %314 = vector.extract_strided_slice %311 {offsets = [0, 32], sizes = [8, 32], strides = [1, 1]} : vector<8x128xf32> to vector<8x32xf32>
    %315 = vector.extract_strided_slice %312 {offsets = [0, 64], sizes = [8, 32], strides = [1, 1]} : vector<8x128xf32> to vector<8x32xf32>
    %316 = vector.extract_strided_slice %311 {offsets = [0, 96], sizes = [8, 32], strides = [1, 1]} : vector<8x128xf32> to vector<8x32xf32>
    %317 = arith.mulf %314, %266 : vector<8x32xf32>
    %318 = arith.mulf %313, %315 : vector<8x32xf32>
    %319 = arith.addf %317, %318 : vector<8x32xf32>
    %320 = math.tanh %319 : vector<8x32xf32>
    %321 = arith.mulf %316, %320 : vector<8x32xf32>
    %c0_135 = arith.constant 0 : index
    %c0_136 = arith.constant 0 : index
    %322 = vector.load %arg14[%c0_135, %c0_136] : memref<32x128xf32, #tpu.memory_space<vmem>>, vector<32x128xf32>
    %cst_137 = arith.constant dense<0.000000e+00> : vector<8x128xf32>
    %323 = tpu.matmul %321, %322, %cst_137 {dimension_numbers = #tpu.dot_dimension_numbers<[1], [0], [0], [1], [0, 0, 1, 1], [], []>} : vector<8x32xf32>, vector<32x128xf32>, vector<8x128xf32> -> vector<8x128xf32>
    %c0_138 = arith.constant 0 : index
    %c0_139 = arith.constant 0 : index
    %324 = vector.load %arg15[%c0_138, %c0_139] : memref<32x128xf32, #tpu.memory_space<vmem>>, vector<32x128xf32>
    %cst_140 = arith.constant dense<0.000000e+00> : vector<8x128xf32>
    %325 = tpu.matmul %291, %324, %cst_140 {dimension_numbers = #tpu.dot_dimension_numbers<[1], [0], [0], [1], [0, 0, 1, 1], [], []>} : vector<8x32xf32>, vector<32x128xf32>, vector<8x128xf32> -> vector<8x128xf32>
    %326 = arith.addf %323, %325 : vector<8x128xf32>
    %c0_141 = arith.constant 0 : index
    %c0_142 = arith.constant 0 : index
    %327 = vector.load %arg16[%c0_141, %c0_142] : memref<1x128xf32, #tpu.memory_space<vmem>>, vector<1x128xf32>
    %328 = vector.broadcast %327 : vector<1x128xf32> to vector<8x128xf32>
    %329 = arith.addf %326, %328 : vector<8x128xf32>
    %330 = arith.negf %329 : vector<8x128xf32>
    %331 = math.exp %330 : vector<8x128xf32>
    %cst_143 = arith.constant 1.000000e+00 : f32
    %332 = vector.broadcast %cst_143 : f32 to vector<8x128xf32>
    %333 = arith.addf %332, %331 : vector<8x128xf32>
    %334 = arith.divf %332, %333 : vector<8x128xf32>
    %335 = math.tanh %329 : vector<8x128xf32>
    %336 = vector.extract_strided_slice %334 {offsets = [0, 0], sizes = [8, 32], strides = [1, 1]} : vector<8x128xf32> to vector<8x32xf32>
    %337 = vector.extract_strided_slice %334 {offsets = [0, 32], sizes = [8, 32], strides = [1, 1]} : vector<8x128xf32> to vector<8x32xf32>
    %338 = vector.extract_strided_slice %335 {offsets = [0, 64], sizes = [8, 32], strides = [1, 1]} : vector<8x128xf32> to vector<8x32xf32>
    %339 = vector.extract_strided_slice %334 {offsets = [0, 96], sizes = [8, 32], strides = [1, 1]} : vector<8x128xf32> to vector<8x32xf32>
    %340 = arith.mulf %337, %289 : vector<8x32xf32>
    %341 = arith.mulf %336, %338 : vector<8x32xf32>
    %342 = arith.addf %340, %341 : vector<8x32xf32>
    %343 = math.tanh %342 : vector<8x32xf32>
    %344 = arith.mulf %339, %343 : vector<8x32xf32>
    %c0_144 = arith.constant 0 : index
    %c0_145 = arith.constant 0 : index
    %345 = vector.load %arg17[%c0_144, %c0_145] : memref<32x10xf32, #tpu.memory_space<vmem>>, vector<32x10xf32>
    %cst_146 = arith.constant dense<0.000000e+00> : vector<8x10xf32>
    %346 = tpu.matmul %344, %345, %cst_146 {dimension_numbers = #tpu.dot_dimension_numbers<[1], [0], [0], [1], [0, 0, 1, 1], [], []>} : vector<8x32xf32>, vector<32x10xf32>, vector<8x10xf32> -> vector<8x10xf32>
    %c0_147 = arith.constant 0 : index
    %c0_148 = arith.constant 0 : index
    %347 = vector.load %arg18[%c0_147, %c0_148] : memref<1x10xf32, #tpu.memory_space<vmem>>, vector<1x10xf32>
    %348 = vector.broadcast %347 : vector<1x10xf32> to vector<8x10xf32>
    %349 = arith.addf %346, %348 : vector<8x10xf32>
    %c0_149 = arith.constant 0 : index
    %c0_150 = arith.constant 0 : index
    %c0_151 = arith.constant 0 : index
    %350 = vector.load %arg19[%c0_149, %c0_150, %c0_151] : memref<8x8x10xf32, #tpu.memory_space<vmem>>, vector<1x8x10xf32>
    %351 = vector.shape_cast %350 : vector<1x8x10xf32> to vector<8x10xf32>
    %352 = vector.shape_cast %349 : vector<8x10xf32> to vector<1x8x10xf32>
    tpu.vector_store %arg19[%c0_149, %c0_150, %c0_151], %352 {strides = array<i32>} : memref<8x8x10xf32, #tpu.memory_space<vmem>>, vector<1x8x10xf32>,
    %cst_152 = arith.constant dense<0xFF800000> : vector<8xf32>
    %353 = vector.multi_reduction <maximumf>, %349, %cst_152 [1] : vector<8x10xf32> to vector<8xf32>
    %354 = vector.shape_cast %353 : vector<8xf32> to vector<8x1xf32>
    %355 = vector.broadcast %354 : vector<8x1xf32> to vector<8x10xf32>
    %356 = arith.cmpf oeq, %349, %355 : vector<8x10xf32>
    %c10_i32 = arith.constant 10 : i32
    %357 = vector.broadcast %c10_i32 : i32 to vector<8x10xi32>
    %358 = arith.select %356, %292, %357 : vector<8x10xi1>, vector<8x10xi32>
    %cst_153 = arith.constant dense<2147483647> : vector<8xi32>
    %359 = vector.multi_reduction <minsi>, %358, %cst_153 [1] : vector<8x10xi32> to vector<8xi32>
    %360 = vector.shape_cast %359 : vector<8xi32> to vector<8x1xi32>
    %361 = vector.broadcast %360 : vector<8x1xi32> to vector<8x10xi32>
    %362 = arith.cmpi eq, %292, %361 : vector<8x10xi32>
    %363 = arith.extui %362 : vector<8x10xi1> to vector<8x10xi32>
    %364 = arith.sitofp %363 : vector<8x10xi32> to vector<8x10xf32>
    %c0_154 = arith.constant 0 : index
    %365 = memref.load %arg1[%c0_154] : memref<8xi32, #tpu.memory_space<smem>>
    %366 = arith.sitofp %365 : i32 to f32
    %c0_155 = arith.constant 0 : index
    %c0_156 = arith.constant 0 : index
    %c0_157 = arith.constant 0 : index
    %367 = vector.load %arg3[%c0_155, %c0_156, %c0_157] : memref<8x8x10xf32, #tpu.memory_space<vmem>>, vector<1x8x10xf32>
    %368 = vector.shape_cast %367 : vector<1x8x10xf32> to vector<8x10xf32>
    %369 = vector.broadcast %366 : f32 to vector<8x10xf32>
    %370 = arith.mulf %369, %368 : vector<8x10xf32>
    %cst_158 = arith.constant 1.000000e+00 : f32
    %371 = arith.subf %cst_158, %366 : f32
    %372 = vector.broadcast %371 : f32 to vector<8x10xf32>
    %373 = arith.mulf %372, %364 : vector<8x10xf32>
    %374 = arith.addf %370, %373 : vector<8x10xf32>
    %c0_159 = arith.constant 0 : index
    %c0_160 = arith.constant 0 : index
    %375 = vector.load %arg10[%c0_159, %c0_160] : memref<10x16xf32, #tpu.memory_space<vmem>>, vector<10x16xf32>
    %cst_161 = arith.constant dense<0.000000e+00> : vector<8x16xf32>
    %376 = tpu.matmul %374, %375, %cst_161 {dimension_numbers = #tpu.dot_dimension_numbers<[1], [0], [0], [1], [0, 0, 1, 1], [], []>} : vector<8x10xf32>, vector<10x16xf32>, vector<8x16xf32> -> vector<8x16xf32>
    %c0_162 = arith.constant 0 : index
    %c0_163 = arith.constant 0 : index
    %377 = vector.load %arg11[%c0_162, %c0_163] : memref<16x128xf32, #tpu.memory_space<vmem>>, vector<16x128xf32>
    %cst_164 = arith.constant dense<0.000000e+00> : vector<8x128xf32>
    %378 = tpu.matmul %376, %377, %cst_164 {dimension_numbers = #tpu.dot_dimension_numbers<[1], [0], [0], [1], [0, 0, 1, 1], [], []>} : vector<8x16xf32>, vector<16x128xf32>, vector<8x128xf32> -> vector<8x128xf32>
    %c0_165 = arith.constant 0 : index
    %c0_166 = arith.constant 0 : index
    %379 = vector.load %arg12[%c0_165, %c0_166] : memref<32x128xf32, #tpu.memory_space<vmem>>, vector<32x128xf32>
    %cst_167 = arith.constant dense<0.000000e+00> : vector<8x128xf32>
    %380 = tpu.matmul %321, %379, %cst_167 {dimension_numbers = #tpu.dot_dimension_numbers<[1], [0], [0], [1], [0, 0, 1, 1], [], []>} : vector<8x32xf32>, vector<32x128xf32>, vector<8x128xf32> -> vector<8x128xf32>
    %381 = arith.addf %378, %380 : vector<8x128xf32>
    %c0_168 = arith.constant 0 : index
    %c0_169 = arith.constant 0 : index
    %382 = vector.load %arg13[%c0_168, %c0_169] : memref<1x128xf32, #tpu.memory_space<vmem>>, vector<1x128xf32>
    %383 = vector.broadcast %382 : vector<1x128xf32> to vector<8x128xf32>
    %384 = arith.addf %381, %383 : vector<8x128xf32>
    %385 = arith.negf %384 : vector<8x128xf32>
    %386 = math.exp %385 : vector<8x128xf32>
    %cst_170 = arith.constant 1.000000e+00 : f32
    %387 = vector.broadcast %cst_170 : f32 to vector<8x128xf32>
    %388 = arith.addf %387, %386 : vector<8x128xf32>
    %389 = arith.divf %387, %388 : vector<8x128xf32>
    %390 = math.tanh %384 : vector<8x128xf32>
    %391 = vector.extract_strided_slice %389 {offsets = [0, 0], sizes = [8, 32], strides = [1, 1]} : vector<8x128xf32> to vector<8x32xf32>
    %392 = vector.extract_strided_slice %389 {offsets = [0, 32], sizes = [8, 32], strides = [1, 1]} : vector<8x128xf32> to vector<8x32xf32>
    %393 = vector.extract_strided_slice %390 {offsets = [0, 64], sizes = [8, 32], strides = [1, 1]} : vector<8x128xf32> to vector<8x32xf32>
    %394 = vector.extract_strided_slice %389 {offsets = [0, 96], sizes = [8, 32], strides = [1, 1]} : vector<8x128xf32> to vector<8x32xf32>
    %395 = arith.mulf %392, %319 : vector<8x32xf32>
    %396 = arith.mulf %391, %393 : vector<8x32xf32>
    %397 = arith.addf %395, %396 : vector<8x32xf32>
    %398 = math.tanh %397 : vector<8x32xf32>
    %399 = arith.mulf %394, %398 : vector<8x32xf32>
    %c0_171 = arith.constant 0 : index
    %c0_172 = arith.constant 0 : index
    %400 = vector.load %arg14[%c0_171, %c0_172] : memref<32x128xf32, #tpu.memory_space<vmem>>, vector<32x128xf32>
    %cst_173 = arith.constant dense<0.000000e+00> : vector<8x128xf32>
    %401 = tpu.matmul %399, %400, %cst_173 {dimension_numbers = #tpu.dot_dimension_numbers<[1], [0], [0], [1], [0, 0, 1, 1], [], []>} : vector<8x32xf32>, vector<32x128xf32>, vector<8x128xf32> -> vector<8x128xf32>
    %c0_174 = arith.constant 0 : index
    %c0_175 = arith.constant 0 : index
    %402 = vector.load %arg15[%c0_174, %c0_175] : memref<32x128xf32, #tpu.memory_space<vmem>>, vector<32x128xf32>
    %cst_176 = arith.constant dense<0.000000e+00> : vector<8x128xf32>
    %403 = tpu.matmul %344, %402, %cst_176 {dimension_numbers = #tpu.dot_dimension_numbers<[1], [0], [0], [1], [0, 0, 1, 1], [], []>} : vector<8x32xf32>, vector<32x128xf32>, vector<8x128xf32> -> vector<8x128xf32>
    %404 = arith.addf %401, %403 : vector<8x128xf32>
    %c0_177 = arith.constant 0 : index
    %c0_178 = arith.constant 0 : index
    %405 = vector.load %arg16[%c0_177, %c0_178] : memref<1x128xf32, #tpu.memory_space<vmem>>, vector<1x128xf32>
    %406 = vector.broadcast %405 : vector<1x128xf32> to vector<8x128xf32>
    %407 = arith.addf %404, %406 : vector<8x128xf32>
    %408 = arith.negf %407 : vector<8x128xf32>
    %409 = math.exp %408 : vector<8x128xf32>
    %cst_179 = arith.constant 1.000000e+00 : f32
    %410 = vector.broadcast %cst_179 : f32 to vector<8x128xf32>
    %411 = arith.addf %410, %409 : vector<8x128xf32>
    %412 = arith.divf %410, %411 : vector<8x128xf32>
    %413 = math.tanh %407 : vector<8x128xf32>
    %414 = vector.extract_strided_slice %412 {offsets = [0, 0], sizes = [8, 32], strides = [1, 1]} : vector<8x128xf32> to vector<8x32xf32>
    %415 = vector.extract_strided_slice %412 {offsets = [0, 32], sizes = [8, 32], strides = [1, 1]} : vector<8x128xf32> to vector<8x32xf32>
    %416 = vector.extract_strided_slice %413 {offsets = [0, 64], sizes = [8, 32], strides = [1, 1]} : vector<8x128xf32> to vector<8x32xf32>
    %417 = vector.extract_strided_slice %412 {offsets = [0, 96], sizes = [8, 32], strides = [1, 1]} : vector<8x128xf32> to vector<8x32xf32>
    %418 = arith.mulf %415, %342 : vector<8x32xf32>
    %419 = arith.mulf %414, %416 : vector<8x32xf32>
    %420 = arith.addf %418, %419 : vector<8x32xf32>
    %421 = math.tanh %420 : vector<8x32xf32>
    %422 = arith.mulf %417, %421 : vector<8x32xf32>
    %c0_180 = arith.constant 0 : index
    %c0_181 = arith.constant 0 : index
    %423 = vector.load %arg17[%c0_180, %c0_181] : memref<32x10xf32, #tpu.memory_space<vmem>>, vector<32x10xf32>
    %cst_182 = arith.constant dense<0.000000e+00> : vector<8x10xf32>
    %424 = tpu.matmul %422, %423, %cst_182 {dimension_numbers = #tpu.dot_dimension_numbers<[1], [0], [0], [1], [0, 0, 1, 1], [], []>} : vector<8x32xf32>, vector<32x10xf32>, vector<8x10xf32> -> vector<8x10xf32>
    %c0_183 = arith.constant 0 : index
    %c0_184 = arith.constant 0 : index
    %425 = vector.load %arg18[%c0_183, %c0_184] : memref<1x10xf32, #tpu.memory_space<vmem>>, vector<1x10xf32>
    %426 = vector.broadcast %425 : vector<1x10xf32> to vector<8x10xf32>
    %427 = arith.addf %424, %426 : vector<8x10xf32>
    %c1_185 = arith.constant 1 : index
    %c0_186 = arith.constant 0 : index
    %c0_187 = arith.constant 0 : index
    %428 = vector.load %arg19[%c1_185, %c0_186, %c0_187] : memref<8x8x10xf32, #tpu.memory_space<vmem>>, vector<1x8x10xf32>
    %429 = vector.shape_cast %428 : vector<1x8x10xf32> to vector<8x10xf32>
    %430 = vector.shape_cast %427 : vector<8x10xf32> to vector<1x8x10xf32>
    tpu.vector_store %arg19[%c1_185, %c0_186, %c0_187], %430 {strides = array<i32>} : memref<8x8x10xf32, #tpu.memory_space<vmem>>, vector<1x8x10xf32>,
    %cst_188 = arith.constant dense<0xFF800000> : vector<8xf32>
    %431 = vector.multi_reduction <maximumf>, %427, %cst_188 [1] : vector<8x10xf32> to vector<8xf32>
    %432 = vector.shape_cast %431 : vector<8xf32> to vector<8x1xf32>
    %433 = vector.broadcast %432 : vector<8x1xf32> to vector<8x10xf32>
    %434 = arith.cmpf oeq, %427, %433 : vector<8x10xf32>
    %c10_i32_189 = arith.constant 10 : i32
    %435 = vector.broadcast %c10_i32_189 : i32 to vector<8x10xi32>
    %436 = arith.select %434, %292, %435 : vector<8x10xi1>, vector<8x10xi32>
    %cst_190 = arith.constant dense<2147483647> : vector<8xi32>
    %437 = vector.multi_reduction <minsi>, %436, %cst_190 [1] : vector<8x10xi32> to vector<8xi32>
    %438 = vector.shape_cast %437 : vector<8xi32> to vector<8x1xi32>
    %439 = vector.broadcast %438 : vector<8x1xi32> to vector<8x10xi32>
    %440 = arith.cmpi eq, %292, %439 : vector<8x10xi32>
    %441 = arith.extui %440 : vector<8x10xi1> to vector<8x10xi32>
    %442 = arith.sitofp %441 : vector<8x10xi32> to vector<8x10xf32>
    %c1_191 = arith.constant 1 : index
    %443 = memref.load %arg1[%c1_191] : memref<8xi32, #tpu.memory_space<smem>>
    %444 = arith.sitofp %443 : i32 to f32
    %c1_192 = arith.constant 1 : index
    %c0_193 = arith.constant 0 : index
    %c0_194 = arith.constant 0 : index
    %445 = vector.load %arg3[%c1_192, %c0_193, %c0_194] : memref<8x8x10xf32, #tpu.memory_space<vmem>>, vector<1x8x10xf32>
    %446 = vector.shape_cast %445 : vector<1x8x10xf32> to vector<8x10xf32>
    %447 = vector.broadcast %444 : f32 to vector<8x10xf32>
    %448 = arith.mulf %447, %446 : vector<8x10xf32>
    %cst_195 = arith.constant 1.000000e+00 : f32
    %449 = arith.subf %cst_195, %444 : f32
    %450 = vector.broadcast %449 : f32 to vector<8x10xf32>
    %451 = arith.mulf %450, %442 : vector<8x10xf32>
    %452 = arith.addf %448, %451 : vector<8x10xf32>
    %c0_196 = arith.constant 0 : index
    %c0_197 = arith.constant 0 : index
    %453 = vector.load %arg10[%c0_196, %c0_197] : memref<10x16xf32, #tpu.memory_space<vmem>>, vector<10x16xf32>
    %cst_198 = arith.constant dense<0.000000e+00> : vector<8x16xf32>
    %454 = tpu.matmul %452, %453, %cst_198 {dimension_numbers = #tpu.dot_dimension_numbers<[1], [0], [0], [1], [0, 0, 1, 1], [], []>} : vector<8x10xf32>, vector<10x16xf32>, vector<8x16xf32> -> vector<8x16xf32>
    %c0_199 = arith.constant 0 : index
    %c0_200 = arith.constant 0 : index
    %455 = vector.load %arg11[%c0_199, %c0_200] : memref<16x128xf32, #tpu.memory_space<vmem>>, vector<16x128xf32>
    %cst_201 = arith.constant dense<0.000000e+00> : vector<8x128xf32>
    %456 = tpu.matmul %454, %455, %cst_201 {dimension_numbers = #tpu.dot_dimension_numbers<[1], [0], [0], [1], [0, 0, 1, 1], [], []>} : vector<8x16xf32>, vector<16x128xf32>, vector<8x128xf32> -> vector<8x128xf32>
    %c0_202 = arith.constant 0 : index
    %c0_203 = arith.constant 0 : index
    %457 = vector.load %arg12[%c0_202, %c0_203] : memref<32x128xf32, #tpu.memory_space<vmem>>, vector<32x128xf32>
    %cst_204 = arith.constant dense<0.000000e+00> : vector<8x128xf32>
    %458 = tpu.matmul %399, %457, %cst_204 {dimension_numbers = #tpu.dot_dimension_numbers<[1], [0], [0], [1], [0, 0, 1, 1], [], []>} : vector<8x32xf32>, vector<32x128xf32>, vector<8x128xf32> -> vector<8x128xf32>
    %459 = arith.addf %456, %458 : vector<8x128xf32>
    %c0_205 = arith.constant 0 : index
    %c0_206 = arith.constant 0 : index
    %460 = vector.load %arg13[%c0_205, %c0_206] : memref<1x128xf32, #tpu.memory_space<vmem>>, vector<1x128xf32>
    %461 = vector.broadcast %460 : vector<1x128xf32> to vector<8x128xf32>
    %462 = arith.addf %459, %461 : vector<8x128xf32>
    %463 = arith.negf %462 : vector<8x128xf32>
    %464 = math.exp %463 : vector<8x128xf32>
    %cst_207 = arith.constant 1.000000e+00 : f32
    %465 = vector.broadcast %cst_207 : f32 to vector<8x128xf32>
    %466 = arith.addf %465, %464 : vector<8x128xf32>
    %467 = arith.divf %465, %466 : vector<8x128xf32>
    %468 = math.tanh %462 : vector<8x128xf32>
    %469 = vector.extract_strided_slice %467 {offsets = [0, 0], sizes = [8, 32], strides = [1, 1]} : vector<8x128xf32> to vector<8x32xf32>
    %470 = vector.extract_strided_slice %467 {offsets = [0, 32], sizes = [8, 32], strides = [1, 1]} : vector<8x128xf32> to vector<8x32xf32>
    %471 = vector.extract_strided_slice %468 {offsets = [0, 64], sizes = [8, 32], strides = [1, 1]} : vector<8x128xf32> to vector<8x32xf32>
    %472 = vector.extract_strided_slice %467 {offsets = [0, 96], sizes = [8, 32], strides = [1, 1]} : vector<8x128xf32> to vector<8x32xf32>
    %473 = arith.mulf %470, %397 : vector<8x32xf32>
    %474 = arith.mulf %469, %471 : vector<8x32xf32>
    %475 = arith.addf %473, %474 : vector<8x32xf32>
    %476 = math.tanh %475 : vector<8x32xf32>
    %477 = arith.mulf %472, %476 : vector<8x32xf32>
    %c0_208 = arith.constant 0 : index
    %c0_209 = arith.constant 0 : index
    %478 = vector.load %arg14[%c0_208, %c0_209] : memref<32x128xf32, #tpu.memory_space<vmem>>, vector<32x128xf32>
    %cst_210 = arith.constant dense<0.000000e+00> : vector<8x128xf32>
    %479 = tpu.matmul %477, %478, %cst_210 {dimension_numbers = #tpu.dot_dimension_numbers<[1], [0], [0], [1], [0, 0, 1, 1], [], []>} : vector<8x32xf32>, vector<32x128xf32>, vector<8x128xf32> -> vector<8x128xf32>
    %c0_211 = arith.constant 0 : index
    %c0_212 = arith.constant 0 : index
    %480 = vector.load %arg15[%c0_211, %c0_212] : memref<32x128xf32, #tpu.memory_space<vmem>>, vector<32x128xf32>
    %cst_213 = arith.constant dense<0.000000e+00> : vector<8x128xf32>
    %481 = tpu.matmul %422, %480, %cst_213 {dimension_numbers = #tpu.dot_dimension_numbers<[1], [0], [0], [1], [0, 0, 1, 1], [], []>} : vector<8x32xf32>, vector<32x128xf32>, vector<8x128xf32> -> vector<8x128xf32>
    %482 = arith.addf %479, %481 : vector<8x128xf32>
    %c0_214 = arith.constant 0 : index
    %c0_215 = arith.constant 0 : index
    %483 = vector.load %arg16[%c0_214, %c0_215] : memref<1x128xf32, #tpu.memory_space<vmem>>, vector<1x128xf32>
    %484 = vector.broadcast %483 : vector<1x128xf32> to vector<8x128xf32>
    %485 = arith.addf %482, %484 : vector<8x128xf32>
    %486 = arith.negf %485 : vector<8x128xf32>
    %487 = math.exp %486 : vector<8x128xf32>
    %cst_216 = arith.constant 1.000000e+00 : f32
    %488 = vector.broadcast %cst_216 : f32 to vector<8x128xf32>
    %489 = arith.addf %488, %487 : vector<8x128xf32>
    %490 = arith.divf %488, %489 : vector<8x128xf32>
    %491 = math.tanh %485 : vector<8x128xf32>
    %492 = vector.extract_strided_slice %490 {offsets = [0, 0], sizes = [8, 32], strides = [1, 1]} : vector<8x128xf32> to vector<8x32xf32>
    %493 = vector.extract_strided_slice %490 {offsets = [0, 32], sizes = [8, 32], strides = [1, 1]} : vector<8x128xf32> to vector<8x32xf32>
    %494 = vector.extract_strided_slice %491 {offsets = [0, 64], sizes = [8, 32], strides = [1, 1]} : vector<8x128xf32> to vector<8x32xf32>
    %495 = vector.extract_strided_slice %490 {offsets = [0, 96], sizes = [8, 32], strides = [1, 1]} : vector<8x128xf32> to vector<8x32xf32>
    %496 = arith.mulf %493, %420 : vector<8x32xf32>
    %497 = arith.mulf %492, %494 : vector<8x32xf32>
    %498 = arith.addf %496, %497 : vector<8x32xf32>
    %499 = math.tanh %498 : vector<8x32xf32>
    %500 = arith.mulf %495, %499 : vector<8x32xf32>
    %c0_217 = arith.constant 0 : index
    %c0_218 = arith.constant 0 : index
    %501 = vector.load %arg17[%c0_217, %c0_218] : memref<32x10xf32, #tpu.memory_space<vmem>>, vector<32x10xf32>
    %cst_219 = arith.constant dense<0.000000e+00> : vector<8x10xf32>
    %502 = tpu.matmul %500, %501, %cst_219 {dimension_numbers = #tpu.dot_dimension_numbers<[1], [0], [0], [1], [0, 0, 1, 1], [], []>} : vector<8x32xf32>, vector<32x10xf32>, vector<8x10xf32> -> vector<8x10xf32>
    %c0_220 = arith.constant 0 : index
    %c0_221 = arith.constant 0 : index
    %503 = vector.load %arg18[%c0_220, %c0_221] : memref<1x10xf32, #tpu.memory_space<vmem>>, vector<1x10xf32>
    %504 = vector.broadcast %503 : vector<1x10xf32> to vector<8x10xf32>
    %505 = arith.addf %502, %504 : vector<8x10xf32>
    %c2_222 = arith.constant 2 : index
    %c0_223 = arith.constant 0 : index
    %c0_224 = arith.constant 0 : index
    %506 = vector.load %arg19[%c2_222, %c0_223, %c0_224] : memref<8x8x10xf32, #tpu.memory_space<vmem>>, vector<1x8x10xf32>
    %507 = vector.shape_cast %506 : vector<1x8x10xf32> to vector<8x10xf32>
    %508 = vector.shape_cast %505 : vector<8x10xf32> to vector<1x8x10xf32>
    tpu.vector_store %arg19[%c2_222, %c0_223, %c0_224], %508 {strides = array<i32>} : memref<8x8x10xf32, #tpu.memory_space<vmem>>, vector<1x8x10xf32>,
    %cst_225 = arith.constant dense<0xFF800000> : vector<8xf32>
    %509 = vector.multi_reduction <maximumf>, %505, %cst_225 [1] : vector<8x10xf32> to vector<8xf32>
    %510 = vector.shape_cast %509 : vector<8xf32> to vector<8x1xf32>
    %511 = vector.broadcast %510 : vector<8x1xf32> to vector<8x10xf32>
    %512 = arith.cmpf oeq, %505, %511 : vector<8x10xf32>
    %c10_i32_226 = arith.constant 10 : i32
    %513 = vector.broadcast %c10_i32_226 : i32 to vector<8x10xi32>
    %514 = arith.select %512, %292, %513 : vector<8x10xi1>, vector<8x10xi32>
    %cst_227 = arith.constant dense<2147483647> : vector<8xi32>
    %515 = vector.multi_reduction <minsi>, %514, %cst_227 [1] : vector<8x10xi32> to vector<8xi32>
    %516 = vector.shape_cast %515 : vector<8xi32> to vector<8x1xi32>
    %517 = vector.broadcast %516 : vector<8x1xi32> to vector<8x10xi32>
    %518 = arith.cmpi eq, %292, %517 : vector<8x10xi32>
    %519 = arith.extui %518 : vector<8x10xi1> to vector<8x10xi32>
    %520 = arith.sitofp %519 : vector<8x10xi32> to vector<8x10xf32>
    %c2_228 = arith.constant 2 : index
    %521 = memref.load %arg1[%c2_228] : memref<8xi32, #tpu.memory_space<smem>>
    %522 = arith.sitofp %521 : i32 to f32
    %c2_229 = arith.constant 2 : index
    %c0_230 = arith.constant 0 : index
    %c0_231 = arith.constant 0 : index
    %523 = vector.load %arg3[%c2_229, %c0_230, %c0_231] : memref<8x8x10xf32, #tpu.memory_space<vmem>>, vector<1x8x10xf32>
    %524 = vector.shape_cast %523 : vector<1x8x10xf32> to vector<8x10xf32>
    %525 = vector.broadcast %522 : f32 to vector<8x10xf32>
    %526 = arith.mulf %525, %524 : vector<8x10xf32>
    %cst_232 = arith.constant 1.000000e+00 : f32
    %527 = arith.subf %cst_232, %522 : f32
    %528 = vector.broadcast %527 : f32 to vector<8x10xf32>
    %529 = arith.mulf %528, %520 : vector<8x10xf32>
    %530 = arith.addf %526, %529 : vector<8x10xf32>
    %c0_233 = arith.constant 0 : index
    %c0_234 = arith.constant 0 : index
    %531 = vector.load %arg10[%c0_233, %c0_234] : memref<10x16xf32, #tpu.memory_space<vmem>>, vector<10x16xf32>
    %cst_235 = arith.constant dense<0.000000e+00> : vector<8x16xf32>
    %532 = tpu.matmul %530, %531, %cst_235 {dimension_numbers = #tpu.dot_dimension_numbers<[1], [0], [0], [1], [0, 0, 1, 1], [], []>} : vector<8x10xf32>, vector<10x16xf32>, vector<8x16xf32> -> vector<8x16xf32>
    %c0_236 = arith.constant 0 : index
    %c0_237 = arith.constant 0 : index
    %533 = vector.load %arg11[%c0_236, %c0_237] : memref<16x128xf32, #tpu.memory_space<vmem>>, vector<16x128xf32>
    %cst_238 = arith.constant dense<0.000000e+00> : vector<8x128xf32>
    %534 = tpu.matmul %532, %533, %cst_238 {dimension_numbers = #tpu.dot_dimension_numbers<[1], [0], [0], [1], [0, 0, 1, 1], [], []>} : vector<8x16xf32>, vector<16x128xf32>, vector<8x128xf32> -> vector<8x128xf32>
    %c0_239 = arith.constant 0 : index
    %c0_240 = arith.constant 0 : index
    %535 = vector.load %arg12[%c0_239, %c0_240] : memref<32x128xf32, #tpu.memory_space<vmem>>, vector<32x128xf32>
    %cst_241 = arith.constant dense<0.000000e+00> : vector<8x128xf32>
    %536 = tpu.matmul %477, %535, %cst_241 {dimension_numbers = #tpu.dot_dimension_numbers<[1], [0], [0], [1], [0, 0, 1, 1], [], []>} : vector<8x32xf32>, vector<32x128xf32>, vector<8x128xf32> -> vector<8x128xf32>
    %537 = arith.addf %534, %536 : vector<8x128xf32>
    %c0_242 = arith.constant 0 : index
    %c0_243 = arith.constant 0 : index
    %538 = vector.load %arg13[%c0_242, %c0_243] : memref<1x128xf32, #tpu.memory_space<vmem>>, vector<1x128xf32>
    %539 = vector.broadcast %538 : vector<1x128xf32> to vector<8x128xf32>
    %540 = arith.addf %537, %539 : vector<8x128xf32>
    %541 = arith.negf %540 : vector<8x128xf32>
    %542 = math.exp %541 : vector<8x128xf32>
    %cst_244 = arith.constant 1.000000e+00 : f32
    %543 = vector.broadcast %cst_244 : f32 to vector<8x128xf32>
    %544 = arith.addf %543, %542 : vector<8x128xf32>
    %545 = arith.divf %543, %544 : vector<8x128xf32>
    %546 = math.tanh %540 : vector<8x128xf32>
    %547 = vector.extract_strided_slice %545 {offsets = [0, 0], sizes = [8, 32], strides = [1, 1]} : vector<8x128xf32> to vector<8x32xf32>
    %548 = vector.extract_strided_slice %545 {offsets = [0, 32], sizes = [8, 32], strides = [1, 1]} : vector<8x128xf32> to vector<8x32xf32>
    %549 = vector.extract_strided_slice %546 {offsets = [0, 64], sizes = [8, 32], strides = [1, 1]} : vector<8x128xf32> to vector<8x32xf32>
    %550 = vector.extract_strided_slice %545 {offsets = [0, 96], sizes = [8, 32], strides = [1, 1]} : vector<8x128xf32> to vector<8x32xf32>
    %551 = arith.mulf %548, %475 : vector<8x32xf32>
    %552 = arith.mulf %547, %549 : vector<8x32xf32>
    %553 = arith.addf %551, %552 : vector<8x32xf32>
    %554 = math.tanh %553 : vector<8x32xf32>
    %555 = arith.mulf %550, %554 : vector<8x32xf32>
    %c0_245 = arith.constant 0 : index
    %c0_246 = arith.constant 0 : index
    %556 = vector.load %arg14[%c0_245, %c0_246] : memref<32x128xf32, #tpu.memory_space<vmem>>, vector<32x128xf32>
    %cst_247 = arith.constant dense<0.000000e+00> : vector<8x128xf32>
    %557 = tpu.matmul %555, %556, %cst_247 {dimension_numbers = #tpu.dot_dimension_numbers<[1], [0], [0], [1], [0, 0, 1, 1], [], []>} : vector<8x32xf32>, vector<32x128xf32>, vector<8x128xf32> -> vector<8x128xf32>
    %c0_248 = arith.constant 0 : index
    %c0_249 = arith.constant 0 : index
    %558 = vector.load %arg15[%c0_248, %c0_249] : memref<32x128xf32, #tpu.memory_space<vmem>>, vector<32x128xf32>
    %cst_250 = arith.constant dense<0.000000e+00> : vector<8x128xf32>
    %559 = tpu.matmul %500, %558, %cst_250 {dimension_numbers = #tpu.dot_dimension_numbers<[1], [0], [0], [1], [0, 0, 1, 1], [], []>} : vector<8x32xf32>, vector<32x128xf32>, vector<8x128xf32> -> vector<8x128xf32>
    %560 = arith.addf %557, %559 : vector<8x128xf32>
    %c0_251 = arith.constant 0 : index
    %c0_252 = arith.constant 0 : index
    %561 = vector.load %arg16[%c0_251, %c0_252] : memref<1x128xf32, #tpu.memory_space<vmem>>, vector<1x128xf32>
    %562 = vector.broadcast %561 : vector<1x128xf32> to vector<8x128xf32>
    %563 = arith.addf %560, %562 : vector<8x128xf32>
    %564 = arith.negf %563 : vector<8x128xf32>
    %565 = math.exp %564 : vector<8x128xf32>
    %cst_253 = arith.constant 1.000000e+00 : f32
    %566 = vector.broadcast %cst_253 : f32 to vector<8x128xf32>
    %567 = arith.addf %566, %565 : vector<8x128xf32>
    %568 = arith.divf %566, %567 : vector<8x128xf32>
    %569 = math.tanh %563 : vector<8x128xf32>
    %570 = vector.extract_strided_slice %568 {offsets = [0, 0], sizes = [8, 32], strides = [1, 1]} : vector<8x128xf32> to vector<8x32xf32>
    %571 = vector.extract_strided_slice %568 {offsets = [0, 32], sizes = [8, 32], strides = [1, 1]} : vector<8x128xf32> to vector<8x32xf32>
    %572 = vector.extract_strided_slice %569 {offsets = [0, 64], sizes = [8, 32], strides = [1, 1]} : vector<8x128xf32> to vector<8x32xf32>
    %573 = vector.extract_strided_slice %568 {offsets = [0, 96], sizes = [8, 32], strides = [1, 1]} : vector<8x128xf32> to vector<8x32xf32>
    %574 = arith.mulf %571, %498 : vector<8x32xf32>
    %575 = arith.mulf %570, %572 : vector<8x32xf32>
    %576 = arith.addf %574, %575 : vector<8x32xf32>
    %577 = math.tanh %576 : vector<8x32xf32>
    %578 = arith.mulf %573, %577 : vector<8x32xf32>
    %c0_254 = arith.constant 0 : index
    %c0_255 = arith.constant 0 : index
    %579 = vector.load %arg17[%c0_254, %c0_255] : memref<32x10xf32, #tpu.memory_space<vmem>>, vector<32x10xf32>
    %cst_256 = arith.constant dense<0.000000e+00> : vector<8x10xf32>
    %580 = tpu.matmul %578, %579, %cst_256 {dimension_numbers = #tpu.dot_dimension_numbers<[1], [0], [0], [1], [0, 0, 1, 1], [], []>} : vector<8x32xf32>, vector<32x10xf32>, vector<8x10xf32> -> vector<8x10xf32>
    %c0_257 = arith.constant 0 : index
    %c0_258 = arith.constant 0 : index
    %581 = vector.load %arg18[%c0_257, %c0_258] : memref<1x10xf32, #tpu.memory_space<vmem>>, vector<1x10xf32>
    %582 = vector.broadcast %581 : vector<1x10xf32> to vector<8x10xf32>
    %583 = arith.addf %580, %582 : vector<8x10xf32>
    %c3_259 = arith.constant 3 : index
    %c0_260 = arith.constant 0 : index
    %c0_261 = arith.constant 0 : index
    %584 = vector.load %arg19[%c3_259, %c0_260, %c0_261] : memref<8x8x10xf32, #tpu.memory_space<vmem>>, vector<1x8x10xf32>
    %585 = vector.shape_cast %584 : vector<1x8x10xf32> to vector<8x10xf32>
    %586 = vector.shape_cast %583 : vector<8x10xf32> to vector<1x8x10xf32>
    tpu.vector_store %arg19[%c3_259, %c0_260, %c0_261], %586 {strides = array<i32>} : memref<8x8x10xf32, #tpu.memory_space<vmem>>, vector<1x8x10xf32>,
    %cst_262 = arith.constant dense<0xFF800000> : vector<8xf32>
    %587 = vector.multi_reduction <maximumf>, %583, %cst_262 [1] : vector<8x10xf32> to vector<8xf32>
    %588 = vector.shape_cast %587 : vector<8xf32> to vector<8x1xf32>
    %589 = vector.broadcast %588 : vector<8x1xf32> to vector<8x10xf32>
    %590 = arith.cmpf oeq, %583, %589 : vector<8x10xf32>
    %c10_i32_263 = arith.constant 10 : i32
    %591 = vector.broadcast %c10_i32_263 : i32 to vector<8x10xi32>
    %592 = arith.select %590, %292, %591 : vector<8x10xi1>, vector<8x10xi32>
    %cst_264 = arith.constant dense<2147483647> : vector<8xi32>
    %593 = vector.multi_reduction <minsi>, %592, %cst_264 [1] : vector<8x10xi32> to vector<8xi32>
    %594 = vector.shape_cast %593 : vector<8xi32> to vector<8x1xi32>
    %595 = vector.broadcast %594 : vector<8x1xi32> to vector<8x10xi32>
    %596 = arith.cmpi eq, %292, %595 : vector<8x10xi32>
    %597 = arith.extui %596 : vector<8x10xi1> to vector<8x10xi32>
    %598 = arith.sitofp %597 : vector<8x10xi32> to vector<8x10xf32>
    %c3_265 = arith.constant 3 : index
    %599 = memref.load %arg1[%c3_265] : memref<8xi32, #tpu.memory_space<smem>>
    %600 = arith.sitofp %599 : i32 to f32
    %c3_266 = arith.constant 3 : index
    %c0_267 = arith.constant 0 : index
    %c0_268 = arith.constant 0 : index
    %601 = vector.load %arg3[%c3_266, %c0_267, %c0_268] : memref<8x8x10xf32, #tpu.memory_space<vmem>>, vector<1x8x10xf32>
    %602 = vector.shape_cast %601 : vector<1x8x10xf32> to vector<8x10xf32>
    %603 = vector.broadcast %600 : f32 to vector<8x10xf32>
    %604 = arith.mulf %603, %602 : vector<8x10xf32>
    %cst_269 = arith.constant 1.000000e+00 : f32
    %605 = arith.subf %cst_269, %600 : f32
    %606 = vector.broadcast %605 : f32 to vector<8x10xf32>
    %607 = arith.mulf %606, %598 : vector<8x10xf32>
    %608 = arith.addf %604, %607 : vector<8x10xf32>
    %c0_270 = arith.constant 0 : index
    %c0_271 = arith.constant 0 : index
    %609 = vector.load %arg10[%c0_270, %c0_271] : memref<10x16xf32, #tpu.memory_space<vmem>>, vector<10x16xf32>
    %cst_272 = arith.constant dense<0.000000e+00> : vector<8x16xf32>
    %610 = tpu.matmul %608, %609, %cst_272 {dimension_numbers = #tpu.dot_dimension_numbers<[1], [0], [0], [1], [0, 0, 1, 1], [], []>} : vector<8x10xf32>, vector<10x16xf32>, vector<8x16xf32> -> vector<8x16xf32>
    %c0_273 = arith.constant 0 : index
    %c0_274 = arith.constant 0 : index
    %611 = vector.load %arg11[%c0_273, %c0_274] : memref<16x128xf32, #tpu.memory_space<vmem>>, vector<16x128xf32>
    %cst_275 = arith.constant dense<0.000000e+00> : vector<8x128xf32>
    %612 = tpu.matmul %610, %611, %cst_275 {dimension_numbers = #tpu.dot_dimension_numbers<[1], [0], [0], [1], [0, 0, 1, 1], [], []>} : vector<8x16xf32>, vector<16x128xf32>, vector<8x128xf32> -> vector<8x128xf32>
    %c0_276 = arith.constant 0 : index
    %c0_277 = arith.constant 0 : index
    %613 = vector.load %arg12[%c0_276, %c0_277] : memref<32x128xf32, #tpu.memory_space<vmem>>, vector<32x128xf32>
    %cst_278 = arith.constant dense<0.000000e+00> : vector<8x128xf32>
    %614 = tpu.matmul %555, %613, %cst_278 {dimension_numbers = #tpu.dot_dimension_numbers<[1], [0], [0], [1], [0, 0, 1, 1], [], []>} : vector<8x32xf32>, vector<32x128xf32>, vector<8x128xf32> -> vector<8x128xf32>
    %615 = arith.addf %612, %614 : vector<8x128xf32>
    %c0_279 = arith.constant 0 : index
    %c0_280 = arith.constant 0 : index
    %616 = vector.load %arg13[%c0_279, %c0_280] : memref<1x128xf32, #tpu.memory_space<vmem>>, vector<1x128xf32>
    %617 = vector.broadcast %616 : vector<1x128xf32> to vector<8x128xf32>
    %618 = arith.addf %615, %617 : vector<8x128xf32>
    %619 = arith.negf %618 : vector<8x128xf32>
    %620 = math.exp %619 : vector<8x128xf32>
    %cst_281 = arith.constant 1.000000e+00 : f32
    %621 = vector.broadcast %cst_281 : f32 to vector<8x128xf32>
    %622 = arith.addf %621, %620 : vector<8x128xf32>
    %623 = arith.divf %621, %622 : vector<8x128xf32>
    %624 = math.tanh %618 : vector<8x128xf32>
    %625 = vector.extract_strided_slice %623 {offsets = [0, 0], sizes = [8, 32], strides = [1, 1]} : vector<8x128xf32> to vector<8x32xf32>
    %626 = vector.extract_strided_slice %623 {offsets = [0, 32], sizes = [8, 32], strides = [1, 1]} : vector<8x128xf32> to vector<8x32xf32>
    %627 = vector.extract_strided_slice %624 {offsets = [0, 64], sizes = [8, 32], strides = [1, 1]} : vector<8x128xf32> to vector<8x32xf32>
    %628 = vector.extract_strided_slice %623 {offsets = [0, 96], sizes = [8, 32], strides = [1, 1]} : vector<8x128xf32> to vector<8x32xf32>
    %629 = arith.mulf %626, %553 : vector<8x32xf32>
    %630 = arith.mulf %625, %627 : vector<8x32xf32>
    %631 = arith.addf %629, %630 : vector<8x32xf32>
    %632 = math.tanh %631 : vector<8x32xf32>
    %633 = arith.mulf %628, %632 : vector<8x32xf32>
    %c0_282 = arith.constant 0 : index
    %c0_283 = arith.constant 0 : index
    %634 = vector.load %arg14[%c0_282, %c0_283] : memref<32x128xf32, #tpu.memory_space<vmem>>, vector<32x128xf32>
    %cst_284 = arith.constant dense<0.000000e+00> : vector<8x128xf32>
    %635 = tpu.matmul %633, %634, %cst_284 {dimension_numbers = #tpu.dot_dimension_numbers<[1], [0], [0], [1], [0, 0, 1, 1], [], []>} : vector<8x32xf32>, vector<32x128xf32>, vector<8x128xf32> -> vector<8x128xf32>
    %c0_285 = arith.constant 0 : index
    %c0_286 = arith.constant 0 : index
    %636 = vector.load %arg15[%c0_285, %c0_286] : memref<32x128xf32, #tpu.memory_space<vmem>>, vector<32x128xf32>
    %cst_287 = arith.constant dense<0.000000e+00> : vector<8x128xf32>
    %637 = tpu.matmul %578, %636, %cst_287 {dimension_numbers = #tpu.dot_dimension_numbers<[1], [0], [0], [1], [0, 0, 1, 1], [], []>} : vector<8x32xf32>, vector<32x128xf32>, vector<8x128xf32> -> vector<8x128xf32>
    %638 = arith.addf %635, %637 : vector<8x128xf32>
    %c0_288 = arith.constant 0 : index
    %c0_289 = arith.constant 0 : index
    %639 = vector.load %arg16[%c0_288, %c0_289] : memref<1x128xf32, #tpu.memory_space<vmem>>, vector<1x128xf32>
    %640 = vector.broadcast %639 : vector<1x128xf32> to vector<8x128xf32>
    %641 = arith.addf %638, %640 : vector<8x128xf32>
    %642 = arith.negf %641 : vector<8x128xf32>
    %643 = math.exp %642 : vector<8x128xf32>
    %cst_290 = arith.constant 1.000000e+00 : f32
    %644 = vector.broadcast %cst_290 : f32 to vector<8x128xf32>
    %645 = arith.addf %644, %643 : vector<8x128xf32>
    %646 = arith.divf %644, %645 : vector<8x128xf32>
    %647 = math.tanh %641 : vector<8x128xf32>
    %648 = vector.extract_strided_slice %646 {offsets = [0, 0], sizes = [8, 32], strides = [1, 1]} : vector<8x128xf32> to vector<8x32xf32>
    %649 = vector.extract_strided_slice %646 {offsets = [0, 32], sizes = [8, 32], strides = [1, 1]} : vector<8x128xf32> to vector<8x32xf32>
    %650 = vector.extract_strided_slice %647 {offsets = [0, 64], sizes = [8, 32], strides = [1, 1]} : vector<8x128xf32> to vector<8x32xf32>
    %651 = vector.extract_strided_slice %646 {offsets = [0, 96], sizes = [8, 32], strides = [1, 1]} : vector<8x128xf32> to vector<8x32xf32>
    %652 = arith.mulf %649, %576 : vector<8x32xf32>
    %653 = arith.mulf %648, %650 : vector<8x32xf32>
    %654 = arith.addf %652, %653 : vector<8x32xf32>
    %655 = math.tanh %654 : vector<8x32xf32>
    %656 = arith.mulf %651, %655 : vector<8x32xf32>
    %c0_291 = arith.constant 0 : index
    %c0_292 = arith.constant 0 : index
    %657 = vector.load %arg17[%c0_291, %c0_292] : memref<32x10xf32, #tpu.memory_space<vmem>>, vector<32x10xf32>
    %cst_293 = arith.constant dense<0.000000e+00> : vector<8x10xf32>
    %658 = tpu.matmul %656, %657, %cst_293 {dimension_numbers = #tpu.dot_dimension_numbers<[1], [0], [0], [1], [0, 0, 1, 1], [], []>} : vector<8x32xf32>, vector<32x10xf32>, vector<8x10xf32> -> vector<8x10xf32>
    %c0_294 = arith.constant 0 : index
    %c0_295 = arith.constant 0 : index
    %659 = vector.load %arg18[%c0_294, %c0_295] : memref<1x10xf32, #tpu.memory_space<vmem>>, vector<1x10xf32>
    %660 = vector.broadcast %659 : vector<1x10xf32> to vector<8x10xf32>
    %661 = arith.addf %658, %660 : vector<8x10xf32>
    %c4_296 = arith.constant 4 : index
    %c0_297 = arith.constant 0 : index
    %c0_298 = arith.constant 0 : index
    %662 = vector.load %arg19[%c4_296, %c0_297, %c0_298] : memref<8x8x10xf32, #tpu.memory_space<vmem>>, vector<1x8x10xf32>
    %663 = vector.shape_cast %662 : vector<1x8x10xf32> to vector<8x10xf32>
    %664 = vector.shape_cast %661 : vector<8x10xf32> to vector<1x8x10xf32>
    tpu.vector_store %arg19[%c4_296, %c0_297, %c0_298], %664 {strides = array<i32>} : memref<8x8x10xf32, #tpu.memory_space<vmem>>, vector<1x8x10xf32>,
    %cst_299 = arith.constant dense<0xFF800000> : vector<8xf32>
    %665 = vector.multi_reduction <maximumf>, %661, %cst_299 [1] : vector<8x10xf32> to vector<8xf32>
    %666 = vector.shape_cast %665 : vector<8xf32> to vector<8x1xf32>
    %667 = vector.broadcast %666 : vector<8x1xf32> to vector<8x10xf32>
    %668 = arith.cmpf oeq, %661, %667 : vector<8x10xf32>
    %c10_i32_300 = arith.constant 10 : i32
    %669 = vector.broadcast %c10_i32_300 : i32 to vector<8x10xi32>
    %670 = arith.select %668, %292, %669 : vector<8x10xi1>, vector<8x10xi32>
    %cst_301 = arith.constant dense<2147483647> : vector<8xi32>
    %671 = vector.multi_reduction <minsi>, %670, %cst_301 [1] : vector<8x10xi32> to vector<8xi32>
    %672 = vector.shape_cast %671 : vector<8xi32> to vector<8x1xi32>
    %673 = vector.broadcast %672 : vector<8x1xi32> to vector<8x10xi32>
    %674 = arith.cmpi eq, %292, %673 : vector<8x10xi32>
    %675 = arith.extui %674 : vector<8x10xi1> to vector<8x10xi32>
    %676 = arith.sitofp %675 : vector<8x10xi32> to vector<8x10xf32>
    %c4_302 = arith.constant 4 : index
    %677 = memref.load %arg1[%c4_302] : memref<8xi32, #tpu.memory_space<smem>>
    %678 = arith.sitofp %677 : i32 to f32
    %c4_303 = arith.constant 4 : index
    %c0_304 = arith.constant 0 : index
    %c0_305 = arith.constant 0 : index
    %679 = vector.load %arg3[%c4_303, %c0_304, %c0_305] : memref<8x8x10xf32, #tpu.memory_space<vmem>>, vector<1x8x10xf32>
    %680 = vector.shape_cast %679 : vector<1x8x10xf32> to vector<8x10xf32>
    %681 = vector.broadcast %678 : f32 to vector<8x10xf32>
    %682 = arith.mulf %681, %680 : vector<8x10xf32>
    %cst_306 = arith.constant 1.000000e+00 : f32
    %683 = arith.subf %cst_306, %678 : f32
    %684 = vector.broadcast %683 : f32 to vector<8x10xf32>
    %685 = arith.mulf %684, %676 : vector<8x10xf32>
    %686 = arith.addf %682, %685 : vector<8x10xf32>
    %c0_307 = arith.constant 0 : index
    %c0_308 = arith.constant 0 : index
    %687 = vector.load %arg10[%c0_307, %c0_308] : memref<10x16xf32, #tpu.memory_space<vmem>>, vector<10x16xf32>
    %cst_309 = arith.constant dense<0.000000e+00> : vector<8x16xf32>
    %688 = tpu.matmul %686, %687, %cst_309 {dimension_numbers = #tpu.dot_dimension_numbers<[1], [0], [0], [1], [0, 0, 1, 1], [], []>} : vector<8x10xf32>, vector<10x16xf32>, vector<8x16xf32> -> vector<8x16xf32>
    %c0_310 = arith.constant 0 : index
    %c0_311 = arith.constant 0 : index
    %689 = vector.load %arg11[%c0_310, %c0_311] : memref<16x128xf32, #tpu.memory_space<vmem>>, vector<16x128xf32>
    %cst_312 = arith.constant dense<0.000000e+00> : vector<8x128xf32>
    %690 = tpu.matmul %688, %689, %cst_312 {dimension_numbers = #tpu.dot_dimension_numbers<[1], [0], [0], [1], [0, 0, 1, 1], [], []>} : vector<8x16xf32>, vector<16x128xf32>, vector<8x128xf32> -> vector<8x128xf32>
    %c0_313 = arith.constant 0 : index
    %c0_314 = arith.constant 0 : index
    %691 = vector.load %arg12[%c0_313, %c0_314] : memref<32x128xf32, #tpu.memory_space<vmem>>, vector<32x128xf32>
    %cst_315 = arith.constant dense<0.000000e+00> : vector<8x128xf32>
    %692 = tpu.matmul %633, %691, %cst_315 {dimension_numbers = #tpu.dot_dimension_numbers<[1], [0], [0], [1], [0, 0, 1, 1], [], []>} : vector<8x32xf32>, vector<32x128xf32>, vector<8x128xf32> -> vector<8x128xf32>
    %693 = arith.addf %690, %692 : vector<8x128xf32>
    %c0_316 = arith.constant 0 : index
    %c0_317 = arith.constant 0 : index
    %694 = vector.load %arg13[%c0_316, %c0_317] : memref<1x128xf32, #tpu.memory_space<vmem>>, vector<1x128xf32>
    %695 = vector.broadcast %694 : vector<1x128xf32> to vector<8x128xf32>
    %696 = arith.addf %693, %695 : vector<8x128xf32>
    %697 = arith.negf %696 : vector<8x128xf32>
    %698 = math.exp %697 : vector<8x128xf32>
    %cst_318 = arith.constant 1.000000e+00 : f32
    %699 = vector.broadcast %cst_318 : f32 to vector<8x128xf32>
    %700 = arith.addf %699, %698 : vector<8x128xf32>
    %701 = arith.divf %699, %700 : vector<8x128xf32>
    %702 = math.tanh %696 : vector<8x128xf32>
    %703 = vector.extract_strided_slice %701 {offsets = [0, 0], sizes = [8, 32], strides = [1, 1]} : vector<8x128xf32> to vector<8x32xf32>
    %704 = vector.extract_strided_slice %701 {offsets = [0, 32], sizes = [8, 32], strides = [1, 1]} : vector<8x128xf32> to vector<8x32xf32>
    %705 = vector.extract_strided_slice %702 {offsets = [0, 64], sizes = [8, 32], strides = [1, 1]} : vector<8x128xf32> to vector<8x32xf32>
    %706 = vector.extract_strided_slice %701 {offsets = [0, 96], sizes = [8, 32], strides = [1, 1]} : vector<8x128xf32> to vector<8x32xf32>
    %707 = arith.mulf %704, %631 : vector<8x32xf32>
    %708 = arith.mulf %703, %705 : vector<8x32xf32>
    %709 = arith.addf %707, %708 : vector<8x32xf32>
    %710 = math.tanh %709 : vector<8x32xf32>
    %711 = arith.mulf %706, %710 : vector<8x32xf32>
    %c0_319 = arith.constant 0 : index
    %c0_320 = arith.constant 0 : index
    %712 = vector.load %arg14[%c0_319, %c0_320] : memref<32x128xf32, #tpu.memory_space<vmem>>, vector<32x128xf32>
    %cst_321 = arith.constant dense<0.000000e+00> : vector<8x128xf32>
    %713 = tpu.matmul %711, %712, %cst_321 {dimension_numbers = #tpu.dot_dimension_numbers<[1], [0], [0], [1], [0, 0, 1, 1], [], []>} : vector<8x32xf32>, vector<32x128xf32>, vector<8x128xf32> -> vector<8x128xf32>
    %c0_322 = arith.constant 0 : index
    %c0_323 = arith.constant 0 : index
    %714 = vector.load %arg15[%c0_322, %c0_323] : memref<32x128xf32, #tpu.memory_space<vmem>>, vector<32x128xf32>
    %cst_324 = arith.constant dense<0.000000e+00> : vector<8x128xf32>
    %715 = tpu.matmul %656, %714, %cst_324 {dimension_numbers = #tpu.dot_dimension_numbers<[1], [0], [0], [1], [0, 0, 1, 1], [], []>} : vector<8x32xf32>, vector<32x128xf32>, vector<8x128xf32> -> vector<8x128xf32>
    %716 = arith.addf %713, %715 : vector<8x128xf32>
    %c0_325 = arith.constant 0 : index
    %c0_326 = arith.constant 0 : index
    %717 = vector.load %arg16[%c0_325, %c0_326] : memref<1x128xf32, #tpu.memory_space<vmem>>, vector<1x128xf32>
    %718 = vector.broadcast %717 : vector<1x128xf32> to vector<8x128xf32>
    %719 = arith.addf %716, %718 : vector<8x128xf32>
    %720 = arith.negf %719 : vector<8x128xf32>
    %721 = math.exp %720 : vector<8x128xf32>
    %cst_327 = arith.constant 1.000000e+00 : f32
    %722 = vector.broadcast %cst_327 : f32 to vector<8x128xf32>
    %723 = arith.addf %722, %721 : vector<8x128xf32>
    %724 = arith.divf %722, %723 : vector<8x128xf32>
    %725 = math.tanh %719 : vector<8x128xf32>
    %726 = vector.extract_strided_slice %724 {offsets = [0, 0], sizes = [8, 32], strides = [1, 1]} : vector<8x128xf32> to vector<8x32xf32>
    %727 = vector.extract_strided_slice %724 {offsets = [0, 32], sizes = [8, 32], strides = [1, 1]} : vector<8x128xf32> to vector<8x32xf32>
    %728 = vector.extract_strided_slice %725 {offsets = [0, 64], sizes = [8, 32], strides = [1, 1]} : vector<8x128xf32> to vector<8x32xf32>
    %729 = vector.extract_strided_slice %724 {offsets = [0, 96], sizes = [8, 32], strides = [1, 1]} : vector<8x128xf32> to vector<8x32xf32>
    %730 = arith.mulf %727, %654 : vector<8x32xf32>
    %731 = arith.mulf %726, %728 : vector<8x32xf32>
    %732 = arith.addf %730, %731 : vector<8x32xf32>
    %733 = math.tanh %732 : vector<8x32xf32>
    %734 = arith.mulf %729, %733 : vector<8x32xf32>
    %c0_328 = arith.constant 0 : index
    %c0_329 = arith.constant 0 : index
    %735 = vector.load %arg17[%c0_328, %c0_329] : memref<32x10xf32, #tpu.memory_space<vmem>>, vector<32x10xf32>
    %cst_330 = arith.constant dense<0.000000e+00> : vector<8x10xf32>
    %736 = tpu.matmul %734, %735, %cst_330 {dimension_numbers = #tpu.dot_dimension_numbers<[1], [0], [0], [1], [0, 0, 1, 1], [], []>} : vector<8x32xf32>, vector<32x10xf32>, vector<8x10xf32> -> vector<8x10xf32>
    %c0_331 = arith.constant 0 : index
    %c0_332 = arith.constant 0 : index
    %737 = vector.load %arg18[%c0_331, %c0_332] : memref<1x10xf32, #tpu.memory_space<vmem>>, vector<1x10xf32>
    %738 = vector.broadcast %737 : vector<1x10xf32> to vector<8x10xf32>
    %739 = arith.addf %736, %738 : vector<8x10xf32>
    %c5_333 = arith.constant 5 : index
    %c0_334 = arith.constant 0 : index
    %c0_335 = arith.constant 0 : index
    %740 = vector.load %arg19[%c5_333, %c0_334, %c0_335] : memref<8x8x10xf32, #tpu.memory_space<vmem>>, vector<1x8x10xf32>
    %741 = vector.shape_cast %740 : vector<1x8x10xf32> to vector<8x10xf32>
    %742 = vector.shape_cast %739 : vector<8x10xf32> to vector<1x8x10xf32>
    tpu.vector_store %arg19[%c5_333, %c0_334, %c0_335], %742 {strides = array<i32>} : memref<8x8x10xf32, #tpu.memory_space<vmem>>, vector<1x8x10xf32>,
    %cst_336 = arith.constant dense<0xFF800000> : vector<8xf32>
    %743 = vector.multi_reduction <maximumf>, %739, %cst_336 [1] : vector<8x10xf32> to vector<8xf32>
    %744 = vector.shape_cast %743 : vector<8xf32> to vector<8x1xf32>
    %745 = vector.broadcast %744 : vector<8x1xf32> to vector<8x10xf32>
    %746 = arith.cmpf oeq, %739, %745 : vector<8x10xf32>
    %c10_i32_337 = arith.constant 10 : i32
    %747 = vector.broadcast %c10_i32_337 : i32 to vector<8x10xi32>
    %748 = arith.select %746, %292, %747 : vector<8x10xi1>, vector<8x10xi32>
    %cst_338 = arith.constant dense<2147483647> : vector<8xi32>
    %749 = vector.multi_reduction <minsi>, %748, %cst_338 [1] : vector<8x10xi32> to vector<8xi32>
    %750 = vector.shape_cast %749 : vector<8xi32> to vector<8x1xi32>
    %751 = vector.broadcast %750 : vector<8x1xi32> to vector<8x10xi32>
    %752 = arith.cmpi eq, %292, %751 : vector<8x10xi32>
    %753 = arith.extui %752 : vector<8x10xi1> to vector<8x10xi32>
    %754 = arith.sitofp %753 : vector<8x10xi32> to vector<8x10xf32>
    %c5_339 = arith.constant 5 : index
    %755 = memref.load %arg1[%c5_339] : memref<8xi32, #tpu.memory_space<smem>>
    %756 = arith.sitofp %755 : i32 to f32
    %c5_340 = arith.constant 5 : index
    %c0_341 = arith.constant 0 : index
    %c0_342 = arith.constant 0 : index
    %757 = vector.load %arg3[%c5_340, %c0_341, %c0_342] : memref<8x8x10xf32, #tpu.memory_space<vmem>>, vector<1x8x10xf32>
    %758 = vector.shape_cast %757 : vector<1x8x10xf32> to vector<8x10xf32>
    %759 = vector.broadcast %756 : f32 to vector<8x10xf32>
    %760 = arith.mulf %759, %758 : vector<8x10xf32>
    %cst_343 = arith.constant 1.000000e+00 : f32
    %761 = arith.subf %cst_343, %756 : f32
    %762 = vector.broadcast %761 : f32 to vector<8x10xf32>
    %763 = arith.mulf %762, %754 : vector<8x10xf32>
    %764 = arith.addf %760, %763 : vector<8x10xf32>
    %c0_344 = arith.constant 0 : index
    %c0_345 = arith.constant 0 : index
    %765 = vector.load %arg10[%c0_344, %c0_345] : memref<10x16xf32, #tpu.memory_space<vmem>>, vector<10x16xf32>
    %cst_346 = arith.constant dense<0.000000e+00> : vector<8x16xf32>
    %766 = tpu.matmul %764, %765, %cst_346 {dimension_numbers = #tpu.dot_dimension_numbers<[1], [0], [0], [1], [0, 0, 1, 1], [], []>} : vector<8x10xf32>, vector<10x16xf32>, vector<8x16xf32> -> vector<8x16xf32>
    %c0_347 = arith.constant 0 : index
    %c0_348 = arith.constant 0 : index
    %767 = vector.load %arg11[%c0_347, %c0_348] : memref<16x128xf32, #tpu.memory_space<vmem>>, vector<16x128xf32>
    %cst_349 = arith.constant dense<0.000000e+00> : vector<8x128xf32>
    %768 = tpu.matmul %766, %767, %cst_349 {dimension_numbers = #tpu.dot_dimension_numbers<[1], [0], [0], [1], [0, 0, 1, 1], [], []>} : vector<8x16xf32>, vector<16x128xf32>, vector<8x128xf32> -> vector<8x128xf32>
    %c0_350 = arith.constant 0 : index
    %c0_351 = arith.constant 0 : index
    %769 = vector.load %arg12[%c0_350, %c0_351] : memref<32x128xf32, #tpu.memory_space<vmem>>, vector<32x128xf32>
    %cst_352 = arith.constant dense<0.000000e+00> : vector<8x128xf32>
    %770 = tpu.matmul %711, %769, %cst_352 {dimension_numbers = #tpu.dot_dimension_numbers<[1], [0], [0], [1], [0, 0, 1, 1], [], []>} : vector<8x32xf32>, vector<32x128xf32>, vector<8x128xf32> -> vector<8x128xf32>
    %771 = arith.addf %768, %770 : vector<8x128xf32>
    %c0_353 = arith.constant 0 : index
    %c0_354 = arith.constant 0 : index
    %772 = vector.load %arg13[%c0_353, %c0_354] : memref<1x128xf32, #tpu.memory_space<vmem>>, vector<1x128xf32>
    %773 = vector.broadcast %772 : vector<1x128xf32> to vector<8x128xf32>
    %774 = arith.addf %771, %773 : vector<8x128xf32>
    %775 = arith.negf %774 : vector<8x128xf32>
    %776 = math.exp %775 : vector<8x128xf32>
    %cst_355 = arith.constant 1.000000e+00 : f32
    %777 = vector.broadcast %cst_355 : f32 to vector<8x128xf32>
    %778 = arith.addf %777, %776 : vector<8x128xf32>
    %779 = arith.divf %777, %778 : vector<8x128xf32>
    %780 = math.tanh %774 : vector<8x128xf32>
    %781 = vector.extract_strided_slice %779 {offsets = [0, 0], sizes = [8, 32], strides = [1, 1]} : vector<8x128xf32> to vector<8x32xf32>
    %782 = vector.extract_strided_slice %779 {offsets = [0, 32], sizes = [8, 32], strides = [1, 1]} : vector<8x128xf32> to vector<8x32xf32>
    %783 = vector.extract_strided_slice %780 {offsets = [0, 64], sizes = [8, 32], strides = [1, 1]} : vector<8x128xf32> to vector<8x32xf32>
    %784 = vector.extract_strided_slice %779 {offsets = [0, 96], sizes = [8, 32], strides = [1, 1]} : vector<8x128xf32> to vector<8x32xf32>
    %785 = arith.mulf %782, %709 : vector<8x32xf32>
    %786 = arith.mulf %781, %783 : vector<8x32xf32>
    %787 = arith.addf %785, %786 : vector<8x32xf32>
    %788 = math.tanh %787 : vector<8x32xf32>
    %789 = arith.mulf %784, %788 : vector<8x32xf32>
    %c0_356 = arith.constant 0 : index
    %c0_357 = arith.constant 0 : index
    %790 = vector.load %arg14[%c0_356, %c0_357] : memref<32x128xf32, #tpu.memory_space<vmem>>, vector<32x128xf32>
    %cst_358 = arith.constant dense<0.000000e+00> : vector<8x128xf32>
    %791 = tpu.matmul %789, %790, %cst_358 {dimension_numbers = #tpu.dot_dimension_numbers<[1], [0], [0], [1], [0, 0, 1, 1], [], []>} : vector<8x32xf32>, vector<32x128xf32>, vector<8x128xf32> -> vector<8x128xf32>
    %c0_359 = arith.constant 0 : index
    %c0_360 = arith.constant 0 : index
    %792 = vector.load %arg15[%c0_359, %c0_360] : memref<32x128xf32, #tpu.memory_space<vmem>>, vector<32x128xf32>
    %cst_361 = arith.constant dense<0.000000e+00> : vector<8x128xf32>
    %793 = tpu.matmul %734, %792, %cst_361 {dimension_numbers = #tpu.dot_dimension_numbers<[1], [0], [0], [1], [0, 0, 1, 1], [], []>} : vector<8x32xf32>, vector<32x128xf32>, vector<8x128xf32> -> vector<8x128xf32>
    %794 = arith.addf %791, %793 : vector<8x128xf32>
    %c0_362 = arith.constant 0 : index
    %c0_363 = arith.constant 0 : index
    %795 = vector.load %arg16[%c0_362, %c0_363] : memref<1x128xf32, #tpu.memory_space<vmem>>, vector<1x128xf32>
    %796 = vector.broadcast %795 : vector<1x128xf32> to vector<8x128xf32>
    %797 = arith.addf %794, %796 : vector<8x128xf32>
    %798 = arith.negf %797 : vector<8x128xf32>
    %799 = math.exp %798 : vector<8x128xf32>
    %cst_364 = arith.constant 1.000000e+00 : f32
    %800 = vector.broadcast %cst_364 : f32 to vector<8x128xf32>
    %801 = arith.addf %800, %799 : vector<8x128xf32>
    %802 = arith.divf %800, %801 : vector<8x128xf32>
    %803 = math.tanh %797 : vector<8x128xf32>
    %804 = vector.extract_strided_slice %802 {offsets = [0, 0], sizes = [8, 32], strides = [1, 1]} : vector<8x128xf32> to vector<8x32xf32>
    %805 = vector.extract_strided_slice %802 {offsets = [0, 32], sizes = [8, 32], strides = [1, 1]} : vector<8x128xf32> to vector<8x32xf32>
    %806 = vector.extract_strided_slice %803 {offsets = [0, 64], sizes = [8, 32], strides = [1, 1]} : vector<8x128xf32> to vector<8x32xf32>
    %807 = vector.extract_strided_slice %802 {offsets = [0, 96], sizes = [8, 32], strides = [1, 1]} : vector<8x128xf32> to vector<8x32xf32>
    %808 = arith.mulf %805, %732 : vector<8x32xf32>
    %809 = arith.mulf %804, %806 : vector<8x32xf32>
    %810 = arith.addf %808, %809 : vector<8x32xf32>
    %811 = math.tanh %810 : vector<8x32xf32>
    %812 = arith.mulf %807, %811 : vector<8x32xf32>
    %c0_365 = arith.constant 0 : index
    %c0_366 = arith.constant 0 : index
    %813 = vector.load %arg17[%c0_365, %c0_366] : memref<32x10xf32, #tpu.memory_space<vmem>>, vector<32x10xf32>
    %cst_367 = arith.constant dense<0.000000e+00> : vector<8x10xf32>
    %814 = tpu.matmul %812, %813, %cst_367 {dimension_numbers = #tpu.dot_dimension_numbers<[1], [0], [0], [1], [0, 0, 1, 1], [], []>} : vector<8x32xf32>, vector<32x10xf32>, vector<8x10xf32> -> vector<8x10xf32>
    %c0_368 = arith.constant 0 : index
    %c0_369 = arith.constant 0 : index
    %815 = vector.load %arg18[%c0_368, %c0_369] : memref<1x10xf32, #tpu.memory_space<vmem>>, vector<1x10xf32>
    %816 = vector.broadcast %815 : vector<1x10xf32> to vector<8x10xf32>
    %817 = arith.addf %814, %816 : vector<8x10xf32>
    %c6 = arith.constant 6 : index
    %c0_370 = arith.constant 0 : index
    %c0_371 = arith.constant 0 : index
    %818 = vector.load %arg19[%c6, %c0_370, %c0_371] : memref<8x8x10xf32, #tpu.memory_space<vmem>>, vector<1x8x10xf32>
    %819 = vector.shape_cast %818 : vector<1x8x10xf32> to vector<8x10xf32>
    %820 = vector.shape_cast %817 : vector<8x10xf32> to vector<1x8x10xf32>
    tpu.vector_store %arg19[%c6, %c0_370, %c0_371], %820 {strides = array<i32>} : memref<8x8x10xf32, #tpu.memory_space<vmem>>, vector<1x8x10xf32>,
    %cst_372 = arith.constant dense<0xFF800000> : vector<8xf32>
    %821 = vector.multi_reduction <maximumf>, %817, %cst_372 [1] : vector<8x10xf32> to vector<8xf32>
    %822 = vector.shape_cast %821 : vector<8xf32> to vector<8x1xf32>
    %823 = vector.broadcast %822 : vector<8x1xf32> to vector<8x10xf32>
    %824 = arith.cmpf oeq, %817, %823 : vector<8x10xf32>
    %c10_i32_373 = arith.constant 10 : i32
    %825 = vector.broadcast %c10_i32_373 : i32 to vector<8x10xi32>
    %826 = arith.select %824, %292, %825 : vector<8x10xi1>, vector<8x10xi32>
    %cst_374 = arith.constant dense<2147483647> : vector<8xi32>
    %827 = vector.multi_reduction <minsi>, %826, %cst_374 [1] : vector<8x10xi32> to vector<8xi32>
    %828 = vector.shape_cast %827 : vector<8xi32> to vector<8x1xi32>
    %829 = vector.broadcast %828 : vector<8x1xi32> to vector<8x10xi32>
    %830 = arith.cmpi eq, %292, %829 : vector<8x10xi32>
    %831 = arith.extui %830 : vector<8x10xi1> to vector<8x10xi32>
    %832 = arith.sitofp %831 : vector<8x10xi32> to vector<8x10xf32>
    %c6_375 = arith.constant 6 : index
    %833 = memref.load %arg1[%c6_375] : memref<8xi32, #tpu.memory_space<smem>>
    %834 = arith.sitofp %833 : i32 to f32
    %c6_376 = arith.constant 6 : index
    %c0_377 = arith.constant 0 : index
    %c0_378 = arith.constant 0 : index
    %835 = vector.load %arg3[%c6_376, %c0_377, %c0_378] : memref<8x8x10xf32, #tpu.memory_space<vmem>>, vector<1x8x10xf32>
    %836 = vector.shape_cast %835 : vector<1x8x10xf32> to vector<8x10xf32>
    %837 = vector.broadcast %834 : f32 to vector<8x10xf32>
    %838 = arith.mulf %837, %836 : vector<8x10xf32>
    %cst_379 = arith.constant 1.000000e+00 : f32
    %839 = arith.subf %cst_379, %834 : f32
    %840 = vector.broadcast %839 : f32 to vector<8x10xf32>
    %841 = arith.mulf %840, %832 : vector<8x10xf32>
    %842 = arith.addf %838, %841 : vector<8x10xf32>
    %c0_380 = arith.constant 0 : index
    %c0_381 = arith.constant 0 : index
    %843 = vector.load %arg10[%c0_380, %c0_381] : memref<10x16xf32, #tpu.memory_space<vmem>>, vector<10x16xf32>
    %cst_382 = arith.constant dense<0.000000e+00> : vector<8x16xf32>
    %844 = tpu.matmul %842, %843, %cst_382 {dimension_numbers = #tpu.dot_dimension_numbers<[1], [0], [0], [1], [0, 0, 1, 1], [], []>} : vector<8x10xf32>, vector<10x16xf32>, vector<8x16xf32> -> vector<8x16xf32>
    %c0_383 = arith.constant 0 : index
    %c0_384 = arith.constant 0 : index
    %845 = vector.load %arg11[%c0_383, %c0_384] : memref<16x128xf32, #tpu.memory_space<vmem>>, vector<16x128xf32>
    %cst_385 = arith.constant dense<0.000000e+00> : vector<8x128xf32>
    %846 = tpu.matmul %844, %845, %cst_385 {dimension_numbers = #tpu.dot_dimension_numbers<[1], [0], [0], [1], [0, 0, 1, 1], [], []>} : vector<8x16xf32>, vector<16x128xf32>, vector<8x128xf32> -> vector<8x128xf32>
    %c0_386 = arith.constant 0 : index
    %c0_387 = arith.constant 0 : index
    %847 = vector.load %arg12[%c0_386, %c0_387] : memref<32x128xf32, #tpu.memory_space<vmem>>, vector<32x128xf32>
    %cst_388 = arith.constant dense<0.000000e+00> : vector<8x128xf32>
    %848 = tpu.matmul %789, %847, %cst_388 {dimension_numbers = #tpu.dot_dimension_numbers<[1], [0], [0], [1], [0, 0, 1, 1], [], []>} : vector<8x32xf32>, vector<32x128xf32>, vector<8x128xf32> -> vector<8x128xf32>
    %849 = arith.addf %846, %848 : vector<8x128xf32>
    %c0_389 = arith.constant 0 : index
    %c0_390 = arith.constant 0 : index
    %850 = vector.load %arg13[%c0_389, %c0_390] : memref<1x128xf32, #tpu.memory_space<vmem>>, vector<1x128xf32>
    %851 = vector.broadcast %850 : vector<1x128xf32> to vector<8x128xf32>
    %852 = arith.addf %849, %851 : vector<8x128xf32>
    %853 = arith.negf %852 : vector<8x128xf32>
    %854 = math.exp %853 : vector<8x128xf32>
    %cst_391 = arith.constant 1.000000e+00 : f32
    %855 = vector.broadcast %cst_391 : f32 to vector<8x128xf32>
    %856 = arith.addf %855, %854 : vector<8x128xf32>
    %857 = arith.divf %855, %856 : vector<8x128xf32>
    %858 = math.tanh %852 : vector<8x128xf32>
    %859 = vector.extract_strided_slice %857 {offsets = [0, 0], sizes = [8, 32], strides = [1, 1]} : vector<8x128xf32> to vector<8x32xf32>
    %860 = vector.extract_strided_slice %857 {offsets = [0, 32], sizes = [8, 32], strides = [1, 1]} : vector<8x128xf32> to vector<8x32xf32>
    %861 = vector.extract_strided_slice %858 {offsets = [0, 64], sizes = [8, 32], strides = [1, 1]} : vector<8x128xf32> to vector<8x32xf32>
    %862 = vector.extract_strided_slice %857 {offsets = [0, 96], sizes = [8, 32], strides = [1, 1]} : vector<8x128xf32> to vector<8x32xf32>
    %863 = arith.mulf %860, %787 : vector<8x32xf32>
    %864 = arith.mulf %859, %861 : vector<8x32xf32>
    %865 = arith.addf %863, %864 : vector<8x32xf32>
    %866 = math.tanh %865 : vector<8x32xf32>
    %867 = arith.mulf %862, %866 : vector<8x32xf32>
    %c0_392 = arith.constant 0 : index
    %c0_393 = arith.constant 0 : index
    %868 = vector.load %arg14[%c0_392, %c0_393] : memref<32x128xf32, #tpu.memory_space<vmem>>, vector<32x128xf32>
    %cst_394 = arith.constant dense<0.000000e+00> : vector<8x128xf32>
    %869 = tpu.matmul %867, %868, %cst_394 {dimension_numbers = #tpu.dot_dimension_numbers<[1], [0], [0], [1], [0, 0, 1, 1], [], []>} : vector<8x32xf32>, vector<32x128xf32>, vector<8x128xf32> -> vector<8x128xf32>
    %c0_395 = arith.constant 0 : index
    %c0_396 = arith.constant 0 : index
    %870 = vector.load %arg15[%c0_395, %c0_396] : memref<32x128xf32, #tpu.memory_space<vmem>>, vector<32x128xf32>
    %cst_397 = arith.constant dense<0.000000e+00> : vector<8x128xf32>
    %871 = tpu.matmul %812, %870, %cst_397 {dimension_numbers = #tpu.dot_dimension_numbers<[1], [0], [0], [1], [0, 0, 1, 1], [], []>} : vector<8x32xf32>, vector<32x128xf32>, vector<8x128xf32> -> vector<8x128xf32>
    %872 = arith.addf %869, %871 : vector<8x128xf32>
    %c0_398 = arith.constant 0 : index
    %c0_399 = arith.constant 0 : index
    %873 = vector.load %arg16[%c0_398, %c0_399] : memref<1x128xf32, #tpu.memory_space<vmem>>, vector<1x128xf32>
    %874 = vector.broadcast %873 : vector<1x128xf32> to vector<8x128xf32>
    %875 = arith.addf %872, %874 : vector<8x128xf32>
    %876 = arith.negf %875 : vector<8x128xf32>
    %877 = math.exp %876 : vector<8x128xf32>
    %cst_400 = arith.constant 1.000000e+00 : f32
    %878 = vector.broadcast %cst_400 : f32 to vector<8x128xf32>
    %879 = arith.addf %878, %877 : vector<8x128xf32>
    %880 = arith.divf %878, %879 : vector<8x128xf32>
    %881 = math.tanh %875 : vector<8x128xf32>
    %882 = vector.extract_strided_slice %880 {offsets = [0, 0], sizes = [8, 32], strides = [1, 1]} : vector<8x128xf32> to vector<8x32xf32>
    %883 = vector.extract_strided_slice %880 {offsets = [0, 32], sizes = [8, 32], strides = [1, 1]} : vector<8x128xf32> to vector<8x32xf32>
    %884 = vector.extract_strided_slice %881 {offsets = [0, 64], sizes = [8, 32], strides = [1, 1]} : vector<8x128xf32> to vector<8x32xf32>
    %885 = vector.extract_strided_slice %880 {offsets = [0, 96], sizes = [8, 32], strides = [1, 1]} : vector<8x128xf32> to vector<8x32xf32>
    %886 = arith.mulf %883, %810 : vector<8x32xf32>
    %887 = arith.mulf %882, %884 : vector<8x32xf32>
    %888 = arith.addf %886, %887 : vector<8x32xf32>
    %889 = math.tanh %888 : vector<8x32xf32>
    %890 = arith.mulf %885, %889 : vector<8x32xf32>
    %c0_401 = arith.constant 0 : index
    %c0_402 = arith.constant 0 : index
    %891 = vector.load %arg17[%c0_401, %c0_402] : memref<32x10xf32, #tpu.memory_space<vmem>>, vector<32x10xf32>
    %cst_403 = arith.constant dense<0.000000e+00> : vector<8x10xf32>
    %892 = tpu.matmul %890, %891, %cst_403 {dimension_numbers = #tpu.dot_dimension_numbers<[1], [0], [0], [1], [0, 0, 1, 1], [], []>} : vector<8x32xf32>, vector<32x10xf32>, vector<8x10xf32> -> vector<8x10xf32>
    %c0_404 = arith.constant 0 : index
    %c0_405 = arith.constant 0 : index
    %893 = vector.load %arg18[%c0_404, %c0_405] : memref<1x10xf32, #tpu.memory_space<vmem>>, vector<1x10xf32>
    %894 = vector.broadcast %893 : vector<1x10xf32> to vector<8x10xf32>
    %895 = arith.addf %892, %894 : vector<8x10xf32>
    %c7 = arith.constant 7 : index
    %c0_406 = arith.constant 0 : index
    %c0_407 = arith.constant 0 : index
    %896 = vector.load %arg19[%c7, %c0_406, %c0_407] : memref<8x8x10xf32, #tpu.memory_space<vmem>>, vector<1x8x10xf32>
    %897 = vector.shape_cast %896 : vector<1x8x10xf32> to vector<8x10xf32>
    %898 = vector.shape_cast %895 : vector<8x10xf32> to vector<1x8x10xf32>
    tpu.vector_store %arg19[%c7, %c0_406, %c0_407], %898 {strides = array<i32>} : memref<8x8x10xf32, #tpu.memory_space<vmem>>, vector<1x8x10xf32>,
    return
  }
  func.func @transform_0(%arg0: i32, %arg1: memref<8xi32, #tpu.memory_space<smem>>) -> (i32, i32, i32) {
    %c0_i32 = arith.constant 0 : i32
    %c0_i32_0 = arith.constant 0 : i32
    %c0_i32_1 = arith.constant 0 : i32
    %c0_i32_2 = arith.constant 0 : i32
    return %c0_i32, %c0_i32_0, %c0_i32_1 : i32, i32, i32
  }
  func.func @transform_1(%arg0: i32, %arg1: memref<8xi32, #tpu.memory_space<smem>>) -> (i32, i32, i32) {
    %c0_i32 = arith.constant 0 : i32
    %c0_i32_0 = arith.constant 0 : i32
    %c0_i32_1 = arith.constant 0 : i32
    %c0_i32_2 = arith.constant 0 : i32
    return %c0_i32, %c0_i32_0, %c0_i32_1 : i32, i32, i32
  }
  func.func @transform_2(%arg0: i32, %arg1: memref<8xi32, #tpu.memory_space<smem>>) -> (i32, i32) {
    %c0_i32 = arith.constant 0 : i32
    %c0_i32_0 = arith.constant 0 : i32
    %c0_i32_1 = arith.constant 0 : i32
    return %c0_i32, %c0_i32_0 : i32, i32
  }
  func.func @transform_3(%arg0: i32, %arg1: memref<8xi32, #tpu.memory_space<smem>>) -> (i32, i32) {
    %c0_i32 = arith.constant 0 : i32
    %c0_i32_0 = arith.constant 0 : i32
    %c0_i32_1 = arith.constant 0 : i32
    return %c0_i32, %c0_i32_0 : i32, i32
  }
  func.func @transform_4(%arg0: i32, %arg1: memref<8xi32, #tpu.memory_space<smem>>) -> (i32, i32) {
    %c0_i32 = arith.constant 0 : i32
    %c0_i32_0 = arith.constant 0 : i32
    %c0_i32_1 = arith.constant 0 : i32
    return %c0_i32, %c0_i32_0 : i32, i32
  }
  func.func @transform_5(%arg0: i32, %arg1: memref<8xi32, #tpu.memory_space<smem>>) -> (i32, i32) {
    %c0_i32 = arith.constant 0 : i32
    %c0_i32_0 = arith.constant 0 : i32
    %c0_i32_1 = arith.constant 0 : i32
    return %c0_i32, %c0_i32_0 : i32, i32
  }
  func.func @transform_6(%arg0: i32, %arg1: memref<8xi32, #tpu.memory_space<smem>>) -> (i32, i32) {
    %c0_i32 = arith.constant 0 : i32
    %c0_i32_0 = arith.constant 0 : i32
    %c0_i32_1 = arith.constant 0 : i32
    return %c0_i32, %c0_i32_0 : i32, i32
  }
  func.func @transform_7(%arg0: i32, %arg1: memref<8xi32, #tpu.memory_space<smem>>) -> (i32, i32) {
    %c0_i32 = arith.constant 0 : i32
    %c0_i32_0 = arith.constant 0 : i32
    %c0_i32_1 = arith.constant 0 : i32
    return %c0_i32, %c0_i32_0 : i32, i32
  }
  func.func @transform_8(%arg0: i32, %arg1: memref<8xi32, #tpu.memory_space<smem>>) -> (i32, i32) {
    %c0_i32 = arith.constant 0 : i32
    %c0_i32_0 = arith.constant 0 : i32
    %c0_i32_1 = arith.constant 0 : i32
    return %c0_i32, %c0_i32_0 : i32, i32
  }
  func.func @transform_9(%arg0: i32, %arg1: memref<8xi32, #tpu.memory_space<smem>>) -> (i32, i32) {
    %c0_i32 = arith.constant 0 : i32
    %c0_i32_0 = arith.constant 0 : i32
    %c0_i32_1 = arith.constant 0 : i32
    return %c0_i32, %c0_i32_0 : i32, i32
  }
  func.func @transform_10(%arg0: i32, %arg1: memref<8xi32, #tpu.memory_space<smem>>) -> (i32, i32) {
    %c0_i32 = arith.constant 0 : i32
    %c0_i32_0 = arith.constant 0 : i32
    %c0_i32_1 = arith.constant 0 : i32
    return %c0_i32, %c0_i32_0 : i32, i32
  }
  func.func @transform_11(%arg0: i32, %arg1: memref<8xi32, #tpu.memory_space<smem>>) -> (i32, i32) {
    %c0_i32 = arith.constant 0 : i32
    %c0_i32_0 = arith.constant 0 : i32
    %c0_i32_1 = arith.constant 0 : i32
    return %c0_i32, %c0_i32_0 : i32, i32
  }
  func.func @transform_12(%arg0: i32, %arg1: memref<8xi32, #tpu.memory_space<smem>>) -> (i32, i32) {
    %c0_i32 = arith.constant 0 : i32
    %c0_i32_0 = arith.constant 0 : i32
    %c0_i32_1 = arith.constant 0 : i32
    return %c0_i32, %c0_i32_0 : i32, i32
  }
  func.func @transform_13(%arg0: i32, %arg1: memref<8xi32, #tpu.memory_space<smem>>) -> (i32, i32) {
    %c0_i32 = arith.constant 0 : i32
    %c0_i32_0 = arith.constant 0 : i32
    %c0_i32_1 = arith.constant 0 : i32
    return %c0_i32, %c0_i32_0 : i32, i32
  }
  func.func @transform_14(%arg0: i32, %arg1: memref<8xi32, #tpu.memory_space<smem>>) -> (i32, i32) {
    %c0_i32 = arith.constant 0 : i32
    %c0_i32_0 = arith.constant 0 : i32
    %c0_i32_1 = arith.constant 0 : i32
    return %c0_i32, %c0_i32_0 : i32, i32
  }
  func.func @transform_15(%arg0: i32, %arg1: memref<8xi32, #tpu.memory_space<smem>>) -> (i32, i32) {
    %c0_i32 = arith.constant 0 : i32
    %c0_i32_0 = arith.constant 0 : i32
    %c0_i32_1 = arith.constant 0 : i32
    return %c0_i32, %c0_i32_0 : i32, i32
  }
  func.func @transform_16(%arg0: i32, %arg1: memref<8xi32, #tpu.memory_space<smem>>) -> (i32, i32) {
    %c0_i32 = arith.constant 0 : i32
    %c0_i32_0 = arith.constant 0 : i32
    %c0_i32_1 = arith.constant 0 : i32
    return %c0_i32, %c0_i32_0 : i32, i32
  }
  func.func @transform_17(%arg0: i32, %arg1: memref<8xi32, #tpu.memory_space<smem>>) -> (i32, i32, i32) {
    %c0_i32 = arith.constant 0 : i32
    %c0_i32_0 = arith.constant 0 : i32
    %c0_i32_1 = arith.constant 0 : i32
    %c0_i32_2 = arith.constant 0 : i32
    return %c0_i32, %c0_i32_0, %c0_i32_1 : i32, i32, i32
  }
}

</mosaic_0001>

<llo_original>
// kernel: seq2seq_forward.1
$region0: #{seq2seq_forward.1}
  #allocation0 [shape = 'u32[]', space=smem, size = 0x4, offset = 0x4, fixed_abs, tag = 'smem constant byte address 0x4 - core index']
  #allocation1 [shape = 'u32[144,128]{1,0:T(1,128)}', space=vmem, size = 0x12000, scoped, tag = 'internal scratch']
  #allocation2 [shape = 's32[1]{0}', space=sflag, size = 0x4, scoped, tag = 'scoped memory for seq2seq_forward.1']
  #allocation3 [shape = 'u8[512]{0}', space=smem, size = 0x200, scoped, tag = 'prefetched SMEM operand 0']
  %s0 = inlined_call_operand.vmem [shape: s32[8], index: 0, kind: input, shape index: {}]
  %s1 = inlined_call_operand.vmem [shape: f32[6,8,16], index: 1, kind: input, shape index: {}]
  %s2 = inlined_call_operand.vmem [shape: f32[8,8,10], index: 2, kind: input, shape index: {}]
  %s3 = inlined_call_operand.vmem [shape: f32[16,128], index: 3, kind: input, shape index: {}]
  %s4 = inlined_call_operand.vmem [shape: f32[32,128], index: 4, kind: input, shape index: {}]
  %s5 = inlined_call_operand.vmem [shape: f32[1,128], index: 5, kind: input, shape index: {}]
  %s6 = inlined_call_operand.vmem [shape: f32[32,128], index: 6, kind: input, shape index: {}]
  %s7 = inlined_call_operand.vmem [shape: f32[32,128], index: 7, kind: input, shape index: {}]
  %s8 = inlined_call_operand.vmem [shape: f32[1,128], index: 8, kind: input, shape index: {}]
  %s9 = inlined_call_operand.vmem [shape: f32[10,16], index: 9, kind: input, shape index: {}]
  %s10 = inlined_call_operand.vmem [shape: f32[16,128], index: 10, kind: input, shape index: {}]
  %s11 = inlined_call_operand.vmem [shape: f32[32,128], index: 11, kind: input, shape index: {}]
  %s12 = inlined_call_operand.vmem [shape: f32[1,128], index: 12, kind: input, shape index: {}]
  %s13 = inlined_call_operand.vmem [shape: f32[32,128], index: 13, kind: input, shape index: {}]
  %s14 = inlined_call_operand.vmem [shape: f32[32,128], index: 14, kind: input, shape index: {}]
  %s15 = inlined_call_operand.vmem [shape: f32[1,128], index: 15, kind: input, shape index: {}]
  %s16 = inlined_call_operand.vmem [shape: f32[32,10], index: 16, kind: input, shape index: {}]
  %s17 = inlined_call_operand.vmem [shape: f32[1,10], index: 17, kind: input, shape index: {}]
  %s18 = inlined_call_operand.hbm [shape: f32[8,8,10], index: 18, kind: output, shape index: {}]
  %s19 = sld [smem:[#allocation0]]
  $region78: #{seq2seq_forward.1} parent=0
    _
  %s21 = ssub.s32 1, %s19
  %s22 = scalar_select 0, %s21, %s19
  %s23 = sshll.u32 %s0, 4
  %s24 = int_to_ptr.vmem [resolvable:$true] %s23
  %26 = dma.vmem_to_smem %s24, 16, [#allocation3], [#allocation2]
  %27 = dma.done [#allocation2], 16
  %28 = sfence
  $region1: #{seq2seq_forward.1} parent=0
    #allocation4 [shape = 'u8[32768]{0}', space=vmem, size = 0x8000, scoped, tag = 'output window, operand 0, single buffered']
    #allocation5 [shape = 's32[1]{0}', space=sflag, size = 0x4, scoped, tag = 'scoped memory for seq2seq_forward.1']
    %29 = vsyncpa [#allocation5], 0
    // Predicated region
    $region2: #{seq2seq_forward.1} parent=1 // pred_check
      _
    $region3: #{seq2seq_forward.1} parent=1 // pred_check_branch
      %31 = sbr.rel (0) target = $region5
    $region4: #{seq2seq_forward.1} parent=1 // pred_region
      _
    $region5: #{seq2seq_forward.1} parent=1 // pred_fallthru
      _
    // Predicated region
    $region6: #{seq2seq_forward.1} parent=1 // pred_check
      _
    $region7: #{seq2seq_forward.1} parent=1 // pred_check_branch
      %33 = sbr.rel (0) target = $region9
    $region8: #{seq2seq_forward.1} parent=1 // pred_region
      _
    $region9: #{seq2seq_forward.1} parent=1 // pred_fallthru
      _
    // Predicated region
    $region10: #{seq2seq_forward.1} parent=1 // pred_check
      _
    $region11: #{seq2seq_forward.1} parent=1 // pred_check_branch
      %35 = sbr.rel (0) target = $region13
    $region12: #{seq2seq_forward.1} parent=1 // pred_region
      _
    $region13: #{seq2seq_forward.1} parent=1 // pred_fallthru
      _
    // Predicated region
    $region14: #{seq2seq_forward.1} parent=1 // pred_check
      _
    $region15: #{seq2seq_forward.1} parent=1 // pred_check_branch
      %37 = sbr.rel (0) target = $region17
    $region16: #{seq2seq_forward.1} parent=1 // pred_region
      _
    $region17: #{seq2seq_forward.1} parent=1 // pred_fallthru
      _
    // Predicated region
    $region18: #{seq2seq_forward.1} parent=1 // pred_check
      _
    $region19: #{seq2seq_forward.1} parent=1 // pred_check_branch
      %39 = sbr.rel (0) target = $region21
    $region20: #{seq2seq_forward.1} parent=1 // pred_region
      _
    $region21: #{seq2seq_forward.1} parent=1 // pred_fallthru
      _
    // Predicated region
    $region22: #{seq2seq_forward.1} parent=1 // pred_check
      _
    $region23: #{seq2seq_forward.1} parent=1 // pred_check_branch
      %41 = sbr.rel (0) target = $region25
    $region24: #{seq2seq_forward.1} parent=1 // pred_region
      _
    $region25: #{seq2seq_forward.1} parent=1 // pred_fallthru
      _
    // Predicated region
    $region26: #{seq2seq_forward.1} parent=1 // pred_check
      _
    $region27: #{seq2seq_forward.1} parent=1 // pred_check_branch
      %43 = sbr.rel (0) target = $region29
    $region28: #{seq2seq_forward.1} parent=1 // pred_region
      _
    $region29: #{seq2seq_forward.1} parent=1 // pred_fallthru
      _
    // Predicated region
    $region30: #{seq2seq_forward.1} parent=1 // pred_check
      _
    $region31: #{seq2seq_forward.1} parent=1 // pred_check_branch
      %45 = sbr.rel (0) target = $region33
    $region32: #{seq2seq_forward.1} parent=1 // pred_region
      _
    $region33: #{seq2seq_forward.1} parent=1 // pred_fallthru
      _
    // Predicated region
    $region34: #{seq2seq_forward.1} parent=1 // pred_check
      _
    $region35: #{seq2seq_forward.1} parent=1 // pred_check_branch
      %47 = sbr.rel (0) target = $region37
    $region36: #{seq2seq_forward.1} parent=1 // pred_region
      _
    $region37: #{seq2seq_forward.1} parent=1 // pred_fallthru
      _
    // Predicated region
    $region38: #{seq2seq_forward.1} parent=1 // pred_check
      _
    $region39: #{seq2seq_forward.1} parent=1 // pred_check_branch
      %49 = sbr.rel (0) target = $region41
    $region40: #{seq2seq_forward.1} parent=1 // pred_region
      _
    $region41: #{seq2seq_forward.1} parent=1 // pred_fallthru
      _
    // Predicated region
    $region42: #{seq2seq_forward.1} parent=1 // pred_check
      _
    $region43: #{seq2seq_forward.1} parent=1 // pred_check_branch
      %51 = sbr.rel (0) target = $region45
    $region44: #{seq2seq_forward.1} parent=1 // pred_region
      _
    $region45: #{seq2seq_forward.1} parent=1 // pred_fallthru
      _
    // Predicated region
    $region46: #{seq2seq_forward.1} parent=1 // pred_check
      _
    $region47: #{seq2seq_forward.1} parent=1 // pred_check_branch
      %53 = sbr.rel (0) target = $region49
    $region48: #{seq2seq_forward.1} parent=1 // pred_region
      _
    $region49: #{seq2seq_forward.1} parent=1 // pred_fallthru
      _
    // Predicated region
    $region50: #{seq2seq_forward.1} parent=1 // pred_check
      _
    $region51: #{seq2seq_forward.1} parent=1 // pred_check_branch
      %55 = sbr.rel (0) target = $region53
    $region52: #{seq2seq_forward.1} parent=1 // pred_region
      _
    $region53: #{seq2seq_forward.1} parent=1 // pred_fallthru
      _
    // Predicated region
    $region54: #{seq2seq_forward.1} parent=1 // pred_check
      _
    $region55: #{seq2seq_forward.1} parent=1 // pred_check_branch
      %57 = sbr.rel (0) target = $region57
    $region56: #{seq2seq_forward.1} parent=1 // pred_region
      _
    $region57: #{seq2seq_forward.1} parent=1 // pred_fallthru
      _
    // Predicated region
    $region58: #{seq2seq_forward.1} parent=1 // pred_check
      _
    $region59: #{seq2seq_forward.1} parent=1 // pred_check_branch
      %59 = sbr.rel (0) target = $region61
    $region60: #{seq2seq_forward.1} parent=1 // pred_region
      _
    $region61: #{seq2seq_forward.1} parent=1 // pred_fallthru
      _
    // Predicated region
    $region62: #{seq2seq_forward.1} parent=1 // pred_check
      _
    $region63: #{seq2seq_forward.1} parent=1 // pred_check_branch
      %61 = sbr.rel (0) target = $region65
    $region64: #{seq2seq_forward.1} parent=1 // pred_region
      _
    $region65: #{seq2seq_forward.1} parent=1 // pred_fallthru
      _
    // Predicated region
    $region66: #{seq2seq_forward.1} parent=1 // pred_check
      _
    $region67: #{seq2seq_forward.1} parent=1 // pred_check_branch
      %63 = sbr.rel (0) target = $region69
    $region68: #{seq2seq_forward.1} parent=1 // pred_region
      _
    $region69: #{seq2seq_forward.1} parent=1 // pred_fallthru
      _
    %v64 = vld [vmem:[%s1] sm:$0xff]
    %v65 = vld [vmem:[%s3] sm:$0xff]
    %v66 = vld [vmem:[%s3 + $0x8] sm:$0xff]
    %v67 = vld [vmem:[%s4] sm:$0xff]
    %v68 = vld [vmem:[%s4 + $0x8] sm:$0xff]
    %v69 = vld [vmem:[%s4 + $0x10] sm:$0xff]
    %v70 = vld [vmem:[%s4 + $0x18] sm:$0xff]
    %vm71 = vcmask 261120
    %v73 = vsel %vm71, 0.0, 0
    %75 = vmatprep.subr.mxu0 0.0
    %76 = vmatpush1.msra.mxu0 %v67
    %77 = vmatprep.subr.mxu0 0.0
    %78 = vmatpush1.msra.mxu0 %v68
    %79 = vmatprep.subr.mxu0 0.0
    %80 = vmatpush1.msra.mxu0 %v69
    %81 = vmatprep.subr.mxu0 0.0
    %82 = vmatpush1.msra.mxu0 %v70
    %83 = vmatprep.subr.mxu0 0.0
    %84 = vmatpush1.msra.mxu0 0.0
    %85 = vmatprep.subr.mxu0 0.0
    %86 = vmatpush1.msra.mxu0 0.0
    %87 = vmatprep.subr.mxu0 0.0
    %88 = vmatpush1.msra.mxu0 0.0
    %89 = vmatprep.subr.mxu0 0.0
    %90 = vmatpush1.msra.mxu0 0.0
    %91 = vmatprep.subr.mxu0 0.0
    %92 = vmatpush1.msra.mxu0 0.0
    %93 = vmatprep.subr.mxu0 0.0
    %94 = vmatpush1.msra.mxu0 0.0
    %95 = vmatprep.subr.mxu0 0.0
    %96 = vmatpush1.msra.mxu0 0.0
    %97 = vmatprep.subr.mxu0 0.0
    %98 = vmatpush1.msra.mxu0 0.0
    %99 = vmatprep.subr.mxu0 0.0
    %100 = vmatpush1.msra.mxu0 0.0
    %101 = vmatprep.subr.mxu0 0.0
    %102 = vmatpush1.msra.mxu0 0.0
    %103 = vmatprep.subr.mxu0 0.0
    %104 = vmatpush1.msra.mxu0 0.0
    %105 = vmatprep.subr.mxu0 0.0
    %106 = vmatpush1.msra.mxu0 0.0
    %107 = vmatprep.subr.mxu0 0.0
    %108 = vmatpush1.msra.mxu0 0.0
    %109 = vmatprep.subr.mxu0 0.0
    %110 = vmatpush1.msra.mxu0 0.0
    %111 = vmatprep.subr.mxu0 0.0
    %112 = vmatpush1.msra.mxu0 0.0
    %113 = vmatprep.subr.mxu0 0.0
    %114 = vmatpush1.msra.mxu0 0.0
    %115 = vmatprep.subr.mxu0 0.0
    %116 = vmatpush1.msra.mxu0 0.0
    %117 = vmatprep.subr.mxu0 0.0
    %118 = vmatpush1.msra.mxu0 0.0
    %119 = vmatprep.subr.mxu0 0.0
    %120 = vmatpush1.msra.mxu0 0.0
    %121 = vmatprep.subr.mxu0 0.0
    %122 = vmatpush1.msra.mxu0 0.0
    %123 = vmatprep.subr.mxu0 0.0
    %124 = vmatpush1.msra.mxu0 0.0
    %125 = vmatprep.subr.mxu0 0.0
    %126 = vmatpush1.msra.mxu0 0.0
    %127 = vmatprep.subr.mxu0 0.0
    %128 = vmatpush1.msra.mxu0 0.0
    %129 = vmatprep.subr.mxu0 0.0
    %130 = vmatpush1.msra.mxu0 0.0
    %131 = vmatprep.subr.mxu0 0.0
    %132 = vmatpush1.msra.mxu0 0.0
    %133 = vmatprep.subr.mxu0 0.0
    %134 = vmatpush1.msra.mxu0 0.0
    %135 = vmatprep.subr.mxu0 0.0
    %136 = vmatpush1.msra.mxu0 0.0
    %137 = vmatprep.subr.mxu0 0.0
    %138 = vmatpush1.msra.mxu0 0.0
    %139 = vmatprep.mubr.f32.mxu0 0.0
    %140 = vmatmul.mubr.f32.gmra.mrb[0].mxu0 %v73
    %v141 = vpop.f32.mrb[0].mxu0
    %v142 = vadd.f32 0.0, %v141
    %v143 = vpop.f32.mrb[0].mxu0
    %144 = vdwg.mxu0
    %vm145 = vcmask 130048
    %v147 = vsel %vm145, %v64, 0
    %149 = vmatprep.subr.mxu0 0.0
    %150 = vmatpush1.msra.mxu0 %v65
    %151 = vmatprep.subr.mxu0 0.0
    %152 = vmatpush1.msra.mxu0 %v66
    %153 = vmatprep.subr.mxu0 0.0
    %154 = vmatpush1.msra.mxu0 0.0
    %155 = vmatprep.subr.mxu0 0.0
    %156 = vmatpush1.msra.mxu0 0.0
    %157 = vmatprep.subr.mxu0 0.0
    %158 = vmatpush1.msra.mxu0 0.0
    %159 = vmatprep.subr.mxu0 0.0
    %160 = vmatpush1.msra.mxu0 0.0
    %161 = vmatprep.subr.mxu0 0.0
    %162 = vmatpush1.msra.mxu0 0.0
    %163 = vmatprep.subr.mxu0 0.0
    %164 = vmatpush1.msra.mxu0 0.0
    %165 = vmatprep.subr.mxu0 0.0
    %166 = vmatpush1.msra.mxu0 0.0
    %167 = vmatprep.subr.mxu0 0.0
    %168 = vmatpush1.msra.mxu0 0.0
    %169 = vmatprep.subr.mxu0 0.0
    %170 = vmatpush1.msra.mxu0 0.0
    %171 = vmatprep.subr.mxu0 0.0
    %172 = vmatpush1.msra.mxu0 0.0
    %173 = vmatprep.subr.mxu0 0.0
    %174 = vmatpush1.msra.mxu0 0.0
    %175 = vmatprep.subr.mxu0 0.0
    %176 = vmatpush1.msra.mxu0 0.0
    %177 = vmatprep.subr.mxu0 0.0
    %178 = vmatpush1.msra.mxu0 0.0
    %179 = vmatprep.subr.mxu0 0.0
    %180 = vmatpush1.msra.mxu0 0.0
    %181 = vmatprep.subr.mxu0 0.0
    %182 = vmatpush1.msra.mxu0 0.0
    %183 = vmatprep.subr.mxu0 0.0
    %184 = vmatpush1.msra.mxu0 0.0
    %185 = vmatprep.subr.mxu0 0.0
    %186 = vmatpush1.msra.mxu0 0.0
    %187 = vmatprep.subr.mxu0 0.0
    %188 = vmatpush1.msra.mxu0 0.0
    %189 = vmatprep.subr.mxu0 0.0
    %190 = vmatpush1.msra.mxu0 0.0
    %191 = vmatprep.subr.mxu0 0.0
    %192 = vmatpush1.msra.mxu0 0.0
    %193 = vmatprep.subr.mxu0 0.0
    %194 = vmatpush1.msra.mxu0 0.0
    %195 = vmatprep.subr.mxu0 0.0
    %196 = vmatpush1.msra.mxu0 0.0
    %197 = vmatprep.subr.mxu0 0.0
    %198 = vmatpush1.msra.mxu0 0.0
    %199 = vmatprep.subr.mxu0 0.0
    %200 = vmatpush1.msra.mxu0 0.0
    %201 = vmatprep.subr.mxu0 0.0
    %202 = vmatpush1.msra.mxu0 0.0
    %203 = vmatprep.subr.mxu0 0.0
    %204 = vmatpush1.msra.mxu0 0.0
    %205 = vmatprep.subr.mxu0 0.0
    %206 = vmatpush1.msra.mxu0 0.0
    %207 = vmatprep.subr.mxu0 0.0
    %208 = vmatpush1.msra.mxu0 0.0
    %209 = vmatprep.subr.mxu0 0.0
    %210 = vmatpush1.msra.mxu0 0.0
    %211 = vmatprep.subr.mxu0 0.0
    %212 = vmatpush1.msra.mxu0 0.0
    %213 = vmatprep.mubr.f32.mxu0 0.0
    %214 = vmatmul.mubr.f32.gmra.mrb[0].mxu0 %v147
    %v215 = vpop.f32.mrb[0].mxu0
    %v216 = vadd.f32 %v142, %v215
    %v217 = vpop.f32.mrb[0].mxu0
    %218 = vdwg.mxu0
    %v219 = vld [vmem:[%s5] sm:$0x1]
    %v221 = vlaneseq
    %v222 = vshrl.u32 %v221, 7
    %v223 = vsub.s32 0, %v222
    %v224 = vrot.slane %v219, %v223
    %v226 = vadd.f32 %v216, %v224
    %v227 = vxor.u32 %v226, 2147483648
    %v228 = vmul.f32 %v227, 1.442695
    %v229 = vpow.pop %v228
    %v230 = vadd.f32 %v229, 1.0
    %v231 = vrcp.pop %v230
    %v232 = vmul.f32 1.0, %v231
    %v233 = vtanh.pop %v226
    %v234 = vmul.f32 %v232, 0.0
    %236 = vrot.lane.b32.xlu0 %v233, 64
    %v237 = vpop.permute.xlu0 %236
    %v239 = vmul.f32 %v232, %v237
    %241 = vrot.lane.b32.xlu0 %v239, 32
    %v242 = vpop.permute.xlu0 %241
    %v244 = vadd.f32 %v234, %v242
    %v245 = vtanh.pop %v244
    %247 = vrot.lane.b32.xlu0 %v245, 64
    %v248 = vpop.permute.xlu0 %247
    %v250 = vmul.f32 %v232, %v248
    %v251 = vld [vmem:[%s6] sm:$0xff]
    %v252 = vld [vmem:[%s6 + $0x8] sm:$0xff]
    %v253 = vld [vmem:[%s6 + $0x10] sm:$0xff]
    %v254 = vld [vmem:[%s6 + $0x18] sm:$0xff]
    %v255 = vld [vmem:[%s7] sm:$0xff]
    %v256 = vld [vmem:[%s7 + $0x8] sm:$0xff]
    %v257 = vld [vmem:[%s7 + $0x10] sm:$0xff]
    %v258 = vld [vmem:[%s7 + $0x18] sm:$0xff]
    %259 = vmatprep.subr.mxu0 0.0
    %260 = vmatpush1.msra.mxu0 %v255
    %261 = vmatprep.subr.mxu0 0.0
    %262 = vmatpush1.msra.mxu0 %v256
    %263 = vmatprep.subr.mxu0 0.0
    %264 = vmatpush1.msra.mxu0 %v257
    %265 = vmatprep.subr.mxu0 0.0
    %266 = vmatpush1.msra.mxu0 %v258
    %267 = vmatprep.subr.mxu0 0.0
    %268 = vmatpush1.msra.mxu0 0.0
    %269 = vmatprep.subr.mxu0 0.0
    %270 = vmatpush1.msra.mxu0 0.0
    %271 = vmatprep.subr.mxu0 0.0
    %272 = vmatpush1.msra.mxu0 0.0
    %273 = vmatprep.subr.mxu0 0.0
    %274 = vmatpush1.msra.mxu0 0.0
    %275 = vmatprep.subr.mxu0 0.0
    %276 = vmatpush1.msra.mxu0 0.0
    %277 = vmatprep.subr.mxu0 0.0
    %278 = vmatpush1.msra.mxu0 0.0
    %279 = vmatprep.subr.mxu0 0.0
    %280 = vmatpush1.msra.mxu0 0.0
    %281 = vmatprep.subr.mxu0 0.0
    %282 = vmatpush1.msra.mxu0 0.0
    %283 = vmatprep.subr.mxu0 0.0
    %284 = vmatpush1.msra.mxu0 0.0
    %285 = vmatprep.subr.mxu0 0.0
    %286 = vmatpush1.msra.mxu0 0.0
    %287 = vmatprep.subr.mxu0 0.0
    %288 = vmatpush1.msra.mxu0 0.0
    %289 = vmatprep.subr.mxu0 0.0
    %290 = vmatpush1.msra.mxu0 0.0
    %291 = vmatprep.subr.mxu0 0.0
    %292 = vmatpush1.msra.mxu0 0.0
    %293 = vmatprep.subr.mxu0 0.0
    %294 = vmatpush1.msra.mxu0 0.0
    %295 = vmatprep.subr.mxu0 0.0
    %296 = vmatpush1.msra.mxu0 0.0
    %297 = vmatprep.subr.mxu0 0.0
    %298 = vmatpush1.msra.mxu0 0.0
    %299 = vmatprep.subr.mxu0 0.0
    %300 = vmatpush1.msra.mxu0 0.0
    %301 = vmatprep.subr.mxu0 0.0
    %302 = vmatpush1.msra.mxu0 0.0
    %303 = vmatprep.subr.mxu0 0.0
    %304 = vmatpush1.msra.mxu0 0.0
    %305 = vmatprep.subr.mxu0 0.0
    %306 = vmatpush1.msra.mxu0 0.0
    %307 = vmatprep.subr.mxu0 0.0
    %308 = vmatpush1.msra.mxu0 0.0
    %309 = vmatprep.subr.mxu0 0.0
    %310 = vmatpush1.msra.mxu0 0.0
    %311 = vmatprep.subr.mxu0 0.0
    %312 = vmatpush1.msra.mxu0 0.0
    %313 = vmatprep.subr.mxu0 0.0
    %314 = vmatpush1.msra.mxu0 0.0
    %315 = vmatprep.subr.mxu0 0.0
    %316 = vmatpush1.msra.mxu0 0.0
    %317 = vmatprep.subr.mxu0 0.0
    %318 = vmatpush1.msra.mxu0 0.0
    %319 = vmatprep.subr.mxu0 0.0
    %320 = vmatpush1.msra.mxu0 0.0
    %321 = vmatprep.subr.mxu0 0.0
    %322 = vmatpush1.msra.mxu0 0.0
    %323 = vmatprep.mubr.f32.mxu0 0.0
    %324 = vmatmul.mubr.f32.gmra.mrb[0].mxu0 %v73
    %v325 = vpop.f32.mrb[0].mxu0
    %v326 = vadd.f32 0.0, %v325
    %v327 = vpop.f32.mrb[0].mxu0
    %328 = vdwg.mxu0
    %330 = vrot.lane.b32.xlu0 %v250, 32
    %v331 = vpop.permute.xlu0 %330
    %v332 = vsel %vm71, %v331, 0
    %334 = vmatprep.subr.mxu0 0.0
    %335 = vmatpush1.msra.mxu0 %v251
    %336 = vmatprep.subr.mxu0 0.0
    %337 = vmatpush1.msra.mxu0 %v252
    %338 = vmatprep.subr.mxu0 0.0
    %339 = vmatpush1.msra.mxu0 %v253
    %340 = vmatprep.subr.mxu0 0.0
    %341 = vmatpush1.msra.mxu0 %v254
    %342 = vmatprep.subr.mxu0 0.0
    %343 = vmatpush1.msra.mxu0 0.0
    %344 = vmatprep.subr.mxu0 0.0
    %345 = vmatpush1.msra.mxu0 0.0
    %346 = vmatprep.subr.mxu0 0.0
    %347 = vmatpush1.msra.mxu0 0.0
    %348 = vmatprep.subr.mxu0 0.0
    %349 = vmatpush1.msra.mxu0 0.0
    %350 = vmatprep.subr.mxu0 0.0
    %351 = vmatpush1.msra.mxu0 0.0
    %352 = vmatprep.subr.mxu0 0.0
    %353 = vmatpush1.msra.mxu0 0.0
    %354 = vmatprep.subr.mxu0 0.0
    %355 = vmatpush1.msra.mxu0 0.0
    %356 = vmatprep.subr.mxu0 0.0
    %357 = vmatpush1.msra.mxu0 0.0
    %358 = vmatprep.subr.mxu0 0.0
    %359 = vmatpush1.msra.mxu0 0.0
    %360 = vmatprep.subr.mxu0 0.0
    %361 = vmatpush1.msra.mxu0 0.0
    %362 = vmatprep.subr.mxu0 0.0
    %363 = vmatpush1.msra.mxu0 0.0
    %364 = vmatprep.subr.mxu0 0.0
    %365 = vmatpush1.msra.mxu0 0.0
    %366 = vmatprep.subr.mxu0 0.0
    %367 = vmatpush1.msra.mxu0 0.0
    %368 = vmatprep.subr.mxu0 0.0
    %369 = vmatpush1.msra.mxu0 0.0
    %370 = vmatprep.subr.mxu0 0.0
    %371 = vmatpush1.msra.mxu0 0.0
    %372 = vmatprep.subr.mxu0 0.0
    %373 = vmatpush1.msra.mxu0 0.0
    %374 = vmatprep.subr.mxu0 0.0
    %375 = vmatpush1.msra.mxu0 0.0
    %376 = vmatprep.subr.mxu0 0.0
    %377 = vmatpush1.msra.mxu0 0.0
    %378 = vmatprep.subr.mxu0 0.0
    %379 = vmatpush1.msra.mxu0 0.0
    %380 = vmatprep.subr.mxu0 0.0
    %381 = vmatpush1.msra.mxu0 0.0
    %382 = vmatprep.subr.mxu0 0.0
    %383 = vmatpush1.msra.mxu0 0.0
    %384 = vmatprep.subr.mxu0 0.0
    %385 = vmatpush1.msra.mxu0 0.0
    %386 = vmatprep.subr.mxu0 0.0
    %387 = vmatpush1.msra.mxu0 0.0
    %388 = vmatprep.subr.mxu0 0.0
    %389 = vmatpush1.msra.mxu0 0.0
    %390 = vmatprep.subr.mxu0 0.0
    %391 = vmatpush1.msra.mxu0 0.0
    %392 = vmatprep.subr.mxu0 0.0
    %393 = vmatpush1.msra.mxu0 0.0
    %394 = vmatprep.subr.mxu0 0.0
    %395 = vmatpush1.msra.mxu0 0.0
    %396 = vmatprep.subr.mxu0 0.0
    %397 = vmatpush1.msra.mxu0 0.0
    %398 = vmatprep.mubr.f32.mxu0 0.0
    %399 = vmatmul.mubr.f32.gmra.mrb[0].mxu0 %v332
    %v400 = vpop.f32.mrb[0].mxu0
    %v401 = vadd.f32 %v326, %v400
    %v402 = vpop.f32.mrb[0].mxu0
    %403 = vdwg.mxu0
    %v404 = vld [vmem:[%s8] sm:$0x1]
    %v406 = vlaneseq
    %v407 = vshrl.u32 %v406, 7
    %v408 = vsub.s32 0, %v407
    %v409 = vrot.slane %v404, %v408
    %v411 = vadd.f32 %v401, %v409
    %v412 = vxor.u32 %v411, 2147483648
    %v413 = vmul.f32 %v412, 1.442695
    %v414 = vpow.pop %v413
    %v415 = vadd.f32 %v414, 1.0
    %v416 = vrcp.pop %v415
    %v417 = vmul.f32 1.0, %v416
    %v418 = vtanh.pop %v411
    %v419 = vmul.f32 %v417, 0.0
    %421 = vrot.lane.b32.xlu0 %v418, 64
    %v422 = vpop.permute.xlu0 %421
    %v424 = vmul.f32 %v417, %v422
    %426 = vrot.lane.b32.xlu0 %v424, 32
    %v427 = vpop.permute.xlu0 %426
    %v429 = vadd.f32 %v419, %v427
    %v430 = vtanh.pop %v429
    %432 = vrot.lane.b32.xlu0 %v430, 64
    %v433 = vpop.permute.xlu0 %432
    %v435 = vmul.f32 %v417, %v433
    %s436 = scalar_lea.vmem %s1, 8
    %v437 = vld [vmem:[%s436] sm:$0xff]
    %438 = vmatprep.subr.mxu0 0.0
    %439 = vmatpush1.msra.mxu0 %v67
    %440 = vmatprep.subr.mxu0 0.0
    %441 = vmatpush1.msra.mxu0 %v68
    %442 = vmatprep.subr.mxu0 0.0
    %443 = vmatpush1.msra.mxu0 %v69
    %444 = vmatprep.subr.mxu0 0.0
    %445 = vmatpush1.msra.mxu0 %v70
    %446 = vmatprep.subr.mxu0 0.0
    %447 = vmatpush1.msra.mxu0 0.0
    %448 = vmatprep.subr.mxu0 0.0
    %449 = vmatpush1.msra.mxu0 0.0
    %450 = vmatprep.subr.mxu0 0.0
    %451 = vmatpush1.msra.mxu0 0.0
    %452 = vmatprep.subr.mxu0 0.0
    %453 = vmatpush1.msra.mxu0 0.0
    %454 = vmatprep.subr.mxu0 0.0
    %455 = vmatpush1.msra.mxu0 0.0
    %456 = vmatprep.subr.mxu0 0.0
    %457 = vmatpush1.msra.mxu0 0.0
    %458 = vmatprep.subr.mxu0 0.0
    %459 = vmatpush1.msra.mxu0 0.0
    %460 = vmatprep.subr.mxu0 0.0
    %461 = vmatpush1.msra.mxu0 0.0
    %462 = vmatprep.subr.mxu0 0.0
    %463 = vmatpush1.msra.mxu0 0.0
    %464 = vmatprep.subr.mxu0 0.0
    %465 = vmatpush1.msra.mxu0 0.0
    %466 = vmatprep.subr.mxu0 0.0
    %467 = vmatpush1.msra.mxu0 0.0
    %468 = vmatprep.subr.mxu0 0.0
    %469 = vmatpush1.msra.mxu0 0.0
    %470 = vmatprep.subr.mxu0 0.0
    %471 = vmatpush1.msra.mxu0 0.0
    %472 = vmatprep.subr.mxu0 0.0
    %473 = vmatpush1.msra.mxu0 0.0
    %474 = vmatprep.subr.mxu0 0.0
    %475 = vmatpush1.msra.mxu0 0.0
    %476 = vmatprep.subr.mxu0 0.0
    %477 = vmatpush1.msra.mxu0 0.0
    %478 = vmatprep.subr.mxu0 0.0
    %479 = vmatpush1.msra.mxu0 0.0
    %480 = vmatprep.subr.mxu0 0.0
    %481 = vmatpush1.msra.mxu0 0.0
    %482 = vmatprep.subr.mxu0 0.0
    %483 = vmatpush1.msra.mxu0 0.0
    %484 = vmatprep.subr.mxu0 0.0
    %485 = vmatpush1.msra.mxu0 0.0
    %486 = vmatprep.subr.mxu0 0.0
    %487 = vmatpush1.msra.mxu0 0.0
    %488 = vmatprep.subr.mxu0 0.0
    %489 = vmatpush1.msra.mxu0 0.0
    %490 = vmatprep.subr.mxu0 0.0
    %491 = vmatpush1.msra.mxu0 0.0
    %492 = vmatprep.subr.mxu0 0.0
    %493 = vmatpush1.msra.mxu0 0.0
    %494 = vmatprep.subr.mxu0 0.0
    %495 = vmatpush1.msra.mxu0 0.0
    %496 = vmatprep.subr.mxu0 0.0
    %497 = vmatpush1.msra.mxu0 0.0
    %498 = vmatprep.subr.mxu0 0.0
    %499 = vmatpush1.msra.mxu0 0.0
    %500 = vmatprep.subr.mxu0 0.0
    %501 = vmatpush1.msra.mxu0 0.0
    %502 = vmatprep.mubr.f32.mxu0 0.0
    %503 = vmatmul.mubr.f32.gmra.mrb[0].mxu0 %v332
    %v504 = vpop.f32.mrb[0].mxu0
    %v505 = vadd.f32 0.0, %v504
    %v506 = vpop.f32.mrb[0].mxu0
    %507 = vdwg.mxu0
    %v509 = vsel %vm145, %v437, 0
    %511 = vmatprep.subr.mxu0 0.0
    %512 = vmatpush1.msra.mxu0 %v65
    %513 = vmatprep.subr.mxu0 0.0
    %514 = vmatpush1.msra.mxu0 %v66
    %515 = vmatprep.subr.mxu0 0.0
    %516 = vmatpush1.msra.mxu0 0.0
    %517 = vmatprep.subr.mxu0 0.0
    %518 = vmatpush1.msra.mxu0 0.0
    %519 = vmatprep.subr.mxu0 0.0
    %520 = vmatpush1.msra.mxu0 0.0
    %521 = vmatprep.subr.mxu0 0.0
    %522 = vmatpush1.msra.mxu0 0.0
    %523 = vmatprep.subr.mxu0 0.0
    %524 = vmatpush1.msra.mxu0 0.0
    %525 = vmatprep.subr.mxu0 0.0
    %526 = vmatpush1.msra.mxu0 0.0
    %527 = vmatprep.subr.mxu0 0.0
    %528 = vmatpush1.msra.mxu0 0.0
    %529 = vmatprep.subr.mxu0 0.0
    %530 = vmatpush1.msra.mxu0 0.0
    %531 = vmatprep.subr.mxu0 0.0
    %532 = vmatpush1.msra.mxu0 0.0
    %533 = vmatprep.subr.mxu0 0.0
    %534 = vmatpush1.msra.mxu0 0.0
    %535 = vmatprep.subr.mxu0 0.0
    %536 = vmatpush1.msra.mxu0 0.0
    %537 = vmatprep.subr.mxu0 0.0
    %538 = vmatpush1.msra.mxu0 0.0
    %539 = vmatprep.subr.mxu0 0.0
    %540 = vmatpush1.msra.mxu0 0.0
    %541 = vmatprep.subr.mxu0 0.0
    %542 = vmatpush1.msra.mxu0 0.0
    %543 = vmatprep.subr.mxu0 0.0
    %544 = vmatpush1.msra.mxu0 0.0
    %545 = vmatprep.subr.mxu0 0.0
    %546 = vmatpush1.msra.mxu0 0.0
    %547 = vmatprep.subr.mxu0 0.0
    %548 = vmatpush1.msra.mxu0 0.0
    %549 = vmatprep.subr.mxu0 0.0
    %550 = vmatpush1.msra.mxu0 0.0
    %551 = vmatprep.subr.mxu0 0.0
    %552 = vmatpush1.msra.mxu0 0.0
    %553 = vmatprep.subr.mxu0 0.0
    %554 = vmatpush1.msra.mxu0 0.0
    %555 = vmatprep.subr.mxu0 0.0
    %556 = vmatpush1.msra.mxu0 0.0
    %557 = vmatprep.subr.mxu0 0.0
    %558 = vmatpush1.msra.mxu0 0.0
    %559 = vmatprep.subr.mxu0 0.0
    %560 = vmatpush1.msra.mxu0 0.0
    %561 = vmatprep.subr.mxu0 0.0
    %562 = vmatpush1.msra.mxu0 0.0
    %563 = vmatprep.subr.mxu0 0.0
    %564 = vmatpush1.msra.mxu0 0.0
    %565 = vmatprep.subr.mxu0 0.0
    %566 = vmatpush1.msra.mxu0 0.0
    %567 = vmatprep.subr.mxu0 0.0
    %568 = vmatpush1.msra.mxu0 0.0
    %569 = vmatprep.subr.mxu0 0.0
    %570 = vmatpush1.msra.mxu0 0.0
    %571 = vmatprep.subr.mxu0 0.0
    %572 = vmatpush1.msra.mxu0 0.0
    %573 = vmatprep.subr.mxu0 0.0
    %574 = vmatpush1.msra.mxu0 0.0
    %575 = vmatprep.mubr.f32.mxu0 0.0
    %576 = vmatmul.mubr.f32.gmra.mrb[0].mxu0 %v509
    %v577 = vpop.f32.mrb[0].mxu0
    %v578 = vadd.f32 %v505, %v577
    %v579 = vpop.f32.mrb[0].mxu0
    %580 = vdwg.mxu0
    %v581 = vadd.f32 %v578, %v224
    %v582 = vxor.u32 %v581, 2147483648
    %v583 = vmul.f32 %v582, 1.442695
    %v584 = vpow.pop %v583
    %v585 = vadd.f32 %v584, 1.0
    %v586 = vrcp.pop %v585
    %v587 = vmul.f32 1.0, %v586
    %v588 = vtanh.pop %v581
    %v589 = vmul.f32 %v587, %v244
    %591 = vrot.lane.b32.xlu0 %v588, 64
    %v592 = vpop.permute.xlu0 %591
    %v594 = vmul.f32 %v587, %v592
    %596 = vrot.lane.b32.xlu0 %v594, 32
    %v597 = vpop.permute.xlu0 %596
    %v599 = vadd.f32 %v589, %v597
    %v600 = vtanh.pop %v599
    %602 = vrot.lane.b32.xlu0 %v600, 64
    %v603 = vpop.permute.xlu0 %602
    %v605 = vmul.f32 %v587, %v603
    %607 = vrot.lane.b32.xlu0 %v435, 32
    %v608 = vpop.permute.xlu0 %607
    %v609 = vsel %vm71, %v608, 0
    %611 = vmatprep.subr.mxu0 0.0
    %612 = vmatpush1.msra.mxu0 %v255
    %613 = vmatprep.subr.mxu0 0.0
    %614 = vmatpush1.msra.mxu0 %v256
    %615 = vmatprep.subr.mxu0 0.0
    %616 = vmatpush1.msra.mxu0 %v257
    %617 = vmatprep.subr.mxu0 0.0
    %618 = vmatpush1.msra.mxu0 %v258
    %619 = vmatprep.subr.mxu0 0.0
    %620 = vmatpush1.msra.mxu0 0.0
    %621 = vmatprep.subr.mxu0 0.0
    %622 = vmatpush1.msra.mxu0 0.0
    %623 = vmatprep.subr.mxu0 0.0
    %624 = vmatpush1.msra.mxu0 0.0
    %625 = vmatprep.subr.mxu0 0.0
    %626 = vmatpush1.msra.mxu0 0.0
    %627 = vmatprep.subr.mxu0 0.0
    %628 = vmatpush1.msra.mxu0 0.0
    %629 = vmatprep.subr.mxu0 0.0
    %630 = vmatpush1.msra.mxu0 0.0
    %631 = vmatprep.subr.mxu0 0.0
    %632 = vmatpush1.msra.mxu0 0.0
    %633 = vmatprep.subr.mxu0 0.0
    %634 = vmatpush1.msra.mxu0 0.0
    %635 = vmatprep.subr.mxu0 0.0
    %636 = vmatpush1.msra.mxu0 0.0
    %637 = vmatprep.subr.mxu0 0.0
    %638 = vmatpush1.msra.mxu0 0.0
    %639 = vmatprep.subr.mxu0 0.0
    %640 = vmatpush1.msra.mxu0 0.0
    %641 = vmatprep.subr.mxu0 0.0
    %642 = vmatpush1.msra.mxu0 0.0
    %643 = vmatprep.subr.mxu0 0.0
    %644 = vmatpush1.msra.mxu0 0.0
    %645 = vmatprep.subr.mxu0 0.0
    %646 = vmatpush1.msra.mxu0 0.0
    %647 = vmatprep.subr.mxu0 0.0
    %648 = vmatpush1.msra.mxu0 0.0
    %649 = vmatprep.subr.mxu0 0.0
    %650 = vmatpush1.msra.mxu0 0.0
    %651 = vmatprep.subr.mxu0 0.0
    %652 = vmatpush1.msra.mxu0 0.0
    %653 = vmatprep.subr.mxu0 0.0
    %654 = vmatpush1.msra.mxu0 0.0
    %655 = vmatprep.subr.mxu0 0.0
    %656 = vmatpush1.msra.mxu0 0.0
    %657 = vmatprep.subr.mxu0 0.0
    %658 = vmatpush1.msra.mxu0 0.0
    %659 = vmatprep.subr.mxu0 0.0
    %660 = vmatpush1.msra.mxu0 0.0
    %661 = vmatprep.subr.mxu0 0.0
    %662 = vmatpush1.msra.mxu0 0.0
    %663 = vmatprep.subr.mxu0 0.0
    %664 = vmatpush1.msra.mxu0 0.0
    %665 = vmatprep.subr.mxu0 0.0
    %666 = vmatpush1.msra.mxu0 0.0
    %667 = vmatprep.subr.mxu0 0.0
    %668 = vmatpush1.msra.mxu0 0.0
    %669 = vmatprep.subr.mxu0 0.0
    %670 = vmatpush1.msra.mxu0 0.0
    %671 = vmatprep.subr.mxu0 0.0
    %672 = vmatpush1.msra.mxu0 0.0
    %673 = vmatprep.subr.mxu0 0.0
    %674 = vmatpush1.msra.mxu0 0.0
    %675 = vmatprep.mubr.f32.mxu0 0.0
    %676 = vmatmul.mubr.f32.gmra.mrb[0].mxu0 %v609
    %v677 = vpop.f32.mrb[0].mxu0
    %v678 = vadd.f32 0.0, %v677
    %v679 = vpop.f32.mrb[0].mxu0
    %680 = vdwg.mxu0
    %682 = vrot.lane.b32.xlu0 %v605, 32
    %v683 = vpop.permute.xlu0 %682
    %v684 = vsel %vm71, %v683, 0
    %686 = vmatprep.subr.mxu0 0.0
    %687 = vmatpush1.msra.mxu0 %v251
    %688 = vmatprep.subr.mxu0 0.0
    %689 = vmatpush1.msra.mxu0 %v252
    %690 = vmatprep.subr.mxu0 0.0
    %691 = vmatpush1.msra.mxu0 %v253
    %692 = vmatprep.subr.mxu0 0.0
    %693 = vmatpush1.msra.mxu0 %v254
    %694 = vmatprep.subr.mxu0 0.0
    %695 = vmatpush1.msra.mxu0 0.0
    %696 = vmatprep.subr.mxu0 0.0
    %697 = vmatpush1.msra.mxu0 0.0
    %698 = vmatprep.subr.mxu0 0.0
    %699 = vmatpush1.msra.mxu0 0.0
    %700 = vmatprep.subr.mxu0 0.0
    %701 = vmatpush1.msra.mxu0 0.0
    %702 = vmatprep.subr.mxu0 0.0
    %703 = vmatpush1.msra.mxu0 0.0
    %704 = vmatprep.subr.mxu0 0.0
    %705 = vmatpush1.msra.mxu0 0.0
    %706 = vmatprep.subr.mxu0 0.0
    %707 = vmatpush1.msra.mxu0 0.0
    %708 = vmatprep.subr.mxu0 0.0
    %709 = vmatpush1.msra.mxu0 0.0
    %710 = vmatprep.subr.mxu0 0.0
    %711 = vmatpush1.msra.mxu0 0.0
    %712 = vmatprep.subr.mxu0 0.0
    %713 = vmatpush1.msra.mxu0 0.0
    %714 = vmatprep.subr.mxu0 0.0
    %715 = vmatpush1.msra.mxu0 0.0
    %716 = vmatprep.subr.mxu0 0.0
    %717 = vmatpush1.msra.mxu0 0.0
    %718 = vmatprep.subr.mxu0 0.0
    %719 = vmatpush1.msra.mxu0 0.0
    %720 = vmatprep.subr.mxu0 0.0
    %721 = vmatpush1.msra.mxu0 0.0
    %722 = vmatprep.subr.mxu0 0.0
    %723 = vmatpush1.msra.mxu0 0.0
    %724 = vmatprep.subr.mxu0 0.0
    %725 = vmatpush1.msra.mxu0 0.0
    %726 = vmatprep.subr.mxu0 0.0
    %727 = vmatpush1.msra.mxu0 0.0
    %728 = vmatprep.subr.mxu0 0.0
    %729 = vmatpush1.msra.mxu0 0.0
    %730 = vmatprep.subr.mxu0 0.0
    %731 = vmatpush1.msra.mxu0 0.0
    %732 = vmatprep.subr.mxu0 0.0
    %733 = vmatpush1.msra.mxu0 0.0
    %734 = vmatprep.subr.mxu0 0.0
    %735 = vmatpush1.msra.mxu0 0.0
    %736 = vmatprep.subr.mxu0 0.0
    %737 = vmatpush1.msra.mxu0 0.0
    %738 = vmatprep.subr.mxu0 0.0
    %739 = vmatpush1.msra.mxu0 0.0
    %740 = vmatprep.subr.mxu0 0.0
    %741 = vmatpush1.msra.mxu0 0.0
    %742 = vmatprep.subr.mxu0 0.0
    %743 = vmatpush1.msra.mxu0 0.0
    %744 = vmatprep.subr.mxu0 0.0
    %745 = vmatpush1.msra.mxu0 0.0
    %746 = vmatprep.subr.mxu0 0.0
    %747 = vmatpush1.msra.mxu0 0.0
    %748 = vmatprep.subr.mxu0 0.0
    %749 = vmatpush1.msra.mxu0 0.0
    %750 = vmatprep.mubr.f32.mxu0 0.0
    %751 = vmatmul.mubr.f32.gmra.mrb[0].mxu0 %v684
    %v752 = vpop.f32.mrb[0].mxu0
    %v753 = vadd.f32 %v678, %v752
    %v754 = vpop.f32.mrb[0].mxu0
    %755 = vdwg.mxu0
    %v756 = vadd.f32 %v753, %v409
    %v757 = vxor.u32 %v756, 2147483648
    %v758 = vmul.f32 %v757, 1.442695
    %v759 = vpow.pop %v758
    %v760 = vadd.f32 %v759, 1.0
    %v761 = vrcp.pop %v760
    %v762 = vmul.f32 1.0, %v761
    %v763 = vtanh.pop %v756
    %v764 = vmul.f32 %v762, %v429
    %766 = vrot.lane.b32.xlu0 %v763, 64
    %v767 = vpop.permute.xlu0 %766
    %v769 = vmul.f32 %v762, %v767
    %771 = vrot.lane.b32.xlu0 %v769, 32
    %v772 = vpop.permute.xlu0 %771
    %v774 = vadd.f32 %v764, %v772
    %v775 = vtanh.pop %v774
    %777 = vrot.lane.b32.xlu0 %v775, 64
    %v778 = vpop.permute.xlu0 %777
    %v780 = vmul.f32 %v762, %v778
    %s781 = scalar_lea.vmem %s1, 16
    %v782 = vld [vmem:[%s781] sm:$0xff]
    %783 = vmatprep.subr.mxu0 0.0
    %784 = vmatpush1.msra.mxu0 %v67
    %785 = vmatprep.subr.mxu0 0.0
    %786 = vmatpush1.msra.mxu0 %v68
    %787 = vmatprep.subr.mxu0 0.0
    %788 = vmatpush1.msra.mxu0 %v69
    %789 = vmatprep.subr.mxu0 0.0
    %790 = vmatpush1.msra.mxu0 %v70
    %791 = vmatprep.subr.mxu0 0.0
    %792 = vmatpush1.msra.mxu0 0.0
    %793 = vmatprep.subr.mxu0 0.0
    %794 = vmatpush1.msra.mxu0 0.0
    %795 = vmatprep.subr.mxu0 0.0
    %796 = vmatpush1.msra.mxu0 0.0
    %797 = vmatprep.subr.mxu0 0.0
    %798 = vmatpush1.msra.mxu0 0.0
    %799 = vmatprep.subr.mxu0 0.0
    %800 = vmatpush1.msra.mxu0 0.0
    %801 = vmatprep.subr.mxu0 0.0
    %802 = vmatpush1.msra.mxu0 0.0
    %803 = vmatprep.subr.mxu0 0.0
    %804 = vmatpush1.msra.mxu0 0.0
    %805 = vmatprep.subr.mxu0 0.0
    %806 = vmatpush1.msra.mxu0 0.0
    %807 = vmatprep.subr.mxu0 0.0
    %808 = vmatpush1.msra.mxu0 0.0
    %809 = vmatprep.subr.mxu0 0.0
    %810 = vmatpush1.msra.mxu0 0.0
    %811 = vmatprep.subr.mxu0 0.0
    %812 = vmatpush1.msra.mxu0 0.0
    %813 = vmatprep.subr.mxu0 0.0
    %814 = vmatpush1.msra.mxu0 0.0
    %815 = vmatprep.subr.mxu0 0.0
    %816 = vmatpush1.msra.mxu0 0.0
    %817 = vmatprep.subr.mxu0 0.0
    %818 = vmatpush1.msra.mxu0 0.0
    %819 = vmatprep.subr.mxu0 0.0
    %820 = vmatpush1.msra.mxu0 0.0
    %821 = vmatprep.subr.mxu0 0.0
    %822 = vmatpush1.msra.mxu0 0.0
    %823 = vmatprep.subr.mxu0 0.0
    %824 = vmatpush1.msra.mxu0 0.0
    %825 = vmatprep.subr.mxu0 0.0
    %826 = vmatpush1.msra.mxu0 0.0
    %827 = vmatprep.subr.mxu0 0.0
    %828 = vmatpush1.msra.mxu0 0.0
    %829 = vmatprep.subr.mxu0 0.0
    %830 = vmatpush1.msra.mxu0 0.0
    %831 = vmatprep.subr.mxu0 0.0
    %832 = vmatpush1.msra.mxu0 0.0
    %833 = vmatprep.subr.mxu0 0.0
    %834 = vmatpush1.msra.mxu0 0.0
    %835 = vmatprep.subr.mxu0 0.0
    %836 = vmatpush1.msra.mxu0 0.0
    %837 = vmatprep.subr.mxu0 0.0
    %838 = vmatpush1.msra.mxu0 0.0
    %839 = vmatprep.subr.mxu0 0.0
    %840 = vmatpush1.msra.mxu0 0.0
    %841 = vmatprep.subr.mxu0 0.0
    %842 = vmatpush1.msra.mxu0 0.0
    %843 = vmatprep.subr.mxu0 0.0
    %844 = vmatpush1.msra.mxu0 0.0
    %845 = vmatprep.subr.mxu0 0.0
    %846 = vmatpush1.msra.mxu0 0.0
    %847 = vmatprep.mubr.f32.mxu0 0.0
    %848 = vmatmul.mubr.f32.gmra.mrb[0].mxu0 %v684
    %v849 = vpop.f32.mrb[0].mxu0
    %v850 = vadd.f32 0.0, %v849
    %v851 = vpop.f32.mrb[0].mxu0
    %852 = vdwg.mxu0
    %v854 = vsel %vm145, %v782, 0
    %856 = vmatprep.subr.mxu0 0.0
    %857 = vmatpush1.msra.mxu0 %v65
    %858 = vmatprep.subr.mxu0 0.0
    %859 = vmatpush1.msra.mxu0 %v66
    %860 = vmatprep.subr.mxu0 0.0
    %861 = vmatpush1.msra.mxu0 0.0
    %862 = vmatprep.subr.mxu0 0.0
    %863 = vmatpush1.msra.mxu0 0.0
    %864 = vmatprep.subr.mxu0 0.0
    %865 = vmatpush1.msra.mxu0 0.0
    %866 = vmatprep.subr.mxu0 0.0
    %867 = vmatpush1.msra.mxu0 0.0
    %868 = vmatprep.subr.mxu0 0.0
    %869 = vmatpush1.msra.mxu0 0.0
    %870 = vmatprep.subr.mxu0 0.0
    %871 = vmatpush1.msra.mxu0 0.0
    %872 = vmatprep.subr.mxu0 0.0
    %873 = vmatpush1.msra.mxu0 0.0
    %874 = vmatprep.subr.mxu0 0.0
    %875 = vmatpush1.msra.mxu0 0.0
    %876 = vmatprep.subr.mxu0 0.0
    %877 = vmatpush1.msra.mxu0 0.0
    %878 = vmatprep.subr.mxu0 0.0
    %879 = vmatpush1.msra.mxu0 0.0
    %880 = vmatprep.subr.mxu0 0.0
    %881 = vmatpush1.msra.mxu0 0.0
    %882 = vmatprep.subr.mxu0 0.0
    %883 = vmatpush1.msra.mxu0 0.0
    %884 = vmatprep.subr.mxu0 0.0
    %885 = vmatpush1.msra.mxu0 0.0
    %886 = vmatprep.subr.mxu0 0.0
    %887 = vmatpush1.msra.mxu0 0.0
    %888 = vmatprep.subr.mxu0 0.0
    %889 = vmatpush1.msra.mxu0 0.0
    %890 = vmatprep.subr.mxu0 0.0
    %891 = vmatpush1.msra.mxu0 0.0
    %892 = vmatprep.subr.mxu0 0.0
    %893 = vmatpush1.msra.mxu0 0.0
    %894 = vmatprep.subr.mxu0 0.0
    %895 = vmatpush1.msra.mxu0 0.0
    %896 = vmatprep.subr.mxu0 0.0
    %897 = vmatpush1.msra.mxu0 0.0
    %898 = vmatprep.subr.mxu0 0.0
    %899 = vmatpush1.msra.mxu0 0.0
    %900 = vmatprep.subr.mxu0 0.0
    %901 = vmatpush1.msra.mxu0 0.0
    %902 = vmatprep.subr.mxu0 0.0
    %903 = vmatpush1.msra.mxu0 0.0
    %904 = vmatprep.subr.mxu0 0.0
    %905 = vmatpush1.msra.mxu0 0.0
    %906 = vmatprep.subr.mxu0 0.0
    %907 = vmatpush1.msra.mxu0 0.0
    %908 = vmatprep.subr.mxu0 0.0
    %909 = vmatpush1.msra.mxu0 0.0
    %910 = vmatprep.subr.mxu0 0.0
    %911 = vmatpush1.msra.mxu0 0.0
    %912 = vmatprep.subr.mxu0 0.0
    %913 = vmatpush1.msra.mxu0 0.0
    %914 = vmatprep.subr.mxu0 0.0
    %915 = vmatpush1.msra.mxu0 0.0
    %916 = vmatprep.subr.mxu0 0.0
    %917 = vmatpush1.msra.mxu0 0.0
    %918 = vmatprep.subr.mxu0 0.0
    %919 = vmatpush1.msra.mxu0 0.0
    %920 = vmatprep.mubr.f32.mxu0 0.0
    %921 = vmatmul.mubr.f32.gmra.mrb[0].mxu0 %v854
    %v922 = vpop.f32.mrb[0].mxu0
    %v923 = vadd.f32 %v850, %v922
    %v924 = vpop.f32.mrb[0].mxu0
    %925 = vdwg.mxu0
    %v926 = vadd.f32 %v923, %v224
    %v927 = vxor.u32 %v926, 2147483648
    %v928 = vmul.f32 %v927, 1.442695
    %v929 = vpow.pop %v928
    %v930 = vadd.f32 %v929, 1.0
    %v931 = vrcp.pop %v930
    %v932 = vmul.f32 1.0, %v931
    %v933 = vtanh.pop %v926
    %v934 = vmul.f32 %v932, %v599
    %936 = vrot.lane.b32.xlu0 %v933, 64
    %v937 = vpop.permute.xlu0 %936
    %v939 = vmul.f32 %v932, %v937
    %941 = vrot.lane.b32.xlu0 %v939, 32
    %v942 = vpop.permute.xlu0 %941
    %v944 = vadd.f32 %v934, %v942
    %v945 = vtanh.pop %v944
    %947 = vrot.lane.b32.xlu0 %v945, 64
    %v948 = vpop.permute.xlu0 %947
    %v950 = vmul.f32 %v932, %v948
    %952 = vrot.lane.b32.xlu0 %v780, 32
    %v953 = vpop.permute.xlu0 %952
    %v954 = vsel %vm71, %v953, 0
    %956 = vmatprep.subr.mxu0 0.0
    %957 = vmatpush1.msra.mxu0 %v255
    %958 = vmatprep.subr.mxu0 0.0
    %959 = vmatpush1.msra.mxu0 %v256
    %960 = vmatprep.subr.mxu0 0.0
    %961 = vmatpush1.msra.mxu0 %v257
    %962 = vmatprep.subr.mxu0 0.0
    %963 = vmatpush1.msra.mxu0 %v258
    %964 = vmatprep.subr.mxu0 0.0
    %965 = vmatpush1.msra.mxu0 0.0
    %966 = vmatprep.subr.mxu0 0.0
    %967 = vmatpush1.msra.mxu0 0.0
    %968 = vmatprep.subr.mxu0 0.0
    %969 = vmatpush1.msra.mxu0 0.0
    %970 = vmatprep.subr.mxu0 0.0
    %971 = vmatpush1.msra.mxu0 0.0
    %972 = vmatprep.subr.mxu0 0.0
    %973 = vmatpush1.msra.mxu0 0.0
    %974 = vmatprep.subr.mxu0 0.0
    %975 = vmatpush1.msra.mxu0 0.0
    %976 = vmatprep.subr.mxu0 0.0
    %977 = vmatpush1.msra.mxu0 0.0
    %978 = vmatprep.subr.mxu0 0.0
    %979 = vmatpush1.msra.mxu0 0.0
    %980 = vmatprep.subr.mxu0 0.0
    %981 = vmatpush1.msra.mxu0 0.0
    %982 = vmatprep.subr.mxu0 0.0
    %983 = vmatpush1.msra.mxu0 0.0
    %984 = vmatprep.subr.mxu0 0.0
    %985 = vmatpush1.msra.mxu0 0.0
    %986 = vmatprep.subr.mxu0 0.0
    %987 = vmatpush1.msra.mxu0 0.0
    %988 = vmatprep.subr.mxu0 0.0
    %989 = vmatpush1.msra.mxu0 0.0
    %990 = vmatprep.subr.mxu0 0.0
    %991 = vmatpush1.msra.mxu0 0.0
    %992 = vmatprep.subr.mxu0 0.0
    %993 = vmatpush1.msra.mxu0 0.0
    %994 = vmatprep.subr.mxu0 0.0
    %995 = vmatpush1.msra.mxu0 0.0
    %996 = vmatprep.subr.mxu0 0.0
    %997 = vmatpush1.msra.mxu0 0.0
    %998 = vmatprep.subr.mxu0 0.0
    %999 = vmatpush1.msra.mxu0 0.0
    %1000 = vmatprep.subr.mxu0 0.0
    %1001 = vmatpush1.msra.mxu0 0.0
    %1002 = vmatprep.subr.mxu0 0.0
    %1003 = vmatpush1.msra.mxu0 0.0
    %1004 = vmatprep.subr.mxu0 0.0
    %1005 = vmatpush1.msra.mxu0 0.0
    %1006 = vmatprep.subr.mxu0 0.0
    %1007 = vmatpush1.msra.mxu0 0.0
    %1008 = vmatprep.subr.mxu0 0.0
    %1009 = vmatpush1.msra.mxu0 0.0
    %1010 = vmatprep.subr.mxu0 0.0
    %1011 = vmatpush1.msra.mxu0 0.0
    %1012 = vmatprep.subr.mxu0 0.0
    %1013 = vmatpush1.msra.mxu0 0.0
    %1014 = vmatprep.subr.mxu0 0.0
    %1015 = vmatpush1.msra.mxu0 0.0
    %1016 = vmatprep.subr.mxu0 0.0
    %1017 = vmatpush1.msra.mxu0 0.0
    %1018 = vmatprep.subr.mxu0 0.0
    %1019 = vmatpush1.msra.mxu0 0.0
    %1020 = vmatprep.mubr.f32.mxu0 0.0
    %1021 = vmatmul.mubr.f32.gmra.mrb[0].mxu0 %v954
    %v1022 = vpop.f32.mrb[0].mxu0
    %v1023 = vadd.f32 0.0, %v1022
    %v1024 = vpop.f32.mrb[0].mxu0
    %1025 = vdwg.mxu0
    %1027 = vrot.lane.b32.xlu0 %v950, 32
    %v1028 = vpop.permute.xlu0 %1027
    %v1029 = vsel %vm71, %v1028, 0
    %1031 = vmatprep.subr.mxu0 0.0
    %1032 = vmatpush1.msra.mxu0 %v251
    %1033 = vmatprep.subr.mxu0 0.0
    %1034 = vmatpush1.msra.mxu0 %v252
    %1035 = vmatprep.subr.mxu0 0.0
    %1036 = vmatpush1.msra.mxu0 %v253
    %1037 = vmatprep.subr.mxu0 0.0
    %1038 = vmatpush1.msra.mxu0 %v254
    %1039 = vmatprep.subr.mxu0 0.0
    %1040 = vmatpush1.msra.mxu0 0.0
    %1041 = vmatprep.subr.mxu0 0.0
    %1042 = vmatpush1.msra.mxu0 0.0
    %1043 = vmatprep.subr.mxu0 0.0
    %1044 = vmatpush1.msra.mxu0 0.0
    %1045 = vmatprep.subr.mxu0 0.0
    %1046 = vmatpush1.msra.mxu0 0.0
    %1047 = vmatprep.subr.mxu0 0.0
    %1048 = vmatpush1.msra.mxu0 0.0
    %1049 = vmatprep.subr.mxu0 0.0
    %1050 = vmatpush1.msra.mxu0 0.0
    %1051 = vmatprep.subr.mxu0 0.0
    %1052 = vmatpush1.msra.mxu0 0.0
    %1053 = vmatprep.subr.mxu0 0.0
    %1054 = vmatpush1.msra.mxu0 0.0
    %1055 = vmatprep.subr.mxu0 0.0
    %1056 = vmatpush1.msra.mxu0 0.0
    %1057 = vmatprep.subr.mxu0 0.0
    %1058 = vmatpush1.msra.mxu0 0.0
    %1059 = vmatprep.subr.mxu0 0.0
    %1060 = vmatpush1.msra.mxu0 0.0
    %1061 = vmatprep.subr.mxu0 0.0
    %1062 = vmatpush1.msra.mxu0 0.0
    %1063 = vmatprep.subr.mxu0 0.0
    %1064 = vmatpush1.msra.mxu0 0.0
    %1065 = vmatprep.subr.mxu0 0.0
    %1066 = vmatpush1.msra.mxu0 0.0
    %1067 = vmatprep.subr.mxu0 0.0
    %1068 = vmatpush1.msra.mxu0 0.0
    %1069 = vmatprep.subr.mxu0 0.0
    %1070 = vmatpush1.msra.mxu0 0.0
    %1071 = vmatprep.subr.mxu0 0.0
    %1072 = vmatpush1.msra.mxu0 0.0
    %1073 = vmatprep.subr.mxu0 0.0
    %1074 = vmatpush1.msra.mxu0 0.0
    %1075 = vmatprep.subr.mxu0 0.0
    %1076 = vmatpush1.msra.mxu0 0.0
    %1077 = vmatprep.subr.mxu0 0.0
    %1078 = vmatpush1.msra.mxu0 0.0
    %1079 = vmatprep.subr.mxu0 0.0
    %1080 = vmatpush1.msra.mxu0 0.0
    %1081 = vmatprep.subr.mxu0 0.0
    %1082 = vmatpush1.msra.mxu0 0.0
    %1083 = vmatprep.subr.mxu0 0.0
    %1084 = vmatpush1.msra.mxu0 0.0
    %1085 = vmatprep.subr.mxu0 0.0
    %1086 = vmatpush1.msra.mxu0 0.0
    %1087 = vmatprep.subr.mxu0 0.0
    %1088 = vmatpush1.msra.mxu0 0.0
    %1089 = vmatprep.subr.mxu0 0.0
    %1090 = vmatpush1.msra.mxu0 0.0
    %1091 = vmatprep.subr.mxu0 0.0
    %1092 = vmatpush1.msra.mxu0 0.0
    %1093 = vmatprep.subr.mxu0 0.0
    %1094 = vmatpush1.msra.mxu0 0.0
    %1095 = vmatprep.mubr.f32.mxu0 0.0
    %1096 = vmatmul.mubr.f32.gmra.mrb[0].mxu0 %v1029
    %v1097 = vpop.f32.mrb[0].mxu0
    %v1098 = vadd.f32 %v1023, %v1097
    %v1099 = vpop.f32.mrb[0].mxu0
    %1100 = vdwg.mxu0
    %v1101 = vadd.f32 %v1098, %v409
    %v1102 = vxor.u32 %v1101, 2147483648
    %v1103 = vmul.f32 %v1102, 1.442695
    %v1104 = vpow.pop %v1103
    %v1105 = vadd.f32 %v1104, 1.0
    %v1106 = vrcp.pop %v1105
    %v1107 = vmul.f32 1.0, %v1106
    %v1108 = vtanh.pop %v1101
    %v1109 = vmul.f32 %v1107, %v774
    %1111 = vrot.lane.b32.xlu0 %v1108, 64
    %v1112 = vpop.permute.xlu0 %1111
    %v1114 = vmul.f32 %v1107, %v1112
    %1116 = vrot.lane.b32.xlu0 %v1114, 32
    %v1117 = vpop.permute.xlu0 %1116
    %v1119 = vadd.f32 %v1109, %v1117
    %v1120 = vtanh.pop %v1119
    %1122 = vrot.lane.b32.xlu0 %v1120, 64
    %v1123 = vpop.permute.xlu0 %1122
    %v1125 = vmul.f32 %v1107, %v1123
    %s1126 = scalar_lea.vmem %s1, 24
    %v1127 = vld [vmem:[%s1126] sm:$0xff]
    %1128 = vmatprep.subr.mxu0 0.0
    %1129 = vmatpush1.msra.mxu0 %v67
    %1130 = vmatprep.subr.mxu0 0.0
    %1131 = vmatpush1.msra.mxu0 %v68
    %1132 = vmatprep.subr.mxu0 0.0
    %1133 = vmatpush1.msra.mxu0 %v69
    %1134 = vmatprep.subr.mxu0 0.0
    %1135 = vmatpush1.msra.mxu0 %v70
    %1136 = vmatprep.subr.mxu0 0.0
    %1137 = vmatpush1.msra.mxu0 0.0
    %1138 = vmatprep.subr.mxu0 0.0
    %1139 = vmatpush1.msra.mxu0 0.0
    %1140 = vmatprep.subr.mxu0 0.0
    %1141 = vmatpush1.msra.mxu0 0.0
    %1142 = vmatprep.subr.mxu0 0.0
    %1143 = vmatpush1.msra.mxu0 0.0
    %1144 = vmatprep.subr.mxu0 0.0
    %1145 = vmatpush1.msra.mxu0 0.0
    %1146 = vmatprep.subr.mxu0 0.0
    %1147 = vmatpush1.msra.mxu0 0.0
    %1148 = vmatprep.subr.mxu0 0.0
    %1149 = vmatpush1.msra.mxu0 0.0
    %1150 = vmatprep.subr.mxu0 0.0
    %1151 = vmatpush1.msra.mxu0 0.0
    %1152 = vmatprep.subr.mxu0 0.0
    %1153 = vmatpush1.msra.mxu0 0.0
    %1154 = vmatprep.subr.mxu0 0.0
    %1155 = vmatpush1.msra.mxu0 0.0
    %1156 = vmatprep.subr.mxu0 0.0
    %1157 = vmatpush1.msra.mxu0 0.0
    %1158 = vmatprep.subr.mxu0 0.0
    %1159 = vmatpush1.msra.mxu0 0.0
    %1160 = vmatprep.subr.mxu0 0.0
    %1161 = vmatpush1.msra.mxu0 0.0
    %1162 = vmatprep.subr.mxu0 0.0
    %1163 = vmatpush1.msra.mxu0 0.0
    %1164 = vmatprep.subr.mxu0 0.0
    %1165 = vmatpush1.msra.mxu0 0.0
    %1166 = vmatprep.subr.mxu0 0.0
    %1167 = vmatpush1.msra.mxu0 0.0
    %1168 = vmatprep.subr.mxu0 0.0
    %1169 = vmatpush1.msra.mxu0 0.0
    %1170 = vmatprep.subr.mxu0 0.0
    %1171 = vmatpush1.msra.mxu0 0.0
    %1172 = vmatprep.subr.mxu0 0.0
    %1173 = vmatpush1.msra.mxu0 0.0
    %1174 = vmatprep.subr.mxu0 0.0
    %1175 = vmatpush1.msra.mxu0 0.0
    %1176 = vmatprep.subr.mxu0 0.0
    %1177 = vmatpush1.msra.mxu0 0.0
    %1178 = vmatprep.subr.mxu0 0.0
    %1179 = vmatpush1.msra.mxu0 0.0
    %1180 = vmatprep.subr.mxu0 0.0
    %1181 = vmatpush1.msra.mxu0 0.0
    %1182 = vmatprep.subr.mxu0 0.0
    %1183 = vmatpush1.msra.mxu0 0.0
    %1184 = vmatprep.subr.mxu0 0.0
    %1185 = vmatpush1.msra.mxu0 0.0
    %1186 = vmatprep.subr.mxu0 0.0
    %1187 = vmatpush1.msra.mxu0 0.0
    %1188 = vmatprep.subr.mxu0 0.0
    %1189 = vmatpush1.msra.mxu0 0.0
    %1190 = vmatprep.subr.mxu0 0.0
    %1191 = vmatpush1.msra.mxu0 0.0
    %1192 = vmatprep.mubr.f32.mxu0 0.0
    %1193 = vmatmul.mubr.f32.gmra.mrb[0].mxu0 %v1029
    %v1194 = vpop.f32.mrb[0].mxu0
    %v1195 = vadd.f32 0.0, %v1194
    %v1196 = vpop.f32.mrb[0].mxu0
    %1197 = vdwg.mxu0
    %v1199 = vsel %vm145, %v1127, 0
    %1201 = vmatprep.subr.mxu0 0.0
    %1202 = vmatpush1.msra.mxu0 %v65
    %1203 = vmatprep.subr.mxu0 0.0
    %1204 = vmatpush1.msra.mxu0 %v66
    %1205 = vmatprep.subr.mxu0 0.0
    %1206 = vmatpush1.msra.mxu0 0.0
    %1207 = vmatprep.subr.mxu0 0.0
    %1208 = vmatpush1.msra.mxu0 0.0
    %1209 = vmatprep.subr.mxu0 0.0
    %1210 = vmatpush1.msra.mxu0 0.0
    %1211 = vmatprep.subr.mxu0 0.0
    %1212 = vmatpush1.msra.mxu0 0.0
    %1213 = vmatprep.subr.mxu0 0.0
    %1214 = vmatpush1.msra.mxu0 0.0
    %1215 = vmatprep.subr.mxu0 0.0
    %1216 = vmatpush1.msra.mxu0 0.0
    %1217 = vmatprep.subr.mxu0 0.0
    %1218 = vmatpush1.msra.mxu0 0.0
    %1219 = vmatprep.subr.mxu0 0.0
    %1220 = vmatpush1.msra.mxu0 0.0
    %1221 = vmatprep.subr.mxu0 0.0
    %1222 = vmatpush1.msra.mxu0 0.0
    %1223 = vmatprep.subr.mxu0 0.0
    %1224 = vmatpush1.msra.mxu0 0.0
    %1225 = vmatprep.subr.mxu0 0.0
    %1226 = vmatpush1.msra.mxu0 0.0
    %1227 = vmatprep.subr.mxu0 0.0
    %1228 = vmatpush1.msra.mxu0 0.0
    %1229 = vmatprep.subr.mxu0 0.0
    %1230 = vmatpush1.msra.mxu0 0.0
    %1231 = vmatprep.subr.mxu0 0.0
    %1232 = vmatpush1.msra.mxu0 0.0
    %1233 = vmatprep.subr.mxu0 0.0
    %1234 = vmatpush1.msra.mxu0 0.0
    %1235 = vmatprep.subr.mxu0 0.0
    %1236 = vmatpush1.msra.mxu0 0.0
    %1237 = vmatprep.subr.mxu0 0.0
    %1238 = vmatpush1.msra.mxu0 0.0
    %1239 = vmatprep.subr.mxu0 0.0
    %1240 = vmatpush1.msra.mxu0 0.0
    %1241 = vmatprep.subr.mxu0 0.0
    %1242 = vmatpush1.msra.mxu0 0.0
    %1243 = vmatprep.subr.mxu0 0.0
    %1244 = vmatpush1.msra.mxu0 0.0
    %1245 = vmatprep.subr.mxu0 0.0
    %1246 = vmatpush1.msra.mxu0 0.0
    %1247 = vmatprep.subr.mxu0 0.0
    %1248 = vmatpush1.msra.mxu0 0.0
    %1249 = vmatprep.subr.mxu0 0.0
    %1250 = vmatpush1.msra.mxu0 0.0
    %1251 = vmatprep.subr.mxu0 0.0
    %1252 = vmatpush1.msra.mxu0 0.0
    %1253 = vmatprep.subr.mxu0 0.0
    %1254 = vmatpush1.msra.mxu0 0.0
    %1255 = vmatprep.subr.mxu0 0.0
    %1256 = vmatpush1.msra.mxu0 0.0
    %1257 = vmatprep.subr.mxu0 0.0
    %1258 = vmatpush1.msra.mxu0 0.0
    %1259 = vmatprep.subr.mxu0 0.0
    %1260 = vmatpush1.msra.mxu0 0.0
    %1261 = vmatprep.subr.mxu0 0.0
    %1262 = vmatpush1.msra.mxu0 0.0
    %1263 = vmatprep.subr.mxu0 0.0
    %1264 = vmatpush1.msra.mxu0 0.0
    %1265 = vmatprep.mubr.f32.mxu0 0.0
    %1266 = vmatmul.mubr.f32.gmra.mrb[0].mxu0 %v1199
    %v1267 = vpop.f32.mrb[0].mxu0
    %v1268 = vadd.f32 %v1195, %v1267
    %v1269 = vpop.f32.mrb[0].mxu0
    %1270 = vdwg.mxu0
    %v1271 = vadd.f32 %v1268, %v224
    %v1272 = vxor.u32 %v1271, 2147483648
    %v1273 = vmul.f32 %v1272, 1.442695
    %v1274 = vpow.pop %v1273
    %v1275 = vadd.f32 %v1274, 1.0
    %v1276 = vrcp.pop %v1275
    %v1277 = vmul.f32 1.0, %v1276
    %v1278 = vtanh.pop %v1271
    %v1279 = vmul.f32 %v1277, %v944
    %1281 = vrot.lane.b32.xlu0 %v1278, 64
    %v1282 = vpop.permute.xlu0 %1281
    %v1284 = vmul.f32 %v1277, %v1282
    %1286 = vrot.lane.b32.xlu0 %v1284, 32
    %v1287 = vpop.permute.xlu0 %1286
    %v1289 = vadd.f32 %v1279, %v1287
    %v1290 = vtanh.pop %v1289
    %1292 = vrot.lane.b32.xlu0 %v1290, 64
    %v1293 = vpop.permute.xlu0 %1292
    %v1295 = vmul.f32 %v1277, %v1293
    %1297 = vrot.lane.b32.xlu0 %v1125, 32
    %v1298 = vpop.permute.xlu0 %1297
    %v1299 = vsel %vm71, %v1298, 0
    %1301 = vmatprep.subr.mxu0 0.0
    %1302 = vmatpush1.msra.mxu0 %v255
    %1303 = vmatprep.subr.mxu0 0.0
    %1304 = vmatpush1.msra.mxu0 %v256
    %1305 = vmatprep.subr.mxu0 0.0
    %1306 = vmatpush1.msra.mxu0 %v257
    %1307 = vmatprep.subr.mxu0 0.0
    %1308 = vmatpush1.msra.mxu0 %v258
    %1309 = vmatprep.subr.mxu0 0.0
    %1310 = vmatpush1.msra.mxu0 0.0
    %1311 = vmatprep.subr.mxu0 0.0
    %1312 = vmatpush1.msra.mxu0 0.0
    %1313 = vmatprep.subr.mxu0 0.0
    %1314 = vmatpush1.msra.mxu0 0.0
    %1315 = vmatprep.subr.mxu0 0.0
    %1316 = vmatpush1.msra.mxu0 0.0
    %1317 = vmatprep.subr.mxu0 0.0
    %1318 = vmatpush1.msra.mxu0 0.0
    %1319 = vmatprep.subr.mxu0 0.0
    %1320 = vmatpush1.msra.mxu0 0.0
    %1321 = vmatprep.subr.mxu0 0.0
    %1322 = vmatpush1.msra.mxu0 0.0
    %1323 = vmatprep.subr.mxu0 0.0
    %1324 = vmatpush1.msra.mxu0 0.0
    %1325 = vmatprep.subr.mxu0 0.0
    %1326 = vmatpush1.msra.mxu0 0.0
    %1327 = vmatprep.subr.mxu0 0.0
    %1328 = vmatpush1.msra.mxu0 0.0
    %1329 = vmatprep.subr.mxu0 0.0
    %1330 = vmatpush1.msra.mxu0 0.0
    %1331 = vmatprep.subr.mxu0 0.0
    %1332 = vmatpush1.msra.mxu0 0.0
    %1333 = vmatprep.subr.mxu0 0.0
    %1334 = vmatpush1.msra.mxu0 0.0
    %1335 = vmatprep.subr.mxu0 0.0
    %1336 = vmatpush1.msra.mxu0 0.0
    %1337 = vmatprep.subr.mxu0 0.0
    %1338 = vmatpush1.msra.mxu0 0.0
    %1339 = vmatprep.subr.mxu0 0.0
    %1340 = vmatpush1.msra.mxu0 0.0
    %1341 = vmatprep.subr.mxu0 0.0
    %1342 = vmatpush1.msra.mxu0 0.0
    %1343 = vmatprep.subr.mxu0 0.0
    %1344 = vmatpush1.msra.mxu0 0.0
    %1345 = vmatprep.subr.mxu0 0.0
    %1346 = vmatpush1.msra.mxu0 0.0
    %1347 = vmatprep.subr.mxu0 0.0
    %1348 = vmatpush1.msra.mxu0 0.0
    %1349 = vmatprep.subr.mxu0 0.0
    %1350 = vmatpush1.msra.mxu0 0.0
    %1351 = vmatprep.subr.mxu0 0.0
    %1352 = vmatpush1.msra.mxu0 0.0
    %1353 = vmatprep.subr.mxu0 0.0
    %1354 = vmatpush1.msra.mxu0 0.0
    %1355 = vmatprep.subr.mxu0 0.0
    %1356 = vmatpush1.msra.mxu0 0.0
    %1357 = vmatprep.subr.mxu0 0.0
    %1358 = vmatpush1.msra.mxu0 0.0
    %1359 = vmatprep.subr.mxu0 0.0
    %1360 = vmatpush1.msra.mxu0 0.0
    %1361 = vmatprep.subr.mxu0 0.0
    %1362 = vmatpush1.msra.mxu0 0.0
    %1363 = vmatprep.subr.mxu0 0.0
    %1364 = vmatpush1.msra.mxu0 0.0
    %1365 = vmatprep.mubr.f32.mxu0 0.0
    %1366 = vmatmul.mubr.f32.gmra.mrb[0].mxu0 %v1299
    %v1367 = vpop.f32.mrb[0].mxu0
    %v1368 = vadd.f32 0.0, %v1367
    %v1369 = vpop.f32.mrb[0].mxu0
    %1370 = vdwg.mxu0
    %1372 = vrot.lane.b32.xlu0 %v1295, 32
    %v1373 = vpop.permute.xlu0 %1372
    %v1374 = vsel %vm71, %v1373, 0
    %1376 = vmatprep.subr.mxu0 0.0
    %1377 = vmatpush1.msra.mxu0 %v251
    %1378 = vmatprep.subr.mxu0 0.0
    %1379 = vmatpush1.msra.mxu0 %v252
    %1380 = vmatprep.subr.mxu0 0.0
    %1381 = vmatpush1.msra.mxu0 %v253
    %1382 = vmatprep.subr.mxu0 0.0
    %1383 = vmatpush1.msra.mxu0 %v254
    %1384 = vmatprep.subr.mxu0 0.0
    %1385 = vmatpush1.msra.mxu0 0.0
    %1386 = vmatprep.subr.mxu0 0.0
    %1387 = vmatpush1.msra.mxu0 0.0
    %1388 = vmatprep.subr.mxu0 0.0
    %1389 = vmatpush1.msra.mxu0 0.0
    %1390 = vmatprep.subr.mxu0 0.0
    %1391 = vmatpush1.msra.mxu0 0.0
    %1392 = vmatprep.subr.mxu0 0.0
    %1393 = vmatpush1.msra.mxu0 0.0
    %1394 = vmatprep.subr.mxu0 0.0
    %1395 = vmatpush1.msra.mxu0 0.0
    %1396 = vmatprep.subr.mxu0 0.0
    %1397 = vmatpush1.msra.mxu0 0.0
    %1398 = vmatprep.subr.mxu0 0.0
    %1399 = vmatpush1.msra.mxu0 0.0
    %1400 = vmatprep.subr.mxu0 0.0
    %1401 = vmatpush1.msra.mxu0 0.0
    %1402 = vmatprep.subr.mxu0 0.0
    %1403 = vmatpush1.msra.mxu0 0.0
    %1404 = vmatprep.subr.mxu0 0.0
    %1405 = vmatpush1.msra.mxu0 0.0
    %1406 = vmatprep.subr.mxu0 0.0
    %1407 = vmatpush1.msra.mxu0 0.0
    %1408 = vmatprep.subr.mxu0 0.0
    %1409 = vmatpush1.msra.mxu0 0.0
    %1410 = vmatprep.subr.mxu0 0.0
    %1411 = vmatpush1.msra.mxu0 0.0
    %1412 = vmatprep.subr.mxu0 0.0
    %1413 = vmatpush1.msra.mxu0 0.0
    %1414 = vmatprep.subr.mxu0 0.0
    %1415 = vmatpush1.msra.mxu0 0.0
    %1416 = vmatprep.subr.mxu0 0.0
    %1417 = vmatpush1.msra.mxu0 0.0
    %1418 = vmatprep.subr.mxu0 0.0
    %1419 = vmatpush1.msra.mxu0 0.0
    %1420 = vmatprep.subr.mxu0 0.0
    %1421 = vmatpush1.msra.mxu0 0.0
    %1422 = vmatprep.subr.mxu0 0.0
    %1423 = vmatpush1.msra.mxu0 0.0
    %1424 = vmatprep.subr.mxu0 0.0
    %1425 = vmatpush1.msra.mxu0 0.0
    %1426 = vmatprep.subr.mxu0 0.0
    %1427 = vmatpush1.msra.mxu0 0.0
    %1428 = vmatprep.subr.mxu0 0.0
    %1429 = vmatpush1.msra.mxu0 0.0
    %1430 = vmatprep.subr.mxu0 0.0
    %1431 = vmatpush1.msra.mxu0 0.0
    %1432 = vmatprep.subr.mxu0 0.0
    %1433 = vmatpush1.msra.mxu0 0.0
    %1434 = vmatprep.subr.mxu0 0.0
    %1435 = vmatpush1.msra.mxu0 0.0
    %1436 = vmatprep.subr.mxu0 0.0
    %1437 = vmatpush1.msra.mxu0 0.0
    %1438 = vmatprep.subr.mxu0 0.0
    %1439 = vmatpush1.msra.mxu0 0.0
    %1440 = vmatprep.mubr.f32.mxu0 0.0
    %1441 = vmatmul.mubr.f32.gmra.mrb[0].mxu0 %v1374
    %v1442 = vpop.f32.mrb[0].mxu0
    %v1443 = vadd.f32 %v1368, %v1442
    %v1444 = vpop.f32.mrb[0].mxu0
    %1445 = vdwg.mxu0
    %v1446 = vadd.f32 %v1443, %v409
    %v1447 = vxor.u32 %v1446, 2147483648
    %v1448 = vmul.f32 %v1447, 1.442695
    %v1449 = vpow.pop %v1448
    %v1450 = vadd.f32 %v1449, 1.0
    %v1451 = vrcp.pop %v1450
    %v1452 = vmul.f32 1.0, %v1451
    %v1453 = vtanh.pop %v1446
    %v1454 = vmul.f32 %v1452, %v1119
    %1456 = vrot.lane.b32.xlu0 %v1453, 64
    %v1457 = vpop.permute.xlu0 %1456
    %v1459 = vmul.f32 %v1452, %v1457
    %1461 = vrot.lane.b32.xlu0 %v1459, 32
    %v1462 = vpop.permute.xlu0 %1461
    %v1464 = vadd.f32 %v1454, %v1462
    %v1465 = vtanh.pop %v1464
    %1467 = vrot.lane.b32.xlu0 %v1465, 64
    %v1468 = vpop.permute.xlu0 %1467
    %v1470 = vmul.f32 %v1452, %v1468
    %s1471 = scalar_lea.vmem %s1, 32
    %v1472 = vld [vmem:[%s1471] sm:$0xff]
    %1473 = vmatprep.subr.mxu0 0.0
    %1474 = vmatpush1.msra.mxu0 %v67
    %1475 = vmatprep.subr.mxu0 0.0
    %1476 = vmatpush1.msra.mxu0 %v68
    %1477 = vmatprep.subr.mxu0 0.0
    %1478 = vmatpush1.msra.mxu0 %v69
    %1479 = vmatprep.subr.mxu0 0.0
    %1480 = vmatpush1.msra.mxu0 %v70
    %1481 = vmatprep.subr.mxu0 0.0
    %1482 = vmatpush1.msra.mxu0 0.0
    %1483 = vmatprep.subr.mxu0 0.0
    %1484 = vmatpush1.msra.mxu0 0.0
    %1485 = vmatprep.subr.mxu0 0.0
    %1486 = vmatpush1.msra.mxu0 0.0
    %1487 = vmatprep.subr.mxu0 0.0
    %1488 = vmatpush1.msra.mxu0 0.0
    %1489 = vmatprep.subr.mxu0 0.0
    %1490 = vmatpush1.msra.mxu0 0.0
    %1491 = vmatprep.subr.mxu0 0.0
    %1492 = vmatpush1.msra.mxu0 0.0
    %1493 = vmatprep.subr.mxu0 0.0
    %1494 = vmatpush1.msra.mxu0 0.0
    %1495 = vmatprep.subr.mxu0 0.0
    %1496 = vmatpush1.msra.mxu0 0.0
    %1497 = vmatprep.subr.mxu0 0.0
    %1498 = vmatpush1.msra.mxu0 0.0
    %1499 = vmatprep.subr.mxu0 0.0
    %1500 = vmatpush1.msra.mxu0 0.0
    %1501 = vmatprep.subr.mxu0 0.0
    %1502 = vmatpush1.msra.mxu0 0.0
    %1503 = vmatprep.subr.mxu0 0.0
    %1504 = vmatpush1.msra.mxu0 0.0
    %1505 = vmatprep.subr.mxu0 0.0
    %1506 = vmatpush1.msra.mxu0 0.0
    %1507 = vmatprep.subr.mxu0 0.0
    %1508 = vmatpush1.msra.mxu0 0.0
    %1509 = vmatprep.subr.mxu0 0.0
    %1510 = vmatpush1.msra.mxu0 0.0
    %1511 = vmatprep.subr.mxu0 0.0
    %1512 = vmatpush1.msra.mxu0 0.0
    %1513 = vmatprep.subr.mxu0 0.0
    %1514 = vmatpush1.msra.mxu0 0.0
    %1515 = vmatprep.subr.mxu0 0.0
    %1516 = vmatpush1.msra.mxu0 0.0
    %1517 = vmatprep.subr.mxu0 0.0
    %1518 = vmatpush1.msra.mxu0 0.0
    %1519 = vmatprep.subr.mxu0 0.0
    %1520 = vmatpush1.msra.mxu0 0.0
    %1521 = vmatprep.subr.mxu0 0.0
    %1522 = vmatpush1.msra.mxu0 0.0
    %1523 = vmatprep.subr.mxu0 0.0
    %1524 = vmatpush1.msra.mxu0 0.0
    %1525 = vmatprep.subr.mxu0 0.0
    %1526 = vmatpush1.msra.mxu0 0.0
    %1527 = vmatprep.subr.mxu0 0.0
    %1528 = vmatpush1.msra.mxu0 0.0
    %1529 = vmatprep.subr.mxu0 0.0
    %1530 = vmatpush1.msra.mxu0 0.0
    %1531 = vmatprep.subr.mxu0 0.0
    %1532 = vmatpush1.msra.mxu0 0.0
    %1533 = vmatprep.subr.mxu0 0.0
    %1534 = vmatpush1.msra.mxu0 0.0
    %1535 = vmatprep.subr.mxu0 0.0
    %1536 = vmatpush1.msra.mxu0 0.0
    %1537 = vmatprep.mubr.f32.mxu0 0.0
    %1538 = vmatmul.mubr.f32.gmra.mrb[0].mxu0 %v1374
    %v1539 = vpop.f32.mrb[0].mxu0
    %v1540 = vadd.f32 0.0, %v1539
    %v1541 = vpop.f32.mrb[0].mxu0
    %1542 = vdwg.mxu0
    %v1544 = vsel %vm145, %v1472, 0
    %1546 = vmatprep.subr.mxu0 0.0
    %1547 = vmatpush1.msra.mxu0 %v65
    %1548 = vmatprep.subr.mxu0 0.0
    %1549 = vmatpush1.msra.mxu0 %v66
    %1550 = vmatprep.subr.mxu0 0.0
    %1551 = vmatpush1.msra.mxu0 0.0
    %1552 = vmatprep.subr.mxu0 0.0
    %1553 = vmatpush1.msra.mxu0 0.0
    %1554 = vmatprep.subr.mxu0 0.0
    %1555 = vmatpush1.msra.mxu0 0.0
    %1556 = vmatprep.subr.mxu0 0.0
    %1557 = vmatpush1.msra.mxu0 0.0
    %1558 = vmatprep.subr.mxu0 0.0
    %1559 = vmatpush1.msra.mxu0 0.0
    %1560 = vmatprep.subr.mxu0 0.0
    %1561 = vmatpush1.msra.mxu0 0.0
    %1562 = vmatprep.subr.mxu0 0.0
    %1563 = vmatpush1.msra.mxu0 0.0
    %1564 = vmatprep.subr.mxu0 0.0
    %1565 = vmatpush1.msra.mxu0 0.0
    %1566 = vmatprep.subr.mxu0 0.0
    %1567 = vmatpush1.msra.mxu0 0.0
    %1568 = vmatprep.subr.mxu0 0.0
    %1569 = vmatpush1.msra.mxu0 0.0
    %1570 = vmatprep.subr.mxu0 0.0
    %1571 = vmatpush1.msra.mxu0 0.0
    %1572 = vmatprep.subr.mxu0 0.0
    %1573 = vmatpush1.msra.mxu0 0.0
    %1574 = vmatprep.subr.mxu0 0.0
    %1575 = vmatpush1.msra.mxu0 0.0
    %1576 = vmatprep.subr.mxu0 0.0
    %1577 = vmatpush1.msra.mxu0 0.0
    %1578 = vmatprep.subr.mxu0 0.0
    %1579 = vmatpush1.msra.mxu0 0.0
    %1580 = vmatprep.subr.mxu0 0.0
    %1581 = vmatpush1.msra.mxu0 0.0
    %1582 = vmatprep.subr.mxu0 0.0
    %1583 = vmatpush1.msra.mxu0 0.0
    %1584 = vmatprep.subr.mxu0 0.0
    %1585 = vmatpush1.msra.mxu0 0.0
    %1586 = vmatprep.subr.mxu0 0.0
    %1587 = vmatpush1.msra.mxu0 0.0
    %1588 = vmatprep.subr.mxu0 0.0
    %1589 = vmatpush1.msra.mxu0 0.0
    %1590 = vmatprep.subr.mxu0 0.0
    %1591 = vmatpush1.msra.mxu0 0.0
    %1592 = vmatprep.subr.mxu0 0.0
    %1593 = vmatpush1.msra.mxu0 0.0
    %1594 = vmatprep.subr.mxu0 0.0
    %1595 = vmatpush1.msra.mxu0 0.0
    %1596 = vmatprep.subr.mxu0 0.0
    %1597 = vmatpush1.msra.mxu0 0.0
    %1598 = vmatprep.subr.mxu0 0.0
    %1599 = vmatpush1.msra.mxu0 0.0
    %1600 = vmatprep.subr.mxu0 0.0
    %1601 = vmatpush1.msra.mxu0 0.0
    %1602 = vmatprep.subr.mxu0 0.0
    %1603 = vmatpush1.msra.mxu0 0.0
    %1604 = vmatprep.subr.mxu0 0.0
    %1605 = vmatpush1.msra.mxu0 0.0
    %1606 = vmatprep.subr.mxu0 0.0
    %1607 = vmatpush1.msra.mxu0 0.0
    %1608 = vmatprep.subr.mxu0 0.0
    %1609 = vmatpush1.msra.mxu0 0.0
    %1610 = vmatprep.mubr.f32.mxu0 0.0
    %1611 = vmatmul.mubr.f32.gmra.mrb[0].mxu0 %v1544
    %v1612 = vpop.f32.mrb[0].mxu0
    %v1613 = vadd.f32 %v1540, %v1612
    %v1614 = vpop.f32.mrb[0].mxu0
    %1615 = vdwg.mxu0
    %v1616 = vadd.f32 %v1613, %v224
    %v1617 = vxor.u32 %v1616, 2147483648
    %v1618 = vmul.f32 %v1617, 1.442695
    %v1619 = vpow.pop %v1618
    %v1620 = vadd.f32 %v1619, 1.0
    %v1621 = vrcp.pop %v1620
    %v1622 = vmul.f32 1.0, %v1621
    %v1623 = vtanh.pop %v1616
    %v1624 = vmul.f32 %v1622, %v1289
    %1626 = vrot.lane.b32.xlu0 %v1623, 64
    %v1627 = vpop.permute.xlu0 %1626
    %v1629 = vmul.f32 %v1622, %v1627
    %1631 = vrot.lane.b32.xlu0 %v1629, 32
    %v1632 = vpop.permute.xlu0 %1631
    %v1634 = vadd.f32 %v1624, %v1632
    %v1635 = vtanh.pop %v1634
    %1637 = vrot.lane.b32.xlu0 %v1635, 64
    %v1638 = vpop.permute.xlu0 %1637
    %v1640 = vmul.f32 %v1622, %v1638
    %1642 = vrot.lane.b32.xlu0 %v1470, 32
    %v1643 = vpop.permute.xlu0 %1642
    %v1644 = vsel %vm71, %v1643, 0
    %1646 = vmatprep.subr.mxu0 0.0
    %1647 = vmatpush1.msra.mxu0 %v255
    %1648 = vmatprep.subr.mxu0 0.0
    %1649 = vmatpush1.msra.mxu0 %v256
    %1650 = vmatprep.subr.mxu0 0.0
    %1651 = vmatpush1.msra.mxu0 %v257
    %1652 = vmatprep.subr.mxu0 0.0
    %1653 = vmatpush1.msra.mxu0 %v258
    %1654 = vmatprep.subr.mxu0 0.0
    %1655 = vmatpush1.msra.mxu0 0.0
    %1656 = vmatprep.subr.mxu0 0.0
    %1657 = vmatpush1.msra.mxu0 0.0
    %1658 = vmatprep.subr.mxu0 0.0
    %1659 = vmatpush1.msra.mxu0 0.0
    %1660 = vmatprep.subr.mxu0 0.0
    %1661 = vmatpush1.msra.mxu0 0.0
    %1662 = vmatprep.subr.mxu0 0.0
    %1663 = vmatpush1.msra.mxu0 0.0
    %1664 = vmatprep.subr.mxu0 0.0
    %1665 = vmatpush1.msra.mxu0 0.0
    %1666 = vmatprep.subr.mxu0 0.0
    %1667 = vmatpush1.msra.mxu0 0.0
    %1668 = vmatprep.subr.mxu0 0.0
    %1669 = vmatpush1.msra.mxu0 0.0
    %1670 = vmatprep.subr.mxu0 0.0
    %1671 = vmatpush1.msra.mxu0 0.0
    %1672 = vmatprep.subr.mxu0 0.0
    %1673 = vmatpush1.msra.mxu0 0.0
    %1674 = vmatprep.subr.mxu0 0.0
    %1675 = vmatpush1.msra.mxu0 0.0
    %1676 = vmatprep.subr.mxu0 0.0
    %1677 = vmatpush1.msra.mxu0 0.0
    %1678 = vmatprep.subr.mxu0 0.0
    %1679 = vmatpush1.msra.mxu0 0.0
    %1680 = vmatprep.subr.mxu0 0.0
    %1681 = vmatpush1.msra.mxu0 0.0
    %1682 = vmatprep.subr.mxu0 0.0
    %1683 = vmatpush1.msra.mxu0 0.0
    %1684 = vmatprep.subr.mxu0 0.0
    %1685 = vmatpush1.msra.mxu0 0.0
    %1686 = vmatprep.subr.mxu0 0.0
    %1687 = vmatpush1.msra.mxu0 0.0
    %1688 = vmatprep.subr.mxu0 0.0
    %1689 = vmatpush1.msra.mxu0 0.0
    %1690 = vmatprep.subr.mxu0 0.0
    %1691 = vmatpush1.msra.mxu0 0.0
    %1692 = vmatprep.subr.mxu0 0.0
    %1693 = vmatpush1.msra.mxu0 0.0
    %1694 = vmatprep.subr.mxu0 0.0
    %1695 = vmatpush1.msra.mxu0 0.0
    %1696 = vmatprep.subr.mxu0 0.0
    %1697 = vmatpush1.msra.mxu0 0.0
    %1698 = vmatprep.subr.mxu0 0.0
    %1699 = vmatpush1.msra.mxu0 0.0
    %1700 = vmatprep.subr.mxu0 0.0
    %1701 = vmatpush1.msra.mxu0 0.0
    %1702 = vmatprep.subr.mxu0 0.0
    %1703 = vmatpush1.msra.mxu0 0.0
    %1704 = vmatprep.subr.mxu0 0.0
    %1705 = vmatpush1.msra.mxu0 0.0
    %1706 = vmatprep.subr.mxu0 0.0
    %1707 = vmatpush1.msra.mxu0 0.0
    %1708 = vmatprep.subr.mxu0 0.0
    %1709 = vmatpush1.msra.mxu0 0.0
    %1710 = vmatprep.mubr.f32.mxu0 0.0
    %1711 = vmatmul.mubr.f32.gmra.mrb[0].mxu0 %v1644
    %v1712 = vpop.f32.mrb[0].mxu0
    %v1713 = vadd.f32 0.0, %v1712
    %v1714 = vpop.f32.mrb[0].mxu0
    %1715 = vdwg.mxu0
    %1717 = vrot.lane.b32.xlu0 %v1640, 32
    %v1718 = vpop.permute.xlu0 %1717
    %v1719 = vsel %vm71, %v1718, 0
    %1721 = vmatprep.subr.mxu0 0.0
    %1722 = vmatpush1.msra.mxu0 %v251
    %1723 = vmatprep.subr.mxu0 0.0
    %1724 = vmatpush1.msra.mxu0 %v252
    %1725 = vmatprep.subr.mxu0 0.0
    %1726 = vmatpush1.msra.mxu0 %v253
    %1727 = vmatprep.subr.mxu0 0.0
    %1728 = vmatpush1.msra.mxu0 %v254
    %1729 = vmatprep.subr.mxu0 0.0
    %1730 = vmatpush1.msra.mxu0 0.0
    %1731 = vmatprep.subr.mxu0 0.0
    %1732 = vmatpush1.msra.mxu0 0.0
    %1733 = vmatprep.subr.mxu0 0.0
    %1734 = vmatpush1.msra.mxu0 0.0
    %1735 = vmatprep.subr.mxu0 0.0
    %1736 = vmatpush1.msra.mxu0 0.0
    %1737 = vmatprep.subr.mxu0 0.0
    %1738 = vmatpush1.msra.mxu0 0.0
    %1739 = vmatprep.subr.mxu0 0.0
    %1740 = vmatpush1.msra.mxu0 0.0
    %1741 = vmatprep.subr.mxu0 0.0
    %1742 = vmatpush1.msra.mxu0 0.0
    %1743 = vmatprep.subr.mxu0 0.0
    %1744 = vmatpush1.msra.mxu0 0.0
    %1745 = vmatprep.subr.mxu0 0.0
    %1746 = vmatpush1.msra.mxu0 0.0
    %1747 = vmatprep.subr.mxu0 0.0
    %1748 = vmatpush1.msra.mxu0 0.0
    %1749 = vmatprep.subr.mxu0 0.0
    %1750 = vmatpush1.msra.mxu0 0.0
    %1751 = vmatprep.subr.mxu0 0.0
    %1752 = vmatpush1.msra.mxu0 0.0
    %1753 = vmatprep.subr.mxu0 0.0
    %1754 = vmatpush1.msra.mxu0 0.0
    %1755 = vmatprep.subr.mxu0 0.0
    %1756 = vmatpush1.msra.mxu0 0.0
    %1757 = vmatprep.subr.mxu0 0.0
    %1758 = vmatpush1.msra.mxu0 0.0
    %1759 = vmatprep.subr.mxu0 0.0
    %1760 = vmatpush1.msra.mxu0 0.0
    %1761 = vmatprep.subr.mxu0 0.0
    %1762 = vmatpush1.msra.mxu0 0.0
    %1763 = vmatprep.subr.mxu0 0.0
    %1764 = vmatpush1.msra.mxu0 0.0
    %1765 = vmatprep.subr.mxu0 0.0
    %1766 = vmatpush1.msra.mxu0 0.0
    %1767 = vmatprep.subr.mxu0 0.0
    %1768 = vmatpush1.msra.mxu0 0.0
    %1769 = vmatprep.subr.mxu0 0.0
    %1770 = vmatpush1.msra.mxu0 0.0
    %1771 = vmatprep.subr.mxu0 0.0
    %1772 = vmatpush1.msra.mxu0 0.0
    %1773 = vmatprep.subr.mxu0 0.0
    %1774 = vmatpush1.msra.mxu0 0.0
    %1775 = vmatprep.subr.mxu0 0.0
    %1776 = vmatpush1.msra.mxu0 0.0
    %1777 = vmatprep.subr.mxu0 0.0
    %1778 = vmatpush1.msra.mxu0 0.0
    %1779 = vmatprep.subr.mxu0 0.0
    %1780 = vmatpush1.msra.mxu0 0.0
    %1781 = vmatprep.subr.mxu0 0.0
    %1782 = vmatpush1.msra.mxu0 0.0
    %1783 = vmatprep.subr.mxu0 0.0
    %1784 = vmatpush1.msra.mxu0 0.0
    %1785 = vmatprep.mubr.f32.mxu0 0.0
    %1786 = vmatmul.mubr.f32.gmra.mrb[0].mxu0 %v1719
    %v1787 = vpop.f32.mrb[0].mxu0
    %v1788 = vadd.f32 %v1713, %v1787
    %v1789 = vpop.f32.mrb[0].mxu0
    %1790 = vdwg.mxu0
    %v1791 = vadd.f32 %v1788, %v409
    %v1792 = vxor.u32 %v1791, 2147483648
    %v1793 = vmul.f32 %v1792, 1.442695
    %v1794 = vpow.pop %v1793
    %v1795 = vadd.f32 %v1794, 1.0
    %v1796 = vrcp.pop %v1795
    %v1797 = vmul.f32 1.0, %v1796
    %v1798 = vtanh.pop %v1791
    %v1799 = vmul.f32 %v1797, %v1464
    %1801 = vrot.lane.b32.xlu0 %v1798, 64
    %v1802 = vpop.permute.xlu0 %1801
    %v1804 = vmul.f32 %v1797, %v1802
    %1806 = vrot.lane.b32.xlu0 %v1804, 32
    %v1807 = vpop.permute.xlu0 %1806
    %v1809 = vadd.f32 %v1799, %v1807
    %v1810 = vtanh.pop %v1809
    %1812 = vrot.lane.b32.xlu0 %v1810, 64
    %v1813 = vpop.permute.xlu0 %1812
    %v1815 = vmul.f32 %v1797, %v1813
    %s1816 = scalar_lea.vmem %s1, 40
    %v1817 = vld [vmem:[%s1816] sm:$0xff]
    %1818 = vmatprep.subr.mxu0 0.0
    %1819 = vmatpush1.msra.mxu0 %v67
    %1820 = vmatprep.subr.mxu0 0.0
    %1821 = vmatpush1.msra.mxu0 %v68
    %1822 = vmatprep.subr.mxu0 0.0
    %1823 = vmatpush1.msra.mxu0 %v69
    %1824 = vmatprep.subr.mxu0 0.0
    %1825 = vmatpush1.msra.mxu0 %v70
    %1826 = vmatprep.subr.mxu0 0.0
    %1827 = vmatpush1.msra.mxu0 0.0
    %1828 = vmatprep.subr.mxu0 0.0
    %1829 = vmatpush1.msra.mxu0 0.0
    %1830 = vmatprep.subr.mxu0 0.0
    %1831 = vmatpush1.msra.mxu0 0.0
    %1832 = vmatprep.subr.mxu0 0.0
    %1833 = vmatpush1.msra.mxu0 0.0
    %1834 = vmatprep.subr.mxu0 0.0
    %1835 = vmatpush1.msra.mxu0 0.0
    %1836 = vmatprep.subr.mxu0 0.0
    %1837 = vmatpush1.msra.mxu0 0.0
    %1838 = vmatprep.subr.mxu0 0.0
    %1839 = vmatpush1.msra.mxu0 0.0
    %1840 = vmatprep.subr.mxu0 0.0
    %1841 = vmatpush1.msra.mxu0 0.0
    %1842 = vmatprep.subr.mxu0 0.0
    %1843 = vmatpush1.msra.mxu0 0.0
    %1844 = vmatprep.subr.mxu0 0.0
    %1845 = vmatpush1.msra.mxu0 0.0
    %1846 = vmatprep.subr.mxu0 0.0
    %1847 = vmatpush1.msra.mxu0 0.0
    %1848 = vmatprep.subr.mxu0 0.0
    %1849 = vmatpush1.msra.mxu0 0.0
    %1850 = vmatprep.subr.mxu0 0.0
    %1851 = vmatpush1.msra.mxu0 0.0
    %1852 = vmatprep.subr.mxu0 0.0
    %1853 = vmatpush1.msra.mxu0 0.0
    %1854 = vmatprep.subr.mxu0 0.0
    %1855 = vmatpush1.msra.mxu0 0.0
    %1856 = vmatprep.subr.mxu0 0.0
    %1857 = vmatpush1.msra.mxu0 0.0
    %1858 = vmatprep.subr.mxu0 0.0
    %1859 = vmatpush1.msra.mxu0 0.0
    %1860 = vmatprep.subr.mxu0 0.0
    %1861 = vmatpush1.msra.mxu0 0.0
    %1862 = vmatprep.subr.mxu0 0.0
    %1863 = vmatpush1.msra.mxu0 0.0
    %1864 = vmatprep.subr.mxu0 0.0
    %1865 = vmatpush1.msra.mxu0 0.0
    %1866 = vmatprep.subr.mxu0 0.0
    %1867 = vmatpush1.msra.mxu0 0.0
    %1868 = vmatprep.subr.mxu0 0.0
    %1869 = vmatpush1.msra.mxu0 0.0
    %1870 = vmatprep.subr.mxu0 0.0
    %1871 = vmatpush1.msra.mxu0 0.0
    %1872 = vmatprep.subr.mxu0 0.0
    %1873 = vmatpush1.msra.mxu0 0.0
    %1874 = vmatprep.subr.mxu0 0.0
    %1875 = vmatpush1.msra.mxu0 0.0
    %1876 = vmatprep.subr.mxu0 0.0
    %1877 = vmatpush1.msra.mxu0 0.0
    %1878 = vmatprep.subr.mxu0 0.0
    %1879 = vmatpush1.msra.mxu0 0.0
    %1880 = vmatprep.subr.mxu0 0.0
    %1881 = vmatpush1.msra.mxu0 0.0
    %1882 = vmatprep.mubr.f32.mxu0 0.0
    %1883 = vmatmul.mubr.f32.gmra.mrb[0].mxu0 %v1719
    %v1884 = vpop.f32.mrb[0].mxu0
    %v1885 = vadd.f32 0.0, %v1884
    %v1886 = vpop.f32.mrb[0].mxu0
    %1887 = vdwg.mxu0
    %v1889 = vsel %vm145, %v1817, 0
    %1891 = vmatprep.subr.mxu0 0.0
    %1892 = vmatpush1.msra.mxu0 %v65
    %1893 = vmatprep.subr.mxu0 0.0
    %1894 = vmatpush1.msra.mxu0 %v66
    %1895 = vmatprep.subr.mxu0 0.0
    %1896 = vmatpush1.msra.mxu0 0.0
    %1897 = vmatprep.subr.mxu0 0.0
    %1898 = vmatpush1.msra.mxu0 0.0
    %1899 = vmatprep.subr.mxu0 0.0
    %1900 = vmatpush1.msra.mxu0 0.0
    %1901 = vmatprep.subr.mxu0 0.0
    %1902 = vmatpush1.msra.mxu0 0.0
    %1903 = vmatprep.subr.mxu0 0.0
    %1904 = vmatpush1.msra.mxu0 0.0
    %1905 = vmatprep.subr.mxu0 0.0
    %1906 = vmatpush1.msra.mxu0 0.0
    %1907 = vmatprep.subr.mxu0 0.0
    %1908 = vmatpush1.msra.mxu0 0.0
    %1909 = vmatprep.subr.mxu0 0.0
    %1910 = vmatpush1.msra.mxu0 0.0
    %1911 = vmatprep.subr.mxu0 0.0
    %1912 = vmatpush1.msra.mxu0 0.0
    %1913 = vmatprep.subr.mxu0 0.0
    %1914 = vmatpush1.msra.mxu0 0.0
    %1915 = vmatprep.subr.mxu0 0.0
    %1916 = vmatpush1.msra.mxu0 0.0
    %1917 = vmatprep.subr.mxu0 0.0
    %1918 = vmatpush1.msra.mxu0 0.0
    %1919 = vmatprep.subr.mxu0 0.0
    %1920 = vmatpush1.msra.mxu0 0.0
    %1921 = vmatprep.subr.mxu0 0.0
    %1922 = vmatpush1.msra.mxu0 0.0
    %1923 = vmatprep.subr.mxu0 0.0
    %1924 = vmatpush1.msra.mxu0 0.0
    %1925 = vmatprep.subr.mxu0 0.0
    %1926 = vmatpush1.msra.mxu0 0.0
    %1927 = vmatprep.subr.mxu0 0.0
    %1928 = vmatpush1.msra.mxu0 0.0
    %1929 = vmatprep.subr.mxu0 0.0
    %1930 = vmatpush1.msra.mxu0 0.0
    %1931 = vmatprep.subr.mxu0 0.0
    %1932 = vmatpush1.msra.mxu0 0.0
    %1933 = vmatprep.subr.mxu0 0.0
    %1934 = vmatpush1.msra.mxu0 0.0
    %1935 = vmatprep.subr.mxu0 0.0
    %1936 = vmatpush1.msra.mxu0 0.0
    %1937 = vmatprep.subr.mxu0 0.0
    %1938 = vmatpush1.msra.mxu0 0.0
    %1939 = vmatprep.subr.mxu0 0.0
    %1940 = vmatpush1.msra.mxu0 0.0
    %1941 = vmatprep.subr.mxu0 0.0
    %1942 = vmatpush1.msra.mxu0 0.0
    %1943 = vmatprep.subr.mxu0 0.0
    %1944 = vmatpush1.msra.mxu0 0.0
    %1945 = vmatprep.subr.mxu0 0.0
    %1946 = vmatpush1.msra.mxu0 0.0
    %1947 = vmatprep.subr.mxu0 0.0
    %1948 = vmatpush1.msra.mxu0 0.0
    %1949 = vmatprep.subr.mxu0 0.0
    %1950 = vmatpush1.msra.mxu0 0.0
    %1951 = vmatprep.subr.mxu0 0.0
    %1952 = vmatpush1.msra.mxu0 0.0
    %1953 = vmatprep.subr.mxu0 0.0
    %1954 = vmatpush1.msra.mxu0 0.0
    %1955 = vmatprep.mubr.f32.mxu0 0.0
    %1956 = vmatmul.mubr.f32.gmra.mrb[0].mxu0 %v1889
    %v1957 = vpop.f32.mrb[0].mxu0
    %v1958 = vadd.f32 %v1885, %v1957
    %v1959 = vpop.f32.mrb[0].mxu0
    %1960 = vdwg.mxu0
    %v1961 = vadd.f32 %v1958, %v224
    %v1962 = vxor.u32 %v1961, 2147483648
    %v1963 = vmul.f32 %v1962, 1.442695
    %v1964 = vpow.pop %v1963
    %v1965 = vadd.f32 %v1964, 1.0
    %v1966 = vrcp.pop %v1965
    %v1967 = vmul.f32 1.0, %v1966
    %v1968 = vtanh.pop %v1961
    %v1969 = vmul.f32 %v1967, %v1634
    %1971 = vrot.lane.b32.xlu0 %v1968, 64
    %v1972 = vpop.permute.xlu0 %1971
    %v1974 = vmul.f32 %v1967, %v1972
    %1976 = vrot.lane.b32.xlu0 %v1974, 32
    %v1977 = vpop.permute.xlu0 %1976
    %v1979 = vadd.f32 %v1969, %v1977
    %v1980 = vtanh.pop %v1979
    %1982 = vrot.lane.b32.xlu0 %v1980, 64
    %v1983 = vpop.permute.xlu0 %1982
    %v1985 = vmul.f32 %v1967, %v1983
    %1987 = vrot.lane.b32.xlu0 %v1815, 32
    %v1988 = vpop.permute.xlu0 %1987
    %v1989 = vsel %vm71, %v1988, 0
    %1991 = vmatprep.subr.mxu0 0.0
    %1992 = vmatpush1.msra.mxu0 %v255
    %1993 = vmatprep.subr.mxu0 0.0
    %1994 = vmatpush1.msra.mxu0 %v256
    %1995 = vmatprep.subr.mxu0 0.0
    %1996 = vmatpush1.msra.mxu0 %v257
    %1997 = vmatprep.subr.mxu0 0.0
    %1998 = vmatpush1.msra.mxu0 %v258
    %1999 = vmatprep.subr.mxu0 0.0
    %2000 = vmatpush1.msra.mxu0 0.0
    %2001 = vmatprep.subr.mxu0 0.0
    %2002 = vmatpush1.msra.mxu0 0.0
    %2003 = vmatprep.subr.mxu0 0.0
    %2004 = vmatpush1.msra.mxu0 0.0
    %2005 = vmatprep.subr.mxu0 0.0
    %2006 = vmatpush1.msra.mxu0 0.0
    %2007 = vmatprep.subr.mxu0 0.0
    %2008 = vmatpush1.msra.mxu0 0.0
    %2009 = vmatprep.subr.mxu0 0.0
    %2010 = vmatpush1.msra.mxu0 0.0
    %2011 = vmatprep.subr.mxu0 0.0
    %2012 = vmatpush1.msra.mxu0 0.0
    %2013 = vmatprep.subr.mxu0 0.0
    %2014 = vmatpush1.msra.mxu0 0.0
    %2015 = vmatprep.subr.mxu0 0.0
    %2016 = vmatpush1.msra.mxu0 0.0
    %2017 = vmatprep.subr.mxu0 0.0
    %2018 = vmatpush1.msra.mxu0 0.0
    %2019 = vmatprep.subr.mxu0 0.0
    %2020 = vmatpush1.msra.mxu0 0.0
    %2021 = vmatprep.subr.mxu0 0.0
    %2022 = vmatpush1.msra.mxu0 0.0
    %2023 = vmatprep.subr.mxu0 0.0
    %2024 = vmatpush1.msra.mxu0 0.0
    %2025 = vmatprep.subr.mxu0 0.0
    %2026 = vmatpush1.msra.mxu0 0.0
    %2027 = vmatprep.subr.mxu0 0.0
    %2028 = vmatpush1.msra.mxu0 0.0
    %2029 = vmatprep.subr.mxu0 0.0
    %2030 = vmatpush1.msra.mxu0 0.0
    %2031 = vmatprep.subr.mxu0 0.0
    %2032 = vmatpush1.msra.mxu0 0.0
    %2033 = vmatprep.subr.mxu0 0.0
    %2034 = vmatpush1.msra.mxu0 0.0
    %2035 = vmatprep.subr.mxu0 0.0
    %2036 = vmatpush1.msra.mxu0 0.0
    %2037 = vmatprep.subr.mxu0 0.0
    %2038 = vmatpush1.msra.mxu0 0.0
    %2039 = vmatprep.subr.mxu0 0.0
    %2040 = vmatpush1.msra.mxu0 0.0
    %2041 = vmatprep.subr.mxu0 0.0
    %2042 = vmatpush1.msra.mxu0 0.0
    %2043 = vmatprep.subr.mxu0 0.0
    %2044 = vmatpush1.msra.mxu0 0.0
    %2045 = vmatprep.subr.mxu0 0.0
    %2046 = vmatpush1.msra.mxu0 0.0
    %2047 = vmatprep.subr.mxu0 0.0
    %2048 = vmatpush1.msra.mxu0 0.0
    %2049 = vmatprep.subr.mxu0 0.0
    %2050 = vmatpush1.msra.mxu0 0.0
    %2051 = vmatprep.subr.mxu0 0.0
    %2052 = vmatpush1.msra.mxu0 0.0
    %2053 = vmatprep.subr.mxu0 0.0
    %2054 = vmatpush1.msra.mxu0 0.0
    %2055 = vmatprep.mubr.f32.mxu0 0.0
    %2056 = vmatmul.mubr.f32.gmra.mrb[0].mxu0 %v1989
    %v2057 = vpop.f32.mrb[0].mxu0
    %v2058 = vadd.f32 0.0, %v2057
    %v2059 = vpop.f32.mrb[0].mxu0
    %2060 = vdwg.mxu0
    %2062 = vrot.lane.b32.xlu0 %v1985, 32
    %v2063 = vpop.permute.xlu0 %2062
    %v2064 = vsel %vm71, %v2063, 0
    %2066 = vmatprep.subr.mxu0 0.0
    %2067 = vmatpush1.msra.mxu0 %v251
    %2068 = vmatprep.subr.mxu0 0.0
    %2069 = vmatpush1.msra.mxu0 %v252
    %2070 = vmatprep.subr.mxu0 0.0
    %2071 = vmatpush1.msra.mxu0 %v253
    %2072 = vmatprep.subr.mxu0 0.0
    %2073 = vmatpush1.msra.mxu0 %v254
    %2074 = vmatprep.subr.mxu0 0.0
    %2075 = vmatpush1.msra.mxu0 0.0
    %2076 = vmatprep.subr.mxu0 0.0
    %2077 = vmatpush1.msra.mxu0 0.0
    %2078 = vmatprep.subr.mxu0 0.0
    %2079 = vmatpush1.msra.mxu0 0.0
    %2080 = vmatprep.subr.mxu0 0.0
    %2081 = vmatpush1.msra.mxu0 0.0
    %2082 = vmatprep.subr.mxu0 0.0
    %2083 = vmatpush1.msra.mxu0 0.0
    %2084 = vmatprep.subr.mxu0 0.0
    %2085 = vmatpush1.msra.mxu0 0.0
    %2086 = vmatprep.subr.mxu0 0.0
    %2087 = vmatpush1.msra.mxu0 0.0
    %2088 = vmatprep.subr.mxu0 0.0
    %2089 = vmatpush1.msra.mxu0 0.0
    %2090 = vmatprep.subr.mxu0 0.0
    %2091 = vmatpush1.msra.mxu0 0.0
    %2092 = vmatprep.subr.mxu0 0.0
    %2093 = vmatpush1.msra.mxu0 0.0
    %2094 = vmatprep.subr.mxu0 0.0
    %2095 = vmatpush1.msra.mxu0 0.0
    %2096 = vmatprep.subr.mxu0 0.0
    %2097 = vmatpush1.msra.mxu0 0.0
    %2098 = vmatprep.subr.mxu0 0.0
    %2099 = vmatpush1.msra.mxu0 0.0
    %2100 = vmatprep.subr.mxu0 0.0
    %2101 = vmatpush1.msra.mxu0 0.0
    %2102 = vmatprep.subr.mxu0 0.0
    %2103 = vmatpush1.msra.mxu0 0.0
    %2104 = vmatprep.subr.mxu0 0.0
    %2105 = vmatpush1.msra.mxu0 0.0
    %2106 = vmatprep.subr.mxu0 0.0
    %2107 = vmatpush1.msra.mxu0 0.0
    %2108 = vmatprep.subr.mxu0 0.0
    %2109 = vmatpush1.msra.mxu0 0.0
    %2110 = vmatprep.subr.mxu0 0.0
    %2111 = vmatpush1.msra.mxu0 0.0
    %2112 = vmatprep.subr.mxu0 0.0
    %2113 = vmatpush1.msra.mxu0 0.0
    %2114 = vmatprep.subr.mxu0 0.0
    %2115 = vmatpush1.msra.mxu0 0.0
    %2116 = vmatprep.subr.mxu0 0.0
    %2117 = vmatpush1.msra.mxu0 0.0
    %2118 = vmatprep.subr.mxu0 0.0
    %2119 = vmatpush1.msra.mxu0 0.0
    %2120 = vmatprep.subr.mxu0 0.0
    %2121 = vmatpush1.msra.mxu0 0.0
    %2122 = vmatprep.subr.mxu0 0.0
    %2123 = vmatpush1.msra.mxu0 0.0
    %2124 = vmatprep.subr.mxu0 0.0
    %2125 = vmatpush1.msra.mxu0 0.0
    %2126 = vmatprep.subr.mxu0 0.0
    %2127 = vmatpush1.msra.mxu0 0.0
    %2128 = vmatprep.subr.mxu0 0.0
    %2129 = vmatpush1.msra.mxu0 0.0
    %2130 = vmatprep.mubr.f32.mxu0 0.0
    %2131 = vmatmul.mubr.f32.gmra.mrb[0].mxu0 %v2064
    %v2132 = vpop.f32.mrb[0].mxu0
    %v2133 = vadd.f32 %v2058, %v2132
    %v2134 = vpop.f32.mrb[0].mxu0
    %2135 = vdwg.mxu0
    %v2136 = vadd.f32 %v2133, %v409
    %v2137 = vxor.u32 %v2136, 2147483648
    %v2138 = vmul.f32 %v2137, 1.442695
    %v2139 = vpow.pop %v2138
    %v2140 = vadd.f32 %v2139, 1.0
    %v2141 = vrcp.pop %v2140
    %v2142 = vmul.f32 1.0, %v2141
    %v2143 = vtanh.pop %v2136
    %v2144 = vmul.f32 %v2142, %v1809
    %2146 = vrot.lane.b32.xlu0 %v2143, 64
    %v2147 = vpop.permute.xlu0 %2146
    %v2149 = vmul.f32 %v2142, %v2147
    %2151 = vrot.lane.b32.xlu0 %v2149, 32
    %v2152 = vpop.permute.xlu0 %2151
    %v2154 = vadd.f32 %v2144, %v2152
    %v2155 = vtanh.pop %v2154
    %2157 = vrot.lane.b32.xlu0 %v2155, 64
    %v2158 = vpop.permute.xlu0 %2157
    %v2160 = vmul.f32 %v2142, %v2158
    %v2161 = vlaneseq
    %v2162 = vand.u32 %v2161, 127
    %vm2163 = vcmp.eq.s32.totalorder %v2162, 0
    %v2164 = vsel %vm2163, 1, 0
    %v2165 = vcvt.s32.f32 %v2164
    %v2166 = vld [vmem:[%s9] sm:$0xff]
    %v2167 = vld [vmem:[%s9 + $0x8] sm:$0x3]
    %vm2168 = vcmask 80896
    %v2170 = vsel %vm2168, %v2165, 0
    %vm2172 = vcmask 1041408
    %v2174 = vsel %vm2172, %v2167, 0
    %2176 = vmatprep.subr.mxu0 0.0
    %2177 = vmatpush1.msra.mxu0 %v2166
    %2178 = vmatprep.subr.mxu0 0.0
    %2179 = vmatpush1.msra.mxu0 %v2174
    %2180 = vmatprep.subr.mxu0 0.0
    %2181 = vmatpush1.msra.mxu0 0.0
    %2182 = vmatprep.subr.mxu0 0.0
    %2183 = vmatpush1.msra.mxu0 0.0
    %2184 = vmatprep.subr.mxu0 0.0
    %2185 = vmatpush1.msra.mxu0 0.0
    %2186 = vmatprep.subr.mxu0 0.0
    %2187 = vmatpush1.msra.mxu0 0.0
    %2188 = vmatprep.subr.mxu0 0.0
    %2189 = vmatpush1.msra.mxu0 0.0
    %2190 = vmatprep.subr.mxu0 0.0
    %2191 = vmatpush1.msra.mxu0 0.0
    %2192 = vmatprep.subr.mxu0 0.0
    %2193 = vmatpush1.msra.mxu0 0.0
    %2194 = vmatprep.subr.mxu0 0.0
    %2195 = vmatpush1.msra.mxu0 0.0
    %2196 = vmatprep.subr.mxu0 0.0
    %2197 = vmatpush1.msra.mxu0 0.0
    %2198 = vmatprep.subr.mxu0 0.0
    %2199 = vmatpush1.msra.mxu0 0.0
    %2200 = vmatprep.subr.mxu0 0.0
    %2201 = vmatpush1.msra.mxu0 0.0
    %2202 = vmatprep.subr.mxu0 0.0
    %2203 = vmatpush1.msra.mxu0 0.0
    %2204 = vmatprep.subr.mxu0 0.0
    %2205 = vmatpush1.msra.mxu0 0.0
    %2206 = vmatprep.subr.mxu0 0.0
    %2207 = vmatpush1.msra.mxu0 0.0
    %2208 = vmatprep.subr.mxu0 0.0
    %2209 = vmatpush1.msra.mxu0 0.0
    %2210 = vmatprep.subr.mxu0 0.0
    %2211 = vmatpush1.msra.mxu0 0.0
    %2212 = vmatprep.subr.mxu0 0.0
    %2213 = vmatpush1.msra.mxu0 0.0
    %2214 = vmatprep.subr.mxu0 0.0
    %2215 = vmatpush1.msra.mxu0 0.0
    %2216 = vmatprep.subr.mxu0 0.0
    %2217 = vmatpush1.msra.mxu0 0.0
    %2218 = vmatprep.subr.mxu0 0.0
    %2219 = vmatpush1.msra.mxu0 0.0
    %2220 = vmatprep.subr.mxu0 0.0
    %2221 = vmatpush1.msra.mxu0 0.0
    %2222 = vmatprep.subr.mxu0 0.0
    %2223 = vmatpush1.msra.mxu0 0.0
    %2224 = vmatprep.subr.mxu0 0.0
    %2225 = vmatpush1.msra.mxu0 0.0
    %2226 = vmatprep.subr.mxu0 0.0
    %2227 = vmatpush1.msra.mxu0 0.0
    %2228 = vmatprep.subr.mxu0 0.0
    %2229 = vmatpush1.msra.mxu0 0.0
    %2230 = vmatprep.subr.mxu0 0.0
    %2231 = vmatpush1.msra.mxu0 0.0
    %2232 = vmatprep.subr.mxu0 0.0
    %2233 = vmatpush1.msra.mxu0 0.0
    %2234 = vmatprep.subr.mxu0 0.0
    %2235 = vmatpush1.msra.mxu0 0.0
    %2236 = vmatprep.subr.mxu0 0.0
    %2237 = vmatpush1.msra.mxu0 0.0
    %2238 = vmatprep.subr.mxu0 0.0
    %2239 = vmatpush1.msra.mxu0 0.0
    %2240 = vmatprep.mubr.f32.mxu0 0.0
    %2241 = vmatmul.mubr.f32.gmra.mrb[0].mxu0 %v2170
    %v2242 = vpop.f32.mrb[0].mxu0
    %v2243 = vadd.f32 0.0, %v2242
    %v2244 = vpop.f32.mrb[0].mxu0
    %2245 = vdwg.mxu0
    %v2246 = vld [vmem:[%s10] sm:$0xff]
    %v2247 = vld [vmem:[%s10 + $0x8] sm:$0xff]
    %v2248 = vld [vmem:[%s11] sm:$0xff]
    %v2249 = vld [vmem:[%s11 + $0x8] sm:$0xff]
    %v2250 = vld [vmem:[%s11 + $0x10] sm:$0xff]
    %v2251 = vld [vmem:[%s11 + $0x18] sm:$0xff]
    %2252 = vmatprep.subr.mxu0 0.0
    %2253 = vmatpush1.msra.mxu0 %v2248
    %2254 = vmatprep.subr.mxu0 0.0
    %2255 = vmatpush1.msra.mxu0 %v2249
    %2256 = vmatprep.subr.mxu0 0.0
    %2257 = vmatpush1.msra.mxu0 %v2250
    %2258 = vmatprep.subr.mxu0 0.0
    %2259 = vmatpush1.msra.mxu0 %v2251
    %2260 = vmatprep.subr.mxu0 0.0
    %2261 = vmatpush1.msra.mxu0 0.0
    %2262 = vmatprep.subr.mxu0 0.0
    %2263 = vmatpush1.msra.mxu0 0.0
    %2264 = vmatprep.subr.mxu0 0.0
    %2265 = vmatpush1.msra.mxu0 0.0
    %2266 = vmatprep.subr.mxu0 0.0
    %2267 = vmatpush1.msra.mxu0 0.0
    %2268 = vmatprep.subr.mxu0 0.0
    %2269 = vmatpush1.msra.mxu0 0.0
    %2270 = vmatprep.subr.mxu0 0.0
    %2271 = vmatpush1.msra.mxu0 0.0
    %2272 = vmatprep.subr.mxu0 0.0
    %2273 = vmatpush1.msra.mxu0 0.0
    %2274 = vmatprep.subr.mxu0 0.0
    %2275 = vmatpush1.msra.mxu0 0.0
    %2276 = vmatprep.subr.mxu0 0.0
    %2277 = vmatpush1.msra.mxu0 0.0
    %2278 = vmatprep.subr.mxu0 0.0
    %2279 = vmatpush1.msra.mxu0 0.0
    %2280 = vmatprep.subr.mxu0 0.0
    %2281 = vmatpush1.msra.mxu0 0.0
    %2282 = vmatprep.subr.mxu0 0.0
    %2283 = vmatpush1.msra.mxu0 0.0
    %2284 = vmatprep.subr.mxu0 0.0
    %2285 = vmatpush1.msra.mxu0 0.0
    %2286 = vmatprep.subr.mxu0 0.0
    %2287 = vmatpush1.msra.mxu0 0.0
    %2288 = vmatprep.subr.mxu0 0.0
    %2289 = vmatpush1.msra.mxu0 0.0
    %2290 = vmatprep.subr.mxu0 0.0
    %2291 = vmatpush1.msra.mxu0 0.0
    %2292 = vmatprep.subr.mxu0 0.0
    %2293 = vmatpush1.msra.mxu0 0.0
    %2294 = vmatprep.subr.mxu0 0.0
    %2295 = vmatpush1.msra.mxu0 0.0
    %2296 = vmatprep.subr.mxu0 0.0
    %2297 = vmatpush1.msra.mxu0 0.0
    %2298 = vmatprep.subr.mxu0 0.0
    %2299 = vmatpush1.msra.mxu0 0.0
    %2300 = vmatprep.subr.mxu0 0.0
    %2301 = vmatpush1.msra.mxu0 0.0
    %2302 = vmatprep.subr.mxu0 0.0
    %2303 = vmatpush1.msra.mxu0 0.0
    %2304 = vmatprep.subr.mxu0 0.0
    %2305 = vmatpush1.msra.mxu0 0.0
    %2306 = vmatprep.subr.mxu0 0.0
    %2307 = vmatpush1.msra.mxu0 0.0
    %2308 = vmatprep.subr.mxu0 0.0
    %2309 = vmatpush1.msra.mxu0 0.0
    %2310 = vmatprep.subr.mxu0 0.0
    %2311 = vmatpush1.msra.mxu0 0.0
    %2312 = vmatprep.subr.mxu0 0.0
    %2313 = vmatpush1.msra.mxu0 0.0
    %2314 = vmatprep.subr.mxu0 0.0
    %2315 = vmatpush1.msra.mxu0 0.0
    %2316 = vmatprep.mubr.f32.mxu0 0.0
    %2317 = vmatmul.mubr.f32.gmra.mrb[0].mxu0 %v2064
    %v2318 = vpop.f32.mrb[0].mxu0
    %v2319 = vadd.f32 0.0, %v2318
    %v2320 = vpop.f32.mrb[0].mxu0
    %2321 = vdwg.mxu0
    %v2323 = vsel %vm145, %v2243, 0
    %2325 = vmatprep.subr.mxu0 0.0
    %2326 = vmatpush1.msra.mxu0 %v2246
    %2327 = vmatprep.subr.mxu0 0.0
    %2328 = vmatpush1.msra.mxu0 %v2247
    %2329 = vmatprep.subr.mxu0 0.0
    %2330 = vmatpush1.msra.mxu0 0.0
    %2331 = vmatprep.subr.mxu0 0.0
    %2332 = vmatpush1.msra.mxu0 0.0
    %2333 = vmatprep.subr.mxu0 0.0
    %2334 = vmatpush1.msra.mxu0 0.0
    %2335 = vmatprep.subr.mxu0 0.0
    %2336 = vmatpush1.msra.mxu0 0.0
    %2337 = vmatprep.subr.mxu0 0.0
    %2338 = vmatpush1.msra.mxu0 0.0
    %2339 = vmatprep.subr.mxu0 0.0
    %2340 = vmatpush1.msra.mxu0 0.0
    %2341 = vmatprep.subr.mxu0 0.0
    %2342 = vmatpush1.msra.mxu0 0.0
    %2343 = vmatprep.subr.mxu0 0.0
    %2344 = vmatpush1.msra.mxu0 0.0
    %2345 = vmatprep.subr.mxu0 0.0
    %2346 = vmatpush1.msra.mxu0 0.0
    %2347 = vmatprep.subr.mxu0 0.0
    %2348 = vmatpush1.msra.mxu0 0.0
    %2349 = vmatprep.subr.mxu0 0.0
    %2350 = vmatpush1.msra.mxu0 0.0
    %2351 = vmatprep.subr.mxu0 0.0
    %2352 = vmatpush1.msra.mxu0 0.0
    %2353 = vmatprep.subr.mxu0 0.0
    %2354 = vmatpush1.msra.mxu0 0.0
    %2355 = vmatprep.subr.mxu0 0.0
    %2356 = vmatpush1.msra.mxu0 0.0
    %2357 = vmatprep.subr.mxu0 0.0
    %2358 = vmatpush1.msra.mxu0 0.0
    %2359 = vmatprep.subr.mxu0 0.0
    %2360 = vmatpush1.msra.mxu0 0.0
    %2361 = vmatprep.subr.mxu0 0.0
    %2362 = vmatpush1.msra.mxu0 0.0
    %2363 = vmatprep.subr.mxu0 0.0
    %2364 = vmatpush1.msra.mxu0 0.0
    %2365 = vmatprep.subr.mxu0 0.0
    %2366 = vmatpush1.msra.mxu0 0.0
    %2367 = vmatprep.subr.mxu0 0.0
    %2368 = vmatpush1.msra.mxu0 0.0
    %2369 = vmatprep.subr.mxu0 0.0
    %2370 = vmatpush1.msra.mxu0 0.0
    %2371 = vmatprep.subr.mxu0 0.0
    %2372 = vmatpush1.msra.mxu0 0.0
    %2373 = vmatprep.subr.mxu0 0.0
    %2374 = vmatpush1.msra.mxu0 0.0
    %2375 = vmatprep.subr.mxu0 0.0
    %2376 = vmatpush1.msra.mxu0 0.0
    %2377 = vmatprep.subr.mxu0 0.0
    %2378 = vmatpush1.msra.mxu0 0.0
    %2379 = vmatprep.subr.mxu0 0.0
    %2380 = vmatpush1.msra.mxu0 0.0
    %2381 = vmatprep.subr.mxu0 0.0
    %2382 = vmatpush1.msra.mxu0 0.0
    %2383 = vmatprep.subr.mxu0 0.0
    %2384 = vmatpush1.msra.mxu0 0.0
    %2385 = vmatprep.subr.mxu0 0.0
    %2386 = vmatpush1.msra.mxu0 0.0
    %2387 = vmatprep.subr.mxu0 0.0
    %2388 = vmatpush1.msra.mxu0 0.0
    %2389 = vmatprep.mubr.f32.mxu0 0.0
    %2390 = vmatmul.mubr.f32.gmra.mrb[0].mxu0 %v2323
    %v2391 = vpop.f32.mrb[0].mxu0
    %v2392 = vadd.f32 %v2319, %v2391
    %v2393 = vpop.f32.mrb[0].mxu0
    %2394 = vdwg.mxu0
    %v2395 = vld [vmem:[%s12] sm:$0x1]
    %v2397 = vlaneseq
    %v2398 = vshrl.u32 %v2397, 7
    %v2399 = vsub.s32 0, %v2398
    %v2400 = vrot.slane %v2395, %v2399
    %v2402 = vadd.f32 %v2392, %v2400
    %v2403 = vxor.u32 %v2402, 2147483648
    %v2404 = vmul.f32 %v2403, 1.442695
    %v2405 = vpow.pop %v2404
    %v2406 = vadd.f32 %v2405, 1.0
    %v2407 = vrcp.pop %v2406
    %v2408 = vmul.f32 1.0, %v2407
    %v2409 = vtanh.pop %v2402
    %v2410 = vmul.f32 %v2408, %v1979
    %2412 = vrot.lane.b32.xlu0 %v2409, 64
    %v2413 = vpop.permute.xlu0 %2412
    %v2415 = vmul.f32 %v2408, %v2413
    %2417 = vrot.lane.b32.xlu0 %v2415, 32
    %v2418 = vpop.permute.xlu0 %2417
    %v2420 = vadd.f32 %v2410, %v2418
    %v2421 = vtanh.pop %v2420
    %2423 = vrot.lane.b32.xlu0 %v2421, 64
    %v2424 = vpop.permute.xlu0 %2423
    %v2426 = vmul.f32 %v2408, %v2424
    %v2427 = vld [vmem:[%s13] sm:$0xff]
    %v2428 = vld [vmem:[%s13 + $0x8] sm:$0xff]
    %v2429 = vld [vmem:[%s13 + $0x10] sm:$0xff]
    %v2430 = vld [vmem:[%s13 + $0x18] sm:$0xff]
    %v2431 = vld [vmem:[%s14] sm:$0xff]
    %v2432 = vld [vmem:[%s14 + $0x8] sm:$0xff]
    %v2433 = vld [vmem:[%s14 + $0x10] sm:$0xff]
    %v2434 = vld [vmem:[%s14 + $0x18] sm:$0xff]
    %2436 = vrot.lane.b32.xlu0 %v2160, 32
    %v2437 = vpop.permute.xlu0 %2436
    %v2438 = vsel %vm71, %v2437, 0
    %2440 = vmatprep.subr.mxu0 0.0
    %2441 = vmatpush1.msra.mxu0 %v2431
    %2442 = vmatprep.subr.mxu0 0.0
    %2443 = vmatpush1.msra.mxu0 %v2432
    %2444 = vmatprep.subr.mxu0 0.0
    %2445 = vmatpush1.msra.mxu0 %v2433
    %2446 = vmatprep.subr.mxu0 0.0
    %2447 = vmatpush1.msra.mxu0 %v2434
    %2448 = vmatprep.subr.mxu0 0.0
    %2449 = vmatpush1.msra.mxu0 0.0
    %2450 = vmatprep.subr.mxu0 0.0
    %2451 = vmatpush1.msra.mxu0 0.0
    %2452 = vmatprep.subr.mxu0 0.0
    %2453 = vmatpush1.msra.mxu0 0.0
    %2454 = vmatprep.subr.mxu0 0.0
    %2455 = vmatpush1.msra.mxu0 0.0
    %2456 = vmatprep.subr.mxu0 0.0
    %2457 = vmatpush1.msra.mxu0 0.0
    %2458 = vmatprep.subr.mxu0 0.0
    %2459 = vmatpush1.msra.mxu0 0.0
    %2460 = vmatprep.subr.mxu0 0.0
    %2461 = vmatpush1.msra.mxu0 0.0
    %2462 = vmatprep.subr.mxu0 0.0
    %2463 = vmatpush1.msra.mxu0 0.0
    %2464 = vmatprep.subr.mxu0 0.0
    %2465 = vmatpush1.msra.mxu0 0.0
    %2466 = vmatprep.subr.mxu0 0.0
    %2467 = vmatpush1.msra.mxu0 0.0
    %2468 = vmatprep.subr.mxu0 0.0
    %2469 = vmatpush1.msra.mxu0 0.0
    %2470 = vmatprep.subr.mxu0 0.0
    %2471 = vmatpush1.msra.mxu0 0.0
    %2472 = vmatprep.subr.mxu0 0.0
    %2473 = vmatpush1.msra.mxu0 0.0
    %2474 = vmatprep.subr.mxu0 0.0
    %2475 = vmatpush1.msra.mxu0 0.0
    %2476 = vmatprep.subr.mxu0 0.0
    %2477 = vmatpush1.msra.mxu0 0.0
    %2478 = vmatprep.subr.mxu0 0.0
    %2479 = vmatpush1.msra.mxu0 0.0
    %2480 = vmatprep.subr.mxu0 0.0
    %2481 = vmatpush1.msra.mxu0 0.0
    %2482 = vmatprep.subr.mxu0 0.0
    %2483 = vmatpush1.msra.mxu0 0.0
    %2484 = vmatprep.subr.mxu0 0.0
    %2485 = vmatpush1.msra.mxu0 0.0
    %2486 = vmatprep.subr.mxu0 0.0
    %2487 = vmatpush1.msra.mxu0 0.0
    %2488 = vmatprep.subr.mxu0 0.0
    %2489 = vmatpush1.msra.mxu0 0.0
    %2490 = vmatprep.subr.mxu0 0.0
    %2491 = vmatpush1.msra.mxu0 0.0
    %2492 = vmatprep.subr.mxu0 0.0
    %2493 = vmatpush1.msra.mxu0 0.0
    %2494 = vmatprep.subr.mxu0 0.0
    %2495 = vmatpush1.msra.mxu0 0.0
    %2496 = vmatprep.subr.mxu0 0.0
    %2497 = vmatpush1.msra.mxu0 0.0
    %2498 = vmatprep.subr.mxu0 0.0
    %2499 = vmatpush1.msra.mxu0 0.0
    %2500 = vmatprep.subr.mxu0 0.0
    %2501 = vmatpush1.msra.mxu0 0.0
    %2502 = vmatprep.subr.mxu0 0.0
    %2503 = vmatpush1.msra.mxu0 0.0
    %2504 = vmatprep.mubr.f32.mxu0 0.0
    %2505 = vmatmul.mubr.f32.gmra.mrb[0].mxu0 %v2438
    %v2506 = vpop.f32.mrb[0].mxu0
    %v2507 = vadd.f32 0.0, %v2506
    %v2508 = vpop.f32.mrb[0].mxu0
    %2509 = vdwg.mxu0
    %2511 = vrot.lane.b32.xlu0 %v2426, 32
    %v2512 = vpop.permute.xlu0 %2511
    %v2513 = vsel %vm71, %v2512, 0
    %2515 = vmatprep.subr.mxu0 0.0
    %2516 = vmatpush1.msra.mxu0 %v2427
    %2517 = vmatprep.subr.mxu0 0.0
    %2518 = vmatpush1.msra.mxu0 %v2428
    %2519 = vmatprep.subr.mxu0 0.0
    %2520 = vmatpush1.msra.mxu0 %v2429
    %2521 = vmatprep.subr.mxu0 0.0
    %2522 = vmatpush1.msra.mxu0 %v2430
    %2523 = vmatprep.subr.mxu0 0.0
    %2524 = vmatpush1.msra.mxu0 0.0
    %2525 = vmatprep.subr.mxu0 0.0
    %2526 = vmatpush1.msra.mxu0 0.0
    %2527 = vmatprep.subr.mxu0 0.0
    %2528 = vmatpush1.msra.mxu0 0.0
    %2529 = vmatprep.subr.mxu0 0.0
    %2530 = vmatpush1.msra.mxu0 0.0
    %2531 = vmatprep.subr.mxu0 0.0
    %2532 = vmatpush1.msra.mxu0 0.0
    %2533 = vmatprep.subr.mxu0 0.0
    %2534 = vmatpush1.msra.mxu0 0.0
    %2535 = vmatprep.subr.mxu0 0.0
    %2536 = vmatpush1.msra.mxu0 0.0
    %2537 = vmatprep.subr.mxu0 0.0
    %2538 = vmatpush1.msra.mxu0 0.0
    %2539 = vmatprep.subr.mxu0 0.0
    %2540 = vmatpush1.msra.mxu0 0.0
    %2541 = vmatprep.subr.mxu0 0.0
    %2542 = vmatpush1.msra.mxu0 0.0
    %2543 = vmatprep.subr.mxu0 0.0
    %2544 = vmatpush1.msra.mxu0 0.0
    %2545 = vmatprep.subr.mxu0 0.0
    %2546 = vmatpush1.msra.mxu0 0.0
    %2547 = vmatprep.subr.mxu0 0.0
    %2548 = vmatpush1.msra.mxu0 0.0
    %2549 = vmatprep.subr.mxu0 0.0
    %2550 = vmatpush1.msra.mxu0 0.0
    %2551 = vmatprep.subr.mxu0 0.0
    %2552 = vmatpush1.msra.mxu0 0.0
    %2553 = vmatprep.subr.mxu0 0.0
    %2554 = vmatpush1.msra.mxu0 0.0
    %2555 = vmatprep.subr.mxu0 0.0
    %2556 = vmatpush1.msra.mxu0 0.0
    %2557 = vmatprep.subr.mxu0 0.0
    %2558 = vmatpush1.msra.mxu0 0.0
    %2559 = vmatprep.subr.mxu0 0.0
    %2560 = vmatpush1.msra.mxu0 0.0
    %2561 = vmatprep.subr.mxu0 0.0
    %2562 = vmatpush1.msra.mxu0 0.0
    %2563 = vmatprep.subr.mxu0 0.0
    %2564 = vmatpush1.msra.mxu0 0.0
    %2565 = vmatprep.subr.mxu0 0.0
    %2566 = vmatpush1.msra.mxu0 0.0
    %2567 = vmatprep.subr.mxu0 0.0
    %2568 = vmatpush1.msra.mxu0 0.0
    %2569 = vmatprep.subr.mxu0 0.0
    %2570 = vmatpush1.msra.mxu0 0.0
    %2571 = vmatprep.subr.mxu0 0.0
    %2572 = vmatpush1.msra.mxu0 0.0
    %2573 = vmatprep.subr.mxu0 0.0
    %2574 = vmatpush1.msra.mxu0 0.0
    %2575 = vmatprep.subr.mxu0 0.0
    %2576 = vmatpush1.msra.mxu0 0.0
    %2577 = vmatprep.subr.mxu0 0.0
    %2578 = vmatpush1.msra.mxu0 0.0
    %2579 = vmatprep.mubr.f32.mxu0 0.0
    %2580 = vmatmul.mubr.f32.gmra.mrb[0].mxu0 %v2513
    %v2581 = vpop.f32.mrb[0].mxu0
    %v2582 = vadd.f32 %v2507, %v2581
    %v2583 = vpop.f32.mrb[0].mxu0
    %2584 = vdwg.mxu0
    %v2585 = vld [vmem:[%s15] sm:$0x1]
    %v2587 = vlaneseq
    %v2588 = vshrl.u32 %v2587, 7
    %v2589 = vsub.s32 0, %v2588
    %v2590 = vrot.slane %v2585, %v2589
    %v2592 = vadd.f32 %v2582, %v2590
    %v2593 = vxor.u32 %v2592, 2147483648
    %v2594 = vmul.f32 %v2593, 1.442695
    %v2595 = vpow.pop %v2594
    %v2596 = vadd.f32 %v2595, 1.0
    %v2597 = vrcp.pop %v2596
    %v2598 = vmul.f32 1.0, %v2597
    %v2599 = vtanh.pop %v2592
    %v2600 = vmul.f32 %v2598, %v2154
    %2602 = vrot.lane.b32.xlu0 %v2599, 64
    %v2603 = vpop.permute.xlu0 %2602
    %v2605 = vmul.f32 %v2598, %v2603
    %2607 = vrot.lane.b32.xlu0 %v2605, 32
    %v2608 = vpop.permute.xlu0 %2607
    %v2610 = vadd.f32 %v2600, %v2608
    %v2611 = vtanh.pop %v2610
    %2613 = vrot.lane.b32.xlu0 %v2611, 64
    %v2614 = vpop.permute.xlu0 %2613
    %v2616 = vmul.f32 %v2598, %v2614
    %v2617 = vld [vmem:[%s16] sm:$0xff]
    %v2618 = vld [vmem:[%s16 + $0x8] sm:$0xff]
    %v2619 = vld [vmem:[%s16 + $0x10] sm:$0xff]
    %v2620 = vld [vmem:[%s16 + $0x18] sm:$0xff]
    %v2621 = vld [vmem:[%s17] sm:$0x1]
    %v2623 = vlaneseq
    %v2624 = vshrl.u32 %v2623, 7
    %v2625 = vsub.s32 0, %v2624
    %v2626 = vrot.slane %v2621, %v2625
    %2629 = vrot.lane.b32.xlu0 %v2616, 32
    %v2630 = vpop.permute.xlu0 %2629
    %v2631 = vsel %vm71, %v2630, 0
    %2633 = vmatprep.subr.mxu0 0.0
    %2634 = vmatpush1.msra.mxu0 %v2617
    %2635 = vmatprep.subr.mxu0 0.0
    %2636 = vmatpush1.msra.mxu0 %v2618
    %2637 = vmatprep.subr.mxu0 0.0
    %2638 = vmatpush1.msra.mxu0 %v2619
    %2639 = vmatprep.subr.mxu0 0.0
    %2640 = vmatpush1.msra.mxu0 %v2620
    %2641 = vmatprep.subr.mxu0 0.0
    %2642 = vmatpush1.msra.mxu0 0.0
    %2643 = vmatprep.subr.mxu0 0.0
    %2644 = vmatpush1.msra.mxu0 0.0
    %2645 = vmatprep.subr.mxu0 0.0
    %2646 = vmatpush1.msra.mxu0 0.0
    %2647 = vmatprep.subr.mxu0 0.0
    %2648 = vmatpush1.msra.mxu0 0.0
    %2649 = vmatprep.subr.mxu0 0.0
    %2650 = vmatpush1.msra.mxu0 0.0
    %2651 = vmatprep.subr.mxu0 0.0
    %2652 = vmatpush1.msra.mxu0 0.0
    %2653 = vmatprep.subr.mxu0 0.0
    %2654 = vmatpush1.msra.mxu0 0.0
    %2655 = vmatprep.subr.mxu0 0.0
    %2656 = vmatpush1.msra.mxu0 0.0
    %2657 = vmatprep.subr.mxu0 0.0
    %2658 = vmatpush1.msra.mxu0 0.0
    %2659 = vmatprep.subr.mxu0 0.0
    %2660 = vmatpush1.msra.mxu0 0.0
    %2661 = vmatprep.subr.mxu0 0.0
    %2662 = vmatpush1.msra.mxu0 0.0
    %2663 = vmatprep.subr.mxu0 0.0
    %2664 = vmatpush1.msra.mxu0 0.0
    %2665 = vmatprep.subr.mxu0 0.0
    %2666 = vmatpush1.msra.mxu0 0.0
    %2667 = vmatprep.subr.mxu0 0.0
    %2668 = vmatpush1.msra.mxu0 0.0
    %2669 = vmatprep.subr.mxu0 0.0
    %2670 = vmatpush1.msra.mxu0 0.0
    %2671 = vmatprep.subr.mxu0 0.0
    %2672 = vmatpush1.msra.mxu0 0.0
    %2673 = vmatprep.subr.mxu0 0.0
    %2674 = vmatpush1.msra.mxu0 0.0
    %2675 = vmatprep.subr.mxu0 0.0
    %2676 = vmatpush1.msra.mxu0 0.0
    %2677 = vmatprep.subr.mxu0 0.0
    %2678 = vmatpush1.msra.mxu0 0.0
    %2679 = vmatprep.subr.mxu0 0.0
    %2680 = vmatpush1.msra.mxu0 0.0
    %2681 = vmatprep.subr.mxu0 0.0
    %2682 = vmatpush1.msra.mxu0 0.0
    %2683 = vmatprep.subr.mxu0 0.0
    %2684 = vmatpush1.msra.mxu0 0.0
    %2685 = vmatprep.subr.mxu0 0.0
    %2686 = vmatpush1.msra.mxu0 0.0
    %2687 = vmatprep.subr.mxu0 0.0
    %2688 = vmatpush1.msra.mxu0 0.0
    %2689 = vmatprep.subr.mxu0 0.0
    %2690 = vmatpush1.msra.mxu0 0.0
    %2691 = vmatprep.subr.mxu0 0.0
    %2692 = vmatpush1.msra.mxu0 0.0
    %2693 = vmatprep.subr.mxu0 0.0
    %2694 = vmatpush1.msra.mxu0 0.0
    %2695 = vmatprep.subr.mxu0 0.0
    %2696 = vmatpush1.msra.mxu0 0.0
    %2697 = vmatprep.mubr.f32.mxu0 0.0
    %2698 = vmatmul.mubr.f32.gmra.mrb[0].mxu0 %v2631
    %v2699 = vpop.f32.mrb[0].mxu0
    %v2700 = vadd.f32 %v2626, %v2699
    %v2701 = vpop.f32.mrb[0].mxu0
    %2702 = vdwg.mxu0
    %2703 = vst.msk [vmem:[#allocation4] sm:$0xff] %vm2168, %v2700
    %v2704 = vsel %vm2168, %v2700, -inf
    %2705 = vmax.xlane.f32.xlu0 %v2704
    %v2706 = vpop.xlane.xlu0 %2705
    %vm2707 = vcmp.eq.f32.partialorder %v2700, %v2706
    %v2708 = vsel %vm2707, %v2162, 10
    %v2709 = vsel %vm2168, %v2708, 2147483647
    %v2710 = vand.u32 %v2709, 65535
    %v2711 = vshra.s32 %v2709, 16
    %v2712 = vcvt.s32.f32 %v2710
    %v2713 = vcvt.s32.f32 %v2711
    %2714 = vmin.xlane.f32.xlu0 %v2713
    %v2715 = vpop.xlane.xlu0 %2714
    %vm2716 = vcmp.eq.f32.partialorder %v2713, %v2715
    %v2717 = vsel %vm2716, %v2712, inf
    %2718 = vmin.xlane.f32.xlu0 %v2717
    %v2719 = vpop.xlane.xlu0 %2718
    %v2720 = vcvt.f32.s32 %v2719
    %v2721 = vcvt.f32.s32 %v2715
    %v2722 = vshll.u32 %v2721, 16
    %v2723 = vadd.s32 %v2722, %v2720
    %vm2724 = vcmp.eq.s32.totalorder %v2162, %v2723
    %v2725 = vsel %vm2724, 1, 0
    %v2726 = vcvt.s32.f32 %v2725
    %s2727 = sld [smem:[#allocation3]]
    %s2728 = scvt.s32.f32 %s2727
    %v2729 = vld [vmem:[%s2] sm:$0xff]
    %v2730 = vstv %s2728
    %v2731 = vmul.f32 %v2730, %v2729
    %s2732 = ssub.f32 1.0, %s2728
    %v2733 = vstv %s2732
    %v2734 = vmul.f32 %v2733, %v2726
    %v2735 = vadd.f32 %v2731, %v2734
    %v2736 = vld [vmem:[%s9] sm:$0xff]
    %v2737 = vld [vmem:[%s9 + $0x8] sm:$0x3]
    %v2739 = vsel %vm2168, %v2735, 0
    %v2742 = vsel %vm2172, %v2737, 0
    %2744 = vmatprep.subr.mxu0 0.0
    %2745 = vmatpush1.msra.mxu0 %v2736
    %2746 = vmatprep.subr.mxu0 0.0
    %2747 = vmatpush1.msra.mxu0 %v2742
    %2748 = vmatprep.subr.mxu0 0.0
    %2749 = vmatpush1.msra.mxu0 0.0
    %2750 = vmatprep.subr.mxu0 0.0
    %2751 = vmatpush1.msra.mxu0 0.0
    %2752 = vmatprep.subr.mxu0 0.0
    %2753 = vmatpush1.msra.mxu0 0.0
    %2754 = vmatprep.subr.mxu0 0.0
    %2755 = vmatpush1.msra.mxu0 0.0
    %2756 = vmatprep.subr.mxu0 0.0
    %2757 = vmatpush1.msra.mxu0 0.0
    %2758 = vmatprep.subr.mxu0 0.0
    %2759 = vmatpush1.msra.mxu0 0.0
    %2760 = vmatprep.subr.mxu0 0.0
    %2761 = vmatpush1.msra.mxu0 0.0
    %2762 = vmatprep.subr.mxu0 0.0
    %2763 = vmatpush1.msra.mxu0 0.0
    %2764 = vmatprep.subr.mxu0 0.0
    %2765 = vmatpush1.msra.mxu0 0.0
    %2766 = vmatprep.subr.mxu0 0.0
    %2767 = vmatpush1.msra.mxu0 0.0
    %2768 = vmatprep.subr.mxu0 0.0
    %2769 = vmatpush1.msra.mxu0 0.0
    %2770 = vmatprep.subr.mxu0 0.0
    %2771 = vmatpush1.msra.mxu0 0.0
    %2772 = vmatprep.subr.mxu0 0.0
    %2773 = vmatpush1.msra.mxu0 0.0
    %2774 = vmatprep.subr.mxu0 0.0
    %2775 = vmatpush1.msra.mxu0 0.0
    %2776 = vmatprep.subr.mxu0 0.0
    %2777 = vmatpush1.msra.mxu0 0.0
    %2778 = vmatprep.subr.mxu0 0.0
    %2779 = vmatpush1.msra.mxu0 0.0
    %2780 = vmatprep.subr.mxu0 0.0
    %2781 = vmatpush1.msra.mxu0 0.0
    %2782 = vmatprep.subr.mxu0 0.0
    %2783 = vmatpush1.msra.mxu0 0.0
    %2784 = vmatprep.subr.mxu0 0.0
    %2785 = vmatpush1.msra.mxu0 0.0
    %2786 = vmatprep.subr.mxu0 0.0
    %2787 = vmatpush1.msra.mxu0 0.0
    %2788 = vmatprep.subr.mxu0 0.0
    %2789 = vmatpush1.msra.mxu0 0.0
    %2790 = vmatprep.subr.mxu0 0.0
    %2791 = vmatpush1.msra.mxu0 0.0
    %2792 = vmatprep.subr.mxu0 0.0
    %2793 = vmatpush1.msra.mxu0 0.0
    %2794 = vmatprep.subr.mxu0 0.0
    %2795 = vmatpush1.msra.mxu0 0.0
    %2796 = vmatprep.subr.mxu0 0.0
    %2797 = vmatpush1.msra.mxu0 0.0
    %2798 = vmatprep.subr.mxu0 0.0
    %2799 = vmatpush1.msra.mxu0 0.0
    %2800 = vmatprep.subr.mxu0 0.0
    %2801 = vmatpush1.msra.mxu0 0.0
    %2802 = vmatprep.subr.mxu0 0.0
    %2803 = vmatpush1.msra.mxu0 0.0
    %2804 = vmatprep.subr.mxu0 0.0
    %2805 = vmatpush1.msra.mxu0 0.0
    %2806 = vmatprep.subr.mxu0 0.0
    %2807 = vmatpush1.msra.mxu0 0.0
    %2808 = vmatprep.mubr.f32.mxu0 0.0
    %2809 = vmatmul.mubr.f32.gmra.mrb[0].mxu0 %v2739
    %v2810 = vpop.f32.mrb[0].mxu0
    %v2811 = vadd.f32 0.0, %v2810
    %v2812 = vpop.f32.mrb[0].mxu0
    %2813 = vdwg.mxu0
    %v2814 = vld [vmem:[%s10] sm:$0xff]
    %v2815 = vld [vmem:[%s10 + $0x8] sm:$0xff]
    %v2816 = vld [vmem:[%s11] sm:$0xff]
    %v2817 = vld [vmem:[%s11 + $0x8] sm:$0xff]
    %v2818 = vld [vmem:[%s11 + $0x10] sm:$0xff]
    %v2819 = vld [vmem:[%s11 + $0x18] sm:$0xff]
    %2820 = vmatprep.subr.mxu0 0.0
    %2821 = vmatpush1.msra.mxu0 %v2816
    %2822 = vmatprep.subr.mxu0 0.0
    %2823 = vmatpush1.msra.mxu0 %v2817
    %2824 = vmatprep.subr.mxu0 0.0
    %2825 = vmatpush1.msra.mxu0 %v2818
    %2826 = vmatprep.subr.mxu0 0.0
    %2827 = vmatpush1.msra.mxu0 %v2819
    %2828 = vmatprep.subr.mxu0 0.0
    %2829 = vmatpush1.msra.mxu0 0.0
    %2830 = vmatprep.subr.mxu0 0.0
    %2831 = vmatpush1.msra.mxu0 0.0
    %2832 = vmatprep.subr.mxu0 0.0
    %2833 = vmatpush1.msra.mxu0 0.0
    %2834 = vmatprep.subr.mxu0 0.0
    %2835 = vmatpush1.msra.mxu0 0.0
    %2836 = vmatprep.subr.mxu0 0.0
    %2837 = vmatpush1.msra.mxu0 0.0
    %2838 = vmatprep.subr.mxu0 0.0
    %2839 = vmatpush1.msra.mxu0 0.0
    %2840 = vmatprep.subr.mxu0 0.0
    %2841 = vmatpush1.msra.mxu0 0.0
    %2842 = vmatprep.subr.mxu0 0.0
    %2843 = vmatpush1.msra.mxu0 0.0
    %2844 = vmatprep.subr.mxu0 0.0
    %2845 = vmatpush1.msra.mxu0 0.0
    %2846 = vmatprep.subr.mxu0 0.0
    %2847 = vmatpush1.msra.mxu0 0.0
    %2848 = vmatprep.subr.mxu0 0.0
    %2849 = vmatpush1.msra.mxu0 0.0
    %2850 = vmatprep.subr.mxu0 0.0
    %2851 = vmatpush1.msra.mxu0 0.0
    %2852 = vmatprep.subr.mxu0 0.0
    %2853 = vmatpush1.msra.mxu0 0.0
    %2854 = vmatprep.subr.mxu0 0.0
    %2855 = vmatpush1.msra.mxu0 0.0
    %2856 = vmatprep.subr.mxu0 0.0
    %2857 = vmatpush1.msra.mxu0 0.0
    %2858 = vmatprep.subr.mxu0 0.0
    %2859 = vmatpush1.msra.mxu0 0.0
    %2860 = vmatprep.subr.mxu0 0.0
    %2861 = vmatpush1.msra.mxu0 0.0
    %2862 = vmatprep.subr.mxu0 0.0
    %2863 = vmatpush1.msra.mxu0 0.0
    %2864 = vmatprep.subr.mxu0 0.0
    %2865 = vmatpush1.msra.mxu0 0.0
    %2866 = vmatprep.subr.mxu0 0.0
    %2867 = vmatpush1.msra.mxu0 0.0
    %2868 = vmatprep.subr.mxu0 0.0
    %2869 = vmatpush1.msra.mxu0 0.0
    %2870 = vmatprep.subr.mxu0 0.0
    %2871 = vmatpush1.msra.mxu0 0.0
    %2872 = vmatprep.subr.mxu0 0.0
    %2873 = vmatpush1.msra.mxu0 0.0
    %2874 = vmatprep.subr.mxu0 0.0
    %2875 = vmatpush1.msra.mxu0 0.0
    %2876 = vmatprep.subr.mxu0 0.0
    %2877 = vmatpush1.msra.mxu0 0.0
    %2878 = vmatprep.subr.mxu0 0.0
    %2879 = vmatpush1.msra.mxu0 0.0
    %2880 = vmatprep.subr.mxu0 0.0
    %2881 = vmatpush1.msra.mxu0 0.0
    %2882 = vmatprep.subr.mxu0 0.0
    %2883 = vmatpush1.msra.mxu0 0.0
    %2884 = vmatprep.mubr.f32.mxu0 0.0
    %2885 = vmatmul.mubr.f32.gmra.mrb[0].mxu0 %v2513
    %v2886 = vpop.f32.mrb[0].mxu0
    %v2887 = vadd.f32 0.0, %v2886
    %v2888 = vpop.f32.mrb[0].mxu0
    %2889 = vdwg.mxu0
    %v2891 = vsel %vm145, %v2811, 0
    %2893 = vmatprep.subr.mxu0 0.0
    %2894 = vmatpush1.msra.mxu0 %v2814
    %2895 = vmatprep.subr.mxu0 0.0
    %2896 = vmatpush1.msra.mxu0 %v2815
    %2897 = vmatprep.subr.mxu0 0.0
    %2898 = vmatpush1.msra.mxu0 0.0
    %2899 = vmatprep.subr.mxu0 0.0
    %2900 = vmatpush1.msra.mxu0 0.0
    %2901 = vmatprep.subr.mxu0 0.0
    %2902 = vmatpush1.msra.mxu0 0.0
    %2903 = vmatprep.subr.mxu0 0.0
    %2904 = vmatpush1.msra.mxu0 0.0
    %2905 = vmatprep.subr.mxu0 0.0
    %2906 = vmatpush1.msra.mxu0 0.0
    %2907 = vmatprep.subr.mxu0 0.0
    %2908 = vmatpush1.msra.mxu0 0.0
    %2909 = vmatprep.subr.mxu0 0.0
    %2910 = vmatpush1.msra.mxu0 0.0
    %2911 = vmatprep.subr.mxu0 0.0
    %2912 = vmatpush1.msra.mxu0 0.0
    %2913 = vmatprep.subr.mxu0 0.0
    %2914 = vmatpush1.msra.mxu0 0.0
    %2915 = vmatprep.subr.mxu0 0.0
    %2916 = vmatpush1.msra.mxu0 0.0
    %2917 = vmatprep.subr.mxu0 0.0
    %2918 = vmatpush1.msra.mxu0 0.0
    %2919 = vmatprep.subr.mxu0 0.0
    %2920 = vmatpush1.msra.mxu0 0.0
    %2921 = vmatprep.subr.mxu0 0.0
    %2922 = vmatpush1.msra.mxu0 0.0
    %2923 = vmatprep.subr.mxu0 0.0
    %2924 = vmatpush1.msra.mxu0 0.0
    %2925 = vmatprep.subr.mxu0 0.0
    %2926 = vmatpush1.msra.mxu0 0.0
    %2927 = vmatprep.subr.mxu0 0.0
    %2928 = vmatpush1.msra.mxu0 0.0
    %2929 = vmatprep.subr.mxu0 0.0
    %2930 = vmatpush1.msra.mxu0 0.0
    %2931 = vmatprep.subr.mxu0 0.0
    %2932 = vmatpush1.msra.mxu0 0.0
    %2933 = vmatprep.subr.mxu0 0.0
    %2934 = vmatpush1.msra.mxu0 0.0
    %2935 = vmatprep.subr.mxu0 0.0
    %2936 = vmatpush1.msra.mxu0 0.0
    %2937 = vmatprep.subr.mxu0 0.0
    %2938 = vmatpush1.msra.mxu0 0.0
    %2939 = vmatprep.subr.mxu0 0.0
    %2940 = vmatpush1.msra.mxu0 0.0
    %2941 = vmatprep.subr.mxu0 0.0
    %2942 = vmatpush1.msra.mxu0 0.0
    %2943 = vmatprep.subr.mxu0 0.0
    %2944 = vmatpush1.msra.mxu0 0.0
    %2945 = vmatprep.subr.mxu0 0.0
    %2946 = vmatpush1.msra.mxu0 0.0
    %2947 = vmatprep.subr.mxu0 0.0
    %2948 = vmatpush1.msra.mxu0 0.0
    %2949 = vmatprep.subr.mxu0 0.0
    %2950 = vmatpush1.msra.mxu0 0.0
    %2951 = vmatprep.subr.mxu0 0.0
    %2952 = vmatpush1.msra.mxu0 0.0
    %2953 = vmatprep.subr.mxu0 0.0
    %2954 = vmatpush1.msra.mxu0 0.0
    %2955 = vmatprep.subr.mxu0 0.0
    %2956 = vmatpush1.msra.mxu0 0.0
    %2957 = vmatprep.mubr.f32.mxu0 0.0
    %2958 = vmatmul.mubr.f32.gmra.mrb[0].mxu0 %v2891
    %v2959 = vpop.f32.mrb[0].mxu0
    %v2960 = vadd.f32 %v2887, %v2959
    %v2961 = vpop.f32.mrb[0].mxu0
    %2962 = vdwg.mxu0
    %v2963 = vld [vmem:[%s12] sm:$0x1]
    %v2965 = vlaneseq
    %v2966 = vshrl.u32 %v2965, 7
    %v2967 = vsub.s32 0, %v2966
    %v2968 = vrot.slane %v2963, %v2967
    %v2970 = vadd.f32 %v2960, %v2968
    %v2971 = vxor.u32 %v2970, 2147483648
    %v2972 = vmul.f32 %v2971, 1.442695
    %v2973 = vpow.pop %v2972
    %v2974 = vadd.f32 %v2973, 1.0
    %v2975 = vrcp.pop %v2974
    %v2976 = vmul.f32 1.0, %v2975
    %v2977 = vtanh.pop %v2970
    %v2978 = vmul.f32 %v2976, %v2420
    %2980 = vrot.lane.b32.xlu0 %v2977, 64
    %v2981 = vpop.permute.xlu0 %2980
    %v2983 = vmul.f32 %v2976, %v2981
    %2985 = vrot.lane.b32.xlu0 %v2983, 32
    %v2986 = vpop.permute.xlu0 %2985
    %v2988 = vadd.f32 %v2978, %v2986
    %v2989 = vtanh.pop %v2988
    %2991 = vrot.lane.b32.xlu0 %v2989, 64
    %v2992 = vpop.permute.xlu0 %2991
    %v2994 = vmul.f32 %v2976, %v2992
    %v2995 = vld [vmem:[%s13] sm:$0xff]
    %v2996 = vld [vmem:[%s13 + $0x8] sm:$0xff]
    %v2997 = vld [vmem:[%s13 + $0x10] sm:$0xff]
    %v2998 = vld [vmem:[%s13 + $0x18] sm:$0xff]
    %v2999 = vld [vmem:[%s14] sm:$0xff]
    %v3000 = vld [vmem:[%s14 + $0x8] sm:$0xff]
    %v3001 = vld [vmem:[%s14 + $0x10] sm:$0xff]
    %v3002 = vld [vmem:[%s14 + $0x18] sm:$0xff]
    %3003 = vmatprep.subr.mxu0 0.0
    %3004 = vmatpush1.msra.mxu0 %v2999
    %3005 = vmatprep.subr.mxu0 0.0
    %3006 = vmatpush1.msra.mxu0 %v3000
    %3007 = vmatprep.subr.mxu0 0.0
    %3008 = vmatpush1.msra.mxu0 %v3001
    %3009 = vmatprep.subr.mxu0 0.0
    %3010 = vmatpush1.msra.mxu0 %v3002
    %3011 = vmatprep.subr.mxu0 0.0
    %3012 = vmatpush1.msra.mxu0 0.0
    %3013 = vmatprep.subr.mxu0 0.0
    %3014 = vmatpush1.msra.mxu0 0.0
    %3015 = vmatprep.subr.mxu0 0.0
    %3016 = vmatpush1.msra.mxu0 0.0
    %3017 = vmatprep.subr.mxu0 0.0
    %3018 = vmatpush1.msra.mxu0 0.0
    %3019 = vmatprep.subr.mxu0 0.0
    %3020 = vmatpush1.msra.mxu0 0.0
    %3021 = vmatprep.subr.mxu0 0.0
    %3022 = vmatpush1.msra.mxu0 0.0
    %3023 = vmatprep.subr.mxu0 0.0
    %3024 = vmatpush1.msra.mxu0 0.0
    %3025 = vmatprep.subr.mxu0 0.0
    %3026 = vmatpush1.msra.mxu0 0.0
    %3027 = vmatprep.subr.mxu0 0.0
    %3028 = vmatpush1.msra.mxu0 0.0
    %3029 = vmatprep.subr.mxu0 0.0
    %3030 = vmatpush1.msra.mxu0 0.0
    %3031 = vmatprep.subr.mxu0 0.0
    %3032 = vmatpush1.msra.mxu0 0.0
    %3033 = vmatprep.subr.mxu0 0.0
    %3034 = vmatpush1.msra.mxu0 0.0
    %3035 = vmatprep.subr.mxu0 0.0
    %3036 = vmatpush1.msra.mxu0 0.0
    %3037 = vmatprep.subr.mxu0 0.0
    %3038 = vmatpush1.msra.mxu0 0.0
    %3039 = vmatprep.subr.mxu0 0.0
    %3040 = vmatpush1.msra.mxu0 0.0
    %3041 = vmatprep.subr.mxu0 0.0
    %3042 = vmatpush1.msra.mxu0 0.0
    %3043 = vmatprep.subr.mxu0 0.0
    %3044 = vmatpush1.msra.mxu0 0.0
    %3045 = vmatprep.subr.mxu0 0.0
    %3046 = vmatpush1.msra.mxu0 0.0
    %3047 = vmatprep.subr.mxu0 0.0
    %3048 = vmatpush1.msra.mxu0 0.0
    %3049 = vmatprep.subr.mxu0 0.0
    %3050 = vmatpush1.msra.mxu0 0.0
    %3051 = vmatprep.subr.mxu0 0.0
    %3052 = vmatpush1.msra.mxu0 0.0
    %3053 = vmatprep.subr.mxu0 0.0
    %3054 = vmatpush1.msra.mxu0 0.0
    %3055 = vmatprep.subr.mxu0 0.0
    %3056 = vmatpush1.msra.mxu0 0.0
    %3057 = vmatprep.subr.mxu0 0.0
    %3058 = vmatpush1.msra.mxu0 0.0
    %3059 = vmatprep.subr.mxu0 0.0
    %3060 = vmatpush1.msra.mxu0 0.0
    %3061 = vmatprep.subr.mxu0 0.0
    %3062 = vmatpush1.msra.mxu0 0.0
    %3063 = vmatprep.subr.mxu0 0.0
    %3064 = vmatpush1.msra.mxu0 0.0
    %3065 = vmatprep.subr.mxu0 0.0
    %3066 = vmatpush1.msra.mxu0 0.0
    %3067 = vmatprep.mubr.f32.mxu0 0.0
    %3068 = vmatmul.mubr.f32.gmra.mrb[0].mxu0 %v2631
    %v3069 = vpop.f32.mrb[0].mxu0
    %v3070 = vadd.f32 0.0, %v3069
    %v3071 = vpop.f32.mrb[0].mxu0
    %3072 = vdwg.mxu0
    %3074 = vrot.lane.b32.xlu0 %v2994, 32
    %v3075 = vpop.permute.xlu0 %3074
    %v3076 = vsel %vm71, %v3075, 0
    %3078 = vmatprep.subr.mxu0 0.0
    %3079 = vmatpush1.msra.mxu0 %v2995
    %3080 = vmatprep.subr.mxu0 0.0
    %3081 = vmatpush1.msra.mxu0 %v2996
    %3082 = vmatprep.subr.mxu0 0.0
    %3083 = vmatpush1.msra.mxu0 %v2997
    %3084 = vmatprep.subr.mxu0 0.0
    %3085 = vmatpush1.msra.mxu0 %v2998
    %3086 = vmatprep.subr.mxu0 0.0
    %3087 = vmatpush1.msra.mxu0 0.0
    %3088 = vmatprep.subr.mxu0 0.0
    %3089 = vmatpush1.msra.mxu0 0.0
    %3090 = vmatprep.subr.mxu0 0.0
    %3091 = vmatpush1.msra.mxu0 0.0
    %3092 = vmatprep.subr.mxu0 0.0
    %3093 = vmatpush1.msra.mxu0 0.0
    %3094 = vmatprep.subr.mxu0 0.0
    %3095 = vmatpush1.msra.mxu0 0.0
    %3096 = vmatprep.subr.mxu0 0.0
    %3097 = vmatpush1.msra.mxu0 0.0
    %3098 = vmatprep.subr.mxu0 0.0
    %3099 = vmatpush1.msra.mxu0 0.0
    %3100 = vmatprep.subr.mxu0 0.0
    %3101 = vmatpush1.msra.mxu0 0.0
    %3102 = vmatprep.subr.mxu0 0.0
    %3103 = vmatpush1.msra.mxu0 0.0
    %3104 = vmatprep.subr.mxu0 0.0
    %3105 = vmatpush1.msra.mxu0 0.0
    %3106 = vmatprep.subr.mxu0 0.0
    %3107 = vmatpush1.msra.mxu0 0.0
    %3108 = vmatprep.subr.mxu0 0.0
    %3109 = vmatpush1.msra.mxu0 0.0
    %3110 = vmatprep.subr.mxu0 0.0
    %3111 = vmatpush1.msra.mxu0 0.0
    %3112 = vmatprep.subr.mxu0 0.0
    %3113 = vmatpush1.msra.mxu0 0.0
    %3114 = vmatprep.subr.mxu0 0.0
    %3115 = vmatpush1.msra.mxu0 0.0
    %3116 = vmatprep.subr.mxu0 0.0
    %3117 = vmatpush1.msra.mxu0 0.0
    %3118 = vmatprep.subr.mxu0 0.0
    %3119 = vmatpush1.msra.mxu0 0.0
    %3120 = vmatprep.subr.mxu0 0.0
    %3121 = vmatpush1.msra.mxu0 0.0
    %3122 = vmatprep.subr.mxu0 0.0
    %3123 = vmatpush1.msra.mxu0 0.0
    %3124 = vmatprep.subr.mxu0 0.0
    %3125 = vmatpush1.msra.mxu0 0.0
    %3126 = vmatprep.subr.mxu0 0.0
    %3127 = vmatpush1.msra.mxu0 0.0
    %3128 = vmatprep.subr.mxu0 0.0
    %3129 = vmatpush1.msra.mxu0 0.0
    %3130 = vmatprep.subr.mxu0 0.0
    %3131 = vmatpush1.msra.mxu0 0.0
    %3132 = vmatprep.subr.mxu0 0.0
    %3133 = vmatpush1.msra.mxu0 0.0
    %3134 = vmatprep.subr.mxu0 0.0
    %3135 = vmatpush1.msra.mxu0 0.0
    %3136 = vmatprep.subr.mxu0 0.0
    %3137 = vmatpush1.msra.mxu0 0.0
    %3138 = vmatprep.subr.mxu0 0.0
    %3139 = vmatpush1.msra.mxu0 0.0
    %3140 = vmatprep.subr.mxu0 0.0
    %3141 = vmatpush1.msra.mxu0 0.0
    %3142 = vmatprep.mubr.f32.mxu0 0.0
    %3143 = vmatmul.mubr.f32.gmra.mrb[0].mxu0 %v3076
    %v3144 = vpop.f32.mrb[0].mxu0
    %v3145 = vadd.f32 %v3070, %v3144
    %v3146 = vpop.f32.mrb[0].mxu0
    %3147 = vdwg.mxu0
    %v3148 = vld [vmem:[%s15] sm:$0x1]
    %v3150 = vlaneseq
    %v3151 = vshrl.u32 %v3150, 7
    %v3152 = vsub.s32 0, %v3151
    %v3153 = vrot.slane %v3148, %v3152
    %v3155 = vadd.f32 %v3145, %v3153
    %v3156 = vxor.u32 %v3155, 2147483648
    %v3157 = vmul.f32 %v3156, 1.442695
    %v3158 = vpow.pop %v3157
    %v3159 = vadd.f32 %v3158, 1.0
    %v3160 = vrcp.pop %v3159
    %v3161 = vmul.f32 1.0, %v3160
    %v3162 = vtanh.pop %v3155
    %v3163 = vmul.f32 %v3161, %v2610
    %3165 = vrot.lane.b32.xlu0 %v3162, 64
    %v3166 = vpop.permute.xlu0 %3165
    %v3168 = vmul.f32 %v3161, %v3166
    %3170 = vrot.lane.b32.xlu0 %v3168, 32
    %v3171 = vpop.permute.xlu0 %3170
    %v3173 = vadd.f32 %v3163, %v3171
    %v3174 = vtanh.pop %v3173
    %3176 = vrot.lane.b32.xlu0 %v3174, 64
    %v3177 = vpop.permute.xlu0 %3176
    %v3179 = vmul.f32 %v3161, %v3177
    %v3180 = vld [vmem:[%s16] sm:$0xff]
    %v3181 = vld [vmem:[%s16 + $0x8] sm:$0xff]
    %v3182 = vld [vmem:[%s16 + $0x10] sm:$0xff]
    %v3183 = vld [vmem:[%s16 + $0x18] sm:$0xff]
    %v3184 = vld [vmem:[%s17] sm:$0x1]
    %v3186 = vlaneseq
    %v3187 = vshrl.u32 %v3186, 7
    %v3188 = vsub.s32 0, %v3187
    %v3189 = vrot.slane %v3184, %v3188
    %3192 = vrot.lane.b32.xlu0 %v3179, 32
    %v3193 = vpop.permute.xlu0 %3192
    %v3194 = vsel %vm71, %v3193, 0
    %3196 = vmatprep.subr.mxu0 0.0
    %3197 = vmatpush1.msra.mxu0 %v3180
    %3198 = vmatprep.subr.mxu0 0.0
    %3199 = vmatpush1.msra.mxu0 %v3181
    %3200 = vmatprep.subr.mxu0 0.0
    %3201 = vmatpush1.msra.mxu0 %v3182
    %3202 = vmatprep.subr.mxu0 0.0
    %3203 = vmatpush1.msra.mxu0 %v3183
    %3204 = vmatprep.subr.mxu0 0.0
    %3205 = vmatpush1.msra.mxu0 0.0
    %3206 = vmatprep.subr.mxu0 0.0
    %3207 = vmatpush1.msra.mxu0 0.0
    %3208 = vmatprep.subr.mxu0 0.0
    %3209 = vmatpush1.msra.mxu0 0.0
    %3210 = vmatprep.subr.mxu0 0.0
    %3211 = vmatpush1.msra.mxu0 0.0
    %3212 = vmatprep.subr.mxu0 0.0
    %3213 = vmatpush1.msra.mxu0 0.0
    %3214 = vmatprep.subr.mxu0 0.0
    %3215 = vmatpush1.msra.mxu0 0.0
    %3216 = vmatprep.subr.mxu0 0.0
    %3217 = vmatpush1.msra.mxu0 0.0
    %3218 = vmatprep.subr.mxu0 0.0
    %3219 = vmatpush1.msra.mxu0 0.0
    %3220 = vmatprep.subr.mxu0 0.0
    %3221 = vmatpush1.msra.mxu0 0.0
    %3222 = vmatprep.subr.mxu0 0.0
    %3223 = vmatpush1.msra.mxu0 0.0
    %3224 = vmatprep.subr.mxu0 0.0
    %3225 = vmatpush1.msra.mxu0 0.0
    %3226 = vmatprep.subr.mxu0 0.0
    %3227 = vmatpush1.msra.mxu0 0.0
    %3228 = vmatprep.subr.mxu0 0.0
    %3229 = vmatpush1.msra.mxu0 0.0
    %3230 = vmatprep.subr.mxu0 0.0
    %3231 = vmatpush1.msra.mxu0 0.0
    %3232 = vmatprep.subr.mxu0 0.0
    %3233 = vmatpush1.msra.mxu0 0.0
    %3234 = vmatprep.subr.mxu0 0.0
    %3235 = vmatpush1.msra.mxu0 0.0
    %3236 = vmatprep.subr.mxu0 0.0
    %3237 = vmatpush1.msra.mxu0 0.0
    %3238 = vmatprep.subr.mxu0 0.0
    %3239 = vmatpush1.msra.mxu0 0.0
    %3240 = vmatprep.subr.mxu0 0.0
    %3241 = vmatpush1.msra.mxu0 0.0
    %3242 = vmatprep.subr.mxu0 0.0
    %3243 = vmatpush1.msra.mxu0 0.0
    %3244 = vmatprep.subr.mxu0 0.0
    %3245 = vmatpush1.msra.mxu0 0.0
    %3246 = vmatprep.subr.mxu0 0.0
    %3247 = vmatpush1.msra.mxu0 0.0
    %3248 = vmatprep.subr.mxu0 0.0
    %3249 = vmatpush1.msra.mxu0 0.0
    %3250 = vmatprep.subr.mxu0 0.0
    %3251 = vmatpush1.msra.mxu0 0.0
    %3252 = vmatprep.subr.mxu0 0.0
    %3253 = vmatpush1.msra.mxu0 0.0
    %3254 = vmatprep.subr.mxu0 0.0
    %3255 = vmatpush1.msra.mxu0 0.0
    %3256 = vmatprep.subr.mxu0 0.0
    %3257 = vmatpush1.msra.mxu0 0.0
    %3258 = vmatprep.subr.mxu0 0.0
    %3259 = vmatpush1.msra.mxu0 0.0
    %3260 = vmatprep.mubr.f32.mxu0 0.0
    %3261 = vmatmul.mubr.f32.gmra.mrb[0].mxu0 %v3194
    %v3262 = vpop.f32.mrb[0].mxu0
    %v3263 = vadd.f32 %v3189, %v3262
    %v3264 = vpop.f32.mrb[0].mxu0
    %3265 = vdwg.mxu0
    %s3266 = scalar_lea.vmem [#allocation4], 8
    %3267 = vst.msk [vmem:[%s3266] sm:$0xff] %vm2168, %v3263
    %v3268 = vsel %vm2168, %v3263, -inf
    %3269 = vmax.xlane.f32.xlu0 %v3268
    %v3270 = vpop.xlane.xlu0 %3269
    %vm3271 = vcmp.eq.f32.partialorder %v3263, %v3270
    %v3272 = vsel %vm3271, %v2162, 10
    %v3273 = vsel %vm2168, %v3272, 2147483647
    %v3274 = vand.u32 %v3273, 65535
    %v3275 = vshra.s32 %v3273, 16
    %v3276 = vcvt.s32.f32 %v3274
    %v3277 = vcvt.s32.f32 %v3275
    %3278 = vmin.xlane.f32.xlu0 %v3277
    %v3279 = vpop.xlane.xlu0 %3278
    %vm3280 = vcmp.eq.f32.partialorder %v3277, %v3279
    %v3281 = vsel %vm3280, %v3276, inf
    %3282 = vmin.xlane.f32.xlu0 %v3281
    %v3283 = vpop.xlane.xlu0 %3282
    %v3284 = vcvt.f32.s32 %v3283
    %v3285 = vcvt.f32.s32 %v3279
    %v3286 = vshll.u32 %v3285, 16
    %v3287 = vadd.s32 %v3286, %v3284
    %vm3288 = vcmp.eq.s32.totalorder %v2162, %v3287
    %v3289 = vsel %vm3288, 1, 0
    %v3290 = vcvt.s32.f32 %v3289
    %s3291 = sld [smem:[#allocation3 + $0x1]]
    %s3292 = scvt.s32.f32 %s3291
    %s3293 = scalar_lea.vmem %s2, 8
    %v3294 = vld [vmem:[%s3293] sm:$0xff]
    %v3295 = vstv %s3292
    %v3296 = vmul.f32 %v3295, %v3294
    %s3297 = ssub.f32 1.0, %s3292
    %v3298 = vstv %s3297
    %v3299 = vmul.f32 %v3298, %v3290
    %v3300 = vadd.f32 %v3296, %v3299
    %v3301 = vld [vmem:[%s9] sm:$0xff]
    %v3302 = vld [vmem:[%s9 + $0x8] sm:$0x3]
    %v3304 = vsel %vm2168, %v3300, 0
    %v3307 = vsel %vm2172, %v3302, 0
    %3309 = vmatprep.subr.mxu0 0.0
    %3310 = vmatpush1.msra.mxu0 %v3301
    %3311 = vmatprep.subr.mxu0 0.0
    %3312 = vmatpush1.msra.mxu0 %v3307
    %3313 = vmatprep.subr.mxu0 0.0
    %3314 = vmatpush1.msra.mxu0 0.0
    %3315 = vmatprep.subr.mxu0 0.0
    %3316 = vmatpush1.msra.mxu0 0.0
    %3317 = vmatprep.subr.mxu0 0.0
    %3318 = vmatpush1.msra.mxu0 0.0
    %3319 = vmatprep.subr.mxu0 0.0
    %3320 = vmatpush1.msra.mxu0 0.0
    %3321 = vmatprep.subr.mxu0 0.0
    %3322 = vmatpush1.msra.mxu0 0.0
    %3323 = vmatprep.subr.mxu0 0.0
    %3324 = vmatpush1.msra.mxu0 0.0
    %3325 = vmatprep.subr.mxu0 0.0
    %3326 = vmatpush1.msra.mxu0 0.0
    %3327 = vmatprep.subr.mxu0 0.0
    %3328 = vmatpush1.msra.mxu0 0.0
    %3329 = vmatprep.subr.mxu0 0.0
    %3330 = vmatpush1.msra.mxu0 0.0
    %3331 = vmatprep.subr.mxu0 0.0
    %3332 = vmatpush1.msra.mxu0 0.0
    %3333 = vmatprep.subr.mxu0 0.0
    %3334 = vmatpush1.msra.mxu0 0.0
    %3335 = vmatprep.subr.mxu0 0.0
    %3336 = vmatpush1.msra.mxu0 0.0
    %3337 = vmatprep.subr.mxu0 0.0
    %3338 = vmatpush1.msra.mxu0 0.0
    %3339 = vmatprep.subr.mxu0 0.0
    %3340 = vmatpush1.msra.mxu0 0.0
    %3341 = vmatprep.subr.mxu0 0.0
    %3342 = vmatpush1.msra.mxu0 0.0
    %3343 = vmatprep.subr.mxu0 0.0
    %3344 = vmatpush1.msra.mxu0 0.0
    %3345 = vmatprep.subr.mxu0 0.0
    %3346 = vmatpush1.msra.mxu0 0.0
    %3347 = vmatprep.subr.mxu0 0.0
    %3348 = vmatpush1.msra.mxu0 0.0
    %3349 = vmatprep.subr.mxu0 0.0
    %3350 = vmatpush1.msra.mxu0 0.0
    %3351 = vmatprep.subr.mxu0 0.0
    %3352 = vmatpush1.msra.mxu0 0.0
    %3353 = vmatprep.subr.mxu0 0.0
    %3354 = vmatpush1.msra.mxu0 0.0
    %3355 = vmatprep.subr.mxu0 0.0
    %3356 = vmatpush1.msra.mxu0 0.0
    %3357 = vmatprep.subr.mxu0 0.0
    %3358 = vmatpush1.msra.mxu0 0.0
    %3359 = vmatprep.subr.mxu0 0.0
    %3360 = vmatpush1.msra.mxu0 0.0
    %3361 = vmatprep.subr.mxu0 0.0
    %3362 = vmatpush1.msra.mxu0 0.0
    %3363 = vmatprep.subr.mxu0 0.0
    %3364 = vmatpush1.msra.mxu0 0.0
    %3365 = vmatprep.subr.mxu0 0.0
    %3366 = vmatpush1.msra.mxu0 0.0
    %3367 = vmatprep.subr.mxu0 0.0
    %3368 = vmatpush1.msra.mxu0 0.0
    %3369 = vmatprep.subr.mxu0 0.0
    %3370 = vmatpush1.msra.mxu0 0.0
    %3371 = vmatprep.subr.mxu0 0.0
    %3372 = vmatpush1.msra.mxu0 0.0
    %3373 = vmatprep.mubr.f32.mxu0 0.0
    %3374 = vmatmul.mubr.f32.gmra.mrb[0].mxu0 %v3304
    %v3375 = vpop.f32.mrb[0].mxu0
    %v3376 = vadd.f32 0.0, %v3375
    %v3377 = vpop.f32.mrb[0].mxu0
    %3378 = vdwg.mxu0
    %v3379 = vld [vmem:[%s10] sm:$0xff]
    %v3380 = vld [vmem:[%s10 + $0x8] sm:$0xff]
    %v3381 = vld [vmem:[%s11] sm:$0xff]
    %v3382 = vld [vmem:[%s11 + $0x8] sm:$0xff]
    %v3383 = vld [vmem:[%s11 + $0x10] sm:$0xff]
    %v3384 = vld [vmem:[%s11 + $0x18] sm:$0xff]
    %3385 = vmatprep.subr.mxu0 0.0
    %3386 = vmatpush1.msra.mxu0 %v3381
    %3387 = vmatprep.subr.mxu0 0.0
    %3388 = vmatpush1.msra.mxu0 %v3382
    %3389 = vmatprep.subr.mxu0 0.0
    %3390 = vmatpush1.msra.mxu0 %v3383
    %3391 = vmatprep.subr.mxu0 0.0
    %3392 = vmatpush1.msra.mxu0 %v3384
    %3393 = vmatprep.subr.mxu0 0.0
    %3394 = vmatpush1.msra.mxu0 0.0
    %3395 = vmatprep.subr.mxu0 0.0
    %3396 = vmatpush1.msra.mxu0 0.0
    %3397 = vmatprep.subr.mxu0 0.0
    %3398 = vmatpush1.msra.mxu0 0.0
    %3399 = vmatprep.subr.mxu0 0.0
    %3400 = vmatpush1.msra.mxu0 0.0
    %3401 = vmatprep.subr.mxu0 0.0
    %3402 = vmatpush1.msra.mxu0 0.0
    %3403 = vmatprep.subr.mxu0 0.0
    %3404 = vmatpush1.msra.mxu0 0.0
    %3405 = vmatprep.subr.mxu0 0.0
    %3406 = vmatpush1.msra.mxu0 0.0
    %3407 = vmatprep.subr.mxu0 0.0
    %3408 = vmatpush1.msra.mxu0 0.0
    %3409 = vmatprep.subr.mxu0 0.0
    %3410 = vmatpush1.msra.mxu0 0.0
    %3411 = vmatprep.subr.mxu0 0.0
    %3412 = vmatpush1.msra.mxu0 0.0
    %3413 = vmatprep.subr.mxu0 0.0
    %3414 = vmatpush1.msra.mxu0 0.0
    %3415 = vmatprep.subr.mxu0 0.0
    %3416 = vmatpush1.msra.mxu0 0.0
    %3417 = vmatprep.subr.mxu0 0.0
    %3418 = vmatpush1.msra.mxu0 0.0
    %3419 = vmatprep.subr.mxu0 0.0
    %3420 = vmatpush1.msra.mxu0 0.0
    %3421 = vmatprep.subr.mxu0 0.0
    %3422 = vmatpush1.msra.mxu0 0.0
    %3423 = vmatprep.subr.mxu0 0.0
    %3424 = vmatpush1.msra.mxu0 0.0
    %3425 = vmatprep.subr.mxu0 0.0
    %3426 = vmatpush1.msra.mxu0 0.0
    %3427 = vmatprep.subr.mxu0 0.0
    %3428 = vmatpush1.msra.mxu0 0.0
    %3429 = vmatprep.subr.mxu0 0.0
    %3430 = vmatpush1.msra.mxu0 0.0
    %3431 = vmatprep.subr.mxu0 0.0
    %3432 = vmatpush1.msra.mxu0 0.0
    %3433 = vmatprep.subr.mxu0 0.0
    %3434 = vmatpush1.msra.mxu0 0.0
    %3435 = vmatprep.subr.mxu0 0.0
    %3436 = vmatpush1.msra.mxu0 0.0
    %3437 = vmatprep.subr.mxu0 0.0
    %3438 = vmatpush1.msra.mxu0 0.0
    %3439 = vmatprep.subr.mxu0 0.0
    %3440 = vmatpush1.msra.mxu0 0.0
    %3441 = vmatprep.subr.mxu0 0.0
    %3442 = vmatpush1.msra.mxu0 0.0
    %3443 = vmatprep.subr.mxu0 0.0
    %3444 = vmatpush1.msra.mxu0 0.0
    %3445 = vmatprep.subr.mxu0 0.0
    %3446 = vmatpush1.msra.mxu0 0.0
    %3447 = vmatprep.subr.mxu0 0.0
    %3448 = vmatpush1.msra.mxu0 0.0
    %3449 = vmatprep.mubr.f32.mxu0 0.0
    %3450 = vmatmul.mubr.f32.gmra.mrb[0].mxu0 %v3076
    %v3451 = vpop.f32.mrb[0].mxu0
    %v3452 = vadd.f32 0.0, %v3451
    %v3453 = vpop.f32.mrb[0].mxu0
    %3454 = vdwg.mxu0
    %v3456 = vsel %vm145, %v3376, 0
    %3458 = vmatprep.subr.mxu0 0.0
    %3459 = vmatpush1.msra.mxu0 %v3379
    %3460 = vmatprep.subr.mxu0 0.0
    %3461 = vmatpush1.msra.mxu0 %v3380
    %3462 = vmatprep.subr.mxu0 0.0
    %3463 = vmatpush1.msra.mxu0 0.0
    %3464 = vmatprep.subr.mxu0 0.0
    %3465 = vmatpush1.msra.mxu0 0.0
    %3466 = vmatprep.subr.mxu0 0.0
    %3467 = vmatpush1.msra.mxu0 0.0
    %3468 = vmatprep.subr.mxu0 0.0
    %3469 = vmatpush1.msra.mxu0 0.0
    %3470 = vmatprep.subr.mxu0 0.0
    %3471 = vmatpush1.msra.mxu0 0.0
    %3472 = vmatprep.subr.mxu0 0.0
    %3473 = vmatpush1.msra.mxu0 0.0
    %3474 = vmatprep.subr.mxu0 0.0
    %3475 = vmatpush1.msra.mxu0 0.0
    %3476 = vmatprep.subr.mxu0 0.0
    %3477 = vmatpush1.msra.mxu0 0.0
    %3478 = vmatprep.subr.mxu0 0.0
    %3479 = vmatpush1.msra.mxu0 0.0
    %3480 = vmatprep.subr.mxu0 0.0
    %3481 = vmatpush1.msra.mxu0 0.0
    %3482 = vmatprep.subr.mxu0 0.0
    %3483 = vmatpush1.msra.mxu0 0.0
    %3484 = vmatprep.subr.mxu0 0.0
    %3485 = vmatpush1.msra.mxu0 0.0
    %3486 = vmatprep.subr.mxu0 0.0
    %3487 = vmatpush1.msra.mxu0 0.0
    %3488 = vmatprep.subr.mxu0 0.0
    %3489 = vmatpush1.msra.mxu0 0.0
    %3490 = vmatprep.subr.mxu0 0.0
    %3491 = vmatpush1.msra.mxu0 0.0
    %3492 = vmatprep.subr.mxu0 0.0
    %3493 = vmatpush1.msra.mxu0 0.0
    %3494 = vmatprep.subr.mxu0 0.0
    %3495 = vmatpush1.msra.mxu0 0.0
    %3496 = vmatprep.subr.mxu0 0.0
    %3497 = vmatpush1.msra.mxu0 0.0
    %3498 = vmatprep.subr.mxu0 0.0
    %3499 = vmatpush1.msra.mxu0 0.0
    %3500 = vmatprep.subr.mxu0 0.0
    %3501 = vmatpush1.msra.mxu0 0.0
    %3502 = vmatprep.subr.mxu0 0.0
    %3503 = vmatpush1.msra.mxu0 0.0
    %3504 = vmatprep.subr.mxu0 0.0
    %3505 = vmatpush1.msra.mxu0 0.0
    %3506 = vmatprep.subr.mxu0 0.0
    %3507 = vmatpush1.msra.mxu0 0.0
    %3508 = vmatprep.subr.mxu0 0.0
    %3509 = vmatpush1.msra.mxu0 0.0
    %3510 = vmatprep.subr.mxu0 0.0
    %3511 = vmatpush1.msra.mxu0 0.0
    %3512 = vmatprep.subr.mxu0 0.0
    %3513 = vmatpush1.msra.mxu0 0.0
    %3514 = vmatprep.subr.mxu0 0.0
    %3515 = vmatpush1.msra.mxu0 0.0
    %3516 = vmatprep.subr.mxu0 0.0
    %3517 = vmatpush1.msra.mxu0 0.0
    %3518 = vmatprep.subr.mxu0 0.0
    %3519 = vmatpush1.msra.mxu0 0.0
    %3520 = vmatprep.subr.mxu0 0.0
    %3521 = vmatpush1.msra.mxu0 0.0
    %3522 = vmatprep.mubr.f32.mxu0 0.0
    %3523 = vmatmul.mubr.f32.gmra.mrb[0].mxu0 %v3456
    %v3524 = vpop.f32.mrb[0].mxu0
    %v3525 = vadd.f32 %v3452, %v3524
    %v3526 = vpop.f32.mrb[0].mxu0
    %3527 = vdwg.mxu0
    %v3528 = vld [vmem:[%s12] sm:$0x1]
    %v3530 = vlaneseq
    %v3531 = vshrl.u32 %v3530, 7
    %v3532 = vsub.s32 0, %v3531
    %v3533 = vrot.slane %v3528, %v3532
    %v3535 = vadd.f32 %v3525, %v3533
    %v3536 = vxor.u32 %v3535, 2147483648
    %v3537 = vmul.f32 %v3536, 1.442695
    %v3538 = vpow.pop %v3537
    %v3539 = vadd.f32 %v3538, 1.0
    %v3540 = vrcp.pop %v3539
    %v3541 = vmul.f32 1.0, %v3540
    %v3542 = vtanh.pop %v3535
    %v3543 = vmul.f32 %v3541, %v2988
    %3545 = vrot.lane.b32.xlu0 %v3542, 64
    %v3546 = vpop.permute.xlu0 %3545
    %v3548 = vmul.f32 %v3541, %v3546
    %3550 = vrot.lane.b32.xlu0 %v3548, 32
    %v3551 = vpop.permute.xlu0 %3550
    %v3553 = vadd.f32 %v3543, %v3551
    %v3554 = vtanh.pop %v3553
    %3556 = vrot.lane.b32.xlu0 %v3554, 64
    %v3557 = vpop.permute.xlu0 %3556
    %v3559 = vmul.f32 %v3541, %v3557
    %v3560 = vld [vmem:[%s13] sm:$0xff]
    %v3561 = vld [vmem:[%s13 + $0x8] sm:$0xff]
    %v3562 = vld [vmem:[%s13 + $0x10] sm:$0xff]
    %v3563 = vld [vmem:[%s13 + $0x18] sm:$0xff]
    %v3564 = vld [vmem:[%s14] sm:$0xff]
    %v3565 = vld [vmem:[%s14 + $0x8] sm:$0xff]
    %v3566 = vld [vmem:[%s14 + $0x10] sm:$0xff]
    %v3567 = vld [vmem:[%s14 + $0x18] sm:$0xff]
    %3568 = vmatprep.subr.mxu0 0.0
    %3569 = vmatpush1.msra.mxu0 %v3564
    %3570 = vmatprep.subr.mxu0 0.0
    %3571 = vmatpush1.msra.mxu0 %v3565
    %3572 = vmatprep.subr.mxu0 0.0
    %3573 = vmatpush1.msra.mxu0 %v3566
    %3574 = vmatprep.subr.mxu0 0.0
    %3575 = vmatpush1.msra.mxu0 %v3567
    %3576 = vmatprep.subr.mxu0 0.0
    %3577 = vmatpush1.msra.mxu0 0.0
    %3578 = vmatprep.subr.mxu0 0.0
    %3579 = vmatpush1.msra.mxu0 0.0
    %3580 = vmatprep.subr.mxu0 0.0
    %3581 = vmatpush1.msra.mxu0 0.0
    %3582 = vmatprep.subr.mxu0 0.0
    %3583 = vmatpush1.msra.mxu0 0.0
    %3584 = vmatprep.subr.mxu0 0.0
    %3585 = vmatpush1.msra.mxu0 0.0
    %3586 = vmatprep.subr.mxu0 0.0
    %3587 = vmatpush1.msra.mxu0 0.0
    %3588 = vmatprep.subr.mxu0 0.0
    %3589 = vmatpush1.msra.mxu0 0.0
    %3590 = vmatprep.subr.mxu0 0.0
    %3591 = vmatpush1.msra.mxu0 0.0
    %3592 = vmatprep.subr.mxu0 0.0
    %3593 = vmatpush1.msra.mxu0 0.0
    %3594 = vmatprep.subr.mxu0 0.0
    %3595 = vmatpush1.msra.mxu0 0.0
    %3596 = vmatprep.subr.mxu0 0.0
    %3597 = vmatpush1.msra.mxu0 0.0
    %3598 = vmatprep.subr.mxu0 0.0
    %3599 = vmatpush1.msra.mxu0 0.0
    %3600 = vmatprep.subr.mxu0 0.0
    %3601 = vmatpush1.msra.mxu0 0.0
    %3602 = vmatprep.subr.mxu0 0.0
    %3603 = vmatpush1.msra.mxu0 0.0
    %3604 = vmatprep.subr.mxu0 0.0
    %3605 = vmatpush1.msra.mxu0 0.0
    %3606 = vmatprep.subr.mxu0 0.0
    %3607 = vmatpush1.msra.mxu0 0.0
    %3608 = vmatprep.subr.mxu0 0.0
    %3609 = vmatpush1.msra.mxu0 0.0
    %3610 = vmatprep.subr.mxu0 0.0
    %3611 = vmatpush1.msra.mxu0 0.0
    %3612 = vmatprep.subr.mxu0 0.0
    %3613 = vmatpush1.msra.mxu0 0.0
    %3614 = vmatprep.subr.mxu0 0.0
    %3615 = vmatpush1.msra.mxu0 0.0
    %3616 = vmatprep.subr.mxu0 0.0
    %3617 = vmatpush1.msra.mxu0 0.0
    %3618 = vmatprep.subr.mxu0 0.0
    %3619 = vmatpush1.msra.mxu0 0.0
    %3620 = vmatprep.subr.mxu0 0.0
    %3621 = vmatpush1.msra.mxu0 0.0
    %3622 = vmatprep.subr.mxu0 0.0
    %3623 = vmatpush1.msra.mxu0 0.0
    %3624 = vmatprep.subr.mxu0 0.0
    %3625 = vmatpush1.msra.mxu0 0.0
    %3626 = vmatprep.subr.mxu0 0.0
    %3627 = vmatpush1.msra.mxu0 0.0
    %3628 = vmatprep.subr.mxu0 0.0
    %3629 = vmatpush1.msra.mxu0 0.0
    %3630 = vmatprep.subr.mxu0 0.0
    %3631 = vmatpush1.msra.mxu0 0.0
    %3632 = vmatprep.mubr.f32.mxu0 0.0
    %3633 = vmatmul.mubr.f32.gmra.mrb[0].mxu0 %v3194
    %v3634 = vpop.f32.mrb[0].mxu0
    %v3635 = vadd.f32 0.0, %v3634
    %v3636 = vpop.f32.mrb[0].mxu0
    %3637 = vdwg.mxu0
    %3639 = vrot.lane.b32.xlu0 %v3559, 32
    %v3640 = vpop.permute.xlu0 %3639
    %v3641 = vsel %vm71, %v3640, 0
    %3643 = vmatprep.subr.mxu0 0.0
    %3644 = vmatpush1.msra.mxu0 %v3560
    %3645 = vmatprep.subr.mxu0 0.0
    %3646 = vmatpush1.msra.mxu0 %v3561
    %3647 = vmatprep.subr.mxu0 0.0
    %3648 = vmatpush1.msra.mxu0 %v3562
    %3649 = vmatprep.subr.mxu0 0.0
    %3650 = vmatpush1.msra.mxu0 %v3563
    %3651 = vmatprep.subr.mxu0 0.0
    %3652 = vmatpush1.msra.mxu0 0.0
    %3653 = vmatprep.subr.mxu0 0.0
    %3654 = vmatpush1.msra.mxu0 0.0
    %3655 = vmatprep.subr.mxu0 0.0
    %3656 = vmatpush1.msra.mxu0 0.0
    %3657 = vmatprep.subr.mxu0 0.0
    %3658 = vmatpush1.msra.mxu0 0.0
    %3659 = vmatprep.subr.mxu0 0.0
    %3660 = vmatpush1.msra.mxu0 0.0
    %3661 = vmatprep.subr.mxu0 0.0
    %3662 = vmatpush1.msra.mxu0 0.0
    %3663 = vmatprep.subr.mxu0 0.0
    %3664 = vmatpush1.msra.mxu0 0.0
    %3665 = vmatprep.subr.mxu0 0.0
    %3666 = vmatpush1.msra.mxu0 0.0
    %3667 = vmatprep.subr.mxu0 0.0
    %3668 = vmatpush1.msra.mxu0 0.0
    %3669 = vmatprep.subr.mxu0 0.0
    %3670 = vmatpush1.msra.mxu0 0.0
    %3671 = vmatprep.subr.mxu0 0.0
    %3672 = vmatpush1.msra.mxu0 0.0
    %3673 = vmatprep.subr.mxu0 0.0
    %3674 = vmatpush1.msra.mxu0 0.0
    %3675 = vmatprep.subr.mxu0 0.0
    %3676 = vmatpush1.msra.mxu0 0.0
    %3677 = vmatprep.subr.mxu0 0.0
    %3678 = vmatpush1.msra.mxu0 0.0
    %3679 = vmatprep.subr.mxu0 0.0
    %3680 = vmatpush1.msra.mxu0 0.0
    %3681 = vmatprep.subr.mxu0 0.0
    %3682 = vmatpush1.msra.mxu0 0.0
    %3683 = vmatprep.subr.mxu0 0.0
    %3684 = vmatpush1.msra.mxu0 0.0
    %3685 = vmatprep.subr.mxu0 0.0
    %3686 = vmatpush1.msra.mxu0 0.0
    %3687 = vmatprep.subr.mxu0 0.0
    %3688 = vmatpush1.msra.mxu0 0.0
    %3689 = vmatprep.subr.mxu0 0.0
    %3690 = vmatpush1.msra.mxu0 0.0
    %3691 = vmatprep.subr.mxu0 0.0
    %3692 = vmatpush1.msra.mxu0 0.0
    %3693 = vmatprep.subr.mxu0 0.0
    %3694 = vmatpush1.msra.mxu0 0.0
    %3695 = vmatprep.subr.mxu0 0.0
    %3696 = vmatpush1.msra.mxu0 0.0
    %3697 = vmatprep.subr.mxu0 0.0
    %3698 = vmatpush1.msra.mxu0 0.0
    %3699 = vmatprep.subr.mxu0 0.0
    %3700 = vmatpush1.msra.mxu0 0.0
    %3701 = vmatprep.subr.mxu0 0.0
    %3702 = vmatpush1.msra.mxu0 0.0
    %3703 = vmatprep.subr.mxu0 0.0
    %3704 = vmatpush1.msra.mxu0 0.0
    %3705 = vmatprep.subr.mxu0 0.0
    %3706 = vmatpush1.msra.mxu0 0.0
    %3707 = vmatprep.mubr.f32.mxu0 0.0
    %3708 = vmatmul.mubr.f32.gmra.mrb[0].mxu0 %v3641
    %v3709 = vpop.f32.mrb[0].mxu0
    %v3710 = vadd.f32 %v3635, %v3709
    %v3711 = vpop.f32.mrb[0].mxu0
    %3712 = vdwg.mxu0
    %v3713 = vld [vmem:[%s15] sm:$0x1]
    %v3715 = vlaneseq
    %v3716 = vshrl.u32 %v3715, 7
    %v3717 = vsub.s32 0, %v3716
    %v3718 = vrot.slane %v3713, %v3717
    %v3720 = vadd.f32 %v3710, %v3718
    %v3721 = vxor.u32 %v3720, 2147483648
    %v3722 = vmul.f32 %v3721, 1.442695
    %v3723 = vpow.pop %v3722
    %v3724 = vadd.f32 %v3723, 1.0
    %v3725 = vrcp.pop %v3724
    %v3726 = vmul.f32 1.0, %v3725
    %v3727 = vtanh.pop %v3720
    %v3728 = vmul.f32 %v3726, %v3173
    %3730 = vrot.lane.b32.xlu0 %v3727, 64
    %v3731 = vpop.permute.xlu0 %3730
    %v3733 = vmul.f32 %v3726, %v3731
    %3735 = vrot.lane.b32.xlu0 %v3733, 32
    %v3736 = vpop.permute.xlu0 %3735
    %v3738 = vadd.f32 %v3728, %v3736
    %v3739 = vtanh.pop %v3738
    %3741 = vrot.lane.b32.xlu0 %v3739, 64
    %v3742 = vpop.permute.xlu0 %3741
    %v3744 = vmul.f32 %v3726, %v3742
    %v3745 = vld [vmem:[%s16] sm:$0xff]
    %v3746 = vld [vmem:[%s16 + $0x8] sm:$0xff]
    %v3747 = vld [vmem:[%s16 + $0x10] sm:$0xff]
    %v3748 = vld [vmem:[%s16 + $0x18] sm:$0xff]
    %v3749 = vld [vmem:[%s17] sm:$0x1]
    %v3751 = vlaneseq
    %v3752 = vshrl.u32 %v3751, 7
    %v3753 = vsub.s32 0, %v3752
    %v3754 = vrot.slane %v3749, %v3753
    %3757 = vrot.lane.b32.xlu0 %v3744, 32
    %v3758 = vpop.permute.xlu0 %3757
    %v3759 = vsel %vm71, %v3758, 0
    %3761 = vmatprep.subr.mxu0 0.0
    %3762 = vmatpush1.msra.mxu0 %v3745
    %3763 = vmatprep.subr.mxu0 0.0
    %3764 = vmatpush1.msra.mxu0 %v3746
    %3765 = vmatprep.subr.mxu0 0.0
    %3766 = vmatpush1.msra.mxu0 %v3747
    %3767 = vmatprep.subr.mxu0 0.0
    %3768 = vmatpush1.msra.mxu0 %v3748
    %3769 = vmatprep.subr.mxu0 0.0
    %3770 = vmatpush1.msra.mxu0 0.0
    %3771 = vmatprep.subr.mxu0 0.0
    %3772 = vmatpush1.msra.mxu0 0.0
    %3773 = vmatprep.subr.mxu0 0.0
    %3774 = vmatpush1.msra.mxu0 0.0
    %3775 = vmatprep.subr.mxu0 0.0
    %3776 = vmatpush1.msra.mxu0 0.0
    %3777 = vmatprep.subr.mxu0 0.0
    %3778 = vmatpush1.msra.mxu0 0.0
    %3779 = vmatprep.subr.mxu0 0.0
    %3780 = vmatpush1.msra.mxu0 0.0
    %3781 = vmatprep.subr.mxu0 0.0
    %3782 = vmatpush1.msra.mxu0 0.0
    %3783 = vmatprep.subr.mxu0 0.0
    %3784 = vmatpush1.msra.mxu0 0.0
    %3785 = vmatprep.subr.mxu0 0.0
    %3786 = vmatpush1.msra.mxu0 0.0
    %3787 = vmatprep.subr.mxu0 0.0
    %3788 = vmatpush1.msra.mxu0 0.0
    %3789 = vmatprep.subr.mxu0 0.0
    %3790 = vmatpush1.msra.mxu0 0.0
    %3791 = vmatprep.subr.mxu0 0.0
    %3792 = vmatpush1.msra.mxu0 0.0
    %3793 = vmatprep.subr.mxu0 0.0
    %3794 = vmatpush1.msra.mxu0 0.0
    %3795 = vmatprep.subr.mxu0 0.0
    %3796 = vmatpush1.msra.mxu0 0.0
    %3797 = vmatprep.subr.mxu0 0.0
    %3798 = vmatpush1.msra.mxu0 0.0
    %3799 = vmatprep.subr.mxu0 0.0
    %3800 = vmatpush1.msra.mxu0 0.0
    %3801 = vmatprep.subr.mxu0 0.0
    %3802 = vmatpush1.msra.mxu0 0.0
    %3803 = vmatprep.subr.mxu0 0.0
    %3804 = vmatpush1.msra.mxu0 0.0
    %3805 = vmatprep.subr.mxu0 0.0
    %3806 = vmatpush1.msra.mxu0 0.0
    %3807 = vmatprep.subr.mxu0 0.0
    %3808 = vmatpush1.msra.mxu0 0.0
    %3809 = vmatprep.subr.mxu0 0.0
    %3810 = vmatpush1.msra.mxu0 0.0
    %3811 = vmatprep.subr.mxu0 0.0
    %3812 = vmatpush1.msra.mxu0 0.0
    %3813 = vmatprep.subr.mxu0 0.0
    %3814 = vmatpush1.msra.mxu0 0.0
    %3815 = vmatprep.subr.mxu0 0.0
    %3816 = vmatpush1.msra.mxu0 0.0
    %3817 = vmatprep.subr.mxu0 0.0
    %3818 = vmatpush1.msra.mxu0 0.0
    %3819 = vmatprep.subr.mxu0 0.0
    %3820 = vmatpush1.msra.mxu0 0.0
    %3821 = vmatprep.subr.mxu0 0.0
    %3822 = vmatpush1.msra.mxu0 0.0
    %3823 = vmatprep.subr.mxu0 0.0
    %3824 = vmatpush1.msra.mxu0 0.0
    %3825 = vmatprep.mubr.f32.mxu0 0.0
    %3826 = vmatmul.mubr.f32.gmra.mrb[0].mxu0 %v3759
    %v3827 = vpop.f32.mrb[0].mxu0
    %v3828 = vadd.f32 %v3754, %v3827
    %v3829 = vpop.f32.mrb[0].mxu0
    %3830 = vdwg.mxu0
    %s3831 = scalar_lea.vmem [#allocation4], 16
    %3832 = vst.msk [vmem:[%s3831] sm:$0xff] %vm2168, %v3828
    %v3833 = vsel %vm2168, %v3828, -inf
    %3834 = vmax.xlane.f32.xlu0 %v3833
    %v3835 = vpop.xlane.xlu0 %3834
    %vm3836 = vcmp.eq.f32.partialorder %v3828, %v3835
    %v3837 = vsel %vm3836, %v2162, 10
    %v3838 = vsel %vm2168, %v3837, 2147483647
    %v3839 = vand.u32 %v3838, 65535
    %v3840 = vshra.s32 %v3838, 16
    %v3841 = vcvt.s32.f32 %v3839
    %v3842 = vcvt.s32.f32 %v3840
    %3843 = vmin.xlane.f32.xlu0 %v3842
    %v3844 = vpop.xlane.xlu0 %3843
    %vm3845 = vcmp.eq.f32.partialorder %v3842, %v3844
    %v3846 = vsel %vm3845, %v3841, inf
    %3847 = vmin.xlane.f32.xlu0 %v3846
    %v3848 = vpop.xlane.xlu0 %3847
    %v3849 = vcvt.f32.s32 %v3848
    %v3850 = vcvt.f32.s32 %v3844
    %v3851 = vshll.u32 %v3850, 16
    %v3852 = vadd.s32 %v3851, %v3849
    %vm3853 = vcmp.eq.s32.totalorder %v2162, %v3852
    %v3854 = vsel %vm3853, 1, 0
    %v3855 = vcvt.s32.f32 %v3854
    %s3856 = sld [smem:[#allocation3 + $0x2]]
    %s3857 = scvt.s32.f32 %s3856
    %s3858 = scalar_lea.vmem %s2, 16
    %v3859 = vld [vmem:[%s3858] sm:$0xff]
    %v3860 = vstv %s3857
    %v3861 = vmul.f32 %v3860, %v3859
    %s3862 = ssub.f32 1.0, %s3857
    %v3863 = vstv %s3862
    %v3864 = vmul.f32 %v3863, %v3855
    %v3865 = vadd.f32 %v3861, %v3864
    %v3866 = vld [vmem:[%s9] sm:$0xff]
    %v3867 = vld [vmem:[%s9 + $0x8] sm:$0x3]
    %v3869 = vsel %vm2168, %v3865, 0
    %v3872 = vsel %vm2172, %v3867, 0
    %3874 = vmatprep.subr.mxu0 0.0
    %3875 = vmatpush1.msra.mxu0 %v3866
    %3876 = vmatprep.subr.mxu0 0.0
    %3877 = vmatpush1.msra.mxu0 %v3872
    %3878 = vmatprep.subr.mxu0 0.0
    %3879 = vmatpush1.msra.mxu0 0.0
    %3880 = vmatprep.subr.mxu0 0.0
    %3881 = vmatpush1.msra.mxu0 0.0
    %3882 = vmatprep.subr.mxu0 0.0
    %3883 = vmatpush1.msra.mxu0 0.0
    %3884 = vmatprep.subr.mxu0 0.0
    %3885 = vmatpush1.msra.mxu0 0.0
    %3886 = vmatprep.subr.mxu0 0.0
    %3887 = vmatpush1.msra.mxu0 0.0
    %3888 = vmatprep.subr.mxu0 0.0
    %3889 = vmatpush1.msra.mxu0 0.0
    %3890 = vmatprep.subr.mxu0 0.0
    %3891 = vmatpush1.msra.mxu0 0.0
    %3892 = vmatprep.subr.mxu0 0.0
    %3893 = vmatpush1.msra.mxu0 0.0
    %3894 = vmatprep.subr.mxu0 0.0
    %3895 = vmatpush1.msra.mxu0 0.0
    %3896 = vmatprep.subr.mxu0 0.0
    %3897 = vmatpush1.msra.mxu0 0.0
    %3898 = vmatprep.subr.mxu0 0.0
    %3899 = vmatpush1.msra.mxu0 0.0
    %3900 = vmatprep.subr.mxu0 0.0
    %3901 = vmatpush1.msra.mxu0 0.0
    %3902 = vmatprep.subr.mxu0 0.0
    %3903 = vmatpush1.msra.mxu0 0.0
    %3904 = vmatprep.subr.mxu0 0.0
    %3905 = vmatpush1.msra.mxu0 0.0
    %3906 = vmatprep.subr.mxu0 0.0
    %3907 = vmatpush1.msra.mxu0 0.0
    %3908 = vmatprep.subr.mxu0 0.0
    %3909 = vmatpush1.msra.mxu0 0.0
    %3910 = vmatprep.subr.mxu0 0.0
    %3911 = vmatpush1.msra.mxu0 0.0
    %3912 = vmatprep.subr.mxu0 0.0
    %3913 = vmatpush1.msra.mxu0 0.0
    %3914 = vmatprep.subr.mxu0 0.0
    %3915 = vmatpush1.msra.mxu0 0.0
    %3916 = vmatprep.subr.mxu0 0.0
    %3917 = vmatpush1.msra.mxu0 0.0
    %3918 = vmatprep.subr.mxu0 0.0
    %3919 = vmatpush1.msra.mxu0 0.0
    %3920 = vmatprep.subr.mxu0 0.0
    %3921 = vmatpush1.msra.mxu0 0.0
    %3922 = vmatprep.subr.mxu0 0.0
    %3923 = vmatpush1.msra.mxu0 0.0
    %3924 = vmatprep.subr.mxu0 0.0
    %3925 = vmatpush1.msra.mxu0 0.0
    %3926 = vmatprep.subr.mxu0 0.0
    %3927 = vmatpush1.msra.mxu0 0.0
    %3928 = vmatprep.subr.mxu0 0.0
    %3929 = vmatpush1.msra.mxu0 0.0
    %3930 = vmatprep.subr.mxu0 0.0
    %3931 = vmatpush1.msra.mxu0 0.0
    %3932 = vmatprep.subr.mxu0 0.0
    %3933 = vmatpush1.msra.mxu0 0.0
    %3934 = vmatprep.subr.mxu0 0.0
    %3935 = vmatpush1.msra.mxu0 0.0
    %3936 = vmatprep.subr.mxu0 0.0
    %3937 = vmatpush1.msra.mxu0 0.0
    %3938 = vmatprep.mubr.f32.mxu0 0.0
    %3939 = vmatmul.mubr.f32.gmra.mrb[0].mxu0 %v3869
    %v3940 = vpop.f32.mrb[0].mxu0
    %v3941 = vadd.f32 0.0, %v3940
    %v3942 = vpop.f32.mrb[0].mxu0
    %3943 = vdwg.mxu0
    %v3944 = vld [vmem:[%s10] sm:$0xff]
    %v3945 = vld [vmem:[%s10 + $0x8] sm:$0xff]
    %v3946 = vld [vmem:[%s11] sm:$0xff]
    %v3947 = vld [vmem:[%s11 + $0x8] sm:$0xff]
    %v3948 = vld [vmem:[%s11 + $0x10] sm:$0xff]
    %v3949 = vld [vmem:[%s11 + $0x18] sm:$0xff]
    %3950 = vmatprep.subr.mxu0 0.0
    %3951 = vmatpush1.msra.mxu0 %v3946
    %3952 = vmatprep.subr.mxu0 0.0
    %3953 = vmatpush1.msra.mxu0 %v3947
    %3954 = vmatprep.subr.mxu0 0.0
    %3955 = vmatpush1.msra.mxu0 %v3948
    %3956 = vmatprep.subr.mxu0 0.0
    %3957 = vmatpush1.msra.mxu0 %v3949
    %3958 = vmatprep.subr.mxu0 0.0
    %3959 = vmatpush1.msra.mxu0 0.0
    %3960 = vmatprep.subr.mxu0 0.0
    %3961 = vmatpush1.msra.mxu0 0.0
    %3962 = vmatprep.subr.mxu0 0.0
    %3963 = vmatpush1.msra.mxu0 0.0
    %3964 = vmatprep.subr.mxu0 0.0
    %3965 = vmatpush1.msra.mxu0 0.0
    %3966 = vmatprep.subr.mxu0 0.0
    %3967 = vmatpush1.msra.mxu0 0.0
    %3968 = vmatprep.subr.mxu0 0.0
    %3969 = vmatpush1.msra.mxu0 0.0
    %3970 = vmatprep.subr.mxu0 0.0
    %3971 = vmatpush1.msra.mxu0 0.0
    %3972 = vmatprep.subr.mxu0 0.0
    %3973 = vmatpush1.msra.mxu0 0.0
    %3974 = vmatprep.subr.mxu0 0.0
    %3975 = vmatpush1.msra.mxu0 0.0
    %3976 = vmatprep.subr.mxu0 0.0
    %3977 = vmatpush1.msra.mxu0 0.0
    %3978 = vmatprep.subr.mxu0 0.0
    %3979 = vmatpush1.msra.mxu0 0.0
    %3980 = vmatprep.subr.mxu0 0.0
    %3981 = vmatpush1.msra.mxu0 0.0
    %3982 = vmatprep.subr.mxu0 0.0
    %3983 = vmatpush1.msra.mxu0 0.0
    %3984 = vmatprep.subr.mxu0 0.0
    %3985 = vmatpush1.msra.mxu0 0.0
    %3986 = vmatprep.subr.mxu0 0.0
    %3987 = vmatpush1.msra.mxu0 0.0
    %3988 = vmatprep.subr.mxu0 0.0
    %3989 = vmatpush1.msra.mxu0 0.0
    %3990 = vmatprep.subr.mxu0 0.0
    %3991 = vmatpush1.msra.mxu0 0.0
    %3992 = vmatprep.subr.mxu0 0.0
    %3993 = vmatpush1.msra.mxu0 0.0
    %3994 = vmatprep.subr.mxu0 0.0
    %3995 = vmatpush1.msra.mxu0 0.0
    %3996 = vmatprep.subr.mxu0 0.0
    %3997 = vmatpush1.msra.mxu0 0.0
    %3998 = vmatprep.subr.mxu0 0.0
    %3999 = vmatpush1.msra.mxu0 0.0
    %4000 = vmatprep.subr.mxu0 0.0
    %4001 = vmatpush1.msra.mxu0 0.0
    %4002 = vmatprep.subr.mxu0 0.0
    %4003 = vmatpush1.msra.mxu0 0.0
    %4004 = vmatprep.subr.mxu0 0.0
    %4005 = vmatpush1.msra.mxu0 0.0
    %4006 = vmatprep.subr.mxu0 0.0
    %4007 = vmatpush1.msra.mxu0 0.0
    %4008 = vmatprep.subr.mxu0 0.0
    %4009 = vmatpush1.msra.mxu0 0.0
    %4010 = vmatprep.subr.mxu0 0.0
    %4011 = vmatpush1.msra.mxu0 0.0
    %4012 = vmatprep.subr.mxu0 0.0
    %4013 = vmatpush1.msra.mxu0 0.0
    %4014 = vmatprep.mubr.f32.mxu0 0.0
    %4015 = vmatmul.mubr.f32.gmra.mrb[0].mxu0 %v3641
    %v4016 = vpop.f32.mrb[0].mxu0
    %v4017 = vadd.f32 0.0, %v4016
    %v4018 = vpop.f32.mrb[0].mxu0
    %4019 = vdwg.mxu0
    %v4021 = vsel %vm145, %v3941, 0
    %4023 = vmatprep.subr.mxu0 0.0
    %4024 = vmatpush1.msra.mxu0 %v3944
    %4025 = vmatprep.subr.mxu0 0.0
    %4026 = vmatpush1.msra.mxu0 %v3945
    %4027 = vmatprep.subr.mxu0 0.0
    %4028 = vmatpush1.msra.mxu0 0.0
    %4029 = vmatprep.subr.mxu0 0.0
    %4030 = vmatpush1.msra.mxu0 0.0
    %4031 = vmatprep.subr.mxu0 0.0
    %4032 = vmatpush1.msra.mxu0 0.0
    %4033 = vmatprep.subr.mxu0 0.0
    %4034 = vmatpush1.msra.mxu0 0.0
    %4035 = vmatprep.subr.mxu0 0.0
    %4036 = vmatpush1.msra.mxu0 0.0
    %4037 = vmatprep.subr.mxu0 0.0
    %4038 = vmatpush1.msra.mxu0 0.0
    %4039 = vmatprep.subr.mxu0 0.0
    %4040 = vmatpush1.msra.mxu0 0.0
    %4041 = vmatprep.subr.mxu0 0.0
    %4042 = vmatpush1.msra.mxu0 0.0
    %4043 = vmatprep.subr.mxu0 0.0
    %4044 = vmatpush1.msra.mxu0 0.0
    %4045 = vmatprep.subr.mxu0 0.0
    %4046 = vmatpush1.msra.mxu0 0.0
    %4047 = vmatprep.subr.mxu0 0.0
    %4048 = vmatpush1.msra.mxu0 0.0
    %4049 = vmatprep.subr.mxu0 0.0
    %4050 = vmatpush1.msra.mxu0 0.0
    %4051 = vmatprep.subr.mxu0 0.0
    %4052 = vmatpush1.msra.mxu0 0.0
    %4053 = vmatprep.subr.mxu0 0.0
    %4054 = vmatpush1.msra.mxu0 0.0
    %4055 = vmatprep.subr.mxu0 0.0
    %4056 = vmatpush1.msra.mxu0 0.0
    %4057 = vmatprep.subr.mxu0 0.0
    %4058 = vmatpush1.msra.mxu0 0.0
    %4059 = vmatprep.subr.mxu0 0.0
    %4060 = vmatpush1.msra.mxu0 0.0
    %4061 = vmatprep.subr.mxu0 0.0
    %4062 = vmatpush1.msra.mxu0 0.0
    %4063 = vmatprep.subr.mxu0 0.0
    %4064 = vmatpush1.msra.mxu0 0.0
    %4065 = vmatprep.subr.mxu0 0.0
    %4066 = vmatpush1.msra.mxu0 0.0
    %4067 = vmatprep.subr.mxu0 0.0
    %4068 = vmatpush1.msra.mxu0 0.0
    %4069 = vmatprep.subr.mxu0 0.0
    %4070 = vmatpush1.msra.mxu0 0.0
    %4071 = vmatprep.subr.mxu0 0.0
    %4072 = vmatpush1.msra.mxu0 0.0
    %4073 = vmatprep.subr.mxu0 0.0
    %4074 = vmatpush1.msra.mxu0 0.0
    %4075 = vmatprep.subr.mxu0 0.0
    %4076 = vmatpush1.msra.mxu0 0.0
    %4077 = vmatprep.subr.mxu0 0.0
    %4078 = vmatpush1.msra.mxu0 0.0
    %4079 = vmatprep.subr.mxu0 0.0
    %4080 = vmatpush1.msra.mxu0 0.0
    %4081 = vmatprep.subr.mxu0 0.0
    %4082 = vmatpush1.msra.mxu0 0.0
    %4083 = vmatprep.subr.mxu0 0.0
    %4084 = vmatpush1.msra.mxu0 0.0
    %4085 = vmatprep.subr.mxu0 0.0
    %4086 = vmatpush1.msra.mxu0 0.0
    %4087 = vmatprep.mubr.f32.mxu0 0.0
    %4088 = vmatmul.mubr.f32.gmra.mrb[0].mxu0 %v4021
    %v4089 = vpop.f32.mrb[0].mxu0
    %v4090 = vadd.f32 %v4017, %v4089
    %v4091 = vpop.f32.mrb[0].mxu0
    %4092 = vdwg.mxu0
    %v4093 = vld [vmem:[%s12] sm:$0x1]
    %v4095 = vlaneseq
    %v4096 = vshrl.u32 %v4095, 7
    %v4097 = vsub.s32 0, %v4096
    %v4098 = vrot.slane %v4093, %v4097
    %v4100 = vadd.f32 %v4090, %v4098
    %v4101 = vxor.u32 %v4100, 2147483648
    %v4102 = vmul.f32 %v4101, 1.442695
    %v4103 = vpow.pop %v4102
    %v4104 = vadd.f32 %v4103, 1.0
    %v4105 = vrcp.pop %v4104
    %v4106 = vmul.f32 1.0, %v4105
    %v4107 = vtanh.pop %v4100
    %v4108 = vmul.f32 %v4106, %v3553
    %4110 = vrot.lane.b32.xlu0 %v4107, 64
    %v4111 = vpop.permute.xlu0 %4110
    %v4113 = vmul.f32 %v4106, %v4111
    %4115 = vrot.lane.b32.xlu0 %v4113, 32
    %v4116 = vpop.permute.xlu0 %4115
    %v4118 = vadd.f32 %v4108, %v4116
    %v4119 = vtanh.pop %v4118
    %4121 = vrot.lane.b32.xlu0 %v4119, 64
    %v4122 = vpop.permute.xlu0 %4121
    %v4124 = vmul.f32 %v4106, %v4122
    %v4125 = vld [vmem:[%s13] sm:$0xff]
    %v4126 = vld [vmem:[%s13 + $0x8] sm:$0xff]
    %v4127 = vld [vmem:[%s13 + $0x10] sm:$0xff]
    %v4128 = vld [vmem:[%s13 + $0x18] sm:$0xff]
    %v4129 = vld [vmem:[%s14] sm:$0xff]
    %v4130 = vld [vmem:[%s14 + $0x8] sm:$0xff]
    %v4131 = vld [vmem:[%s14 + $0x10] sm:$0xff]
    %v4132 = vld [vmem:[%s14 + $0x18] sm:$0xff]
    %4133 = vmatprep.subr.mxu0 0.0
    %4134 = vmatpush1.msra.mxu0 %v4129
    %4135 = vmatprep.subr.mxu0 0.0
    %4136 = vmatpush1.msra.mxu0 %v4130
    %4137 = vmatprep.subr.mxu0 0.0
    %4138 = vmatpush1.msra.mxu0 %v4131
    %4139 = vmatprep.subr.mxu0 0.0
    %4140 = vmatpush1.msra.mxu0 %v4132
    %4141 = vmatprep.subr.mxu0 0.0
    %4142 = vmatpush1.msra.mxu0 0.0
    %4143 = vmatprep.subr.mxu0 0.0
    %4144 = vmatpush1.msra.mxu0 0.0
    %4145 = vmatprep.subr.mxu0 0.0
    %4146 = vmatpush1.msra.mxu0 0.0
    %4147 = vmatprep.subr.mxu0 0.0
    %4148 = vmatpush1.msra.mxu0 0.0
    %4149 = vmatprep.subr.mxu0 0.0
    %4150 = vmatpush1.msra.mxu0 0.0
    %4151 = vmatprep.subr.mxu0 0.0
    %4152 = vmatpush1.msra.mxu0 0.0
    %4153 = vmatprep.subr.mxu0 0.0
    %4154 = vmatpush1.msra.mxu0 0.0
    %4155 = vmatprep.subr.mxu0 0.0
    %4156 = vmatpush1.msra.mxu0 0.0
    %4157 = vmatprep.subr.mxu0 0.0
    %4158 = vmatpush1.msra.mxu0 0.0
    %4159 = vmatprep.subr.mxu0 0.0
    %4160 = vmatpush1.msra.mxu0 0.0
    %4161 = vmatprep.subr.mxu0 0.0
    %4162 = vmatpush1.msra.mxu0 0.0
    %4163 = vmatprep.subr.mxu0 0.0
    %4164 = vmatpush1.msra.mxu0 0.0
    %4165 = vmatprep.subr.mxu0 0.0
    %4166 = vmatpush1.msra.mxu0 0.0
    %4167 = vmatprep.subr.mxu0 0.0
    %4168 = vmatpush1.msra.mxu0 0.0
    %4169 = vmatprep.subr.mxu0 0.0
    %4170 = vmatpush1.msra.mxu0 0.0
    %4171 = vmatprep.subr.mxu0 0.0
    %4172 = vmatpush1.msra.mxu0 0.0
    %4173 = vmatprep.subr.mxu0 0.0
    %4174 = vmatpush1.msra.mxu0 0.0
    %4175 = vmatprep.subr.mxu0 0.0
    %4176 = vmatpush1.msra.mxu0 0.0
    %4177 = vmatprep.subr.mxu0 0.0
    %4178 = vmatpush1.msra.mxu0 0.0
    %4179 = vmatprep.subr.mxu0 0.0
    %4180 = vmatpush1.msra.mxu0 0.0
    %4181 = vmatprep.subr.mxu0 0.0
    %4182 = vmatpush1.msra.mxu0 0.0
    %4183 = vmatprep.subr.mxu0 0.0
    %4184 = vmatpush1.msra.mxu0 0.0
    %4185 = vmatprep.subr.mxu0 0.0
    %4186 = vmatpush1.msra.mxu0 0.0
    %4187 = vmatprep.subr.mxu0 0.0
    %4188 = vmatpush1.msra.mxu0 0.0
    %4189 = vmatprep.subr.mxu0 0.0
    %4190 = vmatpush1.msra.mxu0 0.0
    %4191 = vmatprep.subr.mxu0 0.0
    %4192 = vmatpush1.msra.mxu0 0.0
    %4193 = vmatprep.subr.mxu0 0.0
    %4194 = vmatpush1.msra.mxu0 0.0
    %4195 = vmatprep.subr.mxu0 0.0
    %4196 = vmatpush1.msra.mxu0 0.0
    %4197 = vmatprep.mubr.f32.mxu0 0.0
    %4198 = vmatmul.mubr.f32.gmra.mrb[0].mxu0 %v3759
    %v4199 = vpop.f32.mrb[0].mxu0
    %v4200 = vadd.f32 0.0, %v4199
    %v4201 = vpop.f32.mrb[0].mxu0
    %4202 = vdwg.mxu0
    %4204 = vrot.lane.b32.xlu0 %v4124, 32
    %v4205 = vpop.permute.xlu0 %4204
    %v4206 = vsel %vm71, %v4205, 0
    %4208 = vmatprep.subr.mxu0 0.0
    %4209 = vmatpush1.msra.mxu0 %v4125
    %4210 = vmatprep.subr.mxu0 0.0
    %4211 = vmatpush1.msra.mxu0 %v4126
    %4212 = vmatprep.subr.mxu0 0.0
    %4213 = vmatpush1.msra.mxu0 %v4127
    %4214 = vmatprep.subr.mxu0 0.0
    %4215 = vmatpush1.msra.mxu0 %v4128
    %4216 = vmatprep.subr.mxu0 0.0
    %4217 = vmatpush1.msra.mxu0 0.0
    %4218 = vmatprep.subr.mxu0 0.0
    %4219 = vmatpush1.msra.mxu0 0.0
    %4220 = vmatprep.subr.mxu0 0.0
    %4221 = vmatpush1.msra.mxu0 0.0
    %4222 = vmatprep.subr.mxu0 0.0
    %4223 = vmatpush1.msra.mxu0 0.0
    %4224 = vmatprep.subr.mxu0 0.0
    %4225 = vmatpush1.msra.mxu0 0.0
    %4226 = vmatprep.subr.mxu0 0.0
    %4227 = vmatpush1.msra.mxu0 0.0
    %4228 = vmatprep.subr.mxu0 0.0
    %4229 = vmatpush1.msra.mxu0 0.0
    %4230 = vmatprep.subr.mxu0 0.0
    %4231 = vmatpush1.msra.mxu0 0.0
    %4232 = vmatprep.subr.mxu0 0.0
    %4233 = vmatpush1.msra.mxu0 0.0
    %4234 = vmatprep.subr.mxu0 0.0
    %4235 = vmatpush1.msra.mxu0 0.0
    %4236 = vmatprep.subr.mxu0 0.0
    %4237 = vmatpush1.msra.mxu0 0.0
    %4238 = vmatprep.subr.mxu0 0.0
    %4239 = vmatpush1.msra.mxu0 0.0
    %4240 = vmatprep.subr.mxu0 0.0
    %4241 = vmatpush1.msra.mxu0 0.0
    %4242 = vmatprep.subr.mxu0 0.0
    %4243 = vmatpush1.msra.mxu0 0.0
    %4244 = vmatprep.subr.mxu0 0.0
    %4245 = vmatpush1.msra.mxu0 0.0
    %4246 = vmatprep.subr.mxu0 0.0
    %4247 = vmatpush1.msra.mxu0 0.0
    %4248 = vmatprep.subr.mxu0 0.0
    %4249 = vmatpush1.msra.mxu0 0.0
    %4250 = vmatprep.subr.mxu0 0.0
    %4251 = vmatpush1.msra.mxu0 0.0
    %4252 = vmatprep.subr.mxu0 0.0
    %4253 = vmatpush1.msra.mxu0 0.0
    %4254 = vmatprep.subr.mxu0 0.0
    %4255 = vmatpush1.msra.mxu0 0.0
    %4256 = vmatprep.subr.mxu0 0.0
    %4257 = vmatpush1.msra.mxu0 0.0
    %4258 = vmatprep.subr.mxu0 0.0
    %4259 = vmatpush1.msra.mxu0 0.0
    %4260 = vmatprep.subr.mxu0 0.0
    %4261 = vmatpush1.msra.mxu0 0.0
    %4262 = vmatprep.subr.mxu0 0.0
    %4263 = vmatpush1.msra.mxu0 0.0
    %4264 = vmatprep.subr.mxu0 0.0
    %4265 = vmatpush1.msra.mxu0 0.0
    %4266 = vmatprep.subr.mxu0 0.0
    %4267 = vmatpush1.msra.mxu0 0.0
    %4268 = vmatprep.subr.mxu0 0.0
    %4269 = vmatpush1.msra.mxu0 0.0
    %4270 = vmatprep.subr.mxu0 0.0
    %4271 = vmatpush1.msra.mxu0 0.0
    %4272 = vmatprep.mubr.f32.mxu0 0.0
    %4273 = vmatmul.mubr.f32.gmra.mrb[0].mxu0 %v4206
    %v4274 = vpop.f32.mrb[0].mxu0
    %v4275 = vadd.f32 %v4200, %v4274
    %v4276 = vpop.f32.mrb[0].mxu0
    %4277 = vdwg.mxu0
    %v4278 = vld [vmem:[%s15] sm:$0x1]
    %v4280 = vlaneseq
    %v4281 = vshrl.u32 %v4280, 7
    %v4282 = vsub.s32 0, %v4281
    %v4283 = vrot.slane %v4278, %v4282
    %v4285 = vadd.f32 %v4275, %v4283
    %v4286 = vxor.u32 %v4285, 2147483648
    %v4287 = vmul.f32 %v4286, 1.442695
    %v4288 = vpow.pop %v4287
    %v4289 = vadd.f32 %v4288, 1.0
    %v4290 = vrcp.pop %v4289
    %v4291 = vmul.f32 1.0, %v4290
    %v4292 = vtanh.pop %v4285
    %v4293 = vmul.f32 %v4291, %v3738
    %4295 = vrot.lane.b32.xlu0 %v4292, 64
    %v4296 = vpop.permute.xlu0 %4295
    %v4298 = vmul.f32 %v4291, %v4296
    %4300 = vrot.lane.b32.xlu0 %v4298, 32
    %v4301 = vpop.permute.xlu0 %4300
    %v4303 = vadd.f32 %v4293, %v4301
    %v4304 = vtanh.pop %v4303
    %4306 = vrot.lane.b32.xlu0 %v4304, 64
    %v4307 = vpop.permute.xlu0 %4306
    %v4309 = vmul.f32 %v4291, %v4307
    %v4310 = vld [vmem:[%s16] sm:$0xff]
    %v4311 = vld [vmem:[%s16 + $0x8] sm:$0xff]
    %v4312 = vld [vmem:[%s16 + $0x10] sm:$0xff]
    %v4313 = vld [vmem:[%s16 + $0x18] sm:$0xff]
    %v4314 = vld [vmem:[%s17] sm:$0x1]
    %v4316 = vlaneseq
    %v4317 = vshrl.u32 %v4316, 7
    %v4318 = vsub.s32 0, %v4317
    %v4319 = vrot.slane %v4314, %v4318
    %4322 = vrot.lane.b32.xlu0 %v4309, 32
    %v4323 = vpop.permute.xlu0 %4322
    %v4324 = vsel %vm71, %v4323, 0
    %4326 = vmatprep.subr.mxu0 0.0
    %4327 = vmatpush1.msra.mxu0 %v4310
    %4328 = vmatprep.subr.mxu0 0.0
    %4329 = vmatpush1.msra.mxu0 %v4311
    %4330 = vmatprep.subr.mxu0 0.0
    %4331 = vmatpush1.msra.mxu0 %v4312
    %4332 = vmatprep.subr.mxu0 0.0
    %4333 = vmatpush1.msra.mxu0 %v4313
    %4334 = vmatprep.subr.mxu0 0.0
    %4335 = vmatpush1.msra.mxu0 0.0
    %4336 = vmatprep.subr.mxu0 0.0
    %4337 = vmatpush1.msra.mxu0 0.0
    %4338 = vmatprep.subr.mxu0 0.0
    %4339 = vmatpush1.msra.mxu0 0.0
    %4340 = vmatprep.subr.mxu0 0.0
    %4341 = vmatpush1.msra.mxu0 0.0
    %4342 = vmatprep.subr.mxu0 0.0
    %4343 = vmatpush1.msra.mxu0 0.0
    %4344 = vmatprep.subr.mxu0 0.0
    %4345 = vmatpush1.msra.mxu0 0.0
    %4346 = vmatprep.subr.mxu0 0.0
    %4347 = vmatpush1.msra.mxu0 0.0
    %4348 = vmatprep.subr.mxu0 0.0
    %4349 = vmatpush1.msra.mxu0 0.0
    %4350 = vmatprep.subr.mxu0 0.0
    %4351 = vmatpush1.msra.mxu0 0.0
    %4352 = vmatprep.subr.mxu0 0.0
    %4353 = vmatpush1.msra.mxu0 0.0
    %4354 = vmatprep.subr.mxu0 0.0
    %4355 = vmatpush1.msra.mxu0 0.0
    %4356 = vmatprep.subr.mxu0 0.0
    %4357 = vmatpush1.msra.mxu0 0.0
    %4358 = vmatprep.subr.mxu0 0.0
    %4359 = vmatpush1.msra.mxu0 0.0
    %4360 = vmatprep.subr.mxu0 0.0
    %4361 = vmatpush1.msra.mxu0 0.0
    %4362 = vmatprep.subr.mxu0 0.0
    %4363 = vmatpush1.msra.mxu0 0.0
    %4364 = vmatprep.subr.mxu0 0.0
    %4365 = vmatpush1.msra.mxu0 0.0
    %4366 = vmatprep.subr.mxu0 0.0
    %4367 = vmatpush1.msra.mxu0 0.0
    %4368 = vmatprep.subr.mxu0 0.0
    %4369 = vmatpush1.msra.mxu0 0.0
    %4370 = vmatprep.subr.mxu0 0.0
    %4371 = vmatpush1.msra.mxu0 0.0
    %4372 = vmatprep.subr.mxu0 0.0
    %4373 = vmatpush1.msra.mxu0 0.0
    %4374 = vmatprep.subr.mxu0 0.0
    %4375 = vmatpush1.msra.mxu0 0.0
    %4376 = vmatprep.subr.mxu0 0.0
    %4377 = vmatpush1.msra.mxu0 0.0
    %4378 = vmatprep.subr.mxu0 0.0
    %4379 = vmatpush1.msra.mxu0 0.0
    %4380 = vmatprep.subr.mxu0 0.0
    %4381 = vmatpush1.msra.mxu0 0.0
    %4382 = vmatprep.subr.mxu0 0.0
    %4383 = vmatpush1.msra.mxu0 0.0
    %4384 = vmatprep.subr.mxu0 0.0
    %4385 = vmatpush1.msra.mxu0 0.0
    %4386 = vmatprep.subr.mxu0 0.0
    %4387 = vmatpush1.msra.mxu0 0.0
    %4388 = vmatprep.subr.mxu0 0.0
    %4389 = vmatpush1.msra.mxu0 0.0
    %4390 = vmatprep.mubr.f32.mxu0 0.0
    %4391 = vmatmul.mubr.f32.gmra.mrb[0].mxu0 %v4324
    %v4392 = vpop.f32.mrb[0].mxu0
    %v4393 = vadd.f32 %v4319, %v4392
    %v4394 = vpop.f32.mrb[0].mxu0
    %4395 = vdwg.mxu0
    %s4396 = scalar_lea.vmem [#allocation4], 24
    %4397 = vst.msk [vmem:[%s4396] sm:$0xff] %vm2168, %v4393
    %v4398 = vsel %vm2168, %v4393, -inf
    %4399 = vmax.xlane.f32.xlu0 %v4398
    %v4400 = vpop.xlane.xlu0 %4399
    %vm4401 = vcmp.eq.f32.partialorder %v4393, %v4400
    %v4402 = vsel %vm4401, %v2162, 10
    %v4403 = vsel %vm2168, %v4402, 2147483647
    %v4404 = vand.u32 %v4403, 65535
    %v4405 = vshra.s32 %v4403, 16
    %v4406 = vcvt.s32.f32 %v4404
    %v4407 = vcvt.s32.f32 %v4405
    %4408 = vmin.xlane.f32.xlu0 %v4407
    %v4409 = vpop.xlane.xlu0 %4408
    %vm4410 = vcmp.eq.f32.partialorder %v4407, %v4409
    %v4411 = vsel %vm4410, %v4406, inf
    %4412 = vmin.xlane.f32.xlu0 %v4411
    %v4413 = vpop.xlane.xlu0 %4412
    %v4414 = vcvt.f32.s32 %v4413
    %v4415 = vcvt.f32.s32 %v4409
    %v4416 = vshll.u32 %v4415, 16
    %v4417 = vadd.s32 %v4416, %v4414
    %vm4418 = vcmp.eq.s32.totalorder %v2162, %v4417
    %v4419 = vsel %vm4418, 1, 0
    %v4420 = vcvt.s32.f32 %v4419
    %s4421 = sld [smem:[#allocation3 + $0x3]]
    %s4422 = scvt.s32.f32 %s4421
    %s4423 = scalar_lea.vmem %s2, 24
    %v4424 = vld [vmem:[%s4423] sm:$0xff]
    %v4425 = vstv %s4422
    %v4426 = vmul.f32 %v4425, %v4424
    %s4427 = ssub.f32 1.0, %s4422
    %v4428 = vstv %s4427
    %v4429 = vmul.f32 %v4428, %v4420
    %v4430 = vadd.f32 %v4426, %v4429
    %v4431 = vld [vmem:[%s9] sm:$0xff]
    %v4432 = vld [vmem:[%s9 + $0x8] sm:$0x3]
    %v4434 = vsel %vm2168, %v4430, 0
    %v4437 = vsel %vm2172, %v4432, 0
    %4439 = vmatprep.subr.mxu0 0.0
    %4440 = vmatpush1.msra.mxu0 %v4431
    %4441 = vmatprep.subr.mxu0 0.0
    %4442 = vmatpush1.msra.mxu0 %v4437
    %4443 = vmatprep.subr.mxu0 0.0
    %4444 = vmatpush1.msra.mxu0 0.0
    %4445 = vmatprep.subr.mxu0 0.0
    %4446 = vmatpush1.msra.mxu0 0.0
    %4447 = vmatprep.subr.mxu0 0.0
    %4448 = vmatpush1.msra.mxu0 0.0
    %4449 = vmatprep.subr.mxu0 0.0
    %4450 = vmatpush1.msra.mxu0 0.0
    %4451 = vmatprep.subr.mxu0 0.0
    %4452 = vmatpush1.msra.mxu0 0.0
    %4453 = vmatprep.subr.mxu0 0.0
    %4454 = vmatpush1.msra.mxu0 0.0
    %4455 = vmatprep.subr.mxu0 0.0
    %4456 = vmatpush1.msra.mxu0 0.0
    %4457 = vmatprep.subr.mxu0 0.0
    %4458 = vmatpush1.msra.mxu0 0.0
    %4459 = vmatprep.subr.mxu0 0.0
    %4460 = vmatpush1.msra.mxu0 0.0
    %4461 = vmatprep.subr.mxu0 0.0
    %4462 = vmatpush1.msra.mxu0 0.0
    %4463 = vmatprep.subr.mxu0 0.0
    %4464 = vmatpush1.msra.mxu0 0.0
    %4465 = vmatprep.subr.mxu0 0.0
    %4466 = vmatpush1.msra.mxu0 0.0
    %4467 = vmatprep.subr.mxu0 0.0
    %4468 = vmatpush1.msra.mxu0 0.0
    %4469 = vmatprep.subr.mxu0 0.0
    %4470 = vmatpush1.msra.mxu0 0.0
    %4471 = vmatprep.subr.mxu0 0.0
    %4472 = vmatpush1.msra.mxu0 0.0
    %4473 = vmatprep.subr.mxu0 0.0
    %4474 = vmatpush1.msra.mxu0 0.0
    %4475 = vmatprep.subr.mxu0 0.0
    %4476 = vmatpush1.msra.mxu0 0.0
    %4477 = vmatprep.subr.mxu0 0.0
    %4478 = vmatpush1.msra.mxu0 0.0
    %4479 = vmatprep.subr.mxu0 0.0
    %4480 = vmatpush1.msra.mxu0 0.0
    %4481 = vmatprep.subr.mxu0 0.0
    %4482 = vmatpush1.msra.mxu0 0.0
    %4483 = vmatprep.subr.mxu0 0.0
    %4484 = vmatpush1.msra.mxu0 0.0
    %4485 = vmatprep.subr.mxu0 0.0
    %4486 = vmatpush1.msra.mxu0 0.0
    %4487 = vmatprep.subr.mxu0 0.0
    %4488 = vmatpush1.msra.mxu0 0.0
    %4489 = vmatprep.subr.mxu0 0.0
    %4490 = vmatpush1.msra.mxu0 0.0
    %4491 = vmatprep.subr.mxu0 0.0
    %4492 = vmatpush1.msra.mxu0 0.0
    %4493 = vmatprep.subr.mxu0 0.0
    %4494 = vmatpush1.msra.mxu0 0.0
    %4495 = vmatprep.subr.mxu0 0.0
    %4496 = vmatpush1.msra.mxu0 0.0
    %4497 = vmatprep.subr.mxu0 0.0
    %4498 = vmatpush1.msra.mxu0 0.0
    %4499 = vmatprep.subr.mxu0 0.0
    %4500 = vmatpush1.msra.mxu0 0.0
    %4501 = vmatprep.subr.mxu0 0.0
    %4502 = vmatpush1.msra.mxu0 0.0
    %4503 = vmatprep.mubr.f32.mxu0 0.0
    %4504 = vmatmul.mubr.f32.gmra.mrb[0].mxu0 %v4434
    %v4505 = vpop.f32.mrb[0].mxu0
    %v4506 = vadd.f32 0.0, %v4505
    %v4507 = vpop.f32.mrb[0].mxu0
    %4508 = vdwg.mxu0
    %v4509 = vld [vmem:[%s10] sm:$0xff]
    %v4510 = vld [vmem:[%s10 + $0x8] sm:$0xff]
    %v4511 = vld [vmem:[%s11] sm:$0xff]
    %v4512 = vld [vmem:[%s11 + $0x8] sm:$0xff]
    %v4513 = vld [vmem:[%s11 + $0x10] sm:$0xff]
    %v4514 = vld [vmem:[%s11 + $0x18] sm:$0xff]
    %4515 = vmatprep.subr.mxu0 0.0
    %4516 = vmatpush1.msra.mxu0 %v4511
    %4517 = vmatprep.subr.mxu0 0.0
    %4518 = vmatpush1.msra.mxu0 %v4512
    %4519 = vmatprep.subr.mxu0 0.0
    %4520 = vmatpush1.msra.mxu0 %v4513
    %4521 = vmatprep.subr.mxu0 0.0
    %4522 = vmatpush1.msra.mxu0 %v4514
    %4523 = vmatprep.subr.mxu0 0.0
    %4524 = vmatpush1.msra.mxu0 0.0
    %4525 = vmatprep.subr.mxu0 0.0
    %4526 = vmatpush1.msra.mxu0 0.0
    %4527 = vmatprep.subr.mxu0 0.0
    %4528 = vmatpush1.msra.mxu0 0.0
    %4529 = vmatprep.subr.mxu0 0.0
    %4530 = vmatpush1.msra.mxu0 0.0
    %4531 = vmatprep.subr.mxu0 0.0
    %4532 = vmatpush1.msra.mxu0 0.0
    %4533 = vmatprep.subr.mxu0 0.0
    %4534 = vmatpush1.msra.mxu0 0.0
    %4535 = vmatprep.subr.mxu0 0.0
    %4536 = vmatpush1.msra.mxu0 0.0
    %4537 = vmatprep.subr.mxu0 0.0
    %4538 = vmatpush1.msra.mxu0 0.0
    %4539 = vmatprep.subr.mxu0 0.0
    %4540 = vmatpush1.msra.mxu0 0.0
    %4541 = vmatprep.subr.mxu0 0.0
    %4542 = vmatpush1.msra.mxu0 0.0
    %4543 = vmatprep.subr.mxu0 0.0
    %4544 = vmatpush1.msra.mxu0 0.0
    %4545 = vmatprep.subr.mxu0 0.0
    %4546 = vmatpush1.msra.mxu0 0.0
    %4547 = vmatprep.subr.mxu0 0.0
    %4548 = vmatpush1.msra.mxu0 0.0
    %4549 = vmatprep.subr.mxu0 0.0
    %4550 = vmatpush1.msra.mxu0 0.0
    %4551 = vmatprep.subr.mxu0 0.0
    %4552 = vmatpush1.msra.mxu0 0.0
    %4553 = vmatprep.subr.mxu0 0.0
    %4554 = vmatpush1.msra.mxu0 0.0
    %4555 = vmatprep.subr.mxu0 0.0
    %4556 = vmatpush1.msra.mxu0 0.0
    %4557 = vmatprep.subr.mxu0 0.0
    %4558 = vmatpush1.msra.mxu0 0.0
    %4559 = vmatprep.subr.mxu0 0.0
    %4560 = vmatpush1.msra.mxu0 0.0
    %4561 = vmatprep.subr.mxu0 0.0
    %4562 = vmatpush1.msra.mxu0 0.0
    %4563 = vmatprep.subr.mxu0 0.0
    %4564 = vmatpush1.msra.mxu0 0.0
    %4565 = vmatprep.subr.mxu0 0.0
    %4566 = vmatpush1.msra.mxu0 0.0
    %4567 = vmatprep.subr.mxu0 0.0
    %4568 = vmatpush1.msra.mxu0 0.0
    %4569 = vmatprep.subr.mxu0 0.0
    %4570 = vmatpush1.msra.mxu0 0.0
    %4571 = vmatprep.subr.mxu0 0.0
    %4572 = vmatpush1.msra.mxu0 0.0
    %4573 = vmatprep.subr.mxu0 0.0
    %4574 = vmatpush1.msra.mxu0 0.0
    %4575 = vmatprep.subr.mxu0 0.0
    %4576 = vmatpush1.msra.mxu0 0.0
    %4577 = vmatprep.subr.mxu0 0.0
    %4578 = vmatpush1.msra.mxu0 0.0
    %4579 = vmatprep.mubr.f32.mxu0 0.0
    %4580 = vmatmul.mubr.f32.gmra.mrb[0].mxu0 %v4206
    %v4581 = vpop.f32.mrb[0].mxu0
    %v4582 = vadd.f32 0.0, %v4581
    %v4583 = vpop.f32.mrb[0].mxu0
    %4584 = vdwg.mxu0
    %v4586 = vsel %vm145, %v4506, 0
    %4588 = vmatprep.subr.mxu0 0.0
    %4589 = vmatpush1.msra.mxu0 %v4509
    %4590 = vmatprep.subr.mxu0 0.0
    %4591 = vmatpush1.msra.mxu0 %v4510
    %4592 = vmatprep.subr.mxu0 0.0
    %4593 = vmatpush1.msra.mxu0 0.0
    %4594 = vmatprep.subr.mxu0 0.0
    %4595 = vmatpush1.msra.mxu0 0.0
    %4596 = vmatprep.subr.mxu0 0.0
    %4597 = vmatpush1.msra.mxu0 0.0
    %4598 = vmatprep.subr.mxu0 0.0
    %4599 = vmatpush1.msra.mxu0 0.0
    %4600 = vmatprep.subr.mxu0 0.0
    %4601 = vmatpush1.msra.mxu0 0.0
    %4602 = vmatprep.subr.mxu0 0.0
    %4603 = vmatpush1.msra.mxu0 0.0
    %4604 = vmatprep.subr.mxu0 0.0
    %4605 = vmatpush1.msra.mxu0 0.0
    %4606 = vmatprep.subr.mxu0 0.0
    %4607 = vmatpush1.msra.mxu0 0.0
    %4608 = vmatprep.subr.mxu0 0.0
    %4609 = vmatpush1.msra.mxu0 0.0
    %4610 = vmatprep.subr.mxu0 0.0
    %4611 = vmatpush1.msra.mxu0 0.0
    %4612 = vmatprep.subr.mxu0 0.0
    %4613 = vmatpush1.msra.mxu0 0.0
    %4614 = vmatprep.subr.mxu0 0.0
    %4615 = vmatpush1.msra.mxu0 0.0
    %4616 = vmatprep.subr.mxu0 0.0
    %4617 = vmatpush1.msra.mxu0 0.0
    %4618 = vmatprep.subr.mxu0 0.0
    %4619 = vmatpush1.msra.mxu0 0.0
    %4620 = vmatprep.subr.mxu0 0.0
    %4621 = vmatpush1.msra.mxu0 0.0
    %4622 = vmatprep.subr.mxu0 0.0
    %4623 = vmatpush1.msra.mxu0 0.0
    %4624 = vmatprep.subr.mxu0 0.0
    %4625 = vmatpush1.msra.mxu0 0.0
    %4626 = vmatprep.subr.mxu0 0.0
    %4627 = vmatpush1.msra.mxu0 0.0
    %4628 = vmatprep.subr.mxu0 0.0
    %4629 = vmatpush1.msra.mxu0 0.0
    %4630 = vmatprep.subr.mxu0 0.0
    %4631 = vmatpush1.msra.mxu0 0.0
    %4632 = vmatprep.subr.mxu0 0.0
    %4633 = vmatpush1.msra.mxu0 0.0
    %4634 = vmatprep.subr.mxu0 0.0
    %4635 = vmatpush1.msra.mxu0 0.0
    %4636 = vmatprep.subr.mxu0 0.0
    %4637 = vmatpush1.msra.mxu0 0.0
    %4638 = vmatprep.subr.mxu0 0.0
    %4639 = vmatpush1.msra.mxu0 0.0
    %4640 = vmatprep.subr.mxu0 0.0
    %4641 = vmatpush1.msra.mxu0 0.0
    %4642 = vmatprep.subr.mxu0 0.0
    %4643 = vmatpush1.msra.mxu0 0.0
    %4644 = vmatprep.subr.mxu0 0.0
    %4645 = vmatpush1.msra.mxu0 0.0
    %4646 = vmatprep.subr.mxu0 0.0
    %4647 = vmatpush1.msra.mxu0 0.0
    %4648 = vmatprep.subr.mxu0 0.0
    %4649 = vmatpush1.msra.mxu0 0.0
    %4650 = vmatprep.subr.mxu0 0.0
    %4651 = vmatpush1.msra.mxu0 0.0
    %4652 = vmatprep.mubr.f32.mxu0 0.0
    %4653 = vmatmul.mubr.f32.gmra.mrb[0].mxu0 %v4586
    %v4654 = vpop.f32.mrb[0].mxu0
    %v4655 = vadd.f32 %v4582, %v4654
    %v4656 = vpop.f32.mrb[0].mxu0
    %4657 = vdwg.mxu0
    %v4658 = vld [vmem:[%s12] sm:$0x1]
    %v4660 = vlaneseq
    %v4661 = vshrl.u32 %v4660, 7
    %v4662 = vsub.s32 0, %v4661
    %v4663 = vrot.slane %v4658, %v4662
    %v4665 = vadd.f32 %v4655, %v4663
    %v4666 = vxor.u32 %v4665, 2147483648
    %v4667 = vmul.f32 %v4666, 1.442695
    %v4668 = vpow.pop %v4667
    %v4669 = vadd.f32 %v4668, 1.0
    %v4670 = vrcp.pop %v4669
    %v4671 = vmul.f32 1.0, %v4670
    %v4672 = vtanh.pop %v4665
    %v4673 = vmul.f32 %v4671, %v4118
    %4675 = vrot.lane.b32.xlu0 %v4672, 64
    %v4676 = vpop.permute.xlu0 %4675
    %v4678 = vmul.f32 %v4671, %v4676
    %4680 = vrot.lane.b32.xlu0 %v4678, 32
    %v4681 = vpop.permute.xlu0 %4680
    %v4683 = vadd.f32 %v4673, %v4681
    %v4684 = vtanh.pop %v4683
    %4686 = vrot.lane.b32.xlu0 %v4684, 64
    %v4687 = vpop.permute.xlu0 %4686
    %v4689 = vmul.f32 %v4671, %v4687
    %v4690 = vld [vmem:[%s13] sm:$0xff]
    %v4691 = vld [vmem:[%s13 + $0x8] sm:$0xff]
    %v4692 = vld [vmem:[%s13 + $0x10] sm:$0xff]
    %v4693 = vld [vmem:[%s13 + $0x18] sm:$0xff]
    %v4694 = vld [vmem:[%s14] sm:$0xff]
    %v4695 = vld [vmem:[%s14 + $0x8] sm:$0xff]
    %v4696 = vld [vmem:[%s14 + $0x10] sm:$0xff]
    %v4697 = vld [vmem:[%s14 + $0x18] sm:$0xff]
    %4698 = vmatprep.subr.mxu0 0.0
    %4699 = vmatpush1.msra.mxu0 %v4694
    %4700 = vmatprep.subr.mxu0 0.0
    %4701 = vmatpush1.msra.mxu0 %v4695
    %4702 = vmatprep.subr.mxu0 0.0
    %4703 = vmatpush1.msra.mxu0 %v4696
    %4704 = vmatprep.subr.mxu0 0.0
    %4705 = vmatpush1.msra.mxu0 %v4697
    %4706 = vmatprep.subr.mxu0 0.0
    %4707 = vmatpush1.msra.mxu0 0.0
    %4708 = vmatprep.subr.mxu0 0.0
    %4709 = vmatpush1.msra.mxu0 0.0
    %4710 = vmatprep.subr.mxu0 0.0
    %4711 = vmatpush1.msra.mxu0 0.0
    %4712 = vmatprep.subr.mxu0 0.0
    %4713 = vmatpush1.msra.mxu0 0.0
    %4714 = vmatprep.subr.mxu0 0.0
    %4715 = vmatpush1.msra.mxu0 0.0
    %4716 = vmatprep.subr.mxu0 0.0
    %4717 = vmatpush1.msra.mxu0 0.0
    %4718 = vmatprep.subr.mxu0 0.0
    %4719 = vmatpush1.msra.mxu0 0.0
    %4720 = vmatprep.subr.mxu0 0.0
    %4721 = vmatpush1.msra.mxu0 0.0
    %4722 = vmatprep.subr.mxu0 0.0
    %4723 = vmatpush1.msra.mxu0 0.0
    %4724 = vmatprep.subr.mxu0 0.0
    %4725 = vmatpush1.msra.mxu0 0.0
    %4726 = vmatprep.subr.mxu0 0.0
    %4727 = vmatpush1.msra.mxu0 0.0
    %4728 = vmatprep.subr.mxu0 0.0
    %4729 = vmatpush1.msra.mxu0 0.0
    %4730 = vmatprep.subr.mxu0 0.0
    %4731 = vmatpush1.msra.mxu0 0.0
    %4732 = vmatprep.subr.mxu0 0.0
    %4733 = vmatpush1.msra.mxu0 0.0
    %4734 = vmatprep.subr.mxu0 0.0
    %4735 = vmatpush1.msra.mxu0 0.0
    %4736 = vmatprep.subr.mxu0 0.0
    %4737 = vmatpush1.msra.mxu0 0.0
    %4738 = vmatprep.subr.mxu0 0.0
    %4739 = vmatpush1.msra.mxu0 0.0
    %4740 = vmatprep.subr.mxu0 0.0
    %4741 = vmatpush1.msra.mxu0 0.0
    %4742 = vmatprep.subr.mxu0 0.0
    %4743 = vmatpush1.msra.mxu0 0.0
    %4744 = vmatprep.subr.mxu0 0.0
    %4745 = vmatpush1.msra.mxu0 0.0
    %4746 = vmatprep.subr.mxu0 0.0
    %4747 = vmatpush1.msra.mxu0 0.0
    %4748 = vmatprep.subr.mxu0 0.0
    %4749 = vmatpush1.msra.mxu0 0.0
    %4750 = vmatprep.subr.mxu0 0.0
    %4751 = vmatpush1.msra.mxu0 0.0
    %4752 = vmatprep.subr.mxu0 0.0
    %4753 = vmatpush1.msra.mxu0 0.0
    %4754 = vmatprep.subr.mxu0 0.0
    %4755 = vmatpush1.msra.mxu0 0.0
    %4756 = vmatprep.subr.mxu0 0.0
    %4757 = vmatpush1.msra.mxu0 0.0
    %4758 = vmatprep.subr.mxu0 0.0
    %4759 = vmatpush1.msra.mxu0 0.0
    %4760 = vmatprep.subr.mxu0 0.0
    %4761 = vmatpush1.msra.mxu0 0.0
    %4762 = vmatprep.mubr.f32.mxu0 0.0
    %4763 = vmatmul.mubr.f32.gmra.mrb[0].mxu0 %v4324
    %v4764 = vpop.f32.mrb[0].mxu0
    %v4765 = vadd.f32 0.0, %v4764
    %v4766 = vpop.f32.mrb[0].mxu0
    %4767 = vdwg.mxu0
    %4769 = vrot.lane.b32.xlu0 %v4689, 32
    %v4770 = vpop.permute.xlu0 %4769
    %v4771 = vsel %vm71, %v4770, 0
    %4773 = vmatprep.subr.mxu0 0.0
    %4774 = vmatpush1.msra.mxu0 %v4690
    %4775 = vmatprep.subr.mxu0 0.0
    %4776 = vmatpush1.msra.mxu0 %v4691
    %4777 = vmatprep.subr.mxu0 0.0
    %4778 = vmatpush1.msra.mxu0 %v4692
    %4779 = vmatprep.subr.mxu0 0.0
    %4780 = vmatpush1.msra.mxu0 %v4693
    %4781 = vmatprep.subr.mxu0 0.0
    %4782 = vmatpush1.msra.mxu0 0.0
    %4783 = vmatprep.subr.mxu0 0.0
    %4784 = vmatpush1.msra.mxu0 0.0
    %4785 = vmatprep.subr.mxu0 0.0
    %4786 = vmatpush1.msra.mxu0 0.0
    %4787 = vmatprep.subr.mxu0 0.0
    %4788 = vmatpush1.msra.mxu0 0.0
    %4789 = vmatprep.subr.mxu0 0.0
    %4790 = vmatpush1.msra.mxu0 0.0
    %4791 = vmatprep.subr.mxu0 0.0
    %4792 = vmatpush1.msra.mxu0 0.0
    %4793 = vmatprep.subr.mxu0 0.0
    %4794 = vmatpush1.msra.mxu0 0.0
    %4795 = vmatprep.subr.mxu0 0.0
    %4796 = vmatpush1.msra.mxu0 0.0
    %4797 = vmatprep.subr.mxu0 0.0
    %4798 = vmatpush1.msra.mxu0 0.0
    %4799 = vmatprep.subr.mxu0 0.0
    %4800 = vmatpush1.msra.mxu0 0.0
    %4801 = vmatprep.subr.mxu0 0.0
    %4802 = vmatpush1.msra.mxu0 0.0
    %4803 = vmatprep.subr.mxu0 0.0
    %4804 = vmatpush1.msra.mxu0 0.0
    %4805 = vmatprep.subr.mxu0 0.0
    %4806 = vmatpush1.msra.mxu0 0.0
    %4807 = vmatprep.subr.mxu0 0.0
    %4808 = vmatpush1.msra.mxu0 0.0
    %4809 = vmatprep.subr.mxu0 0.0
    %4810 = vmatpush1.msra.mxu0 0.0
    %4811 = vmatprep.subr.mxu0 0.0
    %4812 = vmatpush1.msra.mxu0 0.0
    %4813 = vmatprep.subr.mxu0 0.0
    %4814 = vmatpush1.msra.mxu0 0.0
    %4815 = vmatprep.subr.mxu0 0.0
    %4816 = vmatpush1.msra.mxu0 0.0
    %4817 = vmatprep.subr.mxu0 0.0
    %4818 = vmatpush1.msra.mxu0 0.0
    %4819 = vmatprep.subr.mxu0 0.0
    %4820 = vmatpush1.msra.mxu0 0.0
    %4821 = vmatprep.subr.mxu0 0.0
    %4822 = vmatpush1.msra.mxu0 0.0
    %4823 = vmatprep.subr.mxu0 0.0
    %4824 = vmatpush1.msra.mxu0 0.0
    %4825 = vmatprep.subr.mxu0 0.0
    %4826 = vmatpush1.msra.mxu0 0.0
    %4827 = vmatprep.subr.mxu0 0.0
    %4828 = vmatpush1.msra.mxu0 0.0
    %4829 = vmatprep.subr.mxu0 0.0
    %4830 = vmatpush1.msra.mxu0 0.0
    %4831 = vmatprep.subr.mxu0 0.0
    %4832 = vmatpush1.msra.mxu0 0.0
    %4833 = vmatprep.subr.mxu0 0.0
    %4834 = vmatpush1.msra.mxu0 0.0
    %4835 = vmatprep.subr.mxu0 0.0
    %4836 = vmatpush1.msra.mxu0 0.0
    %4837 = vmatprep.mubr.f32.mxu0 0.0
    %4838 = vmatmul.mubr.f32.gmra.mrb[0].mxu0 %v4771
    %v4839 = vpop.f32.mrb[0].mxu0
    %v4840 = vadd.f32 %v4765, %v4839
    %v4841 = vpop.f32.mrb[0].mxu0
    %4842 = vdwg.mxu0
    %v4843 = vld [vmem:[%s15] sm:$0x1]
    %v4845 = vlaneseq
    %v4846 = vshrl.u32 %v4845, 7
    %v4847 = vsub.s32 0, %v4846
    %v4848 = vrot.slane %v4843, %v4847
    %v4850 = vadd.f32 %v4840, %v4848
    %v4851 = vxor.u32 %v4850, 2147483648
    %v4852 = vmul.f32 %v4851, 1.442695
    %v4853 = vpow.pop %v4852
    %v4854 = vadd.f32 %v4853, 1.0
    %v4855 = vrcp.pop %v4854
    %v4856 = vmul.f32 1.0, %v4855
    %v4857 = vtanh.pop %v4850
    %v4858 = vmul.f32 %v4856, %v4303
    %4860 = vrot.lane.b32.xlu0 %v4857, 64
    %v4861 = vpop.permute.xlu0 %4860
    %v4863 = vmul.f32 %v4856, %v4861
    %4865 = vrot.lane.b32.xlu0 %v4863, 32
    %v4866 = vpop.permute.xlu0 %4865
    %v4868 = vadd.f32 %v4858, %v4866
    %v4869 = vtanh.pop %v4868
    %4871 = vrot.lane.b32.xlu0 %v4869, 64
    %v4872 = vpop.permute.xlu0 %4871
    %v4874 = vmul.f32 %v4856, %v4872
    %v4875 = vld [vmem:[%s16] sm:$0xff]
    %v4876 = vld [vmem:[%s16 + $0x8] sm:$0xff]
    %v4877 = vld [vmem:[%s16 + $0x10] sm:$0xff]
    %v4878 = vld [vmem:[%s16 + $0x18] sm:$0xff]
    %v4879 = vld [vmem:[%s17] sm:$0x1]
    %v4881 = vlaneseq
    %v4882 = vshrl.u32 %v4881, 7
    %v4883 = vsub.s32 0, %v4882
    %v4884 = vrot.slane %v4879, %v4883
    %4887 = vrot.lane.b32.xlu0 %v4874, 32
    %v4888 = vpop.permute.xlu0 %4887
    %v4889 = vsel %vm71, %v4888, 0
    %4891 = vmatprep.subr.mxu0 0.0
    %4892 = vmatpush1.msra.mxu0 %v4875
    %4893 = vmatprep.subr.mxu0 0.0
    %4894 = vmatpush1.msra.mxu0 %v4876
    %4895 = vmatprep.subr.mxu0 0.0
    %4896 = vmatpush1.msra.mxu0 %v4877
    %4897 = vmatprep.subr.mxu0 0.0
    %4898 = vmatpush1.msra.mxu0 %v4878
    %4899 = vmatprep.subr.mxu0 0.0
    %4900 = vmatpush1.msra.mxu0 0.0
    %4901 = vmatprep.subr.mxu0 0.0
    %4902 = vmatpush1.msra.mxu0 0.0
    %4903 = vmatprep.subr.mxu0 0.0
    %4904 = vmatpush1.msra.mxu0 0.0
    %4905 = vmatprep.subr.mxu0 0.0
    %4906 = vmatpush1.msra.mxu0 0.0
    %4907 = vmatprep.subr.mxu0 0.0
    %4908 = vmatpush1.msra.mxu0 0.0
    %4909 = vmatprep.subr.mxu0 0.0
    %4910 = vmatpush1.msra.mxu0 0.0
    %4911 = vmatprep.subr.mxu0 0.0
    %4912 = vmatpush1.msra.mxu0 0.0
    %4913 = vmatprep.subr.mxu0 0.0
    %4914 = vmatpush1.msra.mxu0 0.0
    %4915 = vmatprep.subr.mxu0 0.0
    %4916 = vmatpush1.msra.mxu0 0.0
    %4917 = vmatprep.subr.mxu0 0.0
    %4918 = vmatpush1.msra.mxu0 0.0
    %4919 = vmatprep.subr.mxu0 0.0
    %4920 = vmatpush1.msra.mxu0 0.0
    %4921 = vmatprep.subr.mxu0 0.0
    %4922 = vmatpush1.msra.mxu0 0.0
    %4923 = vmatprep.subr.mxu0 0.0
    %4924 = vmatpush1.msra.mxu0 0.0
    %4925 = vmatprep.subr.mxu0 0.0
    %4926 = vmatpush1.msra.mxu0 0.0
    %4927 = vmatprep.subr.mxu0 0.0
    %4928 = vmatpush1.msra.mxu0 0.0
    %4929 = vmatprep.subr.mxu0 0.0
    %4930 = vmatpush1.msra.mxu0 0.0
    %4931 = vmatprep.subr.mxu0 0.0
    %4932 = vmatpush1.msra.mxu0 0.0
    %4933 = vmatprep.subr.mxu0 0.0
    %4934 = vmatpush1.msra.mxu0 0.0
    %4935 = vmatprep.subr.mxu0 0.0
    %4936 = vmatpush1.msra.mxu0 0.0
    %4937 = vmatprep.subr.mxu0 0.0
    %4938 = vmatpush1.msra.mxu0 0.0
    %4939 = vmatprep.subr.mxu0 0.0
    %4940 = vmatpush1.msra.mxu0 0.0
    %4941 = vmatprep.subr.mxu0 0.0
    %4942 = vmatpush1.msra.mxu0 0.0
    %4943 = vmatprep.subr.mxu0 0.0
    %4944 = vmatpush1.msra.mxu0 0.0
    %4945 = vmatprep.subr.mxu0 0.0
    %4946 = vmatpush1.msra.mxu0 0.0
    %4947 = vmatprep.subr.mxu0 0.0
    %4948 = vmatpush1.msra.mxu0 0.0
    %4949 = vmatprep.subr.mxu0 0.0
    %4950 = vmatpush1.msra.mxu0 0.0
    %4951 = vmatprep.subr.mxu0 0.0
    %4952 = vmatpush1.msra.mxu0 0.0
    %4953 = vmatprep.subr.mxu0 0.0
    %4954 = vmatpush1.msra.mxu0 0.0
    %4955 = vmatprep.mubr.f32.mxu0 0.0
    %4956 = vmatmul.mubr.f32.gmra.mrb[0].mxu0 %v4889
    %v4957 = vpop.f32.mrb[0].mxu0
    %v4958 = vadd.f32 %v4884, %v4957
    %v4959 = vpop.f32.mrb[0].mxu0
    %4960 = vdwg.mxu0
    %s4961 = scalar_lea.vmem [#allocation4], 32
    %4962 = vst.msk [vmem:[%s4961] sm:$0xff] %vm2168, %v4958
    %v4963 = vsel %vm2168, %v4958, -inf
    %4964 = vmax.xlane.f32.xlu0 %v4963
    %v4965 = vpop.xlane.xlu0 %4964
    %vm4966 = vcmp.eq.f32.partialorder %v4958, %v4965
    %v4967 = vsel %vm4966, %v2162, 10
    %v4968 = vsel %vm2168, %v4967, 2147483647
    %v4969 = vand.u32 %v4968, 65535
    %v4970 = vshra.s32 %v4968, 16
    %v4971 = vcvt.s32.f32 %v4969
    %v4972 = vcvt.s32.f32 %v4970
    %4973 = vmin.xlane.f32.xlu0 %v4972
    %v4974 = vpop.xlane.xlu0 %4973
    %vm4975 = vcmp.eq.f32.partialorder %v4972, %v4974
    %v4976 = vsel %vm4975, %v4971, inf
    %4977 = vmin.xlane.f32.xlu0 %v4976
    %v4978 = vpop.xlane.xlu0 %4977
    %v4979 = vcvt.f32.s32 %v4978
    %v4980 = vcvt.f32.s32 %v4974
    %v4981 = vshll.u32 %v4980, 16
    %v4982 = vadd.s32 %v4981, %v4979
    %vm4983 = vcmp.eq.s32.totalorder %v2162, %v4982
    %v4984 = vsel %vm4983, 1, 0
    %v4985 = vcvt.s32.f32 %v4984
    %s4986 = sld [smem:[#allocation3 + $0x4]]
    %s4987 = scvt.s32.f32 %s4986
    %s4988 = scalar_lea.vmem %s2, 32
    %v4989 = vld [vmem:[%s4988] sm:$0xff]
    %v4990 = vstv %s4987
    %v4991 = vmul.f32 %v4990, %v4989
    %s4992 = ssub.f32 1.0, %s4987
    %v4993 = vstv %s4992
    %v4994 = vmul.f32 %v4993, %v4985
    %v4995 = vadd.f32 %v4991, %v4994
    %v4996 = vld [vmem:[%s9] sm:$0xff]
    %v4997 = vld [vmem:[%s9 + $0x8] sm:$0x3]
    %v4999 = vsel %vm2168, %v4995, 0
    %v5002 = vsel %vm2172, %v4997, 0
    %5004 = vmatprep.subr.mxu0 0.0
    %5005 = vmatpush1.msra.mxu0 %v4996
    %5006 = vmatprep.subr.mxu0 0.0
    %5007 = vmatpush1.msra.mxu0 %v5002
    %5008 = vmatprep.subr.mxu0 0.0
    %5009 = vmatpush1.msra.mxu0 0.0
    %5010 = vmatprep.subr.mxu0 0.0
    %5011 = vmatpush1.msra.mxu0 0.0
    %5012 = vmatprep.subr.mxu0 0.0
    %5013 = vmatpush1.msra.mxu0 0.0
    %5014 = vmatprep.subr.mxu0 0.0
    %5015 = vmatpush1.msra.mxu0 0.0
    %5016 = vmatprep.subr.mxu0 0.0
    %5017 = vmatpush1.msra.mxu0 0.0
    %5018 = vmatprep.subr.mxu0 0.0
    %5019 = vmatpush1.msra.mxu0 0.0
    %5020 = vmatprep.subr.mxu0 0.0
    %5021 = vmatpush1.msra.mxu0 0.0
    %5022 = vmatprep.subr.mxu0 0.0
    %5023 = vmatpush1.msra.mxu0 0.0
    %5024 = vmatprep.subr.mxu0 0.0
    %5025 = vmatpush1.msra.mxu0 0.0
    %5026 = vmatprep.subr.mxu0 0.0
    %5027 = vmatpush1.msra.mxu0 0.0
    %5028 = vmatprep.subr.mxu0 0.0
    %5029 = vmatpush1.msra.mxu0 0.0
    %5030 = vmatprep.subr.mxu0 0.0
    %5031 = vmatpush1.msra.mxu0 0.0
    %5032 = vmatprep.subr.mxu0 0.0
    %5033 = vmatpush1.msra.mxu0 0.0
    %5034 = vmatprep.subr.mxu0 0.0
    %5035 = vmatpush1.msra.mxu0 0.0
    %5036 = vmatprep.subr.mxu0 0.0
    %5037 = vmatpush1.msra.mxu0 0.0
    %5038 = vmatprep.subr.mxu0 0.0
    %5039 = vmatpush1.msra.mxu0 0.0
    %5040 = vmatprep.subr.mxu0 0.0
    %5041 = vmatpush1.msra.mxu0 0.0
    %5042 = vmatprep.subr.mxu0 0.0
    %5043 = vmatpush1.msra.mxu0 0.0
    %5044 = vmatprep.subr.mxu0 0.0
    %5045 = vmatpush1.msra.mxu0 0.0
    %5046 = vmatprep.subr.mxu0 0.0
    %5047 = vmatpush1.msra.mxu0 0.0
    %5048 = vmatprep.subr.mxu0 0.0
    %5049 = vmatpush1.msra.mxu0 0.0
    %5050 = vmatprep.subr.mxu0 0.0
    %5051 = vmatpush1.msra.mxu0 0.0
    %5052 = vmatprep.subr.mxu0 0.0
    %5053 = vmatpush1.msra.mxu0 0.0
    %5054 = vmatprep.subr.mxu0 0.0
    %5055 = vmatpush1.msra.mxu0 0.0
    %5056 = vmatprep.subr.mxu0 0.0
    %5057 = vmatpush1.msra.mxu0 0.0
    %5058 = vmatprep.subr.mxu0 0.0
    %5059 = vmatpush1.msra.mxu0 0.0
    %5060 = vmatprep.subr.mxu0 0.0
    %5061 = vmatpush1.msra.mxu0 0.0
    %5062 = vmatprep.subr.mxu0 0.0
    %5063 = vmatpush1.msra.mxu0 0.0
    %5064 = vmatprep.subr.mxu0 0.0
    %5065 = vmatpush1.msra.mxu0 0.0
    %5066 = vmatprep.subr.mxu0 0.0
    %5067 = vmatpush1.msra.mxu0 0.0
    %5068 = vmatprep.mubr.f32.mxu0 0.0
    %5069 = vmatmul.mubr.f32.gmra.mrb[0].mxu0 %v4999
    %v5070 = vpop.f32.mrb[0].mxu0
    %v5071 = vadd.f32 0.0, %v5070
    %v5072 = vpop.f32.mrb[0].mxu0
    %5073 = vdwg.mxu0
    %v5074 = vld [vmem:[%s10] sm:$0xff]
    %v5075 = vld [vmem:[%s10 + $0x8] sm:$0xff]
    %v5076 = vld [vmem:[%s11] sm:$0xff]
    %v5077 = vld [vmem:[%s11 + $0x8] sm:$0xff]
    %v5078 = vld [vmem:[%s11 + $0x10] sm:$0xff]
    %v5079 = vld [vmem:[%s11 + $0x18] sm:$0xff]
    %5080 = vmatprep.subr.mxu0 0.0
    %5081 = vmatpush1.msra.mxu0 %v5076
    %5082 = vmatprep.subr.mxu0 0.0
    %5083 = vmatpush1.msra.mxu0 %v5077
    %5084 = vmatprep.subr.mxu0 0.0
    %5085 = vmatpush1.msra.mxu0 %v5078
    %5086 = vmatprep.subr.mxu0 0.0
    %5087 = vmatpush1.msra.mxu0 %v5079
    %5088 = vmatprep.subr.mxu0 0.0
    %5089 = vmatpush1.msra.mxu0 0.0
    %5090 = vmatprep.subr.mxu0 0.0
    %5091 = vmatpush1.msra.mxu0 0.0
    %5092 = vmatprep.subr.mxu0 0.0
    %5093 = vmatpush1.msra.mxu0 0.0
    %5094 = vmatprep.subr.mxu0 0.0
    %5095 = vmatpush1.msra.mxu0 0.0
    %5096 = vmatprep.subr.mxu0 0.0
    %5097 = vmatpush1.msra.mxu0 0.0
    %5098 = vmatprep.subr.mxu0 0.0
    %5099 = vmatpush1.msra.mxu0 0.0
    %5100 = vmatprep.subr.mxu0 0.0
    %5101 = vmatpush1.msra.mxu0 0.0
    %5102 = vmatprep.subr.mxu0 0.0
    %5103 = vmatpush1.msra.mxu0 0.0
    %5104 = vmatprep.subr.mxu0 0.0
    %5105 = vmatpush1.msra.mxu0 0.0
    %5106 = vmatprep.subr.mxu0 0.0
    %5107 = vmatpush1.msra.mxu0 0.0
    %5108 = vmatprep.subr.mxu0 0.0
    %5109 = vmatpush1.msra.mxu0 0.0
    %5110 = vmatprep.subr.mxu0 0.0
    %5111 = vmatpush1.msra.mxu0 0.0
    %5112 = vmatprep.subr.mxu0 0.0
    %5113 = vmatpush1.msra.mxu0 0.0
    %5114 = vmatprep.subr.mxu0 0.0
    %5115 = vmatpush1.msra.mxu0 0.0
    %5116 = vmatprep.subr.mxu0 0.0
    %5117 = vmatpush1.msra.mxu0 0.0
    %5118 = vmatprep.subr.mxu0 0.0
    %5119 = vmatpush1.msra.mxu0 0.0
    %5120 = vmatprep.subr.mxu0 0.0
    %5121 = vmatpush1.msra.mxu0 0.0
    %5122 = vmatprep.subr.mxu0 0.0
    %5123 = vmatpush1.msra.mxu0 0.0
    %5124 = vmatprep.subr.mxu0 0.0
    %5125 = vmatpush1.msra.mxu0 0.0
    %5126 = vmatprep.subr.mxu0 0.0
    %5127 = vmatpush1.msra.mxu0 0.0
    %5128 = vmatprep.subr.mxu0 0.0
    %5129 = vmatpush1.msra.mxu0 0.0
    %5130 = vmatprep.subr.mxu0 0.0
    %5131 = vmatpush1.msra.mxu0 0.0
    %5132 = vmatprep.subr.mxu0 0.0
    %5133 = vmatpush1.msra.mxu0 0.0
    %5134 = vmatprep.subr.mxu0 0.0
    %5135 = vmatpush1.msra.mxu0 0.0
    %5136 = vmatprep.subr.mxu0 0.0
    %5137 = vmatpush1.msra.mxu0 0.0
    %5138 = vmatprep.subr.mxu0 0.0
    %5139 = vmatpush1.msra.mxu0 0.0
    %5140 = vmatprep.subr.mxu0 0.0
    %5141 = vmatpush1.msra.mxu0 0.0
    %5142 = vmatprep.subr.mxu0 0.0
    %5143 = vmatpush1.msra.mxu0 0.0
    %5144 = vmatprep.mubr.f32.mxu0 0.0
    %5145 = vmatmul.mubr.f32.gmra.mrb[0].mxu0 %v4771
    %v5146 = vpop.f32.mrb[0].mxu0
    %v5147 = vadd.f32 0.0, %v5146
    %v5148 = vpop.f32.mrb[0].mxu0
    %5149 = vdwg.mxu0
    %v5151 = vsel %vm145, %v5071, 0
    %5153 = vmatprep.subr.mxu0 0.0
    %5154 = vmatpush1.msra.mxu0 %v5074
    %5155 = vmatprep.subr.mxu0 0.0
    %5156 = vmatpush1.msra.mxu0 %v5075
    %5157 = vmatprep.subr.mxu0 0.0
    %5158 = vmatpush1.msra.mxu0 0.0
    %5159 = vmatprep.subr.mxu0 0.0
    %5160 = vmatpush1.msra.mxu0 0.0
    %5161 = vmatprep.subr.mxu0 0.0
    %5162 = vmatpush1.msra.mxu0 0.0
    %5163 = vmatprep.subr.mxu0 0.0
    %5164 = vmatpush1.msra.mxu0 0.0
    %5165 = vmatprep.subr.mxu0 0.0
    %5166 = vmatpush1.msra.mxu0 0.0
    %5167 = vmatprep.subr.mxu0 0.0
    %5168 = vmatpush1.msra.mxu0 0.0
    %5169 = vmatprep.subr.mxu0 0.0
    %5170 = vmatpush1.msra.mxu0 0.0
    %5171 = vmatprep.subr.mxu0 0.0
    %5172 = vmatpush1.msra.mxu0 0.0
    %5173 = vmatprep.subr.mxu0 0.0
    %5174 = vmatpush1.msra.mxu0 0.0
    %5175 = vmatprep.subr.mxu0 0.0
    %5176 = vmatpush1.msra.mxu0 0.0
    %5177 = vmatprep.subr.mxu0 0.0
    %5178 = vmatpush1.msra.mxu0 0.0
    %5179 = vmatprep.subr.mxu0 0.0
    %5180 = vmatpush1.msra.mxu0 0.0
    %5181 = vmatprep.subr.mxu0 0.0
    %5182 = vmatpush1.msra.mxu0 0.0
    %5183 = vmatprep.subr.mxu0 0.0
    %5184 = vmatpush1.msra.mxu0 0.0
    %5185 = vmatprep.subr.mxu0 0.0
    %5186 = vmatpush1.msra.mxu0 0.0
    %5187 = vmatprep.subr.mxu0 0.0
    %5188 = vmatpush1.msra.mxu0 0.0
    %5189 = vmatprep.subr.mxu0 0.0
    %5190 = vmatpush1.msra.mxu0 0.0
    %5191 = vmatprep.subr.mxu0 0.0
    %5192 = vmatpush1.msra.mxu0 0.0
    %5193 = vmatprep.subr.mxu0 0.0
    %5194 = vmatpush1.msra.mxu0 0.0
    %5195 = vmatprep.subr.mxu0 0.0
    %5196 = vmatpush1.msra.mxu0 0.0
    %5197 = vmatprep.subr.mxu0 0.0
    %5198 = vmatpush1.msra.mxu0 0.0
    %5199 = vmatprep.subr.mxu0 0.0
    %5200 = vmatpush1.msra.mxu0 0.0
    %5201 = vmatprep.subr.mxu0 0.0
    %5202 = vmatpush1.msra.mxu0 0.0
    %5203 = vmatprep.subr.mxu0 0.0
    %5204 = vmatpush1.msra.mxu0 0.0
    %5205 = vmatprep.subr.mxu0 0.0
    %5206 = vmatpush1.msra.mxu0 0.0
    %5207 = vmatprep.subr.mxu0 0.0
    %5208 = vmatpush1.msra.mxu0 0.0
    %5209 = vmatprep.subr.mxu0 0.0
    %5210 = vmatpush1.msra.mxu0 0.0
    %5211 = vmatprep.subr.mxu0 0.0
    %5212 = vmatpush1.msra.mxu0 0.0
    %5213 = vmatprep.subr.mxu0 0.0
    %5214 = vmatpush1.msra.mxu0 0.0
    %5215 = vmatprep.subr.mxu0 0.0
    %5216 = vmatpush1.msra.mxu0 0.0
    %5217 = vmatprep.mubr.f32.mxu0 0.0
    %5218 = vmatmul.mubr.f32.gmra.mrb[0].mxu0 %v5151
    %v5219 = vpop.f32.mrb[0].mxu0
    %v5220 = vadd.f32 %v5147, %v5219
    %v5221 = vpop.f32.mrb[0].mxu0
    %5222 = vdwg.mxu0
    %v5223 = vld [vmem:[%s12] sm:$0x1]
    %v5225 = vlaneseq
    %v5226 = vshrl.u32 %v5225, 7
    %v5227 = vsub.s32 0, %v5226
    %v5228 = vrot.slane %v5223, %v5227
    %v5230 = vadd.f32 %v5220, %v5228
    %v5231 = vxor.u32 %v5230, 2147483648
    %v5232 = vmul.f32 %v5231, 1.442695
    %v5233 = vpow.pop %v5232
    %v5234 = vadd.f32 %v5233, 1.0
    %v5235 = vrcp.pop %v5234
    %v5236 = vmul.f32 1.0, %v5235
    %v5237 = vtanh.pop %v5230
    %v5238 = vmul.f32 %v5236, %v4683
    %5240 = vrot.lane.b32.xlu0 %v5237, 64
    %v5241 = vpop.permute.xlu0 %5240
    %v5243 = vmul.f32 %v5236, %v5241
    %5245 = vrot.lane.b32.xlu0 %v5243, 32
    %v5246 = vpop.permute.xlu0 %5245
    %v5248 = vadd.f32 %v5238, %v5246
    %v5249 = vtanh.pop %v5248
    %5251 = vrot.lane.b32.xlu0 %v5249, 64
    %v5252 = vpop.permute.xlu0 %5251
    %v5254 = vmul.f32 %v5236, %v5252
    %v5255 = vld [vmem:[%s13] sm:$0xff]
    %v5256 = vld [vmem:[%s13 + $0x8] sm:$0xff]
    %v5257 = vld [vmem:[%s13 + $0x10] sm:$0xff]
    %v5258 = vld [vmem:[%s13 + $0x18] sm:$0xff]
    %v5259 = vld [vmem:[%s14] sm:$0xff]
    %v5260 = vld [vmem:[%s14 + $0x8] sm:$0xff]
    %v5261 = vld [vmem:[%s14 + $0x10] sm:$0xff]
    %v5262 = vld [vmem:[%s14 + $0x18] sm:$0xff]
    %5263 = vmatprep.subr.mxu0 0.0
    %5264 = vmatpush1.msra.mxu0 %v5259
    %5265 = vmatprep.subr.mxu0 0.0
    %5266 = vmatpush1.msra.mxu0 %v5260
    %5267 = vmatprep.subr.mxu0 0.0
    %5268 = vmatpush1.msra.mxu0 %v5261
    %5269 = vmatprep.subr.mxu0 0.0
    %5270 = vmatpush1.msra.mxu0 %v5262
    %5271 = vmatprep.subr.mxu0 0.0
    %5272 = vmatpush1.msra.mxu0 0.0
    %5273 = vmatprep.subr.mxu0 0.0
    %5274 = vmatpush1.msra.mxu0 0.0
    %5275 = vmatprep.subr.mxu0 0.0
    %5276 = vmatpush1.msra.mxu0 0.0
    %5277 = vmatprep.subr.mxu0 0.0
    %5278 = vmatpush1.msra.mxu0 0.0
    %5279 = vmatprep.subr.mxu0 0.0
    %5280 = vmatpush1.msra.mxu0 0.0
    %5281 = vmatprep.subr.mxu0 0.0
    %5282 = vmatpush1.msra.mxu0 0.0
    %5283 = vmatprep.subr.mxu0 0.0
    %5284 = vmatpush1.msra.mxu0 0.0
    %5285 = vmatprep.subr.mxu0 0.0
    %5286 = vmatpush1.msra.mxu0 0.0
    %5287 = vmatprep.subr.mxu0 0.0
    %5288 = vmatpush1.msra.mxu0 0.0
    %5289 = vmatprep.subr.mxu0 0.0
    %5290 = vmatpush1.msra.mxu0 0.0
    %5291 = vmatprep.subr.mxu0 0.0
    %5292 = vmatpush1.msra.mxu0 0.0
    %5293 = vmatprep.subr.mxu0 0.0
    %5294 = vmatpush1.msra.mxu0 0.0
    %5295 = vmatprep.subr.mxu0 0.0
    %5296 = vmatpush1.msra.mxu0 0.0
    %5297 = vmatprep.subr.mxu0 0.0
    %5298 = vmatpush1.msra.mxu0 0.0
    %5299 = vmatprep.subr.mxu0 0.0
    %5300 = vmatpush1.msra.mxu0 0.0
    %5301 = vmatprep.subr.mxu0 0.0
    %5302 = vmatpush1.msra.mxu0 0.0
    %5303 = vmatprep.subr.mxu0 0.0
    %5304 = vmatpush1.msra.mxu0 0.0
    %5305 = vmatprep.subr.mxu0 0.0
    %5306 = vmatpush1.msra.mxu0 0.0
    %5307 = vmatprep.subr.mxu0 0.0
    %5308 = vmatpush1.msra.mxu0 0.0
    %5309 = vmatprep.subr.mxu0 0.0
    %5310 = vmatpush1.msra.mxu0 0.0
    %5311 = vmatprep.subr.mxu0 0.0
    %5312 = vmatpush1.msra.mxu0 0.0
    %5313 = vmatprep.subr.mxu0 0.0
    %5314 = vmatpush1.msra.mxu0 0.0
    %5315 = vmatprep.subr.mxu0 0.0
    %5316 = vmatpush1.msra.mxu0 0.0
    %5317 = vmatprep.subr.mxu0 0.0
    %5318 = vmatpush1.msra.mxu0 0.0
    %5319 = vmatprep.subr.mxu0 0.0
    %5320 = vmatpush1.msra.mxu0 0.0
    %5321 = vmatprep.subr.mxu0 0.0
    %5322 = vmatpush1.msra.mxu0 0.0
    %5323 = vmatprep.subr.mxu0 0.0
    %5324 = vmatpush1.msra.mxu0 0.0
    %5325 = vmatprep.subr.mxu0 0.0
    %5326 = vmatpush1.msra.mxu0 0.0
    %5327 = vmatprep.mubr.f32.mxu0 0.0
    %5328 = vmatmul.mubr.f32.gmra.mrb[0].mxu0 %v4889
    %v5329 = vpop.f32.mrb[0].mxu0
    %v5330 = vadd.f32 0.0, %v5329
    %v5331 = vpop.f32.mrb[0].mxu0
    %5332 = vdwg.mxu0
    %5334 = vrot.lane.b32.xlu0 %v5254, 32
    %v5335 = vpop.permute.xlu0 %5334
    %v5336 = vsel %vm71, %v5335, 0
    %5338 = vmatprep.subr.mxu0 0.0
    %5339 = vmatpush1.msra.mxu0 %v5255
    %5340 = vmatprep.subr.mxu0 0.0
    %5341 = vmatpush1.msra.mxu0 %v5256
    %5342 = vmatprep.subr.mxu0 0.0
    %5343 = vmatpush1.msra.mxu0 %v5257
    %5344 = vmatprep.subr.mxu0 0.0
    %5345 = vmatpush1.msra.mxu0 %v5258
    %5346 = vmatprep.subr.mxu0 0.0
    %5347 = vmatpush1.msra.mxu0 0.0
    %5348 = vmatprep.subr.mxu0 0.0
    %5349 = vmatpush1.msra.mxu0 0.0
    %5350 = vmatprep.subr.mxu0 0.0
    %5351 = vmatpush1.msra.mxu0 0.0
    %5352 = vmatprep.subr.mxu0 0.0
    %5353 = vmatpush1.msra.mxu0 0.0
    %5354 = vmatprep.subr.mxu0 0.0
    %5355 = vmatpush1.msra.mxu0 0.0
    %5356 = vmatprep.subr.mxu0 0.0
    %5357 = vmatpush1.msra.mxu0 0.0
    %5358 = vmatprep.subr.mxu0 0.0
    %5359 = vmatpush1.msra.mxu0 0.0
    %5360 = vmatprep.subr.mxu0 0.0
    %5361 = vmatpush1.msra.mxu0 0.0
    %5362 = vmatprep.subr.mxu0 0.0
    %5363 = vmatpush1.msra.mxu0 0.0
    %5364 = vmatprep.subr.mxu0 0.0
    %5365 = vmatpush1.msra.mxu0 0.0
    %5366 = vmatprep.subr.mxu0 0.0
    %5367 = vmatpush1.msra.mxu0 0.0
    %5368 = vmatprep.subr.mxu0 0.0
    %5369 = vmatpush1.msra.mxu0 0.0
    %5370 = vmatprep.subr.mxu0 0.0
    %5371 = vmatpush1.msra.mxu0 0.0
    %5372 = vmatprep.subr.mxu0 0.0
    %5373 = vmatpush1.msra.mxu0 0.0
    %5374 = vmatprep.subr.mxu0 0.0
    %5375 = vmatpush1.msra.mxu0 0.0
    %5376 = vmatprep.subr.mxu0 0.0
    %5377 = vmatpush1.msra.mxu0 0.0
    %5378 = vmatprep.subr.mxu0 0.0
    %5379 = vmatpush1.msra.mxu0 0.0
    %5380 = vmatprep.subr.mxu0 0.0
    %5381 = vmatpush1.msra.mxu0 0.0
    %5382 = vmatprep.subr.mxu0 0.0
    %5383 = vmatpush1.msra.mxu0 0.0
    %5384 = vmatprep.subr.mxu0 0.0
    %5385 = vmatpush1.msra.mxu0 0.0
    %5386 = vmatprep.subr.mxu0 0.0
    %5387 = vmatpush1.msra.mxu0 0.0
    %5388 = vmatprep.subr.mxu0 0.0
    %5389 = vmatpush1.msra.mxu0 0.0
    %5390 = vmatprep.subr.mxu0 0.0
    %5391 = vmatpush1.msra.mxu0 0.0
    %5392 = vmatprep.subr.mxu0 0.0
    %5393 = vmatpush1.msra.mxu0 0.0
    %5394 = vmatprep.subr.mxu0 0.0
    %5395 = vmatpush1.msra.mxu0 0.0
    %5396 = vmatprep.subr.mxu0 0.0
    %5397 = vmatpush1.msra.mxu0 0.0
    %5398 = vmatprep.subr.mxu0 0.0
    %5399 = vmatpush1.msra.mxu0 0.0
    %5400 = vmatprep.subr.mxu0 0.0
    %5401 = vmatpush1.msra.mxu0 0.0
    %5402 = vmatprep.mubr.f32.mxu0 0.0
    %5403 = vmatmul.mubr.f32.gmra.mrb[0].mxu0 %v5336
    %v5404 = vpop.f32.mrb[0].mxu0
    %v5405 = vadd.f32 %v5330, %v5404
    %v5406 = vpop.f32.mrb[0].mxu0
    %5407 = vdwg.mxu0
    %v5408 = vld [vmem:[%s15] sm:$0x1]
    %v5410 = vlaneseq
    %v5411 = vshrl.u32 %v5410, 7
    %v5412 = vsub.s32 0, %v5411
    %v5413 = vrot.slane %v5408, %v5412
    %v5415 = vadd.f32 %v5405, %v5413
    %v5416 = vxor.u32 %v5415, 2147483648
    %v5417 = vmul.f32 %v5416, 1.442695
    %v5418 = vpow.pop %v5417
    %v5419 = vadd.f32 %v5418, 1.0
    %v5420 = vrcp.pop %v5419
    %v5421 = vmul.f32 1.0, %v5420
    %v5422 = vtanh.pop %v5415
    %v5423 = vmul.f32 %v5421, %v4868
    %5425 = vrot.lane.b32.xlu0 %v5422, 64
    %v5426 = vpop.permute.xlu0 %5425
    %v5428 = vmul.f32 %v5421, %v5426
    %5430 = vrot.lane.b32.xlu0 %v5428, 32
    %v5431 = vpop.permute.xlu0 %5430
    %v5433 = vadd.f32 %v5423, %v5431
    %v5434 = vtanh.pop %v5433
    %5436 = vrot.lane.b32.xlu0 %v5434, 64
    %v5437 = vpop.permute.xlu0 %5436
    %v5439 = vmul.f32 %v5421, %v5437
    %v5440 = vld [vmem:[%s16] sm:$0xff]
    %v5441 = vld [vmem:[%s16 + $0x8] sm:$0xff]
    %v5442 = vld [vmem:[%s16 + $0x10] sm:$0xff]
    %v5443 = vld [vmem:[%s16 + $0x18] sm:$0xff]
    %v5444 = vld [vmem:[%s17] sm:$0x1]
    %v5446 = vlaneseq
    %v5447 = vshrl.u32 %v5446, 7
    %v5448 = vsub.s32 0, %v5447
    %v5449 = vrot.slane %v5444, %v5448
    %5452 = vrot.lane.b32.xlu0 %v5439, 32
    %v5453 = vpop.permute.xlu0 %5452
    %v5454 = vsel %vm71, %v5453, 0
    %5456 = vmatprep.subr.mxu0 0.0
    %5457 = vmatpush1.msra.mxu0 %v5440
    %5458 = vmatprep.subr.mxu0 0.0
    %5459 = vmatpush1.msra.mxu0 %v5441
    %5460 = vmatprep.subr.mxu0 0.0
    %5461 = vmatpush1.msra.mxu0 %v5442
    %5462 = vmatprep.subr.mxu0 0.0
    %5463 = vmatpush1.msra.mxu0 %v5443
    %5464 = vmatprep.subr.mxu0 0.0
    %5465 = vmatpush1.msra.mxu0 0.0
    %5466 = vmatprep.subr.mxu0 0.0
    %5467 = vmatpush1.msra.mxu0 0.0
    %5468 = vmatprep.subr.mxu0 0.0
    %5469 = vmatpush1.msra.mxu0 0.0
    %5470 = vmatprep.subr.mxu0 0.0
    %5471 = vmatpush1.msra.mxu0 0.0
    %5472 = vmatprep.subr.mxu0 0.0
    %5473 = vmatpush1.msra.mxu0 0.0
    %5474 = vmatprep.subr.mxu0 0.0
    %5475 = vmatpush1.msra.mxu0 0.0
    %5476 = vmatprep.subr.mxu0 0.0
    %5477 = vmatpush1.msra.mxu0 0.0
    %5478 = vmatprep.subr.mxu0 0.0
    %5479 = vmatpush1.msra.mxu0 0.0
    %5480 = vmatprep.subr.mxu0 0.0
    %5481 = vmatpush1.msra.mxu0 0.0
    %5482 = vmatprep.subr.mxu0 0.0
    %5483 = vmatpush1.msra.mxu0 0.0
    %5484 = vmatprep.subr.mxu0 0.0
    %5485 = vmatpush1.msra.mxu0 0.0
    %5486 = vmatprep.subr.mxu0 0.0
    %5487 = vmatpush1.msra.mxu0 0.0
    %5488 = vmatprep.subr.mxu0 0.0
    %5489 = vmatpush1.msra.mxu0 0.0
    %5490 = vmatprep.subr.mxu0 0.0
    %5491 = vmatpush1.msra.mxu0 0.0
    %5492 = vmatprep.subr.mxu0 0.0
    %5493 = vmatpush1.msra.mxu0 0.0
    %5494 = vmatprep.subr.mxu0 0.0
    %5495 = vmatpush1.msra.mxu0 0.0
    %5496 = vmatprep.subr.mxu0 0.0
    %5497 = vmatpush1.msra.mxu0 0.0
    %5498 = vmatprep.subr.mxu0 0.0
    %5499 = vmatpush1.msra.mxu0 0.0
    %5500 = vmatprep.subr.mxu0 0.0
    %5501 = vmatpush1.msra.mxu0 0.0
    %5502 = vmatprep.subr.mxu0 0.0
    %5503 = vmatpush1.msra.mxu0 0.0
    %5504 = vmatprep.subr.mxu0 0.0
    %5505 = vmatpush1.msra.mxu0 0.0
    %5506 = vmatprep.subr.mxu0 0.0
    %5507 = vmatpush1.msra.mxu0 0.0
    %5508 = vmatprep.subr.mxu0 0.0
    %5509 = vmatpush1.msra.mxu0 0.0
    %5510 = vmatprep.subr.mxu0 0.0
    %5511 = vmatpush1.msra.mxu0 0.0
    %5512 = vmatprep.subr.mxu0 0.0
    %5513 = vmatpush1.msra.mxu0 0.0
    %5514 = vmatprep.subr.mxu0 0.0
    %5515 = vmatpush1.msra.mxu0 0.0
    %5516 = vmatprep.subr.mxu0 0.0
    %5517 = vmatpush1.msra.mxu0 0.0
    %5518 = vmatprep.subr.mxu0 0.0
    %5519 = vmatpush1.msra.mxu0 0.0
    %5520 = vmatprep.mubr.f32.mxu0 0.0
    %5521 = vmatmul.mubr.f32.gmra.mrb[0].mxu0 %v5454
    %v5522 = vpop.f32.mrb[0].mxu0
    %v5523 = vadd.f32 %v5449, %v5522
    %v5524 = vpop.f32.mrb[0].mxu0
    %5525 = vdwg.mxu0
    %s5526 = scalar_lea.vmem [#allocation4], 40
    %5527 = vst.msk [vmem:[%s5526] sm:$0xff] %vm2168, %v5523
    %v5528 = vsel %vm2168, %v5523, -inf
    %5529 = vmax.xlane.f32.xlu0 %v5528
    %v5530 = vpop.xlane.xlu0 %5529
    %vm5531 = vcmp.eq.f32.partialorder %v5523, %v5530
    %v5532 = vsel %vm5531, %v2162, 10
    %v5533 = vsel %vm2168, %v5532, 2147483647
    %v5534 = vand.u32 %v5533, 65535
    %v5535 = vshra.s32 %v5533, 16
    %v5536 = vcvt.s32.f32 %v5534
    %v5537 = vcvt.s32.f32 %v5535
    %5538 = vmin.xlane.f32.xlu0 %v5537
    %v5539 = vpop.xlane.xlu0 %5538
    %vm5540 = vcmp.eq.f32.partialorder %v5537, %v5539
    %v5541 = vsel %vm5540, %v5536, inf
    %5542 = vmin.xlane.f32.xlu0 %v5541
    %v5543 = vpop.xlane.xlu0 %5542
    %v5544 = vcvt.f32.s32 %v5543
    %v5545 = vcvt.f32.s32 %v5539
    %v5546 = vshll.u32 %v5545, 16
    %v5547 = vadd.s32 %v5546, %v5544
    %vm5548 = vcmp.eq.s32.totalorder %v2162, %v5547
    %v5549 = vsel %vm5548, 1, 0
    %v5550 = vcvt.s32.f32 %v5549
    %s5551 = sld [smem:[#allocation3 + $0x5]]
    %s5552 = scvt.s32.f32 %s5551
    %s5553 = scalar_lea.vmem %s2, 40
    %v5554 = vld [vmem:[%s5553] sm:$0xff]
    %v5555 = vstv %s5552
    %v5556 = vmul.f32 %v5555, %v5554
    %s5557 = ssub.f32 1.0, %s5552
    %v5558 = vstv %s5557
    %v5559 = vmul.f32 %v5558, %v5550
    %v5560 = vadd.f32 %v5556, %v5559
    %v5561 = vld [vmem:[%s9] sm:$0xff]
    %v5562 = vld [vmem:[%s9 + $0x8] sm:$0x3]
    %v5564 = vsel %vm2168, %v5560, 0
    %v5567 = vsel %vm2172, %v5562, 0
    %5569 = vmatprep.subr.mxu0 0.0
    %5570 = vmatpush1.msra.mxu0 %v5561
    %5571 = vmatprep.subr.mxu0 0.0
    %5572 = vmatpush1.msra.mxu0 %v5567
    %5573 = vmatprep.subr.mxu0 0.0
    %5574 = vmatpush1.msra.mxu0 0.0
    %5575 = vmatprep.subr.mxu0 0.0
    %5576 = vmatpush1.msra.mxu0 0.0
    %5577 = vmatprep.subr.mxu0 0.0
    %5578 = vmatpush1.msra.mxu0 0.0
    %5579 = vmatprep.subr.mxu0 0.0
    %5580 = vmatpush1.msra.mxu0 0.0
    %5581 = vmatprep.subr.mxu0 0.0
    %5582 = vmatpush1.msra.mxu0 0.0
    %5583 = vmatprep.subr.mxu0 0.0
    %5584 = vmatpush1.msra.mxu0 0.0
    %5585 = vmatprep.subr.mxu0 0.0
    %5586 = vmatpush1.msra.mxu0 0.0
    %5587 = vmatprep.subr.mxu0 0.0
    %5588 = vmatpush1.msra.mxu0 0.0
    %5589 = vmatprep.subr.mxu0 0.0
    %5590 = vmatpush1.msra.mxu0 0.0
    %5591 = vmatprep.subr.mxu0 0.0
    %5592 = vmatpush1.msra.mxu0 0.0
    %5593 = vmatprep.subr.mxu0 0.0
    %5594 = vmatpush1.msra.mxu0 0.0
    %5595 = vmatprep.subr.mxu0 0.0
    %5596 = vmatpush1.msra.mxu0 0.0
    %5597 = vmatprep.subr.mxu0 0.0
    %5598 = vmatpush1.msra.mxu0 0.0
    %5599 = vmatprep.subr.mxu0 0.0
    %5600 = vmatpush1.msra.mxu0 0.0
    %5601 = vmatprep.subr.mxu0 0.0
    %5602 = vmatpush1.msra.mxu0 0.0
    %5603 = vmatprep.subr.mxu0 0.0
    %5604 = vmatpush1.msra.mxu0 0.0
    %5605 = vmatprep.subr.mxu0 0.0
    %5606 = vmatpush1.msra.mxu0 0.0
    %5607 = vmatprep.subr.mxu0 0.0
    %5608 = vmatpush1.msra.mxu0 0.0
    %5609 = vmatprep.subr.mxu0 0.0
    %5610 = vmatpush1.msra.mxu0 0.0
    %5611 = vmatprep.subr.mxu0 0.0
    %5612 = vmatpush1.msra.mxu0 0.0
    %5613 = vmatprep.subr.mxu0 0.0
    %5614 = vmatpush1.msra.mxu0 0.0
    %5615 = vmatprep.subr.mxu0 0.0
    %5616 = vmatpush1.msra.mxu0 0.0
    %5617 = vmatprep.subr.mxu0 0.0
    %5618 = vmatpush1.msra.mxu0 0.0
    %5619 = vmatprep.subr.mxu0 0.0
    %5620 = vmatpush1.msra.mxu0 0.0
    %5621 = vmatprep.subr.mxu0 0.0
    %5622 = vmatpush1.msra.mxu0 0.0
    %5623 = vmatprep.subr.mxu0 0.0
    %5624 = vmatpush1.msra.mxu0 0.0
    %5625 = vmatprep.subr.mxu0 0.0
    %5626 = vmatpush1.msra.mxu0 0.0
    %5627 = vmatprep.subr.mxu0 0.0
    %5628 = vmatpush1.msra.mxu0 0.0
    %5629 = vmatprep.subr.mxu0 0.0
    %5630 = vmatpush1.msra.mxu0 0.0
    %5631 = vmatprep.subr.mxu0 0.0
    %5632 = vmatpush1.msra.mxu0 0.0
    %5633 = vmatprep.mubr.f32.mxu0 0.0
    %5634 = vmatmul.mubr.f32.gmra.mrb[0].mxu0 %v5564
    %v5635 = vpop.f32.mrb[0].mxu0
    %v5636 = vadd.f32 0.0, %v5635
    %v5637 = vpop.f32.mrb[0].mxu0
    %5638 = vdwg.mxu0
    %v5639 = vld [vmem:[%s10] sm:$0xff]
    %v5640 = vld [vmem:[%s10 + $0x8] sm:$0xff]
    %v5641 = vld [vmem:[%s11] sm:$0xff]
    %v5642 = vld [vmem:[%s11 + $0x8] sm:$0xff]
    %v5643 = vld [vmem:[%s11 + $0x10] sm:$0xff]
    %v5644 = vld [vmem:[%s11 + $0x18] sm:$0xff]
    %5645 = vmatprep.subr.mxu0 0.0
    %5646 = vmatpush1.msra.mxu0 %v5641
    %5647 = vmatprep.subr.mxu0 0.0
    %5648 = vmatpush1.msra.mxu0 %v5642
    %5649 = vmatprep.subr.mxu0 0.0
    %5650 = vmatpush1.msra.mxu0 %v5643
    %5651 = vmatprep.subr.mxu0 0.0
    %5652 = vmatpush1.msra.mxu0 %v5644
    %5653 = vmatprep.subr.mxu0 0.0
    %5654 = vmatpush1.msra.mxu0 0.0
    %5655 = vmatprep.subr.mxu0 0.0
    %5656 = vmatpush1.msra.mxu0 0.0
    %5657 = vmatprep.subr.mxu0 0.0
    %5658 = vmatpush1.msra.mxu0 0.0
    %5659 = vmatprep.subr.mxu0 0.0
    %5660 = vmatpush1.msra.mxu0 0.0
    %5661 = vmatprep.subr.mxu0 0.0
    %5662 = vmatpush1.msra.mxu0 0.0
    %5663 = vmatprep.subr.mxu0 0.0
    %5664 = vmatpush1.msra.mxu0 0.0
    %5665 = vmatprep.subr.mxu0 0.0
    %5666 = vmatpush1.msra.mxu0 0.0
    %5667 = vmatprep.subr.mxu0 0.0
    %5668 = vmatpush1.msra.mxu0 0.0
    %5669 = vmatprep.subr.mxu0 0.0
    %5670 = vmatpush1.msra.mxu0 0.0
    %5671 = vmatprep.subr.mxu0 0.0
    %5672 = vmatpush1.msra.mxu0 0.0
    %5673 = vmatprep.subr.mxu0 0.0
    %5674 = vmatpush1.msra.mxu0 0.0
    %5675 = vmatprep.subr.mxu0 0.0
    %5676 = vmatpush1.msra.mxu0 0.0
    %5677 = vmatprep.subr.mxu0 0.0
    %5678 = vmatpush1.msra.mxu0 0.0
    %5679 = vmatprep.subr.mxu0 0.0
    %5680 = vmatpush1.msra.mxu0 0.0
    %5681 = vmatprep.subr.mxu0 0.0
    %5682 = vmatpush1.msra.mxu0 0.0
    %5683 = vmatprep.subr.mxu0 0.0
    %5684 = vmatpush1.msra.mxu0 0.0
    %5685 = vmatprep.subr.mxu0 0.0
    %5686 = vmatpush1.msra.mxu0 0.0
    %5687 = vmatprep.subr.mxu0 0.0
    %5688 = vmatpush1.msra.mxu0 0.0
    %5689 = vmatprep.subr.mxu0 0.0
    %5690 = vmatpush1.msra.mxu0 0.0
    %5691 = vmatprep.subr.mxu0 0.0
    %5692 = vmatpush1.msra.mxu0 0.0
    %5693 = vmatprep.subr.mxu0 0.0
    %5694 = vmatpush1.msra.mxu0 0.0
    %5695 = vmatprep.subr.mxu0 0.0
    %5696 = vmatpush1.msra.mxu0 0.0
    %5697 = vmatprep.subr.mxu0 0.0
    %5698 = vmatpush1.msra.mxu0 0.0
    %5699 = vmatprep.subr.mxu0 0.0
    %5700 = vmatpush1.msra.mxu0 0.0
    %5701 = vmatprep.subr.mxu0 0.0
    %5702 = vmatpush1.msra.mxu0 0.0
    %5703 = vmatprep.subr.mxu0 0.0
    %5704 = vmatpush1.msra.mxu0 0.0
    %5705 = vmatprep.subr.mxu0 0.0
    %5706 = vmatpush1.msra.mxu0 0.0
    %5707 = vmatprep.subr.mxu0 0.0
    %5708 = vmatpush1.msra.mxu0 0.0
    %5709 = vmatprep.mubr.f32.mxu0 0.0
    %5710 = vmatmul.mubr.f32.gmra.mrb[0].mxu0 %v5336
    %v5711 = vpop.f32.mrb[0].mxu0
    %v5712 = vadd.f32 0.0, %v5711
    %v5713 = vpop.f32.mrb[0].mxu0
    %5714 = vdwg.mxu0
    %v5716 = vsel %vm145, %v5636, 0
    %5718 = vmatprep.subr.mxu0 0.0
    %5719 = vmatpush1.msra.mxu0 %v5639
    %5720 = vmatprep.subr.mxu0 0.0
    %5721 = vmatpush1.msra.mxu0 %v5640
    %5722 = vmatprep.subr.mxu0 0.0
    %5723 = vmatpush1.msra.mxu0 0.0
    %5724 = vmatprep.subr.mxu0 0.0
    %5725 = vmatpush1.msra.mxu0 0.0
    %5726 = vmatprep.subr.mxu0 0.0
    %5727 = vmatpush1.msra.mxu0 0.0
    %5728 = vmatprep.subr.mxu0 0.0
    %5729 = vmatpush1.msra.mxu0 0.0
    %5730 = vmatprep.subr.mxu0 0.0
    %5731 = vmatpush1.msra.mxu0 0.0
    %5732 = vmatprep.subr.mxu0 0.0
    %5733 = vmatpush1.msra.mxu0 0.0
    %5734 = vmatprep.subr.mxu0 0.0
    %5735 = vmatpush1.msra.mxu0 0.0
    %5736 = vmatprep.subr.mxu0 0.0
    %5737 = vmatpush1.msra.mxu0 0.0
    %5738 = vmatprep.subr.mxu0 0.0
    %5739 = vmatpush1.msra.mxu0 0.0
    %5740 = vmatprep.subr.mxu0 0.0
    %5741 = vmatpush1.msra.mxu0 0.0
    %5742 = vmatprep.subr.mxu0 0.0
    %5743 = vmatpush1.msra.mxu0 0.0
    %5744 = vmatprep.subr.mxu0 0.0
    %5745 = vmatpush1.msra.mxu0 0.0
    %5746 = vmatprep.subr.mxu0 0.0
    %5747 = vmatpush1.msra.mxu0 0.0
    %5748 = vmatprep.subr.mxu0 0.0
    %5749 = vmatpush1.msra.mxu0 0.0
    %5750 = vmatprep.subr.mxu0 0.0
    %5751 = vmatpush1.msra.mxu0 0.0
    %5752 = vmatprep.subr.mxu0 0.0
    %5753 = vmatpush1.msra.mxu0 0.0
    %5754 = vmatprep.subr.mxu0 0.0
    %5755 = vmatpush1.msra.mxu0 0.0
    %5756 = vmatprep.subr.mxu0 0.0
    %5757 = vmatpush1.msra.mxu0 0.0
    %5758 = vmatprep.subr.mxu0 0.0
    %5759 = vmatpush1.msra.mxu0 0.0
    %5760 = vmatprep.subr.mxu0 0.0
    %5761 = vmatpush1.msra.mxu0 0.0
    %5762 = vmatprep.subr.mxu0 0.0
    %5763 = vmatpush1.msra.mxu0 0.0
    %5764 = vmatprep.subr.mxu0 0.0
    %5765 = vmatpush1.msra.mxu0 0.0
    %5766 = vmatprep.subr.mxu0 0.0
    %5767 = vmatpush1.msra.mxu0 0.0
    %5768 = vmatprep.subr.mxu0 0.0
    %5769 = vmatpush1.msra.mxu0 0.0
    %5770 = vmatprep.subr.mxu0 0.0
    %5771 = vmatpush1.msra.mxu0 0.0
    %5772 = vmatprep.subr.mxu0 0.0
    %5773 = vmatpush1.msra.mxu0 0.0
    %5774 = vmatprep.subr.mxu0 0.0
    %5775 = vmatpush1.msra.mxu0 0.0
    %5776 = vmatprep.subr.mxu0 0.0
    %5777 = vmatpush1.msra.mxu0 0.0
    %5778 = vmatprep.subr.mxu0 0.0
    %5779 = vmatpush1.msra.mxu0 0.0
    %5780 = vmatprep.subr.mxu0 0.0
    %5781 = vmatpush1.msra.mxu0 0.0
    %5782 = vmatprep.mubr.f32.mxu0 0.0
    %5783 = vmatmul.mubr.f32.gmra.mrb[0].mxu0 %v5716
    %v5784 = vpop.f32.mrb[0].mxu0
    %v5785 = vadd.f32 %v5712, %v5784
    %v5786 = vpop.f32.mrb[0].mxu0
    %5787 = vdwg.mxu0
    %v5788 = vld [vmem:[%s12] sm:$0x1]
    %v5790 = vlaneseq
    %v5791 = vshrl.u32 %v5790, 7
    %v5792 = vsub.s32 0, %v5791
    %v5793 = vrot.slane %v5788, %v5792
    %v5795 = vadd.f32 %v5785, %v5793
    %v5796 = vxor.u32 %v5795, 2147483648
    %v5797 = vmul.f32 %v5796, 1.442695
    %v5798 = vpow.pop %v5797
    %v5799 = vadd.f32 %v5798, 1.0
    %v5800 = vrcp.pop %v5799
    %v5801 = vmul.f32 1.0, %v5800
    %v5802 = vtanh.pop %v5795
    %v5803 = vmul.f32 %v5801, %v5248
    %5805 = vrot.lane.b32.xlu0 %v5802, 64
    %v5806 = vpop.permute.xlu0 %5805
    %v5808 = vmul.f32 %v5801, %v5806
    %5810 = vrot.lane.b32.xlu0 %v5808, 32
    %v5811 = vpop.permute.xlu0 %5810
    %v5813 = vadd.f32 %v5803, %v5811
    %v5814 = vtanh.pop %v5813
    %5816 = vrot.lane.b32.xlu0 %v5814, 64
    %v5817 = vpop.permute.xlu0 %5816
    %v5819 = vmul.f32 %v5801, %v5817
    %v5820 = vld [vmem:[%s13] sm:$0xff]
    %v5821 = vld [vmem:[%s13 + $0x8] sm:$0xff]
    %v5822 = vld [vmem:[%s13 + $0x10] sm:$0xff]
    %v5823 = vld [vmem:[%s13 + $0x18] sm:$0xff]
    %v5824 = vld [vmem:[%s14] sm:$0xff]
    %v5825 = vld [vmem:[%s14 + $0x8] sm:$0xff]
    %v5826 = vld [vmem:[%s14 + $0x10] sm:$0xff]
    %v5827 = vld [vmem:[%s14 + $0x18] sm:$0xff]
    %5828 = vmatprep.subr.mxu0 0.0
    %5829 = vmatpush1.msra.mxu0 %v5824
    %5830 = vmatprep.subr.mxu0 0.0
    %5831 = vmatpush1.msra.mxu0 %v5825
    %5832 = vmatprep.subr.mxu0 0.0
    %5833 = vmatpush1.msra.mxu0 %v5826
    %5834 = vmatprep.subr.mxu0 0.0
    %5835 = vmatpush1.msra.mxu0 %v5827
    %5836 = vmatprep.subr.mxu0 0.0
    %5837 = vmatpush1.msra.mxu0 0.0
    %5838 = vmatprep.subr.mxu0 0.0
    %5839 = vmatpush1.msra.mxu0 0.0
    %5840 = vmatprep.subr.mxu0 0.0
    %5841 = vmatpush1.msra.mxu0 0.0
    %5842 = vmatprep.subr.mxu0 0.0
    %5843 = vmatpush1.msra.mxu0 0.0
    %5844 = vmatprep.subr.mxu0 0.0
    %5845 = vmatpush1.msra.mxu0 0.0
    %5846 = vmatprep.subr.mxu0 0.0
    %5847 = vmatpush1.msra.mxu0 0.0
    %5848 = vmatprep.subr.mxu0 0.0
    %5849 = vmatpush1.msra.mxu0 0.0
    %5850 = vmatprep.subr.mxu0 0.0
    %5851 = vmatpush1.msra.mxu0 0.0
    %5852 = vmatprep.subr.mxu0 0.0
    %5853 = vmatpush1.msra.mxu0 0.0
    %5854 = vmatprep.subr.mxu0 0.0
    %5855 = vmatpush1.msra.mxu0 0.0
    %5856 = vmatprep.subr.mxu0 0.0
    %5857 = vmatpush1.msra.mxu0 0.0
    %5858 = vmatprep.subr.mxu0 0.0
    %5859 = vmatpush1.msra.mxu0 0.0
    %5860 = vmatprep.subr.mxu0 0.0
    %5861 = vmatpush1.msra.mxu0 0.0
    %5862 = vmatprep.subr.mxu0 0.0
    %5863 = vmatpush1.msra.mxu0 0.0
    %5864 = vmatprep.subr.mxu0 0.0
    %5865 = vmatpush1.msra.mxu0 0.0
    %5866 = vmatprep.subr.mxu0 0.0
    %5867 = vmatpush1.msra.mxu0 0.0
    %5868 = vmatprep.subr.mxu0 0.0
    %5869 = vmatpush1.msra.mxu0 0.0
    %5870 = vmatprep.subr.mxu0 0.0
    %5871 = vmatpush1.msra.mxu0 0.0
    %5872 = vmatprep.subr.mxu0 0.0
    %5873 = vmatpush1.msra.mxu0 0.0
    %5874 = vmatprep.subr.mxu0 0.0
    %5875 = vmatpush1.msra.mxu0 0.0
    %5876 = vmatprep.subr.mxu0 0.0
    %5877 = vmatpush1.msra.mxu0 0.0
    %5878 = vmatprep.subr.mxu0 0.0
    %5879 = vmatpush1.msra.mxu0 0.0
    %5880 = vmatprep.subr.mxu0 0.0
    %5881 = vmatpush1.msra.mxu0 0.0
    %5882 = vmatprep.subr.mxu0 0.0
    %5883 = vmatpush1.msra.mxu0 0.0
    %5884 = vmatprep.subr.mxu0 0.0
    %5885 = vmatpush1.msra.mxu0 0.0
    %5886 = vmatprep.subr.mxu0 0.0
    %5887 = vmatpush1.msra.mxu0 0.0
    %5888 = vmatprep.subr.mxu0 0.0
    %5889 = vmatpush1.msra.mxu0 0.0
    %5890 = vmatprep.subr.mxu0 0.0
    %5891 = vmatpush1.msra.mxu0 0.0
    %5892 = vmatprep.mubr.f32.mxu0 0.0
    %5893 = vmatmul.mubr.f32.gmra.mrb[0].mxu0 %v5454
    %v5894 = vpop.f32.mrb[0].mxu0
    %v5895 = vadd.f32 0.0, %v5894
    %v5896 = vpop.f32.mrb[0].mxu0
    %5897 = vdwg.mxu0
    %5899 = vrot.lane.b32.xlu0 %v5819, 32
    %v5900 = vpop.permute.xlu0 %5899
    %v5901 = vsel %vm71, %v5900, 0
    %5903 = vmatprep.subr.mxu0 0.0
    %5904 = vmatpush1.msra.mxu0 %v5820
    %5905 = vmatprep.subr.mxu0 0.0
    %5906 = vmatpush1.msra.mxu0 %v5821
    %5907 = vmatprep.subr.mxu0 0.0
    %5908 = vmatpush1.msra.mxu0 %v5822
    %5909 = vmatprep.subr.mxu0 0.0
    %5910 = vmatpush1.msra.mxu0 %v5823
    %5911 = vmatprep.subr.mxu0 0.0
    %5912 = vmatpush1.msra.mxu0 0.0
    %5913 = vmatprep.subr.mxu0 0.0
    %5914 = vmatpush1.msra.mxu0 0.0
    %5915 = vmatprep.subr.mxu0 0.0
    %5916 = vmatpush1.msra.mxu0 0.0
    %5917 = vmatprep.subr.mxu0 0.0
    %5918 = vmatpush1.msra.mxu0 0.0
    %5919 = vmatprep.subr.mxu0 0.0
    %5920 = vmatpush1.msra.mxu0 0.0
    %5921 = vmatprep.subr.mxu0 0.0
    %5922 = vmatpush1.msra.mxu0 0.0
    %5923 = vmatprep.subr.mxu0 0.0
    %5924 = vmatpush1.msra.mxu0 0.0
    %5925 = vmatprep.subr.mxu0 0.0
    %5926 = vmatpush1.msra.mxu0 0.0
    %5927 = vmatprep.subr.mxu0 0.0
    %5928 = vmatpush1.msra.mxu0 0.0
    %5929 = vmatprep.subr.mxu0 0.0
    %5930 = vmatpush1.msra.mxu0 0.0
    %5931 = vmatprep.subr.mxu0 0.0
    %5932 = vmatpush1.msra.mxu0 0.0
    %5933 = vmatprep.subr.mxu0 0.0
    %5934 = vmatpush1.msra.mxu0 0.0
    %5935 = vmatprep.subr.mxu0 0.0
    %5936 = vmatpush1.msra.mxu0 0.0
    %5937 = vmatprep.subr.mxu0 0.0
    %5938 = vmatpush1.msra.mxu0 0.0
    %5939 = vmatprep.subr.mxu0 0.0
    %5940 = vmatpush1.msra.mxu0 0.0
    %5941 = vmatprep.subr.mxu0 0.0
    %5942 = vmatpush1.msra.mxu0 0.0
    %5943 = vmatprep.subr.mxu0 0.0
    %5944 = vmatpush1.msra.mxu0 0.0
    %5945 = vmatprep.subr.mxu0 0.0
    %5946 = vmatpush1.msra.mxu0 0.0
    %5947 = vmatprep.subr.mxu0 0.0
    %5948 = vmatpush1.msra.mxu0 0.0
    %5949 = vmatprep.subr.mxu0 0.0
    %5950 = vmatpush1.msra.mxu0 0.0
    %5951 = vmatprep.subr.mxu0 0.0
    %5952 = vmatpush1.msra.mxu0 0.0
    %5953 = vmatprep.subr.mxu0 0.0
    %5954 = vmatpush1.msra.mxu0 0.0
    %5955 = vmatprep.subr.mxu0 0.0
    %5956 = vmatpush1.msra.mxu0 0.0
    %5957 = vmatprep.subr.mxu0 0.0
    %5958 = vmatpush1.msra.mxu0 0.0
    %5959 = vmatprep.subr.mxu0 0.0
    %5960 = vmatpush1.msra.mxu0 0.0
    %5961 = vmatprep.subr.mxu0 0.0
    %5962 = vmatpush1.msra.mxu0 0.0
    %5963 = vmatprep.subr.mxu0 0.0
    %5964 = vmatpush1.msra.mxu0 0.0
    %5965 = vmatprep.subr.mxu0 0.0
    %5966 = vmatpush1.msra.mxu0 0.0
    %5967 = vmatprep.mubr.f32.mxu0 0.0
    %5968 = vmatmul.mubr.f32.gmra.mrb[0].mxu0 %v5901
    %v5969 = vpop.f32.mrb[0].mxu0
    %v5970 = vadd.f32 %v5895, %v5969
    %v5971 = vpop.f32.mrb[0].mxu0
    %5972 = vdwg.mxu0
    %v5973 = vld [vmem:[%s15] sm:$0x1]
    %v5975 = vlaneseq
    %v5976 = vshrl.u32 %v5975, 7
    %v5977 = vsub.s32 0, %v5976
    %v5978 = vrot.slane %v5973, %v5977
    %v5980 = vadd.f32 %v5970, %v5978
    %v5981 = vxor.u32 %v5980, 2147483648
    %v5982 = vmul.f32 %v5981, 1.442695
    %v5983 = vpow.pop %v5982
    %v5984 = vadd.f32 %v5983, 1.0
    %v5985 = vrcp.pop %v5984
    %v5986 = vmul.f32 1.0, %v5985
    %v5987 = vtanh.pop %v5980
    %v5988 = vmul.f32 %v5986, %v5433
    %5990 = vrot.lane.b32.xlu0 %v5987, 64
    %v5991 = vpop.permute.xlu0 %5990
    %v5993 = vmul.f32 %v5986, %v5991
    %5995 = vrot.lane.b32.xlu0 %v5993, 32
    %v5996 = vpop.permute.xlu0 %5995
    %v5998 = vadd.f32 %v5988, %v5996
    %v5999 = vtanh.pop %v5998
    %6001 = vrot.lane.b32.xlu0 %v5999, 64
    %v6002 = vpop.permute.xlu0 %6001
    %v6004 = vmul.f32 %v5986, %v6002
    %v6005 = vld [vmem:[%s16] sm:$0xff]
    %v6006 = vld [vmem:[%s16 + $0x8] sm:$0xff]
    %v6007 = vld [vmem:[%s16 + $0x10] sm:$0xff]
    %v6008 = vld [vmem:[%s16 + $0x18] sm:$0xff]
    %v6009 = vld [vmem:[%s17] sm:$0x1]
    %v6011 = vlaneseq
    %v6012 = vshrl.u32 %v6011, 7
    %v6013 = vsub.s32 0, %v6012
    %v6014 = vrot.slane %v6009, %v6013
    %6017 = vrot.lane.b32.xlu0 %v6004, 32
    %v6018 = vpop.permute.xlu0 %6017
    %v6019 = vsel %vm71, %v6018, 0
    %6021 = vmatprep.subr.mxu0 0.0
    %6022 = vmatpush1.msra.mxu0 %v6005
    %6023 = vmatprep.subr.mxu0 0.0
    %6024 = vmatpush1.msra.mxu0 %v6006
    %6025 = vmatprep.subr.mxu0 0.0
    %6026 = vmatpush1.msra.mxu0 %v6007
    %6027 = vmatprep.subr.mxu0 0.0
    %6028 = vmatpush1.msra.mxu0 %v6008
    %6029 = vmatprep.subr.mxu0 0.0
    %6030 = vmatpush1.msra.mxu0 0.0
    %6031 = vmatprep.subr.mxu0 0.0
    %6032 = vmatpush1.msra.mxu0 0.0
    %6033 = vmatprep.subr.mxu0 0.0
    %6034 = vmatpush1.msra.mxu0 0.0
    %6035 = vmatprep.subr.mxu0 0.0
    %6036 = vmatpush1.msra.mxu0 0.0
    %6037 = vmatprep.subr.mxu0 0.0
    %6038 = vmatpush1.msra.mxu0 0.0
    %6039 = vmatprep.subr.mxu0 0.0
    %6040 = vmatpush1.msra.mxu0 0.0
    %6041 = vmatprep.subr.mxu0 0.0
    %6042 = vmatpush1.msra.mxu0 0.0
    %6043 = vmatprep.subr.mxu0 0.0
    %6044 = vmatpush1.msra.mxu0 0.0
    %6045 = vmatprep.subr.mxu0 0.0
    %6046 = vmatpush1.msra.mxu0 0.0
    %6047 = vmatprep.subr.mxu0 0.0
    %6048 = vmatpush1.msra.mxu0 0.0
    %6049 = vmatprep.subr.mxu0 0.0
    %6050 = vmatpush1.msra.mxu0 0.0
    %6051 = vmatprep.subr.mxu0 0.0
    %6052 = vmatpush1.msra.mxu0 0.0
    %6053 = vmatprep.subr.mxu0 0.0
    %6054 = vmatpush1.msra.mxu0 0.0
    %6055 = vmatprep.subr.mxu0 0.0
    %6056 = vmatpush1.msra.mxu0 0.0
    %6057 = vmatprep.subr.mxu0 0.0
    %6058 = vmatpush1.msra.mxu0 0.0
    %6059 = vmatprep.subr.mxu0 0.0
    %6060 = vmatpush1.msra.mxu0 0.0
    %6061 = vmatprep.subr.mxu0 0.0
    %6062 = vmatpush1.msra.mxu0 0.0
    %6063 = vmatprep.subr.mxu0 0.0
    %6064 = vmatpush1.msra.mxu0 0.0
    %6065 = vmatprep.subr.mxu0 0.0
    %6066 = vmatpush1.msra.mxu0 0.0
    %6067 = vmatprep.subr.mxu0 0.0
    %6068 = vmatpush1.msra.mxu0 0.0
    %6069 = vmatprep.subr.mxu0 0.0
    %6070 = vmatpush1.msra.mxu0 0.0
    %6071 = vmatprep.subr.mxu0 0.0
    %6072 = vmatpush1.msra.mxu0 0.0
    %6073 = vmatprep.subr.mxu0 0.0
    %6074 = vmatpush1.msra.mxu0 0.0
    %6075 = vmatprep.subr.mxu0 0.0
    %6076 = vmatpush1.msra.mxu0 0.0
    %6077 = vmatprep.subr.mxu0 0.0
    %6078 = vmatpush1.msra.mxu0 0.0
    %6079 = vmatprep.subr.mxu0 0.0
    %6080 = vmatpush1.msra.mxu0 0.0
    %6081 = vmatprep.subr.mxu0 0.0
    %6082 = vmatpush1.msra.mxu0 0.0
    %6083 = vmatprep.subr.mxu0 0.0
    %6084 = vmatpush1.msra.mxu0 0.0
    %6085 = vmatprep.mubr.f32.mxu0 0.0
    %6086 = vmatmul.mubr.f32.gmra.mrb[0].mxu0 %v6019
    %v6087 = vpop.f32.mrb[0].mxu0
    %v6088 = vadd.f32 %v6014, %v6087
    %v6089 = vpop.f32.mrb[0].mxu0
    %6090 = vdwg.mxu0
    %s6091 = scalar_lea.vmem [#allocation4], 48
    %6092 = vst.msk [vmem:[%s6091] sm:$0xff] %vm2168, %v6088
    %v6093 = vsel %vm2168, %v6088, -inf
    %6094 = vmax.xlane.f32.xlu0 %v6093
    %v6095 = vpop.xlane.xlu0 %6094
    %vm6096 = vcmp.eq.f32.partialorder %v6088, %v6095
    %v6097 = vsel %vm6096, %v2162, 10
    %v6098 = vsel %vm2168, %v6097, 2147483647
    %v6099 = vand.u32 %v6098, 65535
    %v6100 = vshra.s32 %v6098, 16
    %v6101 = vcvt.s32.f32 %v6099
    %v6102 = vcvt.s32.f32 %v6100
    %6103 = vmin.xlane.f32.xlu0 %v6102
    %v6104 = vpop.xlane.xlu0 %6103
    %vm6105 = vcmp.eq.f32.partialorder %v6102, %v6104
    %v6106 = vsel %vm6105, %v6101, inf
    %6107 = vmin.xlane.f32.xlu0 %v6106
    %v6108 = vpop.xlane.xlu0 %6107
    %v6109 = vcvt.f32.s32 %v6108
    %v6110 = vcvt.f32.s32 %v6104
    %v6111 = vshll.u32 %v6110, 16
    %v6112 = vadd.s32 %v6111, %v6109
    %vm6113 = vcmp.eq.s32.totalorder %v2162, %v6112
    %v6114 = vsel %vm6113, 1, 0
    %v6115 = vcvt.s32.f32 %v6114
    %s6116 = sld [smem:[#allocation3 + $0x6]]
    %s6117 = scvt.s32.f32 %s6116
    %s6118 = scalar_lea.vmem %s2, 48
    %v6119 = vld [vmem:[%s6118] sm:$0xff]
    %v6120 = vstv %s6117
    %v6121 = vmul.f32 %v6120, %v6119
    %s6122 = ssub.f32 1.0, %s6117
    %v6123 = vstv %s6122
    %v6124 = vmul.f32 %v6123, %v6115
    %v6125 = vadd.f32 %v6121, %v6124
    %v6126 = vld [vmem:[%s9] sm:$0xff]
    %v6127 = vld [vmem:[%s9 + $0x8] sm:$0x3]
    %v6129 = vsel %vm2168, %v6125, 0
    %v6132 = vsel %vm2172, %v6127, 0
    %6134 = vmatprep.subr.mxu0 0.0
    %6135 = vmatpush1.msra.mxu0 %v6126
    %6136 = vmatprep.subr.mxu0 0.0
    %6137 = vmatpush1.msra.mxu0 %v6132
    %6138 = vmatprep.subr.mxu0 0.0
    %6139 = vmatpush1.msra.mxu0 0.0
    %6140 = vmatprep.subr.mxu0 0.0
    %6141 = vmatpush1.msra.mxu0 0.0
    %6142 = vmatprep.subr.mxu0 0.0
    %6143 = vmatpush1.msra.mxu0 0.0
    %6144 = vmatprep.subr.mxu0 0.0
    %6145 = vmatpush1.msra.mxu0 0.0
    %6146 = vmatprep.subr.mxu0 0.0
    %6147 = vmatpush1.msra.mxu0 0.0
    %6148 = vmatprep.subr.mxu0 0.0
    %6149 = vmatpush1.msra.mxu0 0.0
    %6150 = vmatprep.subr.mxu0 0.0
    %6151 = vmatpush1.msra.mxu0 0.0
    %6152 = vmatprep.subr.mxu0 0.0
    %6153 = vmatpush1.msra.mxu0 0.0
    %6154 = vmatprep.subr.mxu0 0.0
    %6155 = vmatpush1.msra.mxu0 0.0
    %6156 = vmatprep.subr.mxu0 0.0
    %6157 = vmatpush1.msra.mxu0 0.0
    %6158 = vmatprep.subr.mxu0 0.0
    %6159 = vmatpush1.msra.mxu0 0.0
    %6160 = vmatprep.subr.mxu0 0.0
    %6161 = vmatpush1.msra.mxu0 0.0
    %6162 = vmatprep.subr.mxu0 0.0
    %6163 = vmatpush1.msra.mxu0 0.0
    %6164 = vmatprep.subr.mxu0 0.0
    %6165 = vmatpush1.msra.mxu0 0.0
    %6166 = vmatprep.subr.mxu0 0.0
    %6167 = vmatpush1.msra.mxu0 0.0
    %6168 = vmatprep.subr.mxu0 0.0
    %6169 = vmatpush1.msra.mxu0 0.0
    %6170 = vmatprep.subr.mxu0 0.0
    %6171 = vmatpush1.msra.mxu0 0.0
    %6172 = vmatprep.subr.mxu0 0.0
    %6173 = vmatpush1.msra.mxu0 0.0
    %6174 = vmatprep.subr.mxu0 0.0
    %6175 = vmatpush1.msra.mxu0 0.0
    %6176 = vmatprep.subr.mxu0 0.0
    %6177 = vmatpush1.msra.mxu0 0.0
    %6178 = vmatprep.subr.mxu0 0.0
    %6179 = vmatpush1.msra.mxu0 0.0
    %6180 = vmatprep.subr.mxu0 0.0
    %6181 = vmatpush1.msra.mxu0 0.0
    %6182 = vmatprep.subr.mxu0 0.0
    %6183 = vmatpush1.msra.mxu0 0.0
    %6184 = vmatprep.subr.mxu0 0.0
    %6185 = vmatpush1.msra.mxu0 0.0
    %6186 = vmatprep.subr.mxu0 0.0
    %6187 = vmatpush1.msra.mxu0 0.0
    %6188 = vmatprep.subr.mxu0 0.0
    %6189 = vmatpush1.msra.mxu0 0.0
    %6190 = vmatprep.subr.mxu0 0.0
    %6191 = vmatpush1.msra.mxu0 0.0
    %6192 = vmatprep.subr.mxu0 0.0
    %6193 = vmatpush1.msra.mxu0 0.0
    %6194 = vmatprep.subr.mxu0 0.0
    %6195 = vmatpush1.msra.mxu0 0.0
    %6196 = vmatprep.subr.mxu0 0.0
    %6197 = vmatpush1.msra.mxu0 0.0
    %6198 = vmatprep.mubr.f32.mxu0 0.0
    %6199 = vmatmul.mubr.f32.gmra.mrb[0].mxu0 %v6129
    %v6200 = vpop.f32.mrb[0].mxu0
    %v6201 = vadd.f32 0.0, %v6200
    %v6202 = vpop.f32.mrb[0].mxu0
    %6203 = vdwg.mxu0
    %v6204 = vld [vmem:[%s10] sm:$0xff]
    %v6205 = vld [vmem:[%s10 + $0x8] sm:$0xff]
    %v6206 = vld [vmem:[%s11] sm:$0xff]
    %v6207 = vld [vmem:[%s11 + $0x8] sm:$0xff]
    %v6208 = vld [vmem:[%s11 + $0x10] sm:$0xff]
    %v6209 = vld [vmem:[%s11 + $0x18] sm:$0xff]
    %6210 = vmatprep.subr.mxu0 0.0
    %6211 = vmatpush1.msra.mxu0 %v6206
    %6212 = vmatprep.subr.mxu0 0.0
    %6213 = vmatpush1.msra.mxu0 %v6207
    %6214 = vmatprep.subr.mxu0 0.0
    %6215 = vmatpush1.msra.mxu0 %v6208
    %6216 = vmatprep.subr.mxu0 0.0
    %6217 = vmatpush1.msra.mxu0 %v6209
    %6218 = vmatprep.subr.mxu0 0.0
    %6219 = vmatpush1.msra.mxu0 0.0
    %6220 = vmatprep.subr.mxu0 0.0
    %6221 = vmatpush1.msra.mxu0 0.0
    %6222 = vmatprep.subr.mxu0 0.0
    %6223 = vmatpush1.msra.mxu0 0.0
    %6224 = vmatprep.subr.mxu0 0.0
    %6225 = vmatpush1.msra.mxu0 0.0
    %6226 = vmatprep.subr.mxu0 0.0
    %6227 = vmatpush1.msra.mxu0 0.0
    %6228 = vmatprep.subr.mxu0 0.0
    %6229 = vmatpush1.msra.mxu0 0.0
    %6230 = vmatprep.subr.mxu0 0.0
    %6231 = vmatpush1.msra.mxu0 0.0
    %6232 = vmatprep.subr.mxu0 0.0
    %6233 = vmatpush1.msra.mxu0 0.0
    %6234 = vmatprep.subr.mxu0 0.0
    %6235 = vmatpush1.msra.mxu0 0.0
    %6236 = vmatprep.subr.mxu0 0.0
    %6237 = vmatpush1.msra.mxu0 0.0
    %6238 = vmatprep.subr.mxu0 0.0
    %6239 = vmatpush1.msra.mxu0 0.0
    %6240 = vmatprep.subr.mxu0 0.0
    %6241 = vmatpush1.msra.mxu0 0.0
    %6242 = vmatprep.subr.mxu0 0.0
    %6243 = vmatpush1.msra.mxu0 0.0
    %6244 = vmatprep.subr.mxu0 0.0
    %6245 = vmatpush1.msra.mxu0 0.0
    %6246 = vmatprep.subr.mxu0 0.0
    %6247 = vmatpush1.msra.mxu0 0.0
    %6248 = vmatprep.subr.mxu0 0.0
    %6249 = vmatpush1.msra.mxu0 0.0
    %6250 = vmatprep.subr.mxu0 0.0
    %6251 = vmatpush1.msra.mxu0 0.0
    %6252 = vmatprep.subr.mxu0 0.0
    %6253 = vmatpush1.msra.mxu0 0.0
    %6254 = vmatprep.subr.mxu0 0.0
    %6255 = vmatpush1.msra.mxu0 0.0
    %6256 = vmatprep.subr.mxu0 0.0
    %6257 = vmatpush1.msra.mxu0 0.0
    %6258 = vmatprep.subr.mxu0 0.0
    %6259 = vmatpush1.msra.mxu0 0.0
    %6260 = vmatprep.subr.mxu0 0.0
    %6261 = vmatpush1.msra.mxu0 0.0
    %6262 = vmatprep.subr.mxu0 0.0
    %6263 = vmatpush1.msra.mxu0 0.0
    %6264 = vmatprep.subr.mxu0 0.0
    %6265 = vmatpush1.msra.mxu0 0.0
    %6266 = vmatprep.subr.mxu0 0.0
    %6267 = vmatpush1.msra.mxu0 0.0
    %6268 = vmatprep.subr.mxu0 0.0
    %6269 = vmatpush1.msra.mxu0 0.0
    %6270 = vmatprep.subr.mxu0 0.0
    %6271 = vmatpush1.msra.mxu0 0.0
    %6272 = vmatprep.subr.mxu0 0.0
    %6273 = vmatpush1.msra.mxu0 0.0
    %6274 = vmatprep.mubr.f32.mxu0 0.0
    %6275 = vmatmul.mubr.f32.gmra.mrb[0].mxu0 %v5901
    %v6276 = vpop.f32.mrb[0].mxu0
    %v6277 = vadd.f32 0.0, %v6276
    %v6278 = vpop.f32.mrb[0].mxu0
    %6279 = vdwg.mxu0
    %v6281 = vsel %vm145, %v6201, 0
    %6283 = vmatprep.subr.mxu0 0.0
    %6284 = vmatpush1.msra.mxu0 %v6204
    %6285 = vmatprep.subr.mxu0 0.0
    %6286 = vmatpush1.msra.mxu0 %v6205
    %6287 = vmatprep.subr.mxu0 0.0
    %6288 = vmatpush1.msra.mxu0 0.0
    %6289 = vmatprep.subr.mxu0 0.0
    %6290 = vmatpush1.msra.mxu0 0.0
    %6291 = vmatprep.subr.mxu0 0.0
    %6292 = vmatpush1.msra.mxu0 0.0
    %6293 = vmatprep.subr.mxu0 0.0
    %6294 = vmatpush1.msra.mxu0 0.0
    %6295 = vmatprep.subr.mxu0 0.0
    %6296 = vmatpush1.msra.mxu0 0.0
    %6297 = vmatprep.subr.mxu0 0.0
    %6298 = vmatpush1.msra.mxu0 0.0
    %6299 = vmatprep.subr.mxu0 0.0
    %6300 = vmatpush1.msra.mxu0 0.0
    %6301 = vmatprep.subr.mxu0 0.0
    %6302 = vmatpush1.msra.mxu0 0.0
    %6303 = vmatprep.subr.mxu0 0.0
    %6304 = vmatpush1.msra.mxu0 0.0
    %6305 = vmatprep.subr.mxu0 0.0
    %6306 = vmatpush1.msra.mxu0 0.0
    %6307 = vmatprep.subr.mxu0 0.0
    %6308 = vmatpush1.msra.mxu0 0.0
    %6309 = vmatprep.subr.mxu0 0.0
    %6310 = vmatpush1.msra.mxu0 0.0
    %6311 = vmatprep.subr.mxu0 0.0
    %6312 = vmatpush1.msra.mxu0 0.0
    %6313 = vmatprep.subr.mxu0 0.0
    %6314 = vmatpush1.msra.mxu0 0.0
    %6315 = vmatprep.subr.mxu0 0.0
    %6316 = vmatpush1.msra.mxu0 0.0
    %6317 = vmatprep.subr.mxu0 0.0
    %6318 = vmatpush1.msra.mxu0 0.0
    %6319 = vmatprep.subr.mxu0 0.0
    %6320 = vmatpush1.msra.mxu0 0.0
    %6321 = vmatprep.subr.mxu0 0.0
    %6322 = vmatpush1.msra.mxu0 0.0
    %6323 = vmatprep.subr.mxu0 0.0
    %6324 = vmatpush1.msra.mxu0 0.0
    %6325 = vmatprep.subr.mxu0 0.0
    %6326 = vmatpush1.msra.mxu0 0.0
    %6327 = vmatprep.subr.mxu0 0.0
    %6328 = vmatpush1.msra.mxu0 0.0
    %6329 = vmatprep.subr.mxu0 0.0
    %6330 = vmatpush1.msra.mxu0 0.0
    %6331 = vmatprep.subr.mxu0 0.0
    %6332 = vmatpush1.msra.mxu0 0.0
    %6333 = vmatprep.subr.mxu0 0.0
    %6334 = vmatpush1.msra.mxu0 0.0
    %6335 = vmatprep.subr.mxu0 0.0
    %6336 = vmatpush1.msra.mxu0 0.0
    %6337 = vmatprep.subr.mxu0 0.0
    %6338 = vmatpush1.msra.mxu0 0.0
    %6339 = vmatprep.subr.mxu0 0.0
    %6340 = vmatpush1.msra.mxu0 0.0
    %6341 = vmatprep.subr.mxu0 0.0
    %6342 = vmatpush1.msra.mxu0 0.0
    %6343 = vmatprep.subr.mxu0 0.0
    %6344 = vmatpush1.msra.mxu0 0.0
    %6345 = vmatprep.subr.mxu0 0.0
    %6346 = vmatpush1.msra.mxu0 0.0
    %6347 = vmatprep.mubr.f32.mxu0 0.0
    %6348 = vmatmul.mubr.f32.gmra.mrb[0].mxu0 %v6281
    %v6349 = vpop.f32.mrb[0].mxu0
    %v6350 = vadd.f32 %v6277, %v6349
    %v6351 = vpop.f32.mrb[0].mxu0
    %6352 = vdwg.mxu0
    %v6353 = vld [vmem:[%s12] sm:$0x1]
    %v6355 = vlaneseq
    %v6356 = vshrl.u32 %v6355, 7
    %v6357 = vsub.s32 0, %v6356
    %v6358 = vrot.slane %v6353, %v6357
    %v6360 = vadd.f32 %v6350, %v6358
    %v6361 = vxor.u32 %v6360, 2147483648
    %v6362 = vmul.f32 %v6361, 1.442695
    %v6363 = vpow.pop %v6362
    %v6364 = vadd.f32 %v6363, 1.0
    %v6365 = vrcp.pop %v6364
    %v6366 = vmul.f32 1.0, %v6365
    %v6367 = vtanh.pop %v6360
    %v6368 = vmul.f32 %v6366, %v5813
    %6370 = vrot.lane.b32.xlu0 %v6367, 64
    %v6371 = vpop.permute.xlu0 %6370
    %v6373 = vmul.f32 %v6366, %v6371
    %6375 = vrot.lane.b32.xlu0 %v6373, 32
    %v6376 = vpop.permute.xlu0 %6375
    %v6378 = vadd.f32 %v6368, %v6376
    %v6379 = vtanh.pop %v6378
    %6381 = vrot.lane.b32.xlu0 %v6379, 64
    %v6382 = vpop.permute.xlu0 %6381
    %v6384 = vmul.f32 %v6366, %v6382
    %v6385 = vld [vmem:[%s13] sm:$0xff]
    %v6386 = vld [vmem:[%s13 + $0x8] sm:$0xff]
    %v6387 = vld [vmem:[%s13 + $0x10] sm:$0xff]
    %v6388 = vld [vmem:[%s13 + $0x18] sm:$0xff]
    %v6389 = vld [vmem:[%s14] sm:$0xff]
    %v6390 = vld [vmem:[%s14 + $0x8] sm:$0xff]
    %v6391 = vld [vmem:[%s14 + $0x10] sm:$0xff]
    %v6392 = vld [vmem:[%s14 + $0x18] sm:$0xff]
    %6393 = vmatprep.subr.mxu0 0.0
    %6394 = vmatpush1.msra.mxu0 %v6389
    %6395 = vmatprep.subr.mxu0 0.0
    %6396 = vmatpush1.msra.mxu0 %v6390
    %6397 = vmatprep.subr.mxu0 0.0
    %6398 = vmatpush1.msra.mxu0 %v6391
    %6399 = vmatprep.subr.mxu0 0.0
    %6400 = vmatpush1.msra.mxu0 %v6392
    %6401 = vmatprep.subr.mxu0 0.0
    %6402 = vmatpush1.msra.mxu0 0.0
    %6403 = vmatprep.subr.mxu0 0.0
    %6404 = vmatpush1.msra.mxu0 0.0
    %6405 = vmatprep.subr.mxu0 0.0
    %6406 = vmatpush1.msra.mxu0 0.0
    %6407 = vmatprep.subr.mxu0 0.0
    %6408 = vmatpush1.msra.mxu0 0.0
    %6409 = vmatprep.subr.mxu0 0.0
    %6410 = vmatpush1.msra.mxu0 0.0
    %6411 = vmatprep.subr.mxu0 0.0
    %6412 = vmatpush1.msra.mxu0 0.0
    %6413 = vmatprep.subr.mxu0 0.0
    %6414 = vmatpush1.msra.mxu0 0.0
    %6415 = vmatprep.subr.mxu0 0.0
    %6416 = vmatpush1.msra.mxu0 0.0
    %6417 = vmatprep.subr.mxu0 0.0
    %6418 = vmatpush1.msra.mxu0 0.0
    %6419 = vmatprep.subr.mxu0 0.0
    %6420 = vmatpush1.msra.mxu0 0.0
    %6421 = vmatprep.subr.mxu0 0.0
    %6422 = vmatpush1.msra.mxu0 0.0
    %6423 = vmatprep.subr.mxu0 0.0
    %6424 = vmatpush1.msra.mxu0 0.0
    %6425 = vmatprep.subr.mxu0 0.0
    %6426 = vmatpush1.msra.mxu0 0.0
    %6427 = vmatprep.subr.mxu0 0.0
    %6428 = vmatpush1.msra.mxu0 0.0
    %6429 = vmatprep.subr.mxu0 0.0
    %6430 = vmatpush1.msra.mxu0 0.0
    %6431 = vmatprep.subr.mxu0 0.0
    %6432 = vmatpush1.msra.mxu0 0.0
    %6433 = vmatprep.subr.mxu0 0.0
    %6434 = vmatpush1.msra.mxu0 0.0
    %6435 = vmatprep.subr.mxu0 0.0
    %6436 = vmatpush1.msra.mxu0 0.0
    %6437 = vmatprep.subr.mxu0 0.0
    %6438 = vmatpush1.msra.mxu0 0.0
    %6439 = vmatprep.subr.mxu0 0.0
    %6440 = vmatpush1.msra.mxu0 0.0
    %6441 = vmatprep.subr.mxu0 0.0
    %6442 = vmatpush1.msra.mxu0 0.0
    %6443 = vmatprep.subr.mxu0 0.0
    %6444 = vmatpush1.msra.mxu0 0.0
    %6445 = vmatprep.subr.mxu0 0.0
    %6446 = vmatpush1.msra.mxu0 0.0
    %6447 = vmatprep.subr.mxu0 0.0
    %6448 = vmatpush1.msra.mxu0 0.0
    %6449 = vmatprep.subr.mxu0 0.0
    %6450 = vmatpush1.msra.mxu0 0.0
    %6451 = vmatprep.subr.mxu0 0.0
    %6452 = vmatpush1.msra.mxu0 0.0
    %6453 = vmatprep.subr.mxu0 0.0
    %6454 = vmatpush1.msra.mxu0 0.0
    %6455 = vmatprep.subr.mxu0 0.0
    %6456 = vmatpush1.msra.mxu0 0.0
    %6457 = vmatprep.mubr.f32.mxu0 0.0
    %6458 = vmatmul.mubr.f32.gmra.mrb[0].mxu0 %v6019
    %v6459 = vpop.f32.mrb[0].mxu0
    %v6460 = vadd.f32 0.0, %v6459
    %v6461 = vpop.f32.mrb[0].mxu0
    %6462 = vdwg.mxu0
    %6464 = vrot.lane.b32.xlu0 %v6384, 32
    %v6465 = vpop.permute.xlu0 %6464
    %v6466 = vsel %vm71, %v6465, 0
    %6468 = vmatprep.subr.mxu0 0.0
    %6469 = vmatpush1.msra.mxu0 %v6385
    %6470 = vmatprep.subr.mxu0 0.0
    %6471 = vmatpush1.msra.mxu0 %v6386
    %6472 = vmatprep.subr.mxu0 0.0
    %6473 = vmatpush1.msra.mxu0 %v6387
    %6474 = vmatprep.subr.mxu0 0.0
    %6475 = vmatpush1.msra.mxu0 %v6388
    %6476 = vmatprep.subr.mxu0 0.0
    %6477 = vmatpush1.msra.mxu0 0.0
    %6478 = vmatprep.subr.mxu0 0.0
    %6479 = vmatpush1.msra.mxu0 0.0
    %6480 = vmatprep.subr.mxu0 0.0
    %6481 = vmatpush1.msra.mxu0 0.0
    %6482 = vmatprep.subr.mxu0 0.0
    %6483 = vmatpush1.msra.mxu0 0.0
    %6484 = vmatprep.subr.mxu0 0.0
    %6485 = vmatpush1.msra.mxu0 0.0
    %6486 = vmatprep.subr.mxu0 0.0
    %6487 = vmatpush1.msra.mxu0 0.0
    %6488 = vmatprep.subr.mxu0 0.0
    %6489 = vmatpush1.msra.mxu0 0.0
    %6490 = vmatprep.subr.mxu0 0.0
    %6491 = vmatpush1.msra.mxu0 0.0
    %6492 = vmatprep.subr.mxu0 0.0
    %6493 = vmatpush1.msra.mxu0 0.0
    %6494 = vmatprep.subr.mxu0 0.0
    %6495 = vmatpush1.msra.mxu0 0.0
    %6496 = vmatprep.subr.mxu0 0.0
    %6497 = vmatpush1.msra.mxu0 0.0
    %6498 = vmatprep.subr.mxu0 0.0
    %6499 = vmatpush1.msra.mxu0 0.0
    %6500 = vmatprep.subr.mxu0 0.0
    %6501 = vmatpush1.msra.mxu0 0.0
    %6502 = vmatprep.subr.mxu0 0.0
    %6503 = vmatpush1.msra.mxu0 0.0
    %6504 = vmatprep.subr.mxu0 0.0
    %6505 = vmatpush1.msra.mxu0 0.0
    %6506 = vmatprep.subr.mxu0 0.0
    %6507 = vmatpush1.msra.mxu0 0.0
    %6508 = vmatprep.subr.mxu0 0.0
    %6509 = vmatpush1.msra.mxu0 0.0
    %6510 = vmatprep.subr.mxu0 0.0
    %6511 = vmatpush1.msra.mxu0 0.0
    %6512 = vmatprep.subr.mxu0 0.0
    %6513 = vmatpush1.msra.mxu0 0.0
    %6514 = vmatprep.subr.mxu0 0.0
    %6515 = vmatpush1.msra.mxu0 0.0
    %6516 = vmatprep.subr.mxu0 0.0
    %6517 = vmatpush1.msra.mxu0 0.0
    %6518 = vmatprep.subr.mxu0 0.0
    %6519 = vmatpush1.msra.mxu0 0.0
    %6520 = vmatprep.subr.mxu0 0.0
    %6521 = vmatpush1.msra.mxu0 0.0
    %6522 = vmatprep.subr.mxu0 0.0
    %6523 = vmatpush1.msra.mxu0 0.0
    %6524 = vmatprep.subr.mxu0 0.0
    %6525 = vmatpush1.msra.mxu0 0.0
    %6526 = vmatprep.subr.mxu0 0.0
    %6527 = vmatpush1.msra.mxu0 0.0
    %6528 = vmatprep.subr.mxu0 0.0
    %6529 = vmatpush1.msra.mxu0 0.0
    %6530 = vmatprep.subr.mxu0 0.0
    %6531 = vmatpush1.msra.mxu0 0.0
    %6532 = vmatprep.mubr.f32.mxu0 0.0
    %6533 = vmatmul.mubr.f32.gmra.mrb[0].mxu0 %v6466
    %v6534 = vpop.f32.mrb[0].mxu0
    %v6535 = vadd.f32 %v6460, %v6534
    %v6536 = vpop.f32.mrb[0].mxu0
    %6537 = vdwg.mxu0
    %v6538 = vld [vmem:[%s15] sm:$0x1]
    %v6540 = vlaneseq
    %v6541 = vshrl.u32 %v6540, 7
    %v6542 = vsub.s32 0, %v6541
    %v6543 = vrot.slane %v6538, %v6542
    %v6545 = vadd.f32 %v6535, %v6543
    %v6546 = vxor.u32 %v6545, 2147483648
    %v6547 = vmul.f32 %v6546, 1.442695
    %v6548 = vpow.pop %v6547
    %v6549 = vadd.f32 %v6548, 1.0
    %v6550 = vrcp.pop %v6549
    %v6551 = vmul.f32 1.0, %v6550
    %v6552 = vtanh.pop %v6545
    %v6553 = vmul.f32 %v6551, %v5998
    %6555 = vrot.lane.b32.xlu0 %v6552, 64
    %v6556 = vpop.permute.xlu0 %6555
    %v6558 = vmul.f32 %v6551, %v6556
    %6560 = vrot.lane.b32.xlu0 %v6558, 32
    %v6561 = vpop.permute.xlu0 %6560
    %v6563 = vadd.f32 %v6553, %v6561
    %v6564 = vtanh.pop %v6563
    %6566 = vrot.lane.b32.xlu0 %v6564, 64
    %v6567 = vpop.permute.xlu0 %6566
    %v6569 = vmul.f32 %v6551, %v6567
    %v6570 = vld [vmem:[%s16] sm:$0xff]
    %v6571 = vld [vmem:[%s16 + $0x8] sm:$0xff]
    %v6572 = vld [vmem:[%s16 + $0x10] sm:$0xff]
    %v6573 = vld [vmem:[%s16 + $0x18] sm:$0xff]
    %v6574 = vld [vmem:[%s17] sm:$0x1]
    %v6576 = vlaneseq
    %v6577 = vshrl.u32 %v6576, 7
    %v6578 = vsub.s32 0, %v6577
    %v6579 = vrot.slane %v6574, %v6578
    %6582 = vrot.lane.b32.xlu0 %v6569, 32
    %v6583 = vpop.permute.xlu0 %6582
    %v6584 = vsel %vm71, %v6583, 0
    %6586 = vmatprep.subr.mxu0 0.0
    %6587 = vmatpush1.msra.mxu0 %v6570
    %6588 = vmatprep.subr.mxu0 0.0
    %6589 = vmatpush1.msra.mxu0 %v6571
    %6590 = vmatprep.subr.mxu0 0.0
    %6591 = vmatpush1.msra.mxu0 %v6572
    %6592 = vmatprep.subr.mxu0 0.0
    %6593 = vmatpush1.msra.mxu0 %v6573
    %6594 = vmatprep.subr.mxu0 0.0
    %6595 = vmatpush1.msra.mxu0 0.0
    %6596 = vmatprep.subr.mxu0 0.0
    %6597 = vmatpush1.msra.mxu0 0.0
    %6598 = vmatprep.subr.mxu0 0.0
    %6599 = vmatpush1.msra.mxu0 0.0
    %6600 = vmatprep.subr.mxu0 0.0
    %6601 = vmatpush1.msra.mxu0 0.0
    %6602 = vmatprep.subr.mxu0 0.0
    %6603 = vmatpush1.msra.mxu0 0.0
    %6604 = vmatprep.subr.mxu0 0.0
    %6605 = vmatpush1.msra.mxu0 0.0
    %6606 = vmatprep.subr.mxu0 0.0
    %6607 = vmatpush1.msra.mxu0 0.0
    %6608 = vmatprep.subr.mxu0 0.0
    %6609 = vmatpush1.msra.mxu0 0.0
    %6610 = vmatprep.subr.mxu0 0.0
    %6611 = vmatpush1.msra.mxu0 0.0
    %6612 = vmatprep.subr.mxu0 0.0
    %6613 = vmatpush1.msra.mxu0 0.0
    %6614 = vmatprep.subr.mxu0 0.0
    %6615 = vmatpush1.msra.mxu0 0.0
    %6616 = vmatprep.subr.mxu0 0.0
    %6617 = vmatpush1.msra.mxu0 0.0
    %6618 = vmatprep.subr.mxu0 0.0
    %6619 = vmatpush1.msra.mxu0 0.0
    %6620 = vmatprep.subr.mxu0 0.0
    %6621 = vmatpush1.msra.mxu0 0.0
    %6622 = vmatprep.subr.mxu0 0.0
    %6623 = vmatpush1.msra.mxu0 0.0
    %6624 = vmatprep.subr.mxu0 0.0
    %6625 = vmatpush1.msra.mxu0 0.0
    %6626 = vmatprep.subr.mxu0 0.0
    %6627 = vmatpush1.msra.mxu0 0.0
    %6628 = vmatprep.subr.mxu0 0.0
    %6629 = vmatpush1.msra.mxu0 0.0
    %6630 = vmatprep.subr.mxu0 0.0
    %6631 = vmatpush1.msra.mxu0 0.0
    %6632 = vmatprep.subr.mxu0 0.0
    %6633 = vmatpush1.msra.mxu0 0.0
    %6634 = vmatprep.subr.mxu0 0.0
    %6635 = vmatpush1.msra.mxu0 0.0
    %6636 = vmatprep.subr.mxu0 0.0
    %6637 = vmatpush1.msra.mxu0 0.0
    %6638 = vmatprep.subr.mxu0 0.0
    %6639 = vmatpush1.msra.mxu0 0.0
    %6640 = vmatprep.subr.mxu0 0.0
    %6641 = vmatpush1.msra.mxu0 0.0
    %6642 = vmatprep.subr.mxu0 0.0
    %6643 = vmatpush1.msra.mxu0 0.0
    %6644 = vmatprep.subr.mxu0 0.0
    %6645 = vmatpush1.msra.mxu0 0.0
    %6646 = vmatprep.subr.mxu0 0.0
    %6647 = vmatpush1.msra.mxu0 0.0
    %6648 = vmatprep.subr.mxu0 0.0
    %6649 = vmatpush1.msra.mxu0 0.0
    %6650 = vmatprep.mubr.f32.mxu0 0.0
    %6651 = vmatmul.mubr.f32.gmra.mrb[0].mxu0 %v6584
    %v6652 = vpop.f32.mrb[0].mxu0
    %v6653 = vadd.f32 %v6579, %v6652
    %v6654 = vpop.f32.mrb[0].mxu0
    %6655 = vdwg.mxu0
    %s6656 = scalar_lea.vmem [#allocation4], 56
    %6657 = vst.msk [vmem:[%s6656] sm:$0xff] %vm2168, %v6653
    // Predicated region
    $region70: #{seq2seq_forward.1} parent=1 // pred_check
      _
    $region71: #{seq2seq_forward.1} parent=1 // pred_check_branch
      %6659 = sbr.rel (0) target = $region73
    $region72: #{seq2seq_forward.1} parent=1 // pred_region
      %s6661 = ssub.s32 1024, 1024
      %6662 = vsyncadd [#allocation5], %s6661
      %s6663 = sshll.u32 [#allocation4], 4
      %s6664 = int_to_ptr.vmem [resolvable:$true] %s6663
      %6669 = dma.vmem_to_hbm [thread:$0]  %s6664, 1024, %s18, [#allocation5], 128, 128, 8
    $region73: #{seq2seq_forward.1} parent=1 // pred_fallthru
      _
    // Predicated region
    $region74: #{seq2seq_forward.1} parent=1 // pred_check
      _
    $region75: #{seq2seq_forward.1} parent=1 // pred_check_branch
      %6671 = sbr.rel (0) target = $region77
    $region76: #{seq2seq_forward.1} parent=1 // pred_region
      %6672 = dma.done [#allocation5], 1024
    $region77: #{seq2seq_forward.1} parent=1 // pred_fallthru
      _
    %6673 = vsyncpa [#allocation5], 1

</llo_original>
